<compile_context>
chip_gen: v7x
topology: tpu7x:2x2x1
jax: 0.10.0
libtpu: 0.0.40
codegen_flags: <defaults>
</compile_context>

<pallas_src>
import functools

import jax
import jax.numpy as jnp
from jax.experimental import pallas as pl
from jax.experimental.pallas import tpu as pltpu

D_MODEL = 32
N_HEAD = 4
HEAD_DIM = D_MODEL // N_HEAD
DIM_FF = 64
NUM_LAYERS = 2
EPS = 1e-5                       # PyTorch LayerNorm default eps
SCALE = 1.0 / (HEAD_DIM ** 0.5)  # folded into Wq / bq at pack time

PARAM_LANES = 128                # lane width of the packed bias/LayerNorm slab

# ---- rows of the packed parameter slab (one parameter vector per row, lane offset 0) ----
P_SA_BQK, P_SA_BV, P_SA_BO = 0, 1, 2          # [bq*scale | bk] (64), bv (32), bo (32)
P_CA_BQ, P_CA_BO = 3, 4                       # cross-attn q bias (scaled), out bias
P_F_B1, P_F_B2 = 5, 6                         # FFN biases (64), (32)
P_LN1_G, P_LN1_B, P_LN2_G, P_LN2_B, P_LN3_G, P_LN3_B = 7, 8, 9, 10, 11, 12
ROWS_PER_LAYER = 13
P_CA_BKV = NUM_LAYERS * ROWS_PER_LAYER        # hoisted cross K|V biases, all layers (128)
P_FIN_G = P_CA_BKV + 1
P_FIN_B = P_CA_BKV + 2


# ----------------------------- in-kernel helpers -----------------------------

def _layer_norm(s, g, b):
    """LayerNorm over the last dim (matches torch: biased var, eps inside rsqrt)."""
    mu = jnp.mean(s, axis=-1, keepdims=True)
    var = jnp.mean(jnp.square(s - mu), axis=-1, keepdims=True)
    return (s - mu) * jax.lax.rsqrt(var + EPS) * g + b


def _attention(q, k, v, wo, bo, neg, scr_ref):
    """Multi-head attention core on batch-folded rows.

    q: (RQ, D) already projected, biased and pre-scaled; k/v: (RK, D).
    neg: (RQ, RK) additive mask — 0 for same-batch pairs, -1e30 otherwise — so the
    folded-batch softmax / PV matmuls reproduce per-batch attention exactly.
    Head outputs go into the VMEM scratch at static lane offsets (no lane concat),
    then one out-projection matmul is done on the whole scratch.
    """
    for h in range(N_HEAD):                                    # static unroll
        sl = slice(h * HEAD_DIM, (h + 1) * HEAD_DIM)
        # q_h @ k_h.T without an explicit transpose (contract on last dims).
        s = jax.lax.dot_general(q[:, sl], k[:, sl],
                                (((1,), (1,)), ((), ())),
                                preferred_element_type=jnp.float32) + neg
        m = jnp.max(s, axis=-1, keepdims=True)
        p = jnp.exp(s - m)
        p = p * pl.reciprocal(jnp.sum(p, axis=-1, keepdims=True), approx=True)
        scr_ref[:, sl] = jnp.dot(p, v[:, sl], preferred_element_type=jnp.float32)
    return jnp.dot(scr_ref[...], wo, preferred_element_type=jnp.float32) + bo


# ------------------------------ fused kernel ---------------------------------

def _decoder_kernel(tgt_ref, qp_ref, mem_ref, pos_ref,
                    w_a_ref, w_b_ref, w_kv_ref, w_f2_ref, p_ref,
                    o_ref, scr_ref, *, batch):
    """Entire decoder (all layers + final LN), batch folded onto the sublane axis."""
    D = D_MODEL
    x = tgt_ref[...]                      # (RQ, D) = (B*Lq, D)
    qp = qp_ref[...]                      # (RQ, D)
    mem = mem_ref[...]                    # (RK, D) = (B*Lk, D)
    mem_k_in = mem + pos_ref[...]         # cross-attn key input (loop-invariant)
    rq, rk = x.shape[0], mem.shape[0]

    def prow(r, w):                       # one packed parameter vector -> (1, w)
        return p_ref[r:r + 1, 0:w]

    # Batch block-diagonal additive masks.  Rows were flattened (seq-major,
    # batch-minor), so batch id of row r is r % batch.
    def neg_mask(nq, nk):
        qb = jax.lax.broadcasted_iota(jnp.int32, (nq, nk), 0) % batch
        kb = jax.lax.broadcasted_iota(jnp.int32, (nq, nk), 1) % batch
        return jnp.where(qb == kb, 0.0, -1e30).astype(jnp.float32)

    neg_self = neg_mask(rq, rq)
    neg_cross = neg_mask(rq, rk)

    # Hoisted cross-attention K / V projections for ALL layers (memory/pos are
    # layer-invariant): two (RK,32)@(32,NL*32) matmuls instead of 2*NL small ones.
    # Note K uses memory+pos, V uses memory (different inputs -> two matmuls).
    nld = NUM_LAYERS * D
    k_all = (jnp.dot(mem_k_in, w_kv_ref[:, 0:nld],
                     preferred_element_type=jnp.float32)
             + p_ref[P_CA_BKV:P_CA_BKV + 1, 0:nld])
    v_all = (jnp.dot(mem, w_kv_ref[:, nld:2 * nld],
                     preferred_element_type=jnp.float32)
             + p_ref[P_CA_BKV:P_CA_BKV + 1, nld:2 * nld])

    for li in range(NUM_LAYERS):                       # static unroll over layers
        wa = w_a_ref[li]                               # (D, 128): [wq*s | wk | wv | wo]
        wb = w_b_ref[li]                               # (D, 128): [ca_wq*s | ca_wo | f_w1]
        base = li * ROWS_PER_LAYER

        # --- self-attention: q = k = x + query_pos, v = x (fused Q|K projection) ---
        qk = (jnp.dot(x + qp, wa[:, 0:2 * D], preferred_element_type=jnp.float32)
              + prow(base + P_SA_BQK, 2 * D))
        v = (jnp.dot(x, wa[:, 2 * D:3 * D], preferred_element_type=jnp.float32)
             + prow(base + P_SA_BV, D))
        sa = _attention(qk[:, 0:D], qk[:, D:2 * D], v,
                        wa[:, 3 * D:4 * D], prow(base + P_SA_BO, D),
                        neg_self, scr_ref)
        x = _layer_norm(x + sa, prow(base + P_LN1_G, D), prow(base + P_LN1_B, D))

        # --- cross-attention: q = x + query_pos, k = memory + pos, v = memory ---
        q = (jnp.dot(x + qp, wb[:, 0:D], preferred_element_type=jnp.float32)
             + prow(base + P_CA_BQ, D))
        ca = _attention(q,
                        k_all[:, li * D:(li + 1) * D],
                        v_all[:, li * D:(li + 1) * D],
                        wb[:, D:2 * D], prow(base + P_CA_BO, D),
                        neg_cross, scr_ref)
        x = _layer_norm(x + ca, prow(base + P_LN2_G, D), prow(base + P_LN2_B, D))

        # --- feed-forward ---
        h = (jnp.dot(x, wb[:, 2 * D:2 * D + DIM_FF], preferred_element_type=jnp.float32)
             + prow(base + P_F_B1, DIM_FF))
        h = jnp.maximum(h, 0.0)
        ff = (jnp.dot(h, w_f2_ref[li], preferred_element_type=jnp.float32)
              + prow(base + P_F_B2, D))
        x = _layer_norm(x + ff, prow(base + P_LN3_G, D), prow(base + P_LN3_B, D))

    # --- final decoder norm (epilogue) ---
    x = _layer_norm(x, prow(P_FIN_G, D), prow(P_FIN_B, D))
    o_ref[...] = x.astype(o_ref.dtype)


# ------------------------------- wrapper -------------------------------------

@jax.jit
def transformer_decoder(tgt, memory, pos, query_pos, packed):
    """tgt/query_pos: (Lq, B, D); memory/pos: (Lk, B, D).
    Returns (1, Lq, B, D) == torch output.unsqueeze(0)."""
    Lq, B, D = tgt.shape
    Lk = memory.shape[0]
    # Metadata-only flattening (no transpose kernels): rows are (seq-major,
    # batch-minor); batch identity is recovered in-kernel via block-diagonal masks.
    out = pl.pallas_call(
        functools.partial(_decoder_kernel, batch=B),
        out_shape=jax.ShapeDtypeStruct((Lq * B, D), tgt.dtype),
        scratch_shapes=[pltpu.VMEM((Lq * B, D_MODEL), jnp.float32)],
    )(tgt.reshape(Lq * B, D), query_pos.reshape(Lq * B, D),
      memory.reshape(Lk * B, D), pos.reshape(Lk * B, D),
      packed["w_a"], packed["w_b"], packed["w_kv"], packed["w_f2"],
      packed["params"])
    return out.reshape(Lq, B, D)[None]


# --------------------------- parameter construction --------------------------

def _init_params(key):
    """Parameters in PyTorch convention (Linear weight = (out, in))."""
    def nrm(k, shape, scale=0.02):
        return (scale * jax.random.normal(k, shape)).astype(jnp.float32)

    def attn_params(k):
        ks = jax.random.split(k, 8)
        return {
            "wq": nrm(ks[0], (D_MODEL, D_MODEL)), "bq": nrm(ks[1], (D_MODEL,)),
            "wk": nrm(ks[2], (D_MODEL, D_MODEL)), "bk": nrm(ks[3], (D_MODEL,)),
            "wv": nrm(ks[4], (D_MODEL, D_MODEL)), "bv": nrm(ks[5], (D_MODEL,)),
            "wo": nrm(ks[6], (D_MODEL, D_MODEL)), "bo": nrm(ks[7], (D_MODEL,)),
        }

    def ln_params():
        return {"gamma": jnp.ones((D_MODEL,), jnp.float32),
                "beta": jnp.zeros((D_MODEL,), jnp.float32)}

    layers = []
    for li in range(NUM_LAYERS):
        k = jax.random.fold_in(key, li)
        k_sa, k_ca, k_f1, k_f2, k_b1, k_b2 = jax.random.split(k, 6)
        layers.append({
            "self_attn": attn_params(k_sa),
            "cross_attn": attn_params(k_ca),
            "norm1": ln_params(), "norm2": ln_params(), "norm3": ln_params(),
            "ffn": {"w1": nrm(k_f1, (DIM_FF, D_MODEL)), "b1": nrm(k_b1, (DIM_FF,)),
                    "w2": nrm(k_f2, (D_MODEL, DIM_FF)), "b2": nrm(k_b2, (D_MODEL,))},
        })
    return {"layers": layers, "norm": ln_params()}


def _pack_params(params):
    """One-time host-side packing: pre-transpose to x@W form, fold the attention
    scale into Wq/bq, and collapse everything into 5 lane-dense slabs so the fused
    kernel has only 9 DMA inputs."""
    L = params["layers"]
    cat = functools.partial(jnp.concatenate, axis=1)

    def row(vec):
        vec = jnp.asarray(vec, jnp.float32).reshape(-1)
        return jnp.pad(vec, (0, PARAM_LANES - vec.shape[0]))

    w_a, w_b, w_f2, rows = [], [], [], []
    for lp in L:
        sa, ca, ffn = lp["self_attn"], lp["cross_attn"], lp["ffn"]
        # (D, 4D): [wq*scale | wk | wv | wo]          (self-attn)
        w_a.append(cat([sa["wq"].T * SCALE, sa["wk"].T, sa["wv"].T, sa["wo"].T]))
        # (D, 2D+FF): [ca_wq*scale | ca_wo | ffn_w1]  (cross-attn Q/O + FFN-1)
        w_b.append(cat([ca["wq"].T * SCALE, ca["wo"].T, ffn["w1"].T]))
        w_f2.append(ffn["w2"].T)                                   # (FF, D)
        # parameter rows — order must match the P_* constants
        rows.append(row(jnp.concatenate([sa["bq"] * SCALE, sa["bk"]])))   # P_SA_BQK
        rows.append(row(sa["bv"]))                                        # P_SA_BV
        rows.append(row(sa["bo"]))                                        # P_SA_BO
        rows.append(row(ca["bq"] * SCALE))                                # P_CA_BQ
        rows.append(row(ca["bo"]))                                        # P_CA_BO
        rows.append(row(ffn["b1"]))                                       # P_F_B1
        rows.append(row(ffn["b2"]))                                       # P_F_B2
        for n in ("norm1", "norm2", "norm3"):                             # P_LN*_G/B
            rows.append(row(lp[n]["gamma"]))
            rows.append(row(lp[n]["beta"]))

    # Hoisted cross-attn K/V weights & biases, layer-major: [K(l0)|K(l1)|V(l0)|V(l1)]
    w_kv = cat([cat([lp["cross_attn"]["wk"].T for lp in L]),
                cat([lp["cross_attn"]["wv"].T for lp in L])])      # (D, 2*NL*D)
    rows.append(row(jnp.concatenate(
        [lp["cross_attn"]["bk"] for lp in L]
        + [lp["cross_attn"]["bv"] for lp in L])))                  # P_CA_BKV
    rows.append(row(params["norm"]["gamma"]))                      # P_FIN_G
    rows.append(row(params["norm"]["beta"]))                       # P_FIN_B
    while len(rows) % 8:                                           # sublane padding
        rows.append(jnp.zeros((PARAM_LANES,), jnp.float32))

    return {"w_a": jnp.stack(w_a),        # (NL, D, 4D)    = (2, 32, 128)
            "w_b": jnp.stack(w_b),        # (NL, D, 2D+FF) = (2, 32, 128)
            "w_kv": w_kv,                 # (D, 2*NL*D)    = (32, 128)
            "w_f2": jnp.stack(w_f2),      # (NL, FF, D)    = (2, 64, 32)
            "params": jnp.stack(rows)}    # (32, 128)


# ----------------------------------- main ------------------------------------

if __name__ == "__main__":
    key = jax.random.PRNGKey(0)
    k_p, k_tgt, k_mem, k_pos, k_qp = jax.random.split(key, 5)

    B, Lq, Lk = 2, 8, 16
    packed = _pack_params(_init_params(k_p))   # packed / pre-transposed once, outside jit

    tgt = jax.random.normal(k_tgt, (Lq, B, D_MODEL), jnp.float32)
    memory = jax.random.normal(k_mem, (Lk, B, D_MODEL), jnp.float32)
    pos = jax.random.normal(k_pos, (Lk, B, D_MODEL), jnp.float32)
    query_pos = jax.random.normal(k_qp, (Lq, B, D_MODEL), jnp.float32)

    # TODO(synk): attn_mask / key_padding_mask paths (None in this config) not implemented.
    out = transformer_decoder(tgt, memory, pos, query_pos, packed)
    out = jax.block_until_ready(out)
    assert out.shape == (1, Lq, B, D_MODEL)
    print("KERNEL_OK")
</pallas_src>

<mosaic_0001>
module attributes {stable_mosaic.version = 11 : i64} {
  func.func @_decoder_kernel(%arg0: memref<16x32xf32, #tpu.memory_space<vmem>>, %arg1: memref<16x32xf32, #tpu.memory_space<vmem>>, %arg2: memref<32x32xf32, #tpu.memory_space<vmem>>, %arg3: memref<32x32xf32, #tpu.memory_space<vmem>>, %arg4: memref<2x32x128xf32, #tpu.memory_space<vmem>>, %arg5: memref<2x32x128xf32, #tpu.memory_space<vmem>>, %arg6: memref<32x128xf32, #tpu.memory_space<vmem>>, %arg7: memref<2x64x32xf32, #tpu.memory_space<vmem>>, %arg8: memref<32x128xf32, #tpu.memory_space<vmem>>, %arg9: memref<16x32xf32, #tpu.memory_space<vmem>>, %arg10: memref<16x32xf32, #tpu.memory_space<vmem>>) attributes {dimension_semantics = [], scalar_prefetch = 0 : i64, scratch_operands = 1 : i64, tpu.core_type = #tpu.core_type<tc>} {
    %c0 = arith.constant 0 : index
    %c0_0 = arith.constant 0 : index
    %0 = vector.load %arg0[%c0, %c0_0] : memref<16x32xf32, #tpu.memory_space<vmem>>, vector<16x32xf32>
    %c0_1 = arith.constant 0 : index
    %c0_2 = arith.constant 0 : index
    %1 = vector.load %arg1[%c0_1, %c0_2] : memref<16x32xf32, #tpu.memory_space<vmem>>, vector<16x32xf32>
    %c0_3 = arith.constant 0 : index
    %c0_4 = arith.constant 0 : index
    %2 = vector.load %arg2[%c0_3, %c0_4] : memref<32x32xf32, #tpu.memory_space<vmem>>, vector<32x32xf32>
    %c0_5 = arith.constant 0 : index
    %c0_6 = arith.constant 0 : index
    %3 = vector.load %arg3[%c0_5, %c0_6] : memref<32x32xf32, #tpu.memory_space<vmem>>, vector<32x32xf32>
    %4 = arith.addf %2, %3 : vector<32x32xf32>
    %5 = tpu.iota {dimensions = array<i32: 0>} : vector<16x16xi32>
    %c2_i32 = arith.constant 2 : i32
    %c0_i32 = arith.constant 0 : i32
    %6 = arith.cmpi eq, %c2_i32, %c0_i32 : i32
    %c1_i32 = arith.constant 1 : i32
    %7 = arith.select %6, %c1_i32, %c2_i32 : i32
    %8 = vector.broadcast %7 : i32 to vector<16x16xi32>
    %9 = arith.remsi %5, %8 : vector<16x16xi32>
    %c0_i32_7 = arith.constant 0 : i32
    %10 = vector.broadcast %c0_i32_7 : i32 to vector<16x16xi32>
    %11 = arith.cmpi ne, %9, %10 : vector<16x16xi32>
    %c0_i32_8 = arith.constant 0 : i32
    %12 = vector.broadcast %c0_i32_8 : i32 to vector<16x16xi32>
    %13 = arith.cmpi slt, %9, %12 : vector<16x16xi32>
    %c0_i32_9 = arith.constant 0 : i32
    %14 = arith.cmpi slt, %7, %c0_i32_9 : i32
    %15 = vector.broadcast %14 : i1 to vector<16x16xi1>
    %16 = vector.broadcast %15 : vector<16x16xi1> to vector<16x16xi1>
    %17 = arith.xori %13, %16 : vector<16x16xi1>
    %18 = arith.andi %17, %11 : vector<16x16xi1>
    %19 = vector.broadcast %7 : i32 to vector<16x16xi32>
    %20 = arith.addi %9, %19 : vector<16x16xi32>
    %21 = arith.select %18, %20, %9 : vector<16x16xi1>, vector<16x16xi32>
    %22 = tpu.iota {dimensions = array<i32: 1>} : vector<16x16xi32>
    %c2_i32_10 = arith.constant 2 : i32
    %c0_i32_11 = arith.constant 0 : i32
    %23 = arith.cmpi eq, %c2_i32_10, %c0_i32_11 : i32
    %c1_i32_12 = arith.constant 1 : i32
    %24 = arith.select %23, %c1_i32_12, %c2_i32_10 : i32
    %25 = vector.broadcast %24 : i32 to vector<16x16xi32>
    %26 = arith.remsi %22, %25 : vector<16x16xi32>
    %c0_i32_13 = arith.constant 0 : i32
    %27 = vector.broadcast %c0_i32_13 : i32 to vector<16x16xi32>
    %28 = arith.cmpi ne, %26, %27 : vector<16x16xi32>
    %c0_i32_14 = arith.constant 0 : i32
    %29 = vector.broadcast %c0_i32_14 : i32 to vector<16x16xi32>
    %30 = arith.cmpi slt, %26, %29 : vector<16x16xi32>
    %c0_i32_15 = arith.constant 0 : i32
    %31 = arith.cmpi slt, %24, %c0_i32_15 : i32
    %32 = vector.broadcast %31 : i1 to vector<16x16xi1>
    %33 = vector.broadcast %32 : vector<16x16xi1> to vector<16x16xi1>
    %34 = arith.xori %30, %33 : vector<16x16xi1>
    %35 = arith.andi %34, %28 : vector<16x16xi1>
    %36 = vector.broadcast %24 : i32 to vector<16x16xi32>
    %37 = arith.addi %26, %36 : vector<16x16xi32>
    %38 = arith.select %35, %37, %26 : vector<16x16xi1>, vector<16x16xi32>
    %39 = arith.cmpi eq, %21, %38 : vector<16x16xi32>
    %cst = arith.constant 0.000000e+00 : f32
    %cst_16 = arith.constant -1.000000e+30 : f32
    %40 = vector.broadcast %cst : f32 to vector<16x16xf32>
    %41 = vector.broadcast %cst_16 : f32 to vector<16x16xf32>
    %42 = arith.select %39, %40, %41 : vector<16x16xi1>, vector<16x16xf32>
    %43 = tpu.iota {dimensions = array<i32: 0>} : vector<16x32xi32>
    %c2_i32_17 = arith.constant 2 : i32
    %c0_i32_18 = arith.constant 0 : i32
    %44 = arith.cmpi eq, %c2_i32_17, %c0_i32_18 : i32
    %c1_i32_19 = arith.constant 1 : i32
    %45 = arith.select %44, %c1_i32_19, %c2_i32_17 : i32
    %46 = vector.broadcast %45 : i32 to vector<16x32xi32>
    %47 = arith.remsi %43, %46 : vector<16x32xi32>
    %c0_i32_20 = arith.constant 0 : i32
    %48 = vector.broadcast %c0_i32_20 : i32 to vector<16x32xi32>
    %49 = arith.cmpi ne, %47, %48 : vector<16x32xi32>
    %c0_i32_21 = arith.constant 0 : i32
    %50 = vector.broadcast %c0_i32_21 : i32 to vector<16x32xi32>
    %51 = arith.cmpi slt, %47, %50 : vector<16x32xi32>
    %c0_i32_22 = arith.constant 0 : i32
    %52 = arith.cmpi slt, %45, %c0_i32_22 : i32
    %53 = vector.broadcast %52 : i1 to vector<16x32xi1>
    %54 = vector.broadcast %53 : vector<16x32xi1> to vector<16x32xi1>
    %55 = arith.xori %51, %54 : vector<16x32xi1>
    %56 = arith.andi %55, %49 : vector<16x32xi1>
    %57 = vector.broadcast %45 : i32 to vector<16x32xi32>
    %58 = arith.addi %47, %57 : vector<16x32xi32>
    %59 = arith.select %56, %58, %47 : vector<16x32xi1>, vector<16x32xi32>
    %60 = tpu.iota {dimensions = array<i32: 1>} : vector<16x32xi32>
    %c2_i32_23 = arith.constant 2 : i32
    %c0_i32_24 = arith.constant 0 : i32
    %61 = arith.cmpi eq, %c2_i32_23, %c0_i32_24 : i32
    %c1_i32_25 = arith.constant 1 : i32
    %62 = arith.select %61, %c1_i32_25, %c2_i32_23 : i32
    %63 = vector.broadcast %62 : i32 to vector<16x32xi32>
    %64 = arith.remsi %60, %63 : vector<16x32xi32>
    %c0_i32_26 = arith.constant 0 : i32
    %65 = vector.broadcast %c0_i32_26 : i32 to vector<16x32xi32>
    %66 = arith.cmpi ne, %64, %65 : vector<16x32xi32>
    %c0_i32_27 = arith.constant 0 : i32
    %67 = vector.broadcast %c0_i32_27 : i32 to vector<16x32xi32>
    %68 = arith.cmpi slt, %64, %67 : vector<16x32xi32>
    %c0_i32_28 = arith.constant 0 : i32
    %69 = arith.cmpi slt, %62, %c0_i32_28 : i32
    %70 = vector.broadcast %69 : i1 to vector<16x32xi1>
    %71 = vector.broadcast %70 : vector<16x32xi1> to vector<16x32xi1>
    %72 = arith.xori %68, %71 : vector<16x32xi1>
    %73 = arith.andi %72, %66 : vector<16x32xi1>
    %74 = vector.broadcast %62 : i32 to vector<16x32xi32>
    %75 = arith.addi %64, %74 : vector<16x32xi32>
    %76 = arith.select %73, %75, %64 : vector<16x32xi1>, vector<16x32xi32>
    %77 = arith.cmpi eq, %59, %76 : vector<16x32xi32>
    %cst_29 = arith.constant 0.000000e+00 : f32
    %cst_30 = arith.constant -1.000000e+30 : f32
    %78 = vector.broadcast %cst_29 : f32 to vector<16x32xf32>
    %79 = vector.broadcast %cst_30 : f32 to vector<16x32xf32>
    %80 = arith.select %77, %78, %79 : vector<16x32xi1>, vector<16x32xf32>
    %c0_31 = arith.constant 0 : index
    %c0_32 = arith.constant 0 : index
    %81 = vector.load %arg6[%c0_31, %c0_32] : memref<32x128xf32, #tpu.memory_space<vmem>>, vector<32x64xf32>
    %cst_33 = arith.constant dense<0.000000e+00> : vector<32x64xf32>
    %82 = tpu.matmul %4, %81, %cst_33 {dimension_numbers = #tpu.dot_dimension_numbers<[1], [0], [0], [1], [0, 0, 1, 1], [], []>} : vector<32x32xf32>, vector<32x64xf32>, vector<32x64xf32> -> vector<32x64xf32>
    %c26 = arith.constant 26 : index
    %c0_34 = arith.constant 0 : index
    %83 = vector.load %arg8[%c26, %c0_34] : memref<32x128xf32, #tpu.memory_space<vmem>>, vector<1x64xf32>
    %84 = vector.broadcast %83 : vector<1x64xf32> to vector<32x64xf32>
    %85 = arith.addf %82, %84 : vector<32x64xf32>
    %c0_35 = arith.constant 0 : index
    %c64 = arith.constant 64 : index
    %86 = vector.load %arg6[%c0_35, %c64] : memref<32x128xf32, #tpu.memory_space<vmem>>, vector<32x64xf32>
    %cst_36 = arith.constant dense<0.000000e+00> : vector<32x64xf32>
    %87 = tpu.matmul %2, %86, %cst_36 {dimension_numbers = #tpu.dot_dimension_numbers<[1], [0], [0], [1], [0, 0, 1, 1], [], []>} : vector<32x32xf32>, vector<32x64xf32>, vector<32x64xf32> -> vector<32x64xf32>
    %c26_37 = arith.constant 26 : index
    %c64_38 = arith.constant 64 : index
    %88 = vector.load %arg8[%c26_37, %c64_38] : memref<32x128xf32, #tpu.memory_space<vmem>>, vector<1x64xf32>
    %89 = vector.broadcast %88 : vector<1x64xf32> to vector<32x64xf32>
    %90 = arith.addf %87, %89 : vector<32x64xf32>
    %c0_39 = arith.constant 0 : index
    %c0_40 = arith.constant 0 : index
    %c0_41 = arith.constant 0 : index
    %91 = vector.load %arg4[%c0_39, %c0_40, %c0_41] : memref<2x32x128xf32, #tpu.memory_space<vmem>>, vector<1x32x128xf32>
    %92 = vector.shape_cast %91 : vector<1x32x128xf32> to vector<32x128xf32>
    %c0_42 = arith.constant 0 : index
    %c0_43 = arith.constant 0 : index
    %c0_44 = arith.constant 0 : index
    %93 = vector.load %arg5[%c0_42, %c0_43, %c0_44] : memref<2x32x128xf32, #tpu.memory_space<vmem>>, vector<1x32x128xf32>
    %94 = vector.shape_cast %93 : vector<1x32x128xf32> to vector<32x128xf32>
    %95 = arith.addf %0, %1 : vector<16x32xf32>
    %96 = vector.extract_strided_slice %92 {offsets = [0, 0], sizes = [32, 64], strides = [1, 1]} : vector<32x128xf32> to vector<32x64xf32>
    %cst_45 = arith.constant dense<0.000000e+00> : vector<16x64xf32>
    %97 = tpu.matmul %95, %96, %cst_45 {dimension_numbers = #tpu.dot_dimension_numbers<[1], [0], [0], [1], [0, 0, 1, 1], [], []>} : vector<16x32xf32>, vector<32x64xf32>, vector<16x64xf32> -> vector<16x64xf32>
    %c0_46 = arith.constant 0 : index
    %c0_47 = arith.constant 0 : index
    %98 = vector.load %arg8[%c0_46, %c0_47] : memref<32x128xf32, #tpu.memory_space<vmem>>, vector<1x64xf32>
    %99 = vector.broadcast %98 : vector<1x64xf32> to vector<16x64xf32>
    %100 = arith.addf %97, %99 : vector<16x64xf32>
    %101 = vector.extract_strided_slice %92 {offsets = [0, 64], sizes = [32, 32], strides = [1, 1]} : vector<32x128xf32> to vector<32x32xf32>
    %cst_48 = arith.constant dense<0.000000e+00> : vector<16x32xf32>
    %102 = tpu.matmul %0, %101, %cst_48 {dimension_numbers = #tpu.dot_dimension_numbers<[1], [0], [0], [1], [0, 0, 1, 1], [], []>} : vector<16x32xf32>, vector<32x32xf32>, vector<16x32xf32> -> vector<16x32xf32>
    %c1 = arith.constant 1 : index
    %c0_49 = arith.constant 0 : index
    %103 = vector.load %arg8[%c1, %c0_49] : memref<32x128xf32, #tpu.memory_space<vmem>>, vector<1x32xf32>
    %104 = vector.broadcast %103 : vector<1x32xf32> to vector<16x32xf32>
    %105 = arith.addf %102, %104 : vector<16x32xf32>
    %106 = vector.extract_strided_slice %100 {offsets = [0, 0], sizes = [16, 32], strides = [1, 1]} : vector<16x64xf32> to vector<16x32xf32>
    %107 = vector.extract_strided_slice %100 {offsets = [0, 32], sizes = [16, 32], strides = [1, 1]} : vector<16x64xf32> to vector<16x32xf32>
    %108 = vector.extract_strided_slice %92 {offsets = [0, 96], sizes = [32, 32], strides = [1, 1]} : vector<32x128xf32> to vector<32x32xf32>
    %c2 = arith.constant 2 : index
    %c0_50 = arith.constant 0 : index
    %109 = vector.load %arg8[%c2, %c0_50] : memref<32x128xf32, #tpu.memory_space<vmem>>, vector<1x32xf32>
    %110 = vector.extract_strided_slice %106 {offsets = [0, 0], sizes = [16, 8], strides = [1, 1]} : vector<16x32xf32> to vector<16x8xf32>
    %111 = vector.extract_strided_slice %107 {offsets = [0, 0], sizes = [16, 8], strides = [1, 1]} : vector<16x32xf32> to vector<16x8xf32>
    %cst_51 = arith.constant dense<0.000000e+00> : vector<16x16xf32>
    %112 = tpu.matmul %110, %111, %cst_51 {dimension_numbers = #tpu.dot_dimension_numbers<[1], [1], [0], [0], [0, 0, 1, 0], [], []>} : vector<16x8xf32>, vector<16x8xf32>, vector<16x16xf32> -> vector<16x16xf32>
    %113 = arith.addf %112, %42 : vector<16x16xf32>
    %cst_52 = arith.constant dense<0xFF800000> : vector<16xf32>
    %114 = vector.multi_reduction <maximumf>, %113, %cst_52 [1] : vector<16x16xf32> to vector<16xf32>
    %115 = vector.shape_cast %114 : vector<16xf32> to vector<16x1xf32>
    %116 = vector.broadcast %115 : vector<16x1xf32> to vector<16x16xf32>
    %117 = arith.subf %113, %116 : vector<16x16xf32>
    %118 = math.exp %117 : vector<16x16xf32>
    %cst_53 = arith.constant dense<0.000000e+00> : vector<16xf32>
    %119 = vector.multi_reduction <add>, %118, %cst_53 [1] : vector<16x16xf32> to vector<16xf32>
    %120 = vector.shape_cast %119 : vector<16xf32> to vector<16x1xf32>
    %121 = tpu.reciprocal %120 {approx = true} : vector<16x1xf32> -> vector<16x1xf32>
    %122 = vector.broadcast %121 : vector<16x1xf32> to vector<16x16xf32>
    %123 = arith.mulf %118, %122 : vector<16x16xf32>
    %124 = vector.extract_strided_slice %105 {offsets = [0, 0], sizes = [16, 8], strides = [1, 1]} : vector<16x32xf32> to vector<16x8xf32>
    %cst_54 = arith.constant dense<0.000000e+00> : vector<16x8xf32>
    %125 = tpu.matmul %123, %124, %cst_54 {dimension_numbers = #tpu.dot_dimension_numbers<[1], [0], [0], [1], [0, 0, 1, 1], [], []>} : vector<16x16xf32>, vector<16x8xf32>, vector<16x8xf32> -> vector<16x8xf32>
    %c0_55 = arith.constant 0 : index
    %c0_56 = arith.constant 0 : index
    %126 = vector.load %arg10[%c0_55, %c0_56] : memref<16x32xf32, #tpu.memory_space<vmem>>, vector<16x8xf32>
    tpu.vector_store %arg10[%c0_55, %c0_56], %125 {strides = array<i32>} : memref<16x32xf32, #tpu.memory_space<vmem>>, vector<16x8xf32>,
    %127 = vector.extract_strided_slice %106 {offsets = [0, 8], sizes = [16, 8], strides = [1, 1]} : vector<16x32xf32> to vector<16x8xf32>
    %128 = vector.extract_strided_slice %107 {offsets = [0, 8], sizes = [16, 8], strides = [1, 1]} : vector<16x32xf32> to vector<16x8xf32>
    %cst_57 = arith.constant dense<0.000000e+00> : vector<16x16xf32>
    %129 = tpu.matmul %127, %128, %cst_57 {dimension_numbers = #tpu.dot_dimension_numbers<[1], [1], [0], [0], [0, 0, 1, 0], [], []>} : vector<16x8xf32>, vector<16x8xf32>, vector<16x16xf32> -> vector<16x16xf32>
    %130 = arith.addf %129, %42 : vector<16x16xf32>
    %cst_58 = arith.constant dense<0xFF800000> : vector<16xf32>
    %131 = vector.multi_reduction <maximumf>, %130, %cst_58 [1] : vector<16x16xf32> to vector<16xf32>
    %132 = vector.shape_cast %131 : vector<16xf32> to vector<16x1xf32>
    %133 = vector.broadcast %132 : vector<16x1xf32> to vector<16x16xf32>
    %134 = arith.subf %130, %133 : vector<16x16xf32>
    %135 = math.exp %134 : vector<16x16xf32>
    %cst_59 = arith.constant dense<0.000000e+00> : vector<16xf32>
    %136 = vector.multi_reduction <add>, %135, %cst_59 [1] : vector<16x16xf32> to vector<16xf32>
    %137 = vector.shape_cast %136 : vector<16xf32> to vector<16x1xf32>
    %138 = tpu.reciprocal %137 {approx = true} : vector<16x1xf32> -> vector<16x1xf32>
    %139 = vector.broadcast %138 : vector<16x1xf32> to vector<16x16xf32>
    %140 = arith.mulf %135, %139 : vector<16x16xf32>
    %141 = vector.extract_strided_slice %105 {offsets = [0, 8], sizes = [16, 8], strides = [1, 1]} : vector<16x32xf32> to vector<16x8xf32>
    %cst_60 = arith.constant dense<0.000000e+00> : vector<16x8xf32>
    %142 = tpu.matmul %140, %141, %cst_60 {dimension_numbers = #tpu.dot_dimension_numbers<[1], [0], [0], [1], [0, 0, 1, 1], [], []>} : vector<16x16xf32>, vector<16x8xf32>, vector<16x8xf32> -> vector<16x8xf32>
    %c0_61 = arith.constant 0 : index
    %c8 = arith.constant 8 : index
    %143 = vector.load %arg10[%c0_61, %c8] : memref<16x32xf32, #tpu.memory_space<vmem>>, vector<16x8xf32>
    tpu.vector_store %arg10[%c0_61, %c8], %142 {strides = array<i32>} : memref<16x32xf32, #tpu.memory_space<vmem>>, vector<16x8xf32>,
    %144 = vector.extract_strided_slice %106 {offsets = [0, 16], sizes = [16, 8], strides = [1, 1]} : vector<16x32xf32> to vector<16x8xf32>
    %145 = vector.extract_strided_slice %107 {offsets = [0, 16], sizes = [16, 8], strides = [1, 1]} : vector<16x32xf32> to vector<16x8xf32>
    %cst_62 = arith.constant dense<0.000000e+00> : vector<16x16xf32>
    %146 = tpu.matmul %144, %145, %cst_62 {dimension_numbers = #tpu.dot_dimension_numbers<[1], [1], [0], [0], [0, 0, 1, 0], [], []>} : vector<16x8xf32>, vector<16x8xf32>, vector<16x16xf32> -> vector<16x16xf32>
    %147 = arith.addf %146, %42 : vector<16x16xf32>
    %cst_63 = arith.constant dense<0xFF800000> : vector<16xf32>
    %148 = vector.multi_reduction <maximumf>, %147, %cst_63 [1] : vector<16x16xf32> to vector<16xf32>
    %149 = vector.shape_cast %148 : vector<16xf32> to vector<16x1xf32>
    %150 = vector.broadcast %149 : vector<16x1xf32> to vector<16x16xf32>
    %151 = arith.subf %147, %150 : vector<16x16xf32>
    %152 = math.exp %151 : vector<16x16xf32>
    %cst_64 = arith.constant dense<0.000000e+00> : vector<16xf32>
    %153 = vector.multi_reduction <add>, %152, %cst_64 [1] : vector<16x16xf32> to vector<16xf32>
    %154 = vector.shape_cast %153 : vector<16xf32> to vector<16x1xf32>
    %155 = tpu.reciprocal %154 {approx = true} : vector<16x1xf32> -> vector<16x1xf32>
    %156 = vector.broadcast %155 : vector<16x1xf32> to vector<16x16xf32>
    %157 = arith.mulf %152, %156 : vector<16x16xf32>
    %158 = vector.extract_strided_slice %105 {offsets = [0, 16], sizes = [16, 8], strides = [1, 1]} : vector<16x32xf32> to vector<16x8xf32>
    %cst_65 = arith.constant dense<0.000000e+00> : vector<16x8xf32>
    %159 = tpu.matmul %157, %158, %cst_65 {dimension_numbers = #tpu.dot_dimension_numbers<[1], [0], [0], [1], [0, 0, 1, 1], [], []>} : vector<16x16xf32>, vector<16x8xf32>, vector<16x8xf32> -> vector<16x8xf32>
    %c0_66 = arith.constant 0 : index
    %c16 = arith.constant 16 : index
    %160 = vector.load %arg10[%c0_66, %c16] : memref<16x32xf32, #tpu.memory_space<vmem>>, vector<16x8xf32>
    tpu.vector_store %arg10[%c0_66, %c16], %159 {strides = array<i32>} : memref<16x32xf32, #tpu.memory_space<vmem>>, vector<16x8xf32>,
    %161 = vector.extract_strided_slice %106 {offsets = [0, 24], sizes = [16, 8], strides = [1, 1]} : vector<16x32xf32> to vector<16x8xf32>
    %162 = vector.extract_strided_slice %107 {offsets = [0, 24], sizes = [16, 8], strides = [1, 1]} : vector<16x32xf32> to vector<16x8xf32>
    %cst_67 = arith.constant dense<0.000000e+00> : vector<16x16xf32>
    %163 = tpu.matmul %161, %162, %cst_67 {dimension_numbers = #tpu.dot_dimension_numbers<[1], [1], [0], [0], [0, 0, 1, 0], [], []>} : vector<16x8xf32>, vector<16x8xf32>, vector<16x16xf32> -> vector<16x16xf32>
    %164 = arith.addf %163, %42 : vector<16x16xf32>
    %cst_68 = arith.constant dense<0xFF800000> : vector<16xf32>
    %165 = vector.multi_reduction <maximumf>, %164, %cst_68 [1] : vector<16x16xf32> to vector<16xf32>
    %166 = vector.shape_cast %165 : vector<16xf32> to vector<16x1xf32>
    %167 = vector.broadcast %166 : vector<16x1xf32> to vector<16x16xf32>
    %168 = arith.subf %164, %167 : vector<16x16xf32>
    %169 = math.exp %168 : vector<16x16xf32>
    %cst_69 = arith.constant dense<0.000000e+00> : vector<16xf32>
    %170 = vector.multi_reduction <add>, %169, %cst_69 [1] : vector<16x16xf32> to vector<16xf32>
    %171 = vector.shape_cast %170 : vector<16xf32> to vector<16x1xf32>
    %172 = tpu.reciprocal %171 {approx = true} : vector<16x1xf32> -> vector<16x1xf32>
    %173 = vector.broadcast %172 : vector<16x1xf32> to vector<16x16xf32>
    %174 = arith.mulf %169, %173 : vector<16x16xf32>
    %175 = vector.extract_strided_slice %105 {offsets = [0, 24], sizes = [16, 8], strides = [1, 1]} : vector<16x32xf32> to vector<16x8xf32>
    %cst_70 = arith.constant dense<0.000000e+00> : vector<16x8xf32>
    %176 = tpu.matmul %174, %175, %cst_70 {dimension_numbers = #tpu.dot_dimension_numbers<[1], [0], [0], [1], [0, 0, 1, 1], [], []>} : vector<16x16xf32>, vector<16x8xf32>, vector<16x8xf32> -> vector<16x8xf32>
    %c0_71 = arith.constant 0 : index
    %c24 = arith.constant 24 : index
    %177 = vector.load %arg10[%c0_71, %c24] : memref<16x32xf32, #tpu.memory_space<vmem>>, vector<16x8xf32>
    tpu.vector_store %arg10[%c0_71, %c24], %176 {strides = array<i32>} : memref<16x32xf32, #tpu.memory_space<vmem>>, vector<16x8xf32>,
    %c0_72 = arith.constant 0 : index
    %c0_73 = arith.constant 0 : index
    %178 = vector.load %arg10[%c0_72, %c0_73] : memref<16x32xf32, #tpu.memory_space<vmem>>, vector<16x32xf32>
    %cst_74 = arith.constant dense<0.000000e+00> : vector<16x32xf32>
    %179 = tpu.matmul %178, %108, %cst_74 {dimension_numbers = #tpu.dot_dimension_numbers<[1], [0], [0], [1], [0, 0, 1, 1], [], []>} : vector<16x32xf32>, vector<32x32xf32>, vector<16x32xf32> -> vector<16x32xf32>
    %180 = vector.broadcast %109 : vector<1x32xf32> to vector<16x32xf32>
    %181 = arith.addf %179, %180 : vector<16x32xf32>
    %182 = arith.addf %0, %181 : vector<16x32xf32>
    %c7 = arith.constant 7 : index
    %c0_75 = arith.constant 0 : index
    %183 = vector.load %arg8[%c7, %c0_75] : memref<32x128xf32, #tpu.memory_space<vmem>>, vector<1x32xf32>
    %c8_76 = arith.constant 8 : index
    %c0_77 = arith.constant 0 : index
    %184 = vector.load %arg8[%c8_76, %c0_77] : memref<32x128xf32, #tpu.memory_space<vmem>>, vector<1x32xf32>
    %cst_78 = arith.constant dense<0.000000e+00> : vector<16xf32>
    %185 = vector.multi_reduction <add>, %182, %cst_78 [1] : vector<16x32xf32> to vector<16xf32>
    %186 = vector.shape_cast %185 : vector<16xf32> to vector<16x1xf32>
    %cst_79 = arith.constant 3.200000e+01 : f32
    %187 = vector.broadcast %cst_79 : f32 to vector<16x1xf32>
    %188 = arith.divf %186, %187 : vector<16x1xf32>
    %189 = vector.broadcast %188 : vector<16x1xf32> to vector<16x32xf32>
    %190 = arith.subf %182, %189 : vector<16x32xf32>
    %191 = arith.mulf %190, %190 : vector<16x32xf32>
    %cst_80 = arith.constant dense<0.000000e+00> : vector<16xf32>
    %192 = vector.multi_reduction <add>, %191, %cst_80 [1] : vector<16x32xf32> to vector<16xf32>
    %193 = vector.shape_cast %192 : vector<16xf32> to vector<16x1xf32>
    %cst_81 = arith.constant 3.200000e+01 : f32
    %194 = vector.broadcast %cst_81 : f32 to vector<16x1xf32>
    %195 = arith.divf %193, %194 : vector<16x1xf32>
    %196 = vector.broadcast %188 : vector<16x1xf32> to vector<16x32xf32>
    %197 = arith.subf %182, %196 : vector<16x32xf32>
    %cst_82 = arith.constant 9.99999974E-6 : f32
    %198 = vector.broadcast %cst_82 : f32 to vector<16x1xf32>
    %199 = arith.addf %195, %198 : vector<16x1xf32>
    %200 = math.rsqrt %199 : vector<16x1xf32>
    %201 = vector.broadcast %200 : vector<16x1xf32> to vector<16x32xf32>
    %202 = arith.mulf %197, %201 : vector<16x32xf32>
    %203 = vector.broadcast %183 : vector<1x32xf32> to vector<16x32xf32>
    %204 = arith.mulf %202, %203 : vector<16x32xf32>
    %205 = vector.broadcast %184 : vector<1x32xf32> to vector<16x32xf32>
    %206 = arith.addf %204, %205 : vector<16x32xf32>
    %207 = arith.addf %206, %1 : vector<16x32xf32>
    %208 = vector.extract_strided_slice %94 {offsets = [0, 0], sizes = [32, 32], strides = [1, 1]} : vector<32x128xf32> to vector<32x32xf32>
    %cst_83 = arith.constant dense<0.000000e+00> : vector<16x32xf32>
    %209 = tpu.matmul %207, %208, %cst_83 {dimension_numbers = #tpu.dot_dimension_numbers<[1], [0], [0], [1], [0, 0, 1, 1], [], []>} : vector<16x32xf32>, vector<32x32xf32>, vector<16x32xf32> -> vector<16x32xf32>
    %c3 = arith.constant 3 : index
    %c0_84 = arith.constant 0 : index
    %210 = vector.load %arg8[%c3, %c0_84] : memref<32x128xf32, #tpu.memory_space<vmem>>, vector<1x32xf32>
    %211 = vector.broadcast %210 : vector<1x32xf32> to vector<16x32xf32>
    %212 = arith.addf %209, %211 : vector<16x32xf32>
    %213 = vector.extract_strided_slice %85 {offsets = [0, 0], sizes = [32, 32], strides = [1, 1]} : vector<32x64xf32> to vector<32x32xf32>
    %214 = vector.extract_strided_slice %90 {offsets = [0, 0], sizes = [32, 32], strides = [1, 1]} : vector<32x64xf32> to vector<32x32xf32>
    %215 = vector.extract_strided_slice %94 {offsets = [0, 32], sizes = [32, 32], strides = [1, 1]} : vector<32x128xf32> to vector<32x32xf32>
    %c4 = arith.constant 4 : index
    %c0_85 = arith.constant 0 : index
    %216 = vector.load %arg8[%c4, %c0_85] : memref<32x128xf32, #tpu.memory_space<vmem>>, vector<1x32xf32>
    %217 = vector.extract_strided_slice %212 {offsets = [0, 0], sizes = [16, 8], strides = [1, 1]} : vector<16x32xf32> to vector<16x8xf32>
    %218 = vector.extract_strided_slice %213 {offsets = [0, 0], sizes = [32, 8], strides = [1, 1]} : vector<32x32xf32> to vector<32x8xf32>
    %cst_86 = arith.constant dense<0.000000e+00> : vector<16x32xf32>
    %219 = tpu.matmul %217, %218, %cst_86 {dimension_numbers = #tpu.dot_dimension_numbers<[1], [1], [0], [0], [0, 0, 1, 0], [], []>} : vector<16x8xf32>, vector<32x8xf32>, vector<16x32xf32> -> vector<16x32xf32>
    %220 = arith.addf %219, %80 : vector<16x32xf32>
    %cst_87 = arith.constant dense<0xFF800000> : vector<16xf32>
    %221 = vector.multi_reduction <maximumf>, %220, %cst_87 [1] : vector<16x32xf32> to vector<16xf32>
    %222 = vector.shape_cast %221 : vector<16xf32> to vector<16x1xf32>
    %223 = vector.broadcast %222 : vector<16x1xf32> to vector<16x32xf32>
    %224 = arith.subf %220, %223 : vector<16x32xf32>
    %225 = math.exp %224 : vector<16x32xf32>
    %cst_88 = arith.constant dense<0.000000e+00> : vector<16xf32>
    %226 = vector.multi_reduction <add>, %225, %cst_88 [1] : vector<16x32xf32> to vector<16xf32>
    %227 = vector.shape_cast %226 : vector<16xf32> to vector<16x1xf32>
    %228 = tpu.reciprocal %227 {approx = true} : vector<16x1xf32> -> vector<16x1xf32>
    %229 = vector.broadcast %228 : vector<16x1xf32> to vector<16x32xf32>
    %230 = arith.mulf %225, %229 : vector<16x32xf32>
    %231 = vector.extract_strided_slice %214 {offsets = [0, 0], sizes = [32, 8], strides = [1, 1]} : vector<32x32xf32> to vector<32x8xf32>
    %cst_89 = arith.constant dense<0.000000e+00> : vector<16x8xf32>
    %232 = tpu.matmul %230, %231, %cst_89 {dimension_numbers = #tpu.dot_dimension_numbers<[1], [0], [0], [1], [0, 0, 1, 1], [], []>} : vector<16x32xf32>, vector<32x8xf32>, vector<16x8xf32> -> vector<16x8xf32>
    %c0_90 = arith.constant 0 : index
    %c0_91 = arith.constant 0 : index
    %233 = vector.load %arg10[%c0_90, %c0_91] : memref<16x32xf32, #tpu.memory_space<vmem>>, vector<16x8xf32>
    tpu.vector_store %arg10[%c0_90, %c0_91], %232 {strides = array<i32>} : memref<16x32xf32, #tpu.memory_space<vmem>>, vector<16x8xf32>,
    %234 = vector.extract_strided_slice %212 {offsets = [0, 8], sizes = [16, 8], strides = [1, 1]} : vector<16x32xf32> to vector<16x8xf32>
    %235 = vector.extract_strided_slice %213 {offsets = [0, 8], sizes = [32, 8], strides = [1, 1]} : vector<32x32xf32> to vector<32x8xf32>
    %cst_92 = arith.constant dense<0.000000e+00> : vector<16x32xf32>
    %236 = tpu.matmul %234, %235, %cst_92 {dimension_numbers = #tpu.dot_dimension_numbers<[1], [1], [0], [0], [0, 0, 1, 0], [], []>} : vector<16x8xf32>, vector<32x8xf32>, vector<16x32xf32> -> vector<16x32xf32>
    %237 = arith.addf %236, %80 : vector<16x32xf32>
    %cst_93 = arith.constant dense<0xFF800000> : vector<16xf32>
    %238 = vector.multi_reduction <maximumf>, %237, %cst_93 [1] : vector<16x32xf32> to vector<16xf32>
    %239 = vector.shape_cast %238 : vector<16xf32> to vector<16x1xf32>
    %240 = vector.broadcast %239 : vector<16x1xf32> to vector<16x32xf32>
    %241 = arith.subf %237, %240 : vector<16x32xf32>
    %242 = math.exp %241 : vector<16x32xf32>
    %cst_94 = arith.constant dense<0.000000e+00> : vector<16xf32>
    %243 = vector.multi_reduction <add>, %242, %cst_94 [1] : vector<16x32xf32> to vector<16xf32>
    %244 = vector.shape_cast %243 : vector<16xf32> to vector<16x1xf32>
    %245 = tpu.reciprocal %244 {approx = true} : vector<16x1xf32> -> vector<16x1xf32>
    %246 = vector.broadcast %245 : vector<16x1xf32> to vector<16x32xf32>
    %247 = arith.mulf %242, %246 : vector<16x32xf32>
    %248 = vector.extract_strided_slice %214 {offsets = [0, 8], sizes = [32, 8], strides = [1, 1]} : vector<32x32xf32> to vector<32x8xf32>
    %cst_95 = arith.constant dense<0.000000e+00> : vector<16x8xf32>
    %249 = tpu.matmul %247, %248, %cst_95 {dimension_numbers = #tpu.dot_dimension_numbers<[1], [0], [0], [1], [0, 0, 1, 1], [], []>} : vector<16x32xf32>, vector<32x8xf32>, vector<16x8xf32> -> vector<16x8xf32>
    %c0_96 = arith.constant 0 : index
    %c8_97 = arith.constant 8 : index
    %250 = vector.load %arg10[%c0_96, %c8_97] : memref<16x32xf32, #tpu.memory_space<vmem>>, vector<16x8xf32>
    tpu.vector_store %arg10[%c0_96, %c8_97], %249 {strides = array<i32>} : memref<16x32xf32, #tpu.memory_space<vmem>>, vector<16x8xf32>,
    %251 = vector.extract_strided_slice %212 {offsets = [0, 16], sizes = [16, 8], strides = [1, 1]} : vector<16x32xf32> to vector<16x8xf32>
    %252 = vector.extract_strided_slice %213 {offsets = [0, 16], sizes = [32, 8], strides = [1, 1]} : vector<32x32xf32> to vector<32x8xf32>
    %cst_98 = arith.constant dense<0.000000e+00> : vector<16x32xf32>
    %253 = tpu.matmul %251, %252, %cst_98 {dimension_numbers = #tpu.dot_dimension_numbers<[1], [1], [0], [0], [0, 0, 1, 0], [], []>} : vector<16x8xf32>, vector<32x8xf32>, vector<16x32xf32> -> vector<16x32xf32>
    %254 = arith.addf %253, %80 : vector<16x32xf32>
    %cst_99 = arith.constant dense<0xFF800000> : vector<16xf32>
    %255 = vector.multi_reduction <maximumf>, %254, %cst_99 [1] : vector<16x32xf32> to vector<16xf32>
    %256 = vector.shape_cast %255 : vector<16xf32> to vector<16x1xf32>
    %257 = vector.broadcast %256 : vector<16x1xf32> to vector<16x32xf32>
    %258 = arith.subf %254, %257 : vector<16x32xf32>
    %259 = math.exp %258 : vector<16x32xf32>
    %cst_100 = arith.constant dense<0.000000e+00> : vector<16xf32>
    %260 = vector.multi_reduction <add>, %259, %cst_100 [1] : vector<16x32xf32> to vector<16xf32>
    %261 = vector.shape_cast %260 : vector<16xf32> to vector<16x1xf32>
    %262 = tpu.reciprocal %261 {approx = true} : vector<16x1xf32> -> vector<16x1xf32>
    %263 = vector.broadcast %262 : vector<16x1xf32> to vector<16x32xf32>
    %264 = arith.mulf %259, %263 : vector<16x32xf32>
    %265 = vector.extract_strided_slice %214 {offsets = [0, 16], sizes = [32, 8], strides = [1, 1]} : vector<32x32xf32> to vector<32x8xf32>
    %cst_101 = arith.constant dense<0.000000e+00> : vector<16x8xf32>
    %266 = tpu.matmul %264, %265, %cst_101 {dimension_numbers = #tpu.dot_dimension_numbers<[1], [0], [0], [1], [0, 0, 1, 1], [], []>} : vector<16x32xf32>, vector<32x8xf32>, vector<16x8xf32> -> vector<16x8xf32>
    %c0_102 = arith.constant 0 : index
    %c16_103 = arith.constant 16 : index
    %267 = vector.load %arg10[%c0_102, %c16_103] : memref<16x32xf32, #tpu.memory_space<vmem>>, vector<16x8xf32>
    tpu.vector_store %arg10[%c0_102, %c16_103], %266 {strides = array<i32>} : memref<16x32xf32, #tpu.memory_space<vmem>>, vector<16x8xf32>,
    %268 = vector.extract_strided_slice %212 {offsets = [0, 24], sizes = [16, 8], strides = [1, 1]} : vector<16x32xf32> to vector<16x8xf32>
    %269 = vector.extract_strided_slice %213 {offsets = [0, 24], sizes = [32, 8], strides = [1, 1]} : vector<32x32xf32> to vector<32x8xf32>
    %cst_104 = arith.constant dense<0.000000e+00> : vector<16x32xf32>
    %270 = tpu.matmul %268, %269, %cst_104 {dimension_numbers = #tpu.dot_dimension_numbers<[1], [1], [0], [0], [0, 0, 1, 0], [], []>} : vector<16x8xf32>, vector<32x8xf32>, vector<16x32xf32> -> vector<16x32xf32>
    %271 = arith.addf %270, %80 : vector<16x32xf32>
    %cst_105 = arith.constant dense<0xFF800000> : vector<16xf32>
    %272 = vector.multi_reduction <maximumf>, %271, %cst_105 [1] : vector<16x32xf32> to vector<16xf32>
    %273 = vector.shape_cast %272 : vector<16xf32> to vector<16x1xf32>
    %274 = vector.broadcast %273 : vector<16x1xf32> to vector<16x32xf32>
    %275 = arith.subf %271, %274 : vector<16x32xf32>
    %276 = math.exp %275 : vector<16x32xf32>
    %cst_106 = arith.constant dense<0.000000e+00> : vector<16xf32>
    %277 = vector.multi_reduction <add>, %276, %cst_106 [1] : vector<16x32xf32> to vector<16xf32>
    %278 = vector.shape_cast %277 : vector<16xf32> to vector<16x1xf32>
    %279 = tpu.reciprocal %278 {approx = true} : vector<16x1xf32> -> vector<16x1xf32>
    %280 = vector.broadcast %279 : vector<16x1xf32> to vector<16x32xf32>
    %281 = arith.mulf %276, %280 : vector<16x32xf32>
    %282 = vector.extract_strided_slice %214 {offsets = [0, 24], sizes = [32, 8], strides = [1, 1]} : vector<32x32xf32> to vector<32x8xf32>
    %cst_107 = arith.constant dense<0.000000e+00> : vector<16x8xf32>
    %283 = tpu.matmul %281, %282, %cst_107 {dimension_numbers = #tpu.dot_dimension_numbers<[1], [0], [0], [1], [0, 0, 1, 1], [], []>} : vector<16x32xf32>, vector<32x8xf32>, vector<16x8xf32> -> vector<16x8xf32>
    %c0_108 = arith.constant 0 : index
    %c24_109 = arith.constant 24 : index
    %284 = vector.load %arg10[%c0_108, %c24_109] : memref<16x32xf32, #tpu.memory_space<vmem>>, vector<16x8xf32>
    tpu.vector_store %arg10[%c0_108, %c24_109], %283 {strides = array<i32>} : memref<16x32xf32, #tpu.memory_space<vmem>>, vector<16x8xf32>,
    %c0_110 = arith.constant 0 : index
    %c0_111 = arith.constant 0 : index
    %285 = vector.load %arg10[%c0_110, %c0_111] : memref<16x32xf32, #tpu.memory_space<vmem>>, vector<16x32xf32>
    %cst_112 = arith.constant dense<0.000000e+00> : vector<16x32xf32>
    %286 = tpu.matmul %285, %215, %cst_112 {dimension_numbers = #tpu.dot_dimension_numbers<[1], [0], [0], [1], [0, 0, 1, 1], [], []>} : vector<16x32xf32>, vector<32x32xf32>, vector<16x32xf32> -> vector<16x32xf32>
    %287 = vector.broadcast %216 : vector<1x32xf32> to vector<16x32xf32>
    %288 = arith.addf %286, %287 : vector<16x32xf32>
    %289 = arith.addf %206, %288 : vector<16x32xf32>
    %c9 = arith.constant 9 : index
    %c0_113 = arith.constant 0 : index
    %290 = vector.load %arg8[%c9, %c0_113] : memref<32x128xf32, #tpu.memory_space<vmem>>, vector<1x32xf32>
    %c10 = arith.constant 10 : index
    %c0_114 = arith.constant 0 : index
    %291 = vector.load %arg8[%c10, %c0_114] : memref<32x128xf32, #tpu.memory_space<vmem>>, vector<1x32xf32>
    %cst_115 = arith.constant dense<0.000000e+00> : vector<16xf32>
    %292 = vector.multi_reduction <add>, %289, %cst_115 [1] : vector<16x32xf32> to vector<16xf32>
    %293 = vector.shape_cast %292 : vector<16xf32> to vector<16x1xf32>
    %cst_116 = arith.constant 3.200000e+01 : f32
    %294 = vector.broadcast %cst_116 : f32 to vector<16x1xf32>
    %295 = arith.divf %293, %294 : vector<16x1xf32>
    %296 = vector.broadcast %295 : vector<16x1xf32> to vector<16x32xf32>
    %297 = arith.subf %289, %296 : vector<16x32xf32>
    %298 = arith.mulf %297, %297 : vector<16x32xf32>
    %cst_117 = arith.constant dense<0.000000e+00> : vector<16xf32>
    %299 = vector.multi_reduction <add>, %298, %cst_117 [1] : vector<16x32xf32> to vector<16xf32>
    %300 = vector.shape_cast %299 : vector<16xf32> to vector<16x1xf32>
    %cst_118 = arith.constant 3.200000e+01 : f32
    %301 = vector.broadcast %cst_118 : f32 to vector<16x1xf32>
    %302 = arith.divf %300, %301 : vector<16x1xf32>
    %303 = vector.broadcast %295 : vector<16x1xf32> to vector<16x32xf32>
    %304 = arith.subf %289, %303 : vector<16x32xf32>
    %cst_119 = arith.constant 9.99999974E-6 : f32
    %305 = vector.broadcast %cst_119 : f32 to vector<16x1xf32>
    %306 = arith.addf %302, %305 : vector<16x1xf32>
    %307 = math.rsqrt %306 : vector<16x1xf32>
    %308 = vector.broadcast %307 : vector<16x1xf32> to vector<16x32xf32>
    %309 = arith.mulf %304, %308 : vector<16x32xf32>
    %310 = vector.broadcast %290 : vector<1x32xf32> to vector<16x32xf32>
    %311 = arith.mulf %309, %310 : vector<16x32xf32>
    %312 = vector.broadcast %291 : vector<1x32xf32> to vector<16x32xf32>
    %313 = arith.addf %311, %312 : vector<16x32xf32>
    %314 = vector.extract_strided_slice %94 {offsets = [0, 64], sizes = [32, 64], strides = [1, 1]} : vector<32x128xf32> to vector<32x64xf32>
    %cst_120 = arith.constant dense<0.000000e+00> : vector<16x64xf32>
    %315 = tpu.matmul %313, %314, %cst_120 {dimension_numbers = #tpu.dot_dimension_numbers<[1], [0], [0], [1], [0, 0, 1, 1], [], []>} : vector<16x32xf32>, vector<32x64xf32>, vector<16x64xf32> -> vector<16x64xf32>
    %c5 = arith.constant 5 : index
    %c0_121 = arith.constant 0 : index
    %316 = vector.load %arg8[%c5, %c0_121] : memref<32x128xf32, #tpu.memory_space<vmem>>, vector<1x64xf32>
    %317 = vector.broadcast %316 : vector<1x64xf32> to vector<16x64xf32>
    %318 = arith.addf %315, %317 : vector<16x64xf32>
    %cst_122 = arith.constant 0.000000e+00 : f32
    %319 = vector.broadcast %cst_122 : f32 to vector<16x64xf32>
    %320 = arith.maximumf %318, %319 : vector<16x64xf32>
    %c0_123 = arith.constant 0 : index
    %c0_124 = arith.constant 0 : index
    %c0_125 = arith.constant 0 : index
    %321 = vector.load %arg7[%c0_123, %c0_124, %c0_125] : memref<2x64x32xf32, #tpu.memory_space<vmem>>, vector<1x64x32xf32>
    %322 = vector.shape_cast %321 : vector<1x64x32xf32> to vector<64x32xf32>
    %cst_126 = arith.constant dense<0.000000e+00> : vector<16x32xf32>
    %323 = tpu.matmul %320, %322, %cst_126 {dimension_numbers = #tpu.dot_dimension_numbers<[1], [0], [0], [1], [0, 0, 1, 1], [], []>} : vector<16x64xf32>, vector<64x32xf32>, vector<16x32xf32> -> vector<16x32xf32>
    %c6 = arith.constant 6 : index
    %c0_127 = arith.constant 0 : index
    %324 = vector.load %arg8[%c6, %c0_127] : memref<32x128xf32, #tpu.memory_space<vmem>>, vector<1x32xf32>
    %325 = vector.broadcast %324 : vector<1x32xf32> to vector<16x32xf32>
    %326 = arith.addf %323, %325 : vector<16x32xf32>
    %327 = arith.addf %313, %326 : vector<16x32xf32>
    %c11 = arith.constant 11 : index
    %c0_128 = arith.constant 0 : index
    %328 = vector.load %arg8[%c11, %c0_128] : memref<32x128xf32, #tpu.memory_space<vmem>>, vector<1x32xf32>
    %c12 = arith.constant 12 : index
    %c0_129 = arith.constant 0 : index
    %329 = vector.load %arg8[%c12, %c0_129] : memref<32x128xf32, #tpu.memory_space<vmem>>, vector<1x32xf32>
    %cst_130 = arith.constant dense<0.000000e+00> : vector<16xf32>
    %330 = vector.multi_reduction <add>, %327, %cst_130 [1] : vector<16x32xf32> to vector<16xf32>
    %331 = vector.shape_cast %330 : vector<16xf32> to vector<16x1xf32>
    %cst_131 = arith.constant 3.200000e+01 : f32
    %332 = vector.broadcast %cst_131 : f32 to vector<16x1xf32>
    %333 = arith.divf %331, %332 : vector<16x1xf32>
    %334 = vector.broadcast %333 : vector<16x1xf32> to vector<16x32xf32>
    %335 = arith.subf %327, %334 : vector<16x32xf32>
    %336 = arith.mulf %335, %335 : vector<16x32xf32>
    %cst_132 = arith.constant dense<0.000000e+00> : vector<16xf32>
    %337 = vector.multi_reduction <add>, %336, %cst_132 [1] : vector<16x32xf32> to vector<16xf32>
    %338 = vector.shape_cast %337 : vector<16xf32> to vector<16x1xf32>
    %cst_133 = arith.constant 3.200000e+01 : f32
    %339 = vector.broadcast %cst_133 : f32 to vector<16x1xf32>
    %340 = arith.divf %338, %339 : vector<16x1xf32>
    %341 = vector.broadcast %333 : vector<16x1xf32> to vector<16x32xf32>
    %342 = arith.subf %327, %341 : vector<16x32xf32>
    %cst_134 = arith.constant 9.99999974E-6 : f32
    %343 = vector.broadcast %cst_134 : f32 to vector<16x1xf32>
    %344 = arith.addf %340, %343 : vector<16x1xf32>
    %345 = math.rsqrt %344 : vector<16x1xf32>
    %346 = vector.broadcast %345 : vector<16x1xf32> to vector<16x32xf32>
    %347 = arith.mulf %342, %346 : vector<16x32xf32>
    %348 = vector.broadcast %328 : vector<1x32xf32> to vector<16x32xf32>
    %349 = arith.mulf %347, %348 : vector<16x32xf32>
    %350 = vector.broadcast %329 : vector<1x32xf32> to vector<16x32xf32>
    %351 = arith.addf %349, %350 : vector<16x32xf32>
    %c1_135 = arith.constant 1 : index
    %c0_136 = arith.constant 0 : index
    %c0_137 = arith.constant 0 : index
    %352 = vector.load %arg4[%c1_135, %c0_136, %c0_137] : memref<2x32x128xf32, #tpu.memory_space<vmem>>, vector<1x32x128xf32>
    %353 = vector.shape_cast %352 : vector<1x32x128xf32> to vector<32x128xf32>
    %c1_138 = arith.constant 1 : index
    %c0_139 = arith.constant 0 : index
    %c0_140 = arith.constant 0 : index
    %354 = vector.load %arg5[%c1_138, %c0_139, %c0_140] : memref<2x32x128xf32, #tpu.memory_space<vmem>>, vector<1x32x128xf32>
    %355 = vector.shape_cast %354 : vector<1x32x128xf32> to vector<32x128xf32>
    %356 = arith.addf %351, %1 : vector<16x32xf32>
    %357 = vector.extract_strided_slice %353 {offsets = [0, 0], sizes = [32, 64], strides = [1, 1]} : vector<32x128xf32> to vector<32x64xf32>
    %cst_141 = arith.constant dense<0.000000e+00> : vector<16x64xf32>
    %358 = tpu.matmul %356, %357, %cst_141 {dimension_numbers = #tpu.dot_dimension_numbers<[1], [0], [0], [1], [0, 0, 1, 1], [], []>} : vector<16x32xf32>, vector<32x64xf32>, vector<16x64xf32> -> vector<16x64xf32>
    %c13 = arith.constant 13 : index
    %c0_142 = arith.constant 0 : index
    %359 = vector.load %arg8[%c13, %c0_142] : memref<32x128xf32, #tpu.memory_space<vmem>>, vector<1x64xf32>
    %360 = vector.broadcast %359 : vector<1x64xf32> to vector<16x64xf32>
    %361 = arith.addf %358, %360 : vector<16x64xf32>
    %362 = vector.extract_strided_slice %353 {offsets = [0, 64], sizes = [32, 32], strides = [1, 1]} : vector<32x128xf32> to vector<32x32xf32>
    %cst_143 = arith.constant dense<0.000000e+00> : vector<16x32xf32>
    %363 = tpu.matmul %351, %362, %cst_143 {dimension_numbers = #tpu.dot_dimension_numbers<[1], [0], [0], [1], [0, 0, 1, 1], [], []>} : vector<16x32xf32>, vector<32x32xf32>, vector<16x32xf32> -> vector<16x32xf32>
    %c14 = arith.constant 14 : index
    %c0_144 = arith.constant 0 : index
    %364 = vector.load %arg8[%c14, %c0_144] : memref<32x128xf32, #tpu.memory_space<vmem>>, vector<1x32xf32>
    %365 = vector.broadcast %364 : vector<1x32xf32> to vector<16x32xf32>
    %366 = arith.addf %363, %365 : vector<16x32xf32>
    %367 = vector.extract_strided_slice %361 {offsets = [0, 0], sizes = [16, 32], strides = [1, 1]} : vector<16x64xf32> to vector<16x32xf32>
    %368 = vector.extract_strided_slice %361 {offsets = [0, 32], sizes = [16, 32], strides = [1, 1]} : vector<16x64xf32> to vector<16x32xf32>
    %369 = vector.extract_strided_slice %353 {offsets = [0, 96], sizes = [32, 32], strides = [1, 1]} : vector<32x128xf32> to vector<32x32xf32>
    %c15 = arith.constant 15 : index
    %c0_145 = arith.constant 0 : index
    %370 = vector.load %arg8[%c15, %c0_145] : memref<32x128xf32, #tpu.memory_space<vmem>>, vector<1x32xf32>
    %371 = vector.extract_strided_slice %367 {offsets = [0, 0], sizes = [16, 8], strides = [1, 1]} : vector<16x32xf32> to vector<16x8xf32>
    %372 = vector.extract_strided_slice %368 {offsets = [0, 0], sizes = [16, 8], strides = [1, 1]} : vector<16x32xf32> to vector<16x8xf32>
    %cst_146 = arith.constant dense<0.000000e+00> : vector<16x16xf32>
    %373 = tpu.matmul %371, %372, %cst_146 {dimension_numbers = #tpu.dot_dimension_numbers<[1], [1], [0], [0], [0, 0, 1, 0], [], []>} : vector<16x8xf32>, vector<16x8xf32>, vector<16x16xf32> -> vector<16x16xf32>
    %374 = arith.addf %373, %42 : vector<16x16xf32>
    %cst_147 = arith.constant dense<0xFF800000> : vector<16xf32>
    %375 = vector.multi_reduction <maximumf>, %374, %cst_147 [1] : vector<16x16xf32> to vector<16xf32>
    %376 = vector.shape_cast %375 : vector<16xf32> to vector<16x1xf32>
    %377 = vector.broadcast %376 : vector<16x1xf32> to vector<16x16xf32>
    %378 = arith.subf %374, %377 : vector<16x16xf32>
    %379 = math.exp %378 : vector<16x16xf32>
    %cst_148 = arith.constant dense<0.000000e+00> : vector<16xf32>
    %380 = vector.multi_reduction <add>, %379, %cst_148 [1] : vector<16x16xf32> to vector<16xf32>
    %381 = vector.shape_cast %380 : vector<16xf32> to vector<16x1xf32>
    %382 = tpu.reciprocal %381 {approx = true} : vector<16x1xf32> -> vector<16x1xf32>
    %383 = vector.broadcast %382 : vector<16x1xf32> to vector<16x16xf32>
    %384 = arith.mulf %379, %383 : vector<16x16xf32>
    %385 = vector.extract_strided_slice %366 {offsets = [0, 0], sizes = [16, 8], strides = [1, 1]} : vector<16x32xf32> to vector<16x8xf32>
    %cst_149 = arith.constant dense<0.000000e+00> : vector<16x8xf32>
    %386 = tpu.matmul %384, %385, %cst_149 {dimension_numbers = #tpu.dot_dimension_numbers<[1], [0], [0], [1], [0, 0, 1, 1], [], []>} : vector<16x16xf32>, vector<16x8xf32>, vector<16x8xf32> -> vector<16x8xf32>
    %c0_150 = arith.constant 0 : index
    %c0_151 = arith.constant 0 : index
    %387 = vector.load %arg10[%c0_150, %c0_151] : memref<16x32xf32, #tpu.memory_space<vmem>>, vector<16x8xf32>
    tpu.vector_store %arg10[%c0_150, %c0_151], %386 {strides = array<i32>} : memref<16x32xf32, #tpu.memory_space<vmem>>, vector<16x8xf32>,
    %388 = vector.extract_strided_slice %367 {offsets = [0, 8], sizes = [16, 8], strides = [1, 1]} : vector<16x32xf32> to vector<16x8xf32>
    %389 = vector.extract_strided_slice %368 {offsets = [0, 8], sizes = [16, 8], strides = [1, 1]} : vector<16x32xf32> to vector<16x8xf32>
    %cst_152 = arith.constant dense<0.000000e+00> : vector<16x16xf32>
    %390 = tpu.matmul %388, %389, %cst_152 {dimension_numbers = #tpu.dot_dimension_numbers<[1], [1], [0], [0], [0, 0, 1, 0], [], []>} : vector<16x8xf32>, vector<16x8xf32>, vector<16x16xf32> -> vector<16x16xf32>
    %391 = arith.addf %390, %42 : vector<16x16xf32>
    %cst_153 = arith.constant dense<0xFF800000> : vector<16xf32>
    %392 = vector.multi_reduction <maximumf>, %391, %cst_153 [1] : vector<16x16xf32> to vector<16xf32>
    %393 = vector.shape_cast %392 : vector<16xf32> to vector<16x1xf32>
    %394 = vector.broadcast %393 : vector<16x1xf32> to vector<16x16xf32>
    %395 = arith.subf %391, %394 : vector<16x16xf32>
    %396 = math.exp %395 : vector<16x16xf32>
    %cst_154 = arith.constant dense<0.000000e+00> : vector<16xf32>
    %397 = vector.multi_reduction <add>, %396, %cst_154 [1] : vector<16x16xf32> to vector<16xf32>
    %398 = vector.shape_cast %397 : vector<16xf32> to vector<16x1xf32>
    %399 = tpu.reciprocal %398 {approx = true} : vector<16x1xf32> -> vector<16x1xf32>
    %400 = vector.broadcast %399 : vector<16x1xf32> to vector<16x16xf32>
    %401 = arith.mulf %396, %400 : vector<16x16xf32>
    %402 = vector.extract_strided_slice %366 {offsets = [0, 8], sizes = [16, 8], strides = [1, 1]} : vector<16x32xf32> to vector<16x8xf32>
    %cst_155 = arith.constant dense<0.000000e+00> : vector<16x8xf32>
    %403 = tpu.matmul %401, %402, %cst_155 {dimension_numbers = #tpu.dot_dimension_numbers<[1], [0], [0], [1], [0, 0, 1, 1], [], []>} : vector<16x16xf32>, vector<16x8xf32>, vector<16x8xf32> -> vector<16x8xf32>
    %c0_156 = arith.constant 0 : index
    %c8_157 = arith.constant 8 : index
    %404 = vector.load %arg10[%c0_156, %c8_157] : memref<16x32xf32, #tpu.memory_space<vmem>>, vector<16x8xf32>
    tpu.vector_store %arg10[%c0_156, %c8_157], %403 {strides = array<i32>} : memref<16x32xf32, #tpu.memory_space<vmem>>, vector<16x8xf32>,
    %405 = vector.extract_strided_slice %367 {offsets = [0, 16], sizes = [16, 8], strides = [1, 1]} : vector<16x32xf32> to vector<16x8xf32>
    %406 = vector.extract_strided_slice %368 {offsets = [0, 16], sizes = [16, 8], strides = [1, 1]} : vector<16x32xf32> to vector<16x8xf32>
    %cst_158 = arith.constant dense<0.000000e+00> : vector<16x16xf32>
    %407 = tpu.matmul %405, %406, %cst_158 {dimension_numbers = #tpu.dot_dimension_numbers<[1], [1], [0], [0], [0, 0, 1, 0], [], []>} : vector<16x8xf32>, vector<16x8xf32>, vector<16x16xf32> -> vector<16x16xf32>
    %408 = arith.addf %407, %42 : vector<16x16xf32>
    %cst_159 = arith.constant dense<0xFF800000> : vector<16xf32>
    %409 = vector.multi_reduction <maximumf>, %408, %cst_159 [1] : vector<16x16xf32> to vector<16xf32>
    %410 = vector.shape_cast %409 : vector<16xf32> to vector<16x1xf32>
    %411 = vector.broadcast %410 : vector<16x1xf32> to vector<16x16xf32>
    %412 = arith.subf %408, %411 : vector<16x16xf32>
    %413 = math.exp %412 : vector<16x16xf32>
    %cst_160 = arith.constant dense<0.000000e+00> : vector<16xf32>
    %414 = vector.multi_reduction <add>, %413, %cst_160 [1] : vector<16x16xf32> to vector<16xf32>
    %415 = vector.shape_cast %414 : vector<16xf32> to vector<16x1xf32>
    %416 = tpu.reciprocal %415 {approx = true} : vector<16x1xf32> -> vector<16x1xf32>
    %417 = vector.broadcast %416 : vector<16x1xf32> to vector<16x16xf32>
    %418 = arith.mulf %413, %417 : vector<16x16xf32>
    %419 = vector.extract_strided_slice %366 {offsets = [0, 16], sizes = [16, 8], strides = [1, 1]} : vector<16x32xf32> to vector<16x8xf32>
    %cst_161 = arith.constant dense<0.000000e+00> : vector<16x8xf32>
    %420 = tpu.matmul %418, %419, %cst_161 {dimension_numbers = #tpu.dot_dimension_numbers<[1], [0], [0], [1], [0, 0, 1, 1], [], []>} : vector<16x16xf32>, vector<16x8xf32>, vector<16x8xf32> -> vector<16x8xf32>
    %c0_162 = arith.constant 0 : index
    %c16_163 = arith.constant 16 : index
    %421 = vector.load %arg10[%c0_162, %c16_163] : memref<16x32xf32, #tpu.memory_space<vmem>>, vector<16x8xf32>
    tpu.vector_store %arg10[%c0_162, %c16_163], %420 {strides = array<i32>} : memref<16x32xf32, #tpu.memory_space<vmem>>, vector<16x8xf32>,
    %422 = vector.extract_strided_slice %367 {offsets = [0, 24], sizes = [16, 8], strides = [1, 1]} : vector<16x32xf32> to vector<16x8xf32>
    %423 = vector.extract_strided_slice %368 {offsets = [0, 24], sizes = [16, 8], strides = [1, 1]} : vector<16x32xf32> to vector<16x8xf32>
    %cst_164 = arith.constant dense<0.000000e+00> : vector<16x16xf32>
    %424 = tpu.matmul %422, %423, %cst_164 {dimension_numbers = #tpu.dot_dimension_numbers<[1], [1], [0], [0], [0, 0, 1, 0], [], []>} : vector<16x8xf32>, vector<16x8xf32>, vector<16x16xf32> -> vector<16x16xf32>
    %425 = arith.addf %424, %42 : vector<16x16xf32>
    %cst_165 = arith.constant dense<0xFF800000> : vector<16xf32>
    %426 = vector.multi_reduction <maximumf>, %425, %cst_165 [1] : vector<16x16xf32> to vector<16xf32>
    %427 = vector.shape_cast %426 : vector<16xf32> to vector<16x1xf32>
    %428 = vector.broadcast %427 : vector<16x1xf32> to vector<16x16xf32>
    %429 = arith.subf %425, %428 : vector<16x16xf32>
    %430 = math.exp %429 : vector<16x16xf32>
    %cst_166 = arith.constant dense<0.000000e+00> : vector<16xf32>
    %431 = vector.multi_reduction <add>, %430, %cst_166 [1] : vector<16x16xf32> to vector<16xf32>
    %432 = vector.shape_cast %431 : vector<16xf32> to vector<16x1xf32>
    %433 = tpu.reciprocal %432 {approx = true} : vector<16x1xf32> -> vector<16x1xf32>
    %434 = vector.broadcast %433 : vector<16x1xf32> to vector<16x16xf32>
    %435 = arith.mulf %430, %434 : vector<16x16xf32>
    %436 = vector.extract_strided_slice %366 {offsets = [0, 24], sizes = [16, 8], strides = [1, 1]} : vector<16x32xf32> to vector<16x8xf32>
    %cst_167 = arith.constant dense<0.000000e+00> : vector<16x8xf32>
    %437 = tpu.matmul %435, %436, %cst_167 {dimension_numbers = #tpu.dot_dimension_numbers<[1], [0], [0], [1], [0, 0, 1, 1], [], []>} : vector<16x16xf32>, vector<16x8xf32>, vector<16x8xf32> -> vector<16x8xf32>
    %c0_168 = arith.constant 0 : index
    %c24_169 = arith.constant 24 : index
    %438 = vector.load %arg10[%c0_168, %c24_169] : memref<16x32xf32, #tpu.memory_space<vmem>>, vector<16x8xf32>
    tpu.vector_store %arg10[%c0_168, %c24_169], %437 {strides = array<i32>} : memref<16x32xf32, #tpu.memory_space<vmem>>, vector<16x8xf32>,
    %c0_170 = arith.constant 0 : index
    %c0_171 = arith.constant 0 : index
    %439 = vector.load %arg10[%c0_170, %c0_171] : memref<16x32xf32, #tpu.memory_space<vmem>>, vector<16x32xf32>
    %cst_172 = arith.constant dense<0.000000e+00> : vector<16x32xf32>
    %440 = tpu.matmul %439, %369, %cst_172 {dimension_numbers = #tpu.dot_dimension_numbers<[1], [0], [0], [1], [0, 0, 1, 1], [], []>} : vector<16x32xf32>, vector<32x32xf32>, vector<16x32xf32> -> vector<16x32xf32>
    %441 = vector.broadcast %370 : vector<1x32xf32> to vector<16x32xf32>
    %442 = arith.addf %440, %441 : vector<16x32xf32>
    %443 = arith.addf %351, %442 : vector<16x32xf32>
    %c20 = arith.constant 20 : index
    %c0_173 = arith.constant 0 : index
    %444 = vector.load %arg8[%c20, %c0_173] : memref<32x128xf32, #tpu.memory_space<vmem>>, vector<1x32xf32>
    %c21 = arith.constant 21 : index
    %c0_174 = arith.constant 0 : index
    %445 = vector.load %arg8[%c21, %c0_174] : memref<32x128xf32, #tpu.memory_space<vmem>>, vector<1x32xf32>
    %cst_175 = arith.constant dense<0.000000e+00> : vector<16xf32>
    %446 = vector.multi_reduction <add>, %443, %cst_175 [1] : vector<16x32xf32> to vector<16xf32>
    %447 = vector.shape_cast %446 : vector<16xf32> to vector<16x1xf32>
    %cst_176 = arith.constant 3.200000e+01 : f32
    %448 = vector.broadcast %cst_176 : f32 to vector<16x1xf32>
    %449 = arith.divf %447, %448 : vector<16x1xf32>
    %450 = vector.broadcast %449 : vector<16x1xf32> to vector<16x32xf32>
    %451 = arith.subf %443, %450 : vector<16x32xf32>
    %452 = arith.mulf %451, %451 : vector<16x32xf32>
    %cst_177 = arith.constant dense<0.000000e+00> : vector<16xf32>
    %453 = vector.multi_reduction <add>, %452, %cst_177 [1] : vector<16x32xf32> to vector<16xf32>
    %454 = vector.shape_cast %453 : vector<16xf32> to vector<16x1xf32>
    %cst_178 = arith.constant 3.200000e+01 : f32
    %455 = vector.broadcast %cst_178 : f32 to vector<16x1xf32>
    %456 = arith.divf %454, %455 : vector<16x1xf32>
    %457 = vector.broadcast %449 : vector<16x1xf32> to vector<16x32xf32>
    %458 = arith.subf %443, %457 : vector<16x32xf32>
    %cst_179 = arith.constant 9.99999974E-6 : f32
    %459 = vector.broadcast %cst_179 : f32 to vector<16x1xf32>
    %460 = arith.addf %456, %459 : vector<16x1xf32>
    %461 = math.rsqrt %460 : vector<16x1xf32>
    %462 = vector.broadcast %461 : vector<16x1xf32> to vector<16x32xf32>
    %463 = arith.mulf %458, %462 : vector<16x32xf32>
    %464 = vector.broadcast %444 : vector<1x32xf32> to vector<16x32xf32>
    %465 = arith.mulf %463, %464 : vector<16x32xf32>
    %466 = vector.broadcast %445 : vector<1x32xf32> to vector<16x32xf32>
    %467 = arith.addf %465, %466 : vector<16x32xf32>
    %468 = arith.addf %467, %1 : vector<16x32xf32>
    %469 = vector.extract_strided_slice %355 {offsets = [0, 0], sizes = [32, 32], strides = [1, 1]} : vector<32x128xf32> to vector<32x32xf32>
    %cst_180 = arith.constant dense<0.000000e+00> : vector<16x32xf32>
    %470 = tpu.matmul %468, %469, %cst_180 {dimension_numbers = #tpu.dot_dimension_numbers<[1], [0], [0], [1], [0, 0, 1, 1], [], []>} : vector<16x32xf32>, vector<32x32xf32>, vector<16x32xf32> -> vector<16x32xf32>
    %c16_181 = arith.constant 16 : index
    %c0_182 = arith.constant 0 : index
    %471 = vector.load %arg8[%c16_181, %c0_182] : memref<32x128xf32, #tpu.memory_space<vmem>>, vector<1x32xf32>
    %472 = vector.broadcast %471 : vector<1x32xf32> to vector<16x32xf32>
    %473 = arith.addf %470, %472 : vector<16x32xf32>
    %474 = vector.extract_strided_slice %85 {offsets = [0, 32], sizes = [32, 32], strides = [1, 1]} : vector<32x64xf32> to vector<32x32xf32>
    %475 = vector.extract_strided_slice %90 {offsets = [0, 32], sizes = [32, 32], strides = [1, 1]} : vector<32x64xf32> to vector<32x32xf32>
    %476 = vector.extract_strided_slice %355 {offsets = [0, 32], sizes = [32, 32], strides = [1, 1]} : vector<32x128xf32> to vector<32x32xf32>
    %c17 = arith.constant 17 : index
    %c0_183 = arith.constant 0 : index
    %477 = vector.load %arg8[%c17, %c0_183] : memref<32x128xf32, #tpu.memory_space<vmem>>, vector<1x32xf32>
    %478 = vector.extract_strided_slice %473 {offsets = [0, 0], sizes = [16, 8], strides = [1, 1]} : vector<16x32xf32> to vector<16x8xf32>
    %479 = vector.extract_strided_slice %474 {offsets = [0, 0], sizes = [32, 8], strides = [1, 1]} : vector<32x32xf32> to vector<32x8xf32>
    %cst_184 = arith.constant dense<0.000000e+00> : vector<16x32xf32>
    %480 = tpu.matmul %478, %479, %cst_184 {dimension_numbers = #tpu.dot_dimension_numbers<[1], [1], [0], [0], [0, 0, 1, 0], [], []>} : vector<16x8xf32>, vector<32x8xf32>, vector<16x32xf32> -> vector<16x32xf32>
    %481 = arith.addf %480, %80 : vector<16x32xf32>
    %cst_185 = arith.constant dense<0xFF800000> : vector<16xf32>
    %482 = vector.multi_reduction <maximumf>, %481, %cst_185 [1] : vector<16x32xf32> to vector<16xf32>
    %483 = vector.shape_cast %482 : vector<16xf32> to vector<16x1xf32>
    %484 = vector.broadcast %483 : vector<16x1xf32> to vector<16x32xf32>
    %485 = arith.subf %481, %484 : vector<16x32xf32>
    %486 = math.exp %485 : vector<16x32xf32>
    %cst_186 = arith.constant dense<0.000000e+00> : vector<16xf32>
    %487 = vector.multi_reduction <add>, %486, %cst_186 [1] : vector<16x32xf32> to vector<16xf32>
    %488 = vector.shape_cast %487 : vector<16xf32> to vector<16x1xf32>
    %489 = tpu.reciprocal %488 {approx = true} : vector<16x1xf32> -> vector<16x1xf32>
    %490 = vector.broadcast %489 : vector<16x1xf32> to vector<16x32xf32>
    %491 = arith.mulf %486, %490 : vector<16x32xf32>
    %492 = vector.extract_strided_slice %475 {offsets = [0, 0], sizes = [32, 8], strides = [1, 1]} : vector<32x32xf32> to vector<32x8xf32>
    %cst_187 = arith.constant dense<0.000000e+00> : vector<16x8xf32>
    %493 = tpu.matmul %491, %492, %cst_187 {dimension_numbers = #tpu.dot_dimension_numbers<[1], [0], [0], [1], [0, 0, 1, 1], [], []>} : vector<16x32xf32>, vector<32x8xf32>, vector<16x8xf32> -> vector<16x8xf32>
    %c0_188 = arith.constant 0 : index
    %c0_189 = arith.constant 0 : index
    %494 = vector.load %arg10[%c0_188, %c0_189] : memref<16x32xf32, #tpu.memory_space<vmem>>, vector<16x8xf32>
    tpu.vector_store %arg10[%c0_188, %c0_189], %493 {strides = array<i32>} : memref<16x32xf32, #tpu.memory_space<vmem>>, vector<16x8xf32>,
    %495 = vector.extract_strided_slice %473 {offsets = [0, 8], sizes = [16, 8], strides = [1, 1]} : vector<16x32xf32> to vector<16x8xf32>
    %496 = vector.extract_strided_slice %474 {offsets = [0, 8], sizes = [32, 8], strides = [1, 1]} : vector<32x32xf32> to vector<32x8xf32>
    %cst_190 = arith.constant dense<0.000000e+00> : vector<16x32xf32>
    %497 = tpu.matmul %495, %496, %cst_190 {dimension_numbers = #tpu.dot_dimension_numbers<[1], [1], [0], [0], [0, 0, 1, 0], [], []>} : vector<16x8xf32>, vector<32x8xf32>, vector<16x32xf32> -> vector<16x32xf32>
    %498 = arith.addf %497, %80 : vector<16x32xf32>
    %cst_191 = arith.constant dense<0xFF800000> : vector<16xf32>
    %499 = vector.multi_reduction <maximumf>, %498, %cst_191 [1] : vector<16x32xf32> to vector<16xf32>
    %500 = vector.shape_cast %499 : vector<16xf32> to vector<16x1xf32>
    %501 = vector.broadcast %500 : vector<16x1xf32> to vector<16x32xf32>
    %502 = arith.subf %498, %501 : vector<16x32xf32>
    %503 = math.exp %502 : vector<16x32xf32>
    %cst_192 = arith.constant dense<0.000000e+00> : vector<16xf32>
    %504 = vector.multi_reduction <add>, %503, %cst_192 [1] : vector<16x32xf32> to vector<16xf32>
    %505 = vector.shape_cast %504 : vector<16xf32> to vector<16x1xf32>
    %506 = tpu.reciprocal %505 {approx = true} : vector<16x1xf32> -> vector<16x1xf32>
    %507 = vector.broadcast %506 : vector<16x1xf32> to vector<16x32xf32>
    %508 = arith.mulf %503, %507 : vector<16x32xf32>
    %509 = vector.extract_strided_slice %475 {offsets = [0, 8], sizes = [32, 8], strides = [1, 1]} : vector<32x32xf32> to vector<32x8xf32>
    %cst_193 = arith.constant dense<0.000000e+00> : vector<16x8xf32>
    %510 = tpu.matmul %508, %509, %cst_193 {dimension_numbers = #tpu.dot_dimension_numbers<[1], [0], [0], [1], [0, 0, 1, 1], [], []>} : vector<16x32xf32>, vector<32x8xf32>, vector<16x8xf32> -> vector<16x8xf32>
    %c0_194 = arith.constant 0 : index
    %c8_195 = arith.constant 8 : index
    %511 = vector.load %arg10[%c0_194, %c8_195] : memref<16x32xf32, #tpu.memory_space<vmem>>, vector<16x8xf32>
    tpu.vector_store %arg10[%c0_194, %c8_195], %510 {strides = array<i32>} : memref<16x32xf32, #tpu.memory_space<vmem>>, vector<16x8xf32>,
    %512 = vector.extract_strided_slice %473 {offsets = [0, 16], sizes = [16, 8], strides = [1, 1]} : vector<16x32xf32> to vector<16x8xf32>
    %513 = vector.extract_strided_slice %474 {offsets = [0, 16], sizes = [32, 8], strides = [1, 1]} : vector<32x32xf32> to vector<32x8xf32>
    %cst_196 = arith.constant dense<0.000000e+00> : vector<16x32xf32>
    %514 = tpu.matmul %512, %513, %cst_196 {dimension_numbers = #tpu.dot_dimension_numbers<[1], [1], [0], [0], [0, 0, 1, 0], [], []>} : vector<16x8xf32>, vector<32x8xf32>, vector<16x32xf32> -> vector<16x32xf32>
    %515 = arith.addf %514, %80 : vector<16x32xf32>
    %cst_197 = arith.constant dense<0xFF800000> : vector<16xf32>
    %516 = vector.multi_reduction <maximumf>, %515, %cst_197 [1] : vector<16x32xf32> to vector<16xf32>
    %517 = vector.shape_cast %516 : vector<16xf32> to vector<16x1xf32>
    %518 = vector.broadcast %517 : vector<16x1xf32> to vector<16x32xf32>
    %519 = arith.subf %515, %518 : vector<16x32xf32>
    %520 = math.exp %519 : vector<16x32xf32>
    %cst_198 = arith.constant dense<0.000000e+00> : vector<16xf32>
    %521 = vector.multi_reduction <add>, %520, %cst_198 [1] : vector<16x32xf32> to vector<16xf32>
    %522 = vector.shape_cast %521 : vector<16xf32> to vector<16x1xf32>
    %523 = tpu.reciprocal %522 {approx = true} : vector<16x1xf32> -> vector<16x1xf32>
    %524 = vector.broadcast %523 : vector<16x1xf32> to vector<16x32xf32>
    %525 = arith.mulf %520, %524 : vector<16x32xf32>
    %526 = vector.extract_strided_slice %475 {offsets = [0, 16], sizes = [32, 8], strides = [1, 1]} : vector<32x32xf32> to vector<32x8xf32>
    %cst_199 = arith.constant dense<0.000000e+00> : vector<16x8xf32>
    %527 = tpu.matmul %525, %526, %cst_199 {dimension_numbers = #tpu.dot_dimension_numbers<[1], [0], [0], [1], [0, 0, 1, 1], [], []>} : vector<16x32xf32>, vector<32x8xf32>, vector<16x8xf32> -> vector<16x8xf32>
    %c0_200 = arith.constant 0 : index
    %c16_201 = arith.constant 16 : index
    %528 = vector.load %arg10[%c0_200, %c16_201] : memref<16x32xf32, #tpu.memory_space<vmem>>, vector<16x8xf32>
    tpu.vector_store %arg10[%c0_200, %c16_201], %527 {strides = array<i32>} : memref<16x32xf32, #tpu.memory_space<vmem>>, vector<16x8xf32>,
    %529 = vector.extract_strided_slice %473 {offsets = [0, 24], sizes = [16, 8], strides = [1, 1]} : vector<16x32xf32> to vector<16x8xf32>
    %530 = vector.extract_strided_slice %474 {offsets = [0, 24], sizes = [32, 8], strides = [1, 1]} : vector<32x32xf32> to vector<32x8xf32>
    %cst_202 = arith.constant dense<0.000000e+00> : vector<16x32xf32>
    %531 = tpu.matmul %529, %530, %cst_202 {dimension_numbers = #tpu.dot_dimension_numbers<[1], [1], [0], [0], [0, 0, 1, 0], [], []>} : vector<16x8xf32>, vector<32x8xf32>, vector<16x32xf32> -> vector<16x32xf32>
    %532 = arith.addf %531, %80 : vector<16x32xf32>
    %cst_203 = arith.constant dense<0xFF800000> : vector<16xf32>
    %533 = vector.multi_reduction <maximumf>, %532, %cst_203 [1] : vector<16x32xf32> to vector<16xf32>
    %534 = vector.shape_cast %533 : vector<16xf32> to vector<16x1xf32>
    %535 = vector.broadcast %534 : vector<16x1xf32> to vector<16x32xf32>
    %536 = arith.subf %532, %535 : vector<16x32xf32>
    %537 = math.exp %536 : vector<16x32xf32>
    %cst_204 = arith.constant dense<0.000000e+00> : vector<16xf32>
    %538 = vector.multi_reduction <add>, %537, %cst_204 [1] : vector<16x32xf32> to vector<16xf32>
    %539 = vector.shape_cast %538 : vector<16xf32> to vector<16x1xf32>
    %540 = tpu.reciprocal %539 {approx = true} : vector<16x1xf32> -> vector<16x1xf32>
    %541 = vector.broadcast %540 : vector<16x1xf32> to vector<16x32xf32>
    %542 = arith.mulf %537, %541 : vector<16x32xf32>
    %543 = vector.extract_strided_slice %475 {offsets = [0, 24], sizes = [32, 8], strides = [1, 1]} : vector<32x32xf32> to vector<32x8xf32>
    %cst_205 = arith.constant dense<0.000000e+00> : vector<16x8xf32>
    %544 = tpu.matmul %542, %543, %cst_205 {dimension_numbers = #tpu.dot_dimension_numbers<[1], [0], [0], [1], [0, 0, 1, 1], [], []>} : vector<16x32xf32>, vector<32x8xf32>, vector<16x8xf32> -> vector<16x8xf32>
    %c0_206 = arith.constant 0 : index
    %c24_207 = arith.constant 24 : index
    %545 = vector.load %arg10[%c0_206, %c24_207] : memref<16x32xf32, #tpu.memory_space<vmem>>, vector<16x8xf32>
    tpu.vector_store %arg10[%c0_206, %c24_207], %544 {strides = array<i32>} : memref<16x32xf32, #tpu.memory_space<vmem>>, vector<16x8xf32>,
    %c0_208 = arith.constant 0 : index
    %c0_209 = arith.constant 0 : index
    %546 = vector.load %arg10[%c0_208, %c0_209] : memref<16x32xf32, #tpu.memory_space<vmem>>, vector<16x32xf32>
    %cst_210 = arith.constant dense<0.000000e+00> : vector<16x32xf32>
    %547 = tpu.matmul %546, %476, %cst_210 {dimension_numbers = #tpu.dot_dimension_numbers<[1], [0], [0], [1], [0, 0, 1, 1], [], []>} : vector<16x32xf32>, vector<32x32xf32>, vector<16x32xf32> -> vector<16x32xf32>
    %548 = vector.broadcast %477 : vector<1x32xf32> to vector<16x32xf32>
    %549 = arith.addf %547, %548 : vector<16x32xf32>
    %550 = arith.addf %467, %549 : vector<16x32xf32>
    %c22 = arith.constant 22 : index
    %c0_211 = arith.constant 0 : index
    %551 = vector.load %arg8[%c22, %c0_211] : memref<32x128xf32, #tpu.memory_space<vmem>>, vector<1x32xf32>
    %c23 = arith.constant 23 : index
    %c0_212 = arith.constant 0 : index
    %552 = vector.load %arg8[%c23, %c0_212] : memref<32x128xf32, #tpu.memory_space<vmem>>, vector<1x32xf32>
    %cst_213 = arith.constant dense<0.000000e+00> : vector<16xf32>
    %553 = vector.multi_reduction <add>, %550, %cst_213 [1] : vector<16x32xf32> to vector<16xf32>
    %554 = vector.shape_cast %553 : vector<16xf32> to vector<16x1xf32>
    %cst_214 = arith.constant 3.200000e+01 : f32
    %555 = vector.broadcast %cst_214 : f32 to vector<16x1xf32>
    %556 = arith.divf %554, %555 : vector<16x1xf32>
    %557 = vector.broadcast %556 : vector<16x1xf32> to vector<16x32xf32>
    %558 = arith.subf %550, %557 : vector<16x32xf32>
    %559 = arith.mulf %558, %558 : vector<16x32xf32>
    %cst_215 = arith.constant dense<0.000000e+00> : vector<16xf32>
    %560 = vector.multi_reduction <add>, %559, %cst_215 [1] : vector<16x32xf32> to vector<16xf32>
    %561 = vector.shape_cast %560 : vector<16xf32> to vector<16x1xf32>
    %cst_216 = arith.constant 3.200000e+01 : f32
    %562 = vector.broadcast %cst_216 : f32 to vector<16x1xf32>
    %563 = arith.divf %561, %562 : vector<16x1xf32>
    %564 = vector.broadcast %556 : vector<16x1xf32> to vector<16x32xf32>
    %565 = arith.subf %550, %564 : vector<16x32xf32>
    %cst_217 = arith.constant 9.99999974E-6 : f32
    %566 = vector.broadcast %cst_217 : f32 to vector<16x1xf32>
    %567 = arith.addf %563, %566 : vector<16x1xf32>
    %568 = math.rsqrt %567 : vector<16x1xf32>
    %569 = vector.broadcast %568 : vector<16x1xf32> to vector<16x32xf32>
    %570 = arith.mulf %565, %569 : vector<16x32xf32>
    %571 = vector.broadcast %551 : vector<1x32xf32> to vector<16x32xf32>
    %572 = arith.mulf %570, %571 : vector<16x32xf32>
    %573 = vector.broadcast %552 : vector<1x32xf32> to vector<16x32xf32>
    %574 = arith.addf %572, %573 : vector<16x32xf32>
    %575 = vector.extract_strided_slice %355 {offsets = [0, 64], sizes = [32, 64], strides = [1, 1]} : vector<32x128xf32> to vector<32x64xf32>
    %cst_218 = arith.constant dense<0.000000e+00> : vector<16x64xf32>
    %576 = tpu.matmul %574, %575, %cst_218 {dimension_numbers = #tpu.dot_dimension_numbers<[1], [0], [0], [1], [0, 0, 1, 1], [], []>} : vector<16x32xf32>, vector<32x64xf32>, vector<16x64xf32> -> vector<16x64xf32>
    %c18 = arith.constant 18 : index
    %c0_219 = arith.constant 0 : index
    %577 = vector.load %arg8[%c18, %c0_219] : memref<32x128xf32, #tpu.memory_space<vmem>>, vector<1x64xf32>
    %578 = vector.broadcast %577 : vector<1x64xf32> to vector<16x64xf32>
    %579 = arith.addf %576, %578 : vector<16x64xf32>
    %cst_220 = arith.constant 0.000000e+00 : f32
    %580 = vector.broadcast %cst_220 : f32 to vector<16x64xf32>
    %581 = arith.maximumf %579, %580 : vector<16x64xf32>
    %c1_221 = arith.constant 1 : index
    %c0_222 = arith.constant 0 : index
    %c0_223 = arith.constant 0 : index
    %582 = vector.load %arg7[%c1_221, %c0_222, %c0_223] : memref<2x64x32xf32, #tpu.memory_space<vmem>>, vector<1x64x32xf32>
    %583 = vector.shape_cast %582 : vector<1x64x32xf32> to vector<64x32xf32>
    %cst_224 = arith.constant dense<0.000000e+00> : vector<16x32xf32>
    %584 = tpu.matmul %581, %583, %cst_224 {dimension_numbers = #tpu.dot_dimension_numbers<[1], [0], [0], [1], [0, 0, 1, 1], [], []>} : vector<16x64xf32>, vector<64x32xf32>, vector<16x32xf32> -> vector<16x32xf32>
    %c19 = arith.constant 19 : index
    %c0_225 = arith.constant 0 : index
    %585 = vector.load %arg8[%c19, %c0_225] : memref<32x128xf32, #tpu.memory_space<vmem>>, vector<1x32xf32>
    %586 = vector.broadcast %585 : vector<1x32xf32> to vector<16x32xf32>
    %587 = arith.addf %584, %586 : vector<16x32xf32>
    %588 = arith.addf %574, %587 : vector<16x32xf32>
    %c24_226 = arith.constant 24 : index
    %c0_227 = arith.constant 0 : index
    %589 = vector.load %arg8[%c24_226, %c0_227] : memref<32x128xf32, #tpu.memory_space<vmem>>, vector<1x32xf32>
    %c25 = arith.constant 25 : index
    %c0_228 = arith.constant 0 : index
    %590 = vector.load %arg8[%c25, %c0_228] : memref<32x128xf32, #tpu.memory_space<vmem>>, vector<1x32xf32>
    %cst_229 = arith.constant dense<0.000000e+00> : vector<16xf32>
    %591 = vector.multi_reduction <add>, %588, %cst_229 [1] : vector<16x32xf32> to vector<16xf32>
    %592 = vector.shape_cast %591 : vector<16xf32> to vector<16x1xf32>
    %cst_230 = arith.constant 3.200000e+01 : f32
    %593 = vector.broadcast %cst_230 : f32 to vector<16x1xf32>
    %594 = arith.divf %592, %593 : vector<16x1xf32>
    %595 = vector.broadcast %594 : vector<16x1xf32> to vector<16x32xf32>
    %596 = arith.subf %588, %595 : vector<16x32xf32>
    %597 = arith.mulf %596, %596 : vector<16x32xf32>
    %cst_231 = arith.constant dense<0.000000e+00> : vector<16xf32>
    %598 = vector.multi_reduction <add>, %597, %cst_231 [1] : vector<16x32xf32> to vector<16xf32>
    %599 = vector.shape_cast %598 : vector<16xf32> to vector<16x1xf32>
    %cst_232 = arith.constant 3.200000e+01 : f32
    %600 = vector.broadcast %cst_232 : f32 to vector<16x1xf32>
    %601 = arith.divf %599, %600 : vector<16x1xf32>
    %602 = vector.broadcast %594 : vector<16x1xf32> to vector<16x32xf32>
    %603 = arith.subf %588, %602 : vector<16x32xf32>
    %cst_233 = arith.constant 9.99999974E-6 : f32
    %604 = vector.broadcast %cst_233 : f32 to vector<16x1xf32>
    %605 = arith.addf %601, %604 : vector<16x1xf32>
    %606 = math.rsqrt %605 : vector<16x1xf32>
    %607 = vector.broadcast %606 : vector<16x1xf32> to vector<16x32xf32>
    %608 = arith.mulf %603, %607 : vector<16x32xf32>
    %609 = vector.broadcast %589 : vector<1x32xf32> to vector<16x32xf32>
    %610 = arith.mulf %608, %609 : vector<16x32xf32>
    %611 = vector.broadcast %590 : vector<1x32xf32> to vector<16x32xf32>
    %612 = arith.addf %610, %611 : vector<16x32xf32>
    %c27 = arith.constant 27 : index
    %c0_234 = arith.constant 0 : index
    %613 = vector.load %arg8[%c27, %c0_234] : memref<32x128xf32, #tpu.memory_space<vmem>>, vector<1x32xf32>
    %c28 = arith.constant 28 : index
    %c0_235 = arith.constant 0 : index
    %614 = vector.load %arg8[%c28, %c0_235] : memref<32x128xf32, #tpu.memory_space<vmem>>, vector<1x32xf32>
    %cst_236 = arith.constant dense<0.000000e+00> : vector<16xf32>
    %615 = vector.multi_reduction <add>, %612, %cst_236 [1] : vector<16x32xf32> to vector<16xf32>
    %616 = vector.shape_cast %615 : vector<16xf32> to vector<16x1xf32>
    %cst_237 = arith.constant 3.200000e+01 : f32
    %617 = vector.broadcast %cst_237 : f32 to vector<16x1xf32>
    %618 = arith.divf %616, %617 : vector<16x1xf32>
    %619 = vector.broadcast %618 : vector<16x1xf32> to vector<16x32xf32>
    %620 = arith.subf %612, %619 : vector<16x32xf32>
    %621 = arith.mulf %620, %620 : vector<16x32xf32>
    %cst_238 = arith.constant dense<0.000000e+00> : vector<16xf32>
    %622 = vector.multi_reduction <add>, %621, %cst_238 [1] : vector<16x32xf32> to vector<16xf32>
    %623 = vector.shape_cast %622 : vector<16xf32> to vector<16x1xf32>
    %cst_239 = arith.constant 3.200000e+01 : f32
    %624 = vector.broadcast %cst_239 : f32 to vector<16x1xf32>
    %625 = arith.divf %623, %624 : vector<16x1xf32>
    %626 = vector.broadcast %618 : vector<16x1xf32> to vector<16x32xf32>
    %627 = arith.subf %612, %626 : vector<16x32xf32>
    %cst_240 = arith.constant 9.99999974E-6 : f32
    %628 = vector.broadcast %cst_240 : f32 to vector<16x1xf32>
    %629 = arith.addf %625, %628 : vector<16x1xf32>
    %630 = math.rsqrt %629 : vector<16x1xf32>
    %631 = vector.broadcast %630 : vector<16x1xf32> to vector<16x32xf32>
    %632 = arith.mulf %627, %631 : vector<16x32xf32>
    %633 = vector.broadcast %613 : vector<1x32xf32> to vector<16x32xf32>
    %634 = arith.mulf %632, %633 : vector<16x32xf32>
    %635 = vector.broadcast %614 : vector<1x32xf32> to vector<16x32xf32>
    %636 = arith.addf %634, %635 : vector<16x32xf32>
    %c0_241 = arith.constant 0 : index
    %c0_242 = arith.constant 0 : index
    %637 = vector.load %arg9[%c0_241, %c0_242] : memref<16x32xf32, #tpu.memory_space<vmem>>, vector<16x32xf32>
    tpu.vector_store %arg9[%c0_241, %c0_242], %636 {strides = array<i32>} : memref<16x32xf32, #tpu.memory_space<vmem>>, vector<16x32xf32>,
    return
  }
}

</mosaic_0001>

<llo_original>
// kernel: transformer_decoder.1
$region0: #{transformer_decoder.1}
  #allocation0 [shape = 'u32[]', space=smem, size = 0x4, offset = 0x4, fixed_abs, tag = 'smem constant byte address 0x4 - core index']
  #allocation1 [shape = 'u32[144,128]{1,0:T(1,128)}', space=vmem, size = 0x12000, scoped, tag = 'internal scratch']
  #allocation2 [shape = 'f32[16,32]{1,0:T(8,128)}', space=vmem, size = 0x2000, scoped, tag = 'scratch operand']
  %s0 = inlined_call_operand.hbm [shape: f32[16,32], index: 0, kind: input, shape index: {}]
  %s1 = inlined_call_operand.hbm [shape: f32[16,32], index: 1, kind: input, shape index: {}]
  %s2 = inlined_call_operand.vmem [shape: f32[32,32], index: 2, kind: input, shape index: {}]
  %s3 = inlined_call_operand.vmem [shape: f32[32,32], index: 3, kind: input, shape index: {}]
  %s4 = inlined_call_operand.vmem [shape: f32[2,32,128], index: 4, kind: input, shape index: {}]
  %s5 = inlined_call_operand.vmem [shape: f32[2,32,128], index: 5, kind: input, shape index: {}]
  %s6 = inlined_call_operand.vmem [shape: f32[32,128], index: 6, kind: input, shape index: {}]
  %s7 = inlined_call_operand.vmem [shape: f32[2,64,32], index: 7, kind: input, shape index: {}]
  %s8 = inlined_call_operand.hbm [shape: f32[32,128], index: 8, kind: input, shape index: {}]
  %s9 = inlined_call_operand.hbm [shape: f32[16,32], index: 9, kind: output, shape index: {}]
  %s10 = sld [smem:[#allocation0]]
  $region58: #{transformer_decoder.1} parent=0
    _
  %s12 = ssub.s32 1, %s10
  %s13 = scalar_select 0, %s12, %s10
  $region1: #{transformer_decoder.1} parent=0
    #allocation3 [shape = 'u8[8192]{0}', space=vmem, size = 0x2000, scoped, tag = 'input window, operand 0, single buffered']
    #allocation4 [shape = 's32[1]{0}', space=sflag, size = 0x4, scoped, tag = 'scoped memory for transformer_decoder.1']
    #allocation5 [shape = 's32[1]{0}', space=sflag, size = 0x4, scoped, tag = 'scoped memory for transformer_decoder.1']
    #allocation6 [shape = 'u8[8192]{0}', space=vmem, size = 0x2000, scoped, tag = 'input window, operand 1, single buffered']
    #allocation7 [shape = 's32[1]{0}', space=sflag, size = 0x4, scoped, tag = 'scoped memory for transformer_decoder.1']
    #allocation8 [shape = 'u8[16384]{0}', space=vmem, size = 0x4000, scoped, tag = 'input window, operand 8, single buffered']
    #allocation9 [shape = 'u8[8192]{0}', space=vmem, size = 0x2000, scoped, tag = 'output window, operand 0, single buffered']
    %14 = vsyncpa [#allocation4], 0
    %15 = vsyncpa [#allocation7], 0
    %16 = vsyncpa [#allocation5], 0
    // Predicated region
    $region2: #{transformer_decoder.1} parent=1 // pred_check
      _
    $region3: #{transformer_decoder.1} parent=1 // pred_check_branch
      %18 = sbr.rel (0) target = $region5
    $region4: #{transformer_decoder.1} parent=1 // pred_region
      %s20 = ssub.s32 256, 256
      %21 = vsyncadd [#allocation4], %s20
      %s22 = sshll.u32 [#allocation3], 4
      %s23 = int_to_ptr.vmem [resolvable:$true] %s22
      %28 = dma.hbm_to_vmem [thread:$0]  %s0, 256, %s23, [#allocation4], 128, 128, 8
    $region5: #{transformer_decoder.1} parent=1 // pred_fallthru
      _
    // Predicated region
    $region6: #{transformer_decoder.1} parent=1 // pred_check
      _
    $region7: #{transformer_decoder.1} parent=1 // pred_check_branch
      %30 = sbr.rel (0) target = $region9
    $region8: #{transformer_decoder.1} parent=1 // pred_region
      %s32 = ssub.s32 256, 256
      %33 = vsyncadd [#allocation7], %s32
      %s34 = sshll.u32 [#allocation6], 4
      %s35 = int_to_ptr.vmem [resolvable:$true] %s34
      %40 = dma.hbm_to_vmem [thread:$0]  %s1, 256, %s35, [#allocation7], 128, 128, 8
    $region9: #{transformer_decoder.1} parent=1 // pred_fallthru
      _
    // Predicated region
    $region10: #{transformer_decoder.1} parent=1 // pred_check
      _
    $region11: #{transformer_decoder.1} parent=1 // pred_check_branch
      %42 = sbr.rel (0) target = $region13
    $region12: #{transformer_decoder.1} parent=1 // pred_region
      _
    $region13: #{transformer_decoder.1} parent=1 // pred_fallthru
      _
    // Predicated region
    $region14: #{transformer_decoder.1} parent=1 // pred_check
      _
    $region15: #{transformer_decoder.1} parent=1 // pred_check_branch
      %44 = sbr.rel (0) target = $region17
    $region16: #{transformer_decoder.1} parent=1 // pred_region
      _
    $region17: #{transformer_decoder.1} parent=1 // pred_fallthru
      _
    // Predicated region
    $region18: #{transformer_decoder.1} parent=1 // pred_check
      _
    $region19: #{transformer_decoder.1} parent=1 // pred_check_branch
      %46 = sbr.rel (0) target = $region21
    $region20: #{transformer_decoder.1} parent=1 // pred_region
      _
    $region21: #{transformer_decoder.1} parent=1 // pred_fallthru
      _
    // Predicated region
    $region22: #{transformer_decoder.1} parent=1 // pred_check
      _
    $region23: #{transformer_decoder.1} parent=1 // pred_check_branch
      %48 = sbr.rel (0) target = $region25
    $region24: #{transformer_decoder.1} parent=1 // pred_region
      _
    $region25: #{transformer_decoder.1} parent=1 // pred_fallthru
      _
    // Predicated region
    $region26: #{transformer_decoder.1} parent=1 // pred_check
      _
    $region27: #{transformer_decoder.1} parent=1 // pred_check_branch
      %50 = sbr.rel (0) target = $region29
    $region28: #{transformer_decoder.1} parent=1 // pred_region
      _
    $region29: #{transformer_decoder.1} parent=1 // pred_fallthru
      _
    // Predicated region
    $region30: #{transformer_decoder.1} parent=1 // pred_check
      _
    $region31: #{transformer_decoder.1} parent=1 // pred_check_branch
      %52 = sbr.rel (0) target = $region33
    $region32: #{transformer_decoder.1} parent=1 // pred_region
      _
    $region33: #{transformer_decoder.1} parent=1 // pred_fallthru
      _
    // Predicated region
    $region34: #{transformer_decoder.1} parent=1 // pred_check
      _
    $region35: #{transformer_decoder.1} parent=1 // pred_check_branch
      %54 = sbr.rel (0) target = $region37
    $region36: #{transformer_decoder.1} parent=1 // pred_region
      %s56 = ssub.s32 512, 512
      %57 = vsyncadd [#allocation7], %s56
      %s58 = sshll.u32 [#allocation8], 4
      %s59 = int_to_ptr.vmem [resolvable:$true] %s58
      %64 = dma.hbm_to_vmem [thread:$0]  %s8, 512, %s59, [#allocation7], 128, 128, 8
    $region37: #{transformer_decoder.1} parent=1 // pred_fallthru
      _
    // Predicated region
    $region38: #{transformer_decoder.1} parent=1 // pred_check
      _
    $region39: #{transformer_decoder.1} parent=1 // pred_check_branch
      %66 = sbr.rel (0) target = $region41
    $region40: #{transformer_decoder.1} parent=1 // pred_region
      %67 = dma.done [#allocation4], 256
    $region41: #{transformer_decoder.1} parent=1 // pred_fallthru
      _
    // Predicated region
    $region42: #{transformer_decoder.1} parent=1 // pred_check
      _
    $region43: #{transformer_decoder.1} parent=1 // pred_check_branch
      %69 = sbr.rel (0) target = $region45
    $region44: #{transformer_decoder.1} parent=1 // pred_region
      %70 = dma.done [#allocation7], 256
    $region45: #{transformer_decoder.1} parent=1 // pred_fallthru
      _
    // Predicated region
    $region46: #{transformer_decoder.1} parent=1 // pred_check
      _
    $region47: #{transformer_decoder.1} parent=1 // pred_check_branch
      %72 = sbr.rel (0) target = $region49
    $region48: #{transformer_decoder.1} parent=1 // pred_region
      %73 = dma.done [#allocation7], 512
    $region49: #{transformer_decoder.1} parent=1 // pred_fallthru
      _
    %v74 = vld [vmem:[#allocation3] sm:$0xff]
    %v75 = vld [vmem:[#allocation3 + $0x8] sm:$0xff]
    %v76 = vld [vmem:[#allocation6] sm:$0xff]
    %v77 = vld [vmem:[#allocation6 + $0x8] sm:$0xff]
    %v78 = vld [vmem:[%s2] sm:$0xff]
    %v79 = vld [vmem:[%s2 + $0x8] sm:$0xff]
    %v80 = vld [vmem:[%s2 + $0x10] sm:$0xff]
    %v81 = vld [vmem:[%s2 + $0x18] sm:$0xff]
    %v82 = vld [vmem:[%s3] sm:$0xff]
    %v83 = vld [vmem:[%s3 + $0x8] sm:$0xff]
    %v84 = vld [vmem:[%s3 + $0x10] sm:$0xff]
    %v85 = vld [vmem:[%s3 + $0x18] sm:$0xff]
    %v86 = vadd.f32 %v78, %v82
    %v87 = vadd.f32 %v79, %v83
    %v88 = vadd.f32 %v80, %v84
    %v89 = vadd.f32 %v81, %v85
    %v90 = vlaneseq
    %v91 = vshrl.u32 %v90, 7
    %v92 = vadd.s32 %v91, 8
    %vm93 = vcmp.lt.s32.totalorder %v91, 0
    %v94 = vsub.s32 0, %v91
    %v95 = vsel %vm93, %v94, %v91
    %v96 = vshrl.u32 %v95, 1
    %v97 = vand.u32 %v95, 1
    %v98 = vsub.s32 0, %v97
    %v99 = vsel %vm93, %v98, %v97
    %vm100 = vcmp.lt.s32.totalorder %v92, 0
    %v101 = vsub.s32 0, %v92
    %v102 = vsel %vm100, %v101, %v92
    %v103 = vshrl.u32 %v102, 1
    %v104 = vand.u32 %v102, 1
    %v105 = vsub.s32 0, %v104
    %v106 = vsel %vm100, %v105, %v104
    %vm107 = vcmp.ne.s32.totalorder %v99, 0
    %vm108 = vcmp.ne.s32.totalorder %v106, 0
    %vm109 = vcmp.lt.s32.totalorder %v99, 0
    %vm110 = vcmp.lt.s32.totalorder %v106, 0
    %vm111 = vmand %vm109, %vm107
    %vm112 = vmand %vm110, %vm108
    %v113 = vadd.s32 %v99, 2
    %v114 = vadd.s32 %v106, 2
    %v115 = vsel %vm111, %v113, %v99
    %v116 = vsel %vm112, %v114, %v106
    %v117 = vlaneseq
    %v118 = vand.u32 %v117, 127
    %vm119 = vcmp.lt.s32.totalorder %v118, 0
    %v120 = vsub.s32 0, %v118
    %v121 = vsel %vm119, %v120, %v118
    %v122 = vshrl.u32 %v121, 1
    %v123 = vand.u32 %v121, 1
    %v124 = vsub.s32 0, %v123
    %v125 = vsel %vm119, %v124, %v123
    %vm126 = vcmp.ne.s32.totalorder %v125, 0
    %vm127 = vcmp.lt.s32.totalorder %v125, 0
    %vm128 = vmand %vm127, %vm126
    %v129 = vadd.s32 %v125, 2
    %v130 = vsel %vm128, %v129, %v125
    %vm131 = vcmp.eq.s32.totalorder %v115, %v130
    %vm132 = vcmp.eq.s32.totalorder %v116, %v130
    %v133 = vsel %vm131, 0.0, -1e+30
    %v134 = vsel %vm132, 0.0, -1e+30
    %v135 = vld [vmem:[%s6] sm:$0xff]
    %v136 = vld [vmem:[%s6 + $0x8] sm:$0xff]
    %v137 = vld [vmem:[%s6 + $0x10] sm:$0xff]
    %v138 = vld [vmem:[%s6 + $0x18] sm:$0xff]
    %v139 = vld [vmem:[#allocation8 + $0x1a] sm:$0x1]
    %v140 = vlaneseq
    %v141 = vshrl.u32 %v140, 7
    %v142 = vsub.s32 0, %v141
    %v143 = vrot.slane %v139, %v142
    %vm144 = vcmask 261120
    %v146 = vsel %vm144, %v86, 0
    %v149 = vsel %vm144, %v87, 0
    %v152 = vsel %vm144, %v88, 0
    %v155 = vsel %vm144, %v89, 0
    %157 = vmatprep.subr.mxu0 0.0
    %158 = vmatpush1.msra.mxu0 %v135
    %159 = vmatprep.subr.mxu0 0.0
    %160 = vmatpush1.msra.mxu0 %v136
    %161 = vmatprep.subr.mxu0 0.0
    %162 = vmatpush1.msra.mxu0 %v137
    %163 = vmatprep.subr.mxu0 0.0
    %164 = vmatpush1.msra.mxu0 %v138
    %165 = vmatprep.subr.mxu0 0.0
    %166 = vmatpush1.msra.mxu0 0.0
    %167 = vmatprep.subr.mxu0 0.0
    %168 = vmatpush1.msra.mxu0 0.0
    %169 = vmatprep.subr.mxu0 0.0
    %170 = vmatpush1.msra.mxu0 0.0
    %171 = vmatprep.subr.mxu0 0.0
    %172 = vmatpush1.msra.mxu0 0.0
    %173 = vmatprep.subr.mxu0 0.0
    %174 = vmatpush1.msra.mxu0 0.0
    %175 = vmatprep.subr.mxu0 0.0
    %176 = vmatpush1.msra.mxu0 0.0
    %177 = vmatprep.subr.mxu0 0.0
    %178 = vmatpush1.msra.mxu0 0.0
    %179 = vmatprep.subr.mxu0 0.0
    %180 = vmatpush1.msra.mxu0 0.0
    %181 = vmatprep.subr.mxu0 0.0
    %182 = vmatpush1.msra.mxu0 0.0
    %183 = vmatprep.subr.mxu0 0.0
    %184 = vmatpush1.msra.mxu0 0.0
    %185 = vmatprep.subr.mxu0 0.0
    %186 = vmatpush1.msra.mxu0 0.0
    %187 = vmatprep.subr.mxu0 0.0
    %188 = vmatpush1.msra.mxu0 0.0
    %189 = vmatprep.subr.mxu0 0.0
    %190 = vmatpush1.msra.mxu0 0.0
    %191 = vmatprep.subr.mxu0 0.0
    %192 = vmatpush1.msra.mxu0 0.0
    %193 = vmatprep.subr.mxu0 0.0
    %194 = vmatpush1.msra.mxu0 0.0
    %195 = vmatprep.subr.mxu0 0.0
    %196 = vmatpush1.msra.mxu0 0.0
    %197 = vmatprep.subr.mxu0 0.0
    %198 = vmatpush1.msra.mxu0 0.0
    %199 = vmatprep.subr.mxu0 0.0
    %200 = vmatpush1.msra.mxu0 0.0
    %201 = vmatprep.subr.mxu0 0.0
    %202 = vmatpush1.msra.mxu0 0.0
    %203 = vmatprep.subr.mxu0 0.0
    %204 = vmatpush1.msra.mxu0 0.0
    %205 = vmatprep.subr.mxu0 0.0
    %206 = vmatpush1.msra.mxu0 0.0
    %207 = vmatprep.subr.mxu0 0.0
    %208 = vmatpush1.msra.mxu0 0.0
    %209 = vmatprep.subr.mxu0 0.0
    %210 = vmatpush1.msra.mxu0 0.0
    %211 = vmatprep.subr.mxu0 0.0
    %212 = vmatpush1.msra.mxu0 0.0
    %213 = vmatprep.subr.mxu0 0.0
    %214 = vmatpush1.msra.mxu0 0.0
    %215 = vmatprep.subr.mxu0 0.0
    %216 = vmatpush1.msra.mxu0 0.0
    %217 = vmatprep.subr.mxu0 0.0
    %218 = vmatpush1.msra.mxu0 0.0
    %219 = vmatprep.subr.mxu0 0.0
    %220 = vmatpush1.msra.mxu0 0.0
    %221 = vmatprep.mubr.f32.mxu0 0.0
    %222 = vmatmul.mubr.f32.gmra.mrb[0].mxu0 %v146
    %v223 = vpop.f32.mrb[0].mxu0
    %v224 = vadd.f32 %v143, %v223
    %v225 = vpop.f32.mrb[0].mxu0
    %226 = vmatprep.mubr.f32.mxu0 0.0
    %227 = vmatmul.mubr.f32.gmra.mrb[0].mxu0 %v149
    %v228 = vpop.f32.mrb[0].mxu0
    %v229 = vadd.f32 %v143, %v228
    %v230 = vpop.f32.mrb[0].mxu0
    %231 = vmatprep.mubr.f32.mxu0 0.0
    %232 = vmatmul.mubr.f32.gmra.mrb[0].mxu0 %v152
    %v233 = vpop.f32.mrb[0].mxu0
    %v234 = vadd.f32 %v143, %v233
    %v235 = vpop.f32.mrb[0].mxu0
    %236 = vmatprep.mubr.f32.mxu0 0.0
    %237 = vmatmul.mubr.f32.gmra.mrb[0].mxu0 %v155
    %v238 = vpop.f32.mrb[0].mxu0
    %v239 = vadd.f32 %v143, %v238
    %v240 = vpop.f32.mrb[0].mxu0
    %241 = vdwg.mxu0
    %246 = vrot.lane.b32.xlu0 %v135, 64
    %v247 = vpop.permute.xlu0 %246
    %248 = vrot.lane.b32.xlu0 %v136, 64
    %v249 = vpop.permute.xlu0 %248
    %250 = vrot.lane.b32.xlu0 %v137, 64
    %v251 = vpop.permute.xlu0 %250
    %252 = vrot.lane.b32.xlu0 %v138, 64
    %v253 = vpop.permute.xlu0 %252
    %259 = vrot.lane.b32.xlu0 %v143, 64
    %v260 = vpop.permute.xlu0 %259
    %v263 = vsel %vm144, %v78, 0
    %v266 = vsel %vm144, %v79, 0
    %v269 = vsel %vm144, %v80, 0
    %v272 = vsel %vm144, %v81, 0
    %274 = vmatprep.subr.mxu0 0.0
    %275 = vmatpush1.msra.mxu0 %v247
    %276 = vmatprep.subr.mxu0 0.0
    %277 = vmatpush1.msra.mxu0 %v249
    %278 = vmatprep.subr.mxu0 0.0
    %279 = vmatpush1.msra.mxu0 %v251
    %280 = vmatprep.subr.mxu0 0.0
    %281 = vmatpush1.msra.mxu0 %v253
    %282 = vmatprep.subr.mxu0 0.0
    %283 = vmatpush1.msra.mxu0 0.0
    %284 = vmatprep.subr.mxu0 0.0
    %285 = vmatpush1.msra.mxu0 0.0
    %286 = vmatprep.subr.mxu0 0.0
    %287 = vmatpush1.msra.mxu0 0.0
    %288 = vmatprep.subr.mxu0 0.0
    %289 = vmatpush1.msra.mxu0 0.0
    %290 = vmatprep.subr.mxu0 0.0
    %291 = vmatpush1.msra.mxu0 0.0
    %292 = vmatprep.subr.mxu0 0.0
    %293 = vmatpush1.msra.mxu0 0.0
    %294 = vmatprep.subr.mxu0 0.0
    %295 = vmatpush1.msra.mxu0 0.0
    %296 = vmatprep.subr.mxu0 0.0
    %297 = vmatpush1.msra.mxu0 0.0
    %298 = vmatprep.subr.mxu0 0.0
    %299 = vmatpush1.msra.mxu0 0.0
    %300 = vmatprep.subr.mxu0 0.0
    %301 = vmatpush1.msra.mxu0 0.0
    %302 = vmatprep.subr.mxu0 0.0
    %303 = vmatpush1.msra.mxu0 0.0
    %304 = vmatprep.subr.mxu0 0.0
    %305 = vmatpush1.msra.mxu0 0.0
    %306 = vmatprep.subr.mxu0 0.0
    %307 = vmatpush1.msra.mxu0 0.0
    %308 = vmatprep.subr.mxu0 0.0
    %309 = vmatpush1.msra.mxu0 0.0
    %310 = vmatprep.subr.mxu0 0.0
    %311 = vmatpush1.msra.mxu0 0.0
    %312 = vmatprep.subr.mxu0 0.0
    %313 = vmatpush1.msra.mxu0 0.0
    %314 = vmatprep.subr.mxu0 0.0
    %315 = vmatpush1.msra.mxu0 0.0
    %316 = vmatprep.subr.mxu0 0.0
    %317 = vmatpush1.msra.mxu0 0.0
    %318 = vmatprep.subr.mxu0 0.0
    %319 = vmatpush1.msra.mxu0 0.0
    %320 = vmatprep.subr.mxu0 0.0
    %321 = vmatpush1.msra.mxu0 0.0
    %322 = vmatprep.subr.mxu0 0.0
    %323 = vmatpush1.msra.mxu0 0.0
    %324 = vmatprep.subr.mxu0 0.0
    %325 = vmatpush1.msra.mxu0 0.0
    %326 = vmatprep.subr.mxu0 0.0
    %327 = vmatpush1.msra.mxu0 0.0
    %328 = vmatprep.subr.mxu0 0.0
    %329 = vmatpush1.msra.mxu0 0.0
    %330 = vmatprep.subr.mxu0 0.0
    %331 = vmatpush1.msra.mxu0 0.0
    %332 = vmatprep.subr.mxu0 0.0
    %333 = vmatpush1.msra.mxu0 0.0
    %334 = vmatprep.subr.mxu0 0.0
    %335 = vmatpush1.msra.mxu0 0.0
    %336 = vmatprep.subr.mxu0 0.0
    %337 = vmatpush1.msra.mxu0 0.0
    %338 = vmatprep.mubr.f32.mxu0 0.0
    %339 = vmatmul.mubr.f32.gmra.mrb[0].mxu0 %v263
    %v340 = vpop.f32.mrb[0].mxu0
    %v341 = vadd.f32 %v260, %v340
    %v342 = vpop.f32.mrb[0].mxu0
    %343 = vmatprep.mubr.f32.mxu0 0.0
    %344 = vmatmul.mubr.f32.gmra.mrb[0].mxu0 %v266
    %v345 = vpop.f32.mrb[0].mxu0
    %v346 = vadd.f32 %v260, %v345
    %v347 = vpop.f32.mrb[0].mxu0
    %348 = vmatprep.mubr.f32.mxu0 0.0
    %349 = vmatmul.mubr.f32.gmra.mrb[0].mxu0 %v269
    %v350 = vpop.f32.mrb[0].mxu0
    %v351 = vadd.f32 %v260, %v350
    %v352 = vpop.f32.mrb[0].mxu0
    %353 = vmatprep.mubr.f32.mxu0 0.0
    %354 = vmatmul.mubr.f32.gmra.mrb[0].mxu0 %v272
    %v355 = vpop.f32.mrb[0].mxu0
    %v356 = vadd.f32 %v260, %v355
    %v357 = vpop.f32.mrb[0].mxu0
    %358 = vdwg.mxu0
    %v359 = vld [vmem:[%s4] sm:$0xff]
    %v360 = vld [vmem:[%s4 + $0x8] sm:$0xff]
    %v361 = vld [vmem:[%s4 + $0x10] sm:$0xff]
    %v362 = vld [vmem:[%s4 + $0x18] sm:$0xff]
    %v363 = vld [vmem:[%s5] sm:$0xff]
    %v364 = vld [vmem:[%s5 + $0x8] sm:$0xff]
    %v365 = vld [vmem:[%s5 + $0x10] sm:$0xff]
    %v366 = vld [vmem:[%s5 + $0x18] sm:$0xff]
    %v367 = vadd.f32 %v74, %v76
    %v368 = vadd.f32 %v75, %v77
    %v369 = vld [vmem:[#allocation8] sm:$0x1]
    %v370 = vlaneseq
    %v371 = vshrl.u32 %v370, 7
    %v372 = vsub.s32 0, %v371
    %v373 = vrot.slane %v369, %v372
    %v375 = vsel %vm144, %v367, 0
    %v378 = vsel %vm144, %v368, 0
    %380 = vmatprep.subr.mxu0 0.0
    %381 = vmatpush1.msra.mxu0 %v359
    %382 = vmatprep.subr.mxu0 0.0
    %383 = vmatpush1.msra.mxu0 %v360
    %384 = vmatprep.subr.mxu0 0.0
    %385 = vmatpush1.msra.mxu0 %v361
    %386 = vmatprep.subr.mxu0 0.0
    %387 = vmatpush1.msra.mxu0 %v362
    %388 = vmatprep.subr.mxu0 0.0
    %389 = vmatpush1.msra.mxu0 0.0
    %390 = vmatprep.subr.mxu0 0.0
    %391 = vmatpush1.msra.mxu0 0.0
    %392 = vmatprep.subr.mxu0 0.0
    %393 = vmatpush1.msra.mxu0 0.0
    %394 = vmatprep.subr.mxu0 0.0
    %395 = vmatpush1.msra.mxu0 0.0
    %396 = vmatprep.subr.mxu0 0.0
    %397 = vmatpush1.msra.mxu0 0.0
    %398 = vmatprep.subr.mxu0 0.0
    %399 = vmatpush1.msra.mxu0 0.0
    %400 = vmatprep.subr.mxu0 0.0
    %401 = vmatpush1.msra.mxu0 0.0
    %402 = vmatprep.subr.mxu0 0.0
    %403 = vmatpush1.msra.mxu0 0.0
    %404 = vmatprep.subr.mxu0 0.0
    %405 = vmatpush1.msra.mxu0 0.0
    %406 = vmatprep.subr.mxu0 0.0
    %407 = vmatpush1.msra.mxu0 0.0
    %408 = vmatprep.subr.mxu0 0.0
    %409 = vmatpush1.msra.mxu0 0.0
    %410 = vmatprep.subr.mxu0 0.0
    %411 = vmatpush1.msra.mxu0 0.0
    %412 = vmatprep.subr.mxu0 0.0
    %413 = vmatpush1.msra.mxu0 0.0
    %414 = vmatprep.subr.mxu0 0.0
    %415 = vmatpush1.msra.mxu0 0.0
    %416 = vmatprep.subr.mxu0 0.0
    %417 = vmatpush1.msra.mxu0 0.0
    %418 = vmatprep.subr.mxu0 0.0
    %419 = vmatpush1.msra.mxu0 0.0
    %420 = vmatprep.subr.mxu0 0.0
    %421 = vmatpush1.msra.mxu0 0.0
    %422 = vmatprep.subr.mxu0 0.0
    %423 = vmatpush1.msra.mxu0 0.0
    %424 = vmatprep.subr.mxu0 0.0
    %425 = vmatpush1.msra.mxu0 0.0
    %426 = vmatprep.subr.mxu0 0.0
    %427 = vmatpush1.msra.mxu0 0.0
    %428 = vmatprep.subr.mxu0 0.0
    %429 = vmatpush1.msra.mxu0 0.0
    %430 = vmatprep.subr.mxu0 0.0
    %431 = vmatpush1.msra.mxu0 0.0
    %432 = vmatprep.subr.mxu0 0.0
    %433 = vmatpush1.msra.mxu0 0.0
    %434 = vmatprep.subr.mxu0 0.0
    %435 = vmatpush1.msra.mxu0 0.0
    %436 = vmatprep.subr.mxu0 0.0
    %437 = vmatpush1.msra.mxu0 0.0
    %438 = vmatprep.subr.mxu0 0.0
    %439 = vmatpush1.msra.mxu0 0.0
    %440 = vmatprep.subr.mxu0 0.0
    %441 = vmatpush1.msra.mxu0 0.0
    %442 = vmatprep.subr.mxu0 0.0
    %443 = vmatpush1.msra.mxu0 0.0
    %444 = vmatprep.mubr.f32.mxu0 0.0
    %445 = vmatmul.mubr.f32.gmra.mrb[0].mxu0 %v375
    %v446 = vpop.f32.mrb[0].mxu0
    %v447 = vadd.f32 %v373, %v446
    %v448 = vpop.f32.mrb[0].mxu0
    %449 = vmatprep.mubr.f32.mxu0 0.0
    %450 = vmatmul.mubr.f32.gmra.mrb[0].mxu0 %v378
    %v451 = vpop.f32.mrb[0].mxu0
    %v452 = vadd.f32 %v373, %v451
    %v453 = vpop.f32.mrb[0].mxu0
    %454 = vdwg.mxu0
    %v455 = vld [vmem:[#allocation8 + $0x1] sm:$0x1]
    %v456 = vlaneseq
    %v457 = vshrl.u32 %v456, 7
    %v458 = vsub.s32 0, %v457
    %v459 = vrot.slane %v455, %v458
    %464 = vrot.lane.b32.xlu0 %v359, 64
    %v465 = vpop.permute.xlu0 %464
    %466 = vrot.lane.b32.xlu0 %v360, 64
    %v467 = vpop.permute.xlu0 %466
    %468 = vrot.lane.b32.xlu0 %v361, 64
    %v469 = vpop.permute.xlu0 %468
    %470 = vrot.lane.b32.xlu0 %v362, 64
    %v471 = vpop.permute.xlu0 %470
    %v477 = vsel %vm144, %v74, 0
    %v480 = vsel %vm144, %v75, 0
    %482 = vmatprep.subr.mxu0 0.0
    %483 = vmatpush1.msra.mxu0 %v465
    %484 = vmatprep.subr.mxu0 0.0
    %485 = vmatpush1.msra.mxu0 %v467
    %486 = vmatprep.subr.mxu0 0.0
    %487 = vmatpush1.msra.mxu0 %v469
    %488 = vmatprep.subr.mxu0 0.0
    %489 = vmatpush1.msra.mxu0 %v471
    %490 = vmatprep.subr.mxu0 0.0
    %491 = vmatpush1.msra.mxu0 0.0
    %492 = vmatprep.subr.mxu0 0.0
    %493 = vmatpush1.msra.mxu0 0.0
    %494 = vmatprep.subr.mxu0 0.0
    %495 = vmatpush1.msra.mxu0 0.0
    %496 = vmatprep.subr.mxu0 0.0
    %497 = vmatpush1.msra.mxu0 0.0
    %498 = vmatprep.subr.mxu0 0.0
    %499 = vmatpush1.msra.mxu0 0.0
    %500 = vmatprep.subr.mxu0 0.0
    %501 = vmatpush1.msra.mxu0 0.0
    %502 = vmatprep.subr.mxu0 0.0
    %503 = vmatpush1.msra.mxu0 0.0
    %504 = vmatprep.subr.mxu0 0.0
    %505 = vmatpush1.msra.mxu0 0.0
    %506 = vmatprep.subr.mxu0 0.0
    %507 = vmatpush1.msra.mxu0 0.0
    %508 = vmatprep.subr.mxu0 0.0
    %509 = vmatpush1.msra.mxu0 0.0
    %510 = vmatprep.subr.mxu0 0.0
    %511 = vmatpush1.msra.mxu0 0.0
    %512 = vmatprep.subr.mxu0 0.0
    %513 = vmatpush1.msra.mxu0 0.0
    %514 = vmatprep.subr.mxu0 0.0
    %515 = vmatpush1.msra.mxu0 0.0
    %516 = vmatprep.subr.mxu0 0.0
    %517 = vmatpush1.msra.mxu0 0.0
    %518 = vmatprep.subr.mxu0 0.0
    %519 = vmatpush1.msra.mxu0 0.0
    %520 = vmatprep.subr.mxu0 0.0
    %521 = vmatpush1.msra.mxu0 0.0
    %522 = vmatprep.subr.mxu0 0.0
    %523 = vmatpush1.msra.mxu0 0.0
    %524 = vmatprep.subr.mxu0 0.0
    %525 = vmatpush1.msra.mxu0 0.0
    %526 = vmatprep.subr.mxu0 0.0
    %527 = vmatpush1.msra.mxu0 0.0
    %528 = vmatprep.subr.mxu0 0.0
    %529 = vmatpush1.msra.mxu0 0.0
    %530 = vmatprep.subr.mxu0 0.0
    %531 = vmatpush1.msra.mxu0 0.0
    %532 = vmatprep.subr.mxu0 0.0
    %533 = vmatpush1.msra.mxu0 0.0
    %534 = vmatprep.subr.mxu0 0.0
    %535 = vmatpush1.msra.mxu0 0.0
    %536 = vmatprep.subr.mxu0 0.0
    %537 = vmatpush1.msra.mxu0 0.0
    %538 = vmatprep.subr.mxu0 0.0
    %539 = vmatpush1.msra.mxu0 0.0
    %540 = vmatprep.subr.mxu0 0.0
    %541 = vmatpush1.msra.mxu0 0.0
    %542 = vmatprep.subr.mxu0 0.0
    %543 = vmatpush1.msra.mxu0 0.0
    %544 = vmatprep.subr.mxu0 0.0
    %545 = vmatpush1.msra.mxu0 0.0
    %546 = vmatprep.mubr.f32.mxu0 0.0
    %547 = vmatmul.mubr.f32.gmra.mrb[0].mxu0 %v477
    %v548 = vpop.f32.mrb[0].mxu0
    %v549 = vadd.f32 %v459, %v548
    %v550 = vpop.f32.mrb[0].mxu0
    %551 = vmatprep.mubr.f32.mxu0 0.0
    %552 = vmatmul.mubr.f32.gmra.mrb[0].mxu0 %v480
    %v553 = vpop.f32.mrb[0].mxu0
    %v554 = vadd.f32 %v459, %v553
    %v555 = vpop.f32.mrb[0].mxu0
    %556 = vdwg.mxu0
    %v557 = vld [vmem:[#allocation8 + $0x2] sm:$0x1]
    %560 = vrot.lane.b32.xlu0 %v447, 96
    %v561 = vpop.permute.xlu0 %560
    %562 = vrot.lane.b32.xlu0 %v452, 96
    %v563 = vpop.permute.xlu0 %562
    %vm564 = vcmask 64512
    %v565 = vsel %vm564, %v447, 0
    %v567 = vsel %vm564, %v452, 0
    %v569 = vsel %vm564, %v561, 0
    %v571 = vsel %vm564, %v563, 0
    %573 = vmatprep.subr.mxu0 0.0
    %574 = vmatpush1.xpose.msra.mxu0 %v569
    %575 = vmatprep.subr.mxu0 0.0
    %576 = vmatpush1.xpose.msra.mxu0 %v571
    %577 = vmatprep.subr.mxu0 0.0
    %578 = vmatpush1.xpose.msra.mxu0 0.0
    %579 = vmatprep.subr.mxu0 0.0
    %580 = vmatpush1.xpose.msra.mxu0 0.0
    %581 = vmatprep.subr.mxu0 0.0
    %582 = vmatpush1.xpose.msra.mxu0 0.0
    %583 = vmatprep.subr.mxu0 0.0
    %584 = vmatpush1.xpose.msra.mxu0 0.0
    %585 = vmatprep.subr.mxu0 0.0
    %586 = vmatpush1.xpose.msra.mxu0 0.0
    %587 = vmatprep.subr.mxu0 0.0
    %588 = vmatpush1.xpose.msra.mxu0 0.0
    %589 = vmatprep.subr.mxu0 0.0
    %590 = vmatpush1.xpose.msra.mxu0 0.0
    %591 = vmatprep.subr.mxu0 0.0
    %592 = vmatpush1.xpose.msra.mxu0 0.0
    %593 = vmatprep.subr.mxu0 0.0
    %594 = vmatpush1.xpose.msra.mxu0 0.0
    %595 = vmatprep.subr.mxu0 0.0
    %596 = vmatpush1.xpose.msra.mxu0 0.0
    %597 = vmatprep.subr.mxu0 0.0
    %598 = vmatpush1.xpose.msra.mxu0 0.0
    %599 = vmatprep.subr.mxu0 0.0
    %600 = vmatpush1.xpose.msra.mxu0 0.0
    %601 = vmatprep.subr.mxu0 0.0
    %602 = vmatpush1.xpose.msra.mxu0 0.0
    %603 = vmatprep.subr.mxu0 0.0
    %604 = vmatpush1.xpose.msra.mxu0 0.0
    %605 = vmatprep.subr.mxu0 0.0
    %606 = vmatpush1.xpose.msra.mxu0 0.0
    %607 = vmatprep.subr.mxu0 0.0
    %608 = vmatpush1.xpose.msra.mxu0 0.0
    %609 = vmatprep.subr.mxu0 0.0
    %610 = vmatpush1.xpose.msra.mxu0 0.0
    %611 = vmatprep.subr.mxu0 0.0
    %612 = vmatpush1.xpose.msra.mxu0 0.0
    %613 = vmatprep.subr.mxu0 0.0
    %614 = vmatpush1.xpose.msra.mxu0 0.0
    %615 = vmatprep.subr.mxu0 0.0
    %616 = vmatpush1.xpose.msra.mxu0 0.0
    %617 = vmatprep.subr.mxu0 0.0
    %618 = vmatpush1.xpose.msra.mxu0 0.0
    %619 = vmatprep.subr.mxu0 0.0
    %620 = vmatpush1.xpose.msra.mxu0 0.0
    %621 = vmatprep.subr.mxu0 0.0
    %622 = vmatpush1.xpose.msra.mxu0 0.0
    %623 = vmatprep.subr.mxu0 0.0
    %624 = vmatpush1.xpose.msra.mxu0 0.0
    %625 = vmatprep.subr.mxu0 0.0
    %626 = vmatpush1.xpose.msra.mxu0 0.0
    %627 = vmatprep.subr.mxu0 0.0
    %628 = vmatpush1.xpose.msra.mxu0 0.0
    %629 = vmatprep.subr.mxu0 0.0
    %630 = vmatpush1.xpose.msra.mxu0 0.0
    %631 = vmatprep.subr.mxu0 0.0
    %632 = vmatpush1.xpose.msra.mxu0 0.0
    %633 = vmatprep.subr.mxu0 0.0
    %634 = vmatpush1.xpose.msra.mxu0 0.0
    %635 = vmatprep.subr.mxu0 0.0
    %636 = vmatpush1.xpose.msra.mxu0 0.0
    %637 = vmatprep.mubr.f32.mxu0 0.0
    %638 = vmatmul.mubr.f32.gmra.mrb[0].mxu0 %v565
    %v639 = vpop.f32.mrb[0].mxu0
    %v640 = vadd.f32 %v133, %v639
    %v641 = vpop.f32.mrb[0].mxu0
    %642 = vmatprep.mubr.f32.mxu0 0.0
    %643 = vmatmul.mubr.f32.gmra.mrb[0].mxu0 %v567
    %v644 = vpop.f32.mrb[0].mxu0
    %v645 = vadd.f32 %v134, %v644
    %v646 = vpop.f32.mrb[0].mxu0
    %647 = vdwg.mxu0
    %vm648 = vcmask 130048
    %v649 = vsel %vm648, %v640, -inf
    %650 = vmax.xlane.f32.xlu0 %v649
    %v651 = vpop.xlane.xlu0 %650
    %v652 = vsel %vm648, %v645, -inf
    %653 = vmax.xlane.f32.xlu0 %v652
    %v654 = vpop.xlane.xlu0 %653
    %v655 = vsub.f32 %v640, %v651
    %v656 = vsub.f32 %v645, %v654
    %v657 = vmul.f32 %v655, 1.442695
    %v658 = vpow.pop %v657
    %v659 = vmul.f32 %v656, 1.442695
    %v660 = vpow.pop %v659
    %v661 = vsel %vm648, %v658, 0.0
    %662 = vadd.xlane.f32.xlu0 %v661
    %v663 = vpop.xlane.xlu0 %662
    %v664 = vsel %vm648, %v660, 0.0
    %665 = vadd.xlane.f32.xlu0 %v664
    %v666 = vpop.xlane.xlu0 %665
    %v667 = vrcp.pop %v663
    %v668 = vrcp.pop %v666
    %v669 = vmul.f32 %v658, %v667
    %v670 = vmul.f32 %v660, %v668
    %v672 = vsel %vm648, %v669, 0
    %v675 = vsel %vm648, %v670, 0
    %677 = vmatprep.subr.mxu0 0.0
    %678 = vmatpush1.msra.mxu0 %v549
    %679 = vmatprep.subr.mxu0 0.0
    %680 = vmatpush1.msra.mxu0 %v554
    %681 = vmatprep.subr.mxu0 0.0
    %682 = vmatpush1.msra.mxu0 0.0
    %683 = vmatprep.subr.mxu0 0.0
    %684 = vmatpush1.msra.mxu0 0.0
    %685 = vmatprep.subr.mxu0 0.0
    %686 = vmatpush1.msra.mxu0 0.0
    %687 = vmatprep.subr.mxu0 0.0
    %688 = vmatpush1.msra.mxu0 0.0
    %689 = vmatprep.subr.mxu0 0.0
    %690 = vmatpush1.msra.mxu0 0.0
    %691 = vmatprep.subr.mxu0 0.0
    %692 = vmatpush1.msra.mxu0 0.0
    %693 = vmatprep.subr.mxu0 0.0
    %694 = vmatpush1.msra.mxu0 0.0
    %695 = vmatprep.subr.mxu0 0.0
    %696 = vmatpush1.msra.mxu0 0.0
    %697 = vmatprep.subr.mxu0 0.0
    %698 = vmatpush1.msra.mxu0 0.0
    %699 = vmatprep.subr.mxu0 0.0
    %700 = vmatpush1.msra.mxu0 0.0
    %701 = vmatprep.subr.mxu0 0.0
    %702 = vmatpush1.msra.mxu0 0.0
    %703 = vmatprep.subr.mxu0 0.0
    %704 = vmatpush1.msra.mxu0 0.0
    %705 = vmatprep.subr.mxu0 0.0
    %706 = vmatpush1.msra.mxu0 0.0
    %707 = vmatprep.subr.mxu0 0.0
    %708 = vmatpush1.msra.mxu0 0.0
    %709 = vmatprep.subr.mxu0 0.0
    %710 = vmatpush1.msra.mxu0 0.0
    %711 = vmatprep.subr.mxu0 0.0
    %712 = vmatpush1.msra.mxu0 0.0
    %713 = vmatprep.subr.mxu0 0.0
    %714 = vmatpush1.msra.mxu0 0.0
    %715 = vmatprep.subr.mxu0 0.0
    %716 = vmatpush1.msra.mxu0 0.0
    %717 = vmatprep.subr.mxu0 0.0
    %718 = vmatpush1.msra.mxu0 0.0
    %719 = vmatprep.subr.mxu0 0.0
    %720 = vmatpush1.msra.mxu0 0.0
    %721 = vmatprep.subr.mxu0 0.0
    %722 = vmatpush1.msra.mxu0 0.0
    %723 = vmatprep.subr.mxu0 0.0
    %724 = vmatpush1.msra.mxu0 0.0
    %725 = vmatprep.subr.mxu0 0.0
    %726 = vmatpush1.msra.mxu0 0.0
    %727 = vmatprep.subr.mxu0 0.0
    %728 = vmatpush1.msra.mxu0 0.0
    %729 = vmatprep.subr.mxu0 0.0
    %730 = vmatpush1.msra.mxu0 0.0
    %731 = vmatprep.subr.mxu0 0.0
    %732 = vmatpush1.msra.mxu0 0.0
    %733 = vmatprep.subr.mxu0 0.0
    %734 = vmatpush1.msra.mxu0 0.0
    %735 = vmatprep.subr.mxu0 0.0
    %736 = vmatpush1.msra.mxu0 0.0
    %737 = vmatprep.subr.mxu0 0.0
    %738 = vmatpush1.msra.mxu0 0.0
    %739 = vmatprep.subr.mxu0 0.0
    %740 = vmatpush1.msra.mxu0 0.0
    %741 = vmatprep.mubr.f32.mxu0 0.0
    %742 = vmatmul.mubr.f32.gmra.mrb[0].mxu0 %v672
    %v743 = vpop.f32.mrb[0].mxu0
    %v744 = vadd.f32 0.0, %v743
    %v745 = vpop.f32.mrb[0].mxu0
    %746 = vmatprep.mubr.f32.mxu0 0.0
    %747 = vmatmul.mubr.f32.gmra.mrb[0].mxu0 %v675
    %v748 = vpop.f32.mrb[0].mxu0
    %v749 = vadd.f32 0.0, %v748
    %v750 = vpop.f32.mrb[0].mxu0
    %751 = vdwg.mxu0
    %752 = vst.msk [vmem:[#allocation2] sm:$0xff] %vm564, %v744
    %753 = vst.msk [vmem:[#allocation2 + $0x8] sm:$0xff] %vm564, %v749
    %754 = vrot.lane.b32.xlu0 %v447, 120
    %v755 = vpop.permute.xlu0 %754
    %756 = vrot.lane.b32.xlu0 %v452, 120
    %v757 = vpop.permute.xlu0 %756
    %758 = vrot.lane.b32.xlu0 %v447, 88
    %v759 = vpop.permute.xlu0 %758
    %760 = vrot.lane.b32.xlu0 %v452, 88
    %v761 = vpop.permute.xlu0 %760
    %v762 = vsel %vm564, %v755, 0
    %v764 = vsel %vm564, %v757, 0
    %v766 = vsel %vm564, %v759, 0
    %v768 = vsel %vm564, %v761, 0
    %770 = vmatprep.subr.mxu0 0.0
    %771 = vmatpush1.xpose.msra.mxu0 %v766
    %772 = vmatprep.subr.mxu0 0.0
    %773 = vmatpush1.xpose.msra.mxu0 %v768
    %774 = vmatprep.subr.mxu0 0.0
    %775 = vmatpush1.xpose.msra.mxu0 0.0
    %776 = vmatprep.subr.mxu0 0.0
    %777 = vmatpush1.xpose.msra.mxu0 0.0
    %778 = vmatprep.subr.mxu0 0.0
    %779 = vmatpush1.xpose.msra.mxu0 0.0
    %780 = vmatprep.subr.mxu0 0.0
    %781 = vmatpush1.xpose.msra.mxu0 0.0
    %782 = vmatprep.subr.mxu0 0.0
    %783 = vmatpush1.xpose.msra.mxu0 0.0
    %784 = vmatprep.subr.mxu0 0.0
    %785 = vmatpush1.xpose.msra.mxu0 0.0
    %786 = vmatprep.subr.mxu0 0.0
    %787 = vmatpush1.xpose.msra.mxu0 0.0
    %788 = vmatprep.subr.mxu0 0.0
    %789 = vmatpush1.xpose.msra.mxu0 0.0
    %790 = vmatprep.subr.mxu0 0.0
    %791 = vmatpush1.xpose.msra.mxu0 0.0
    %792 = vmatprep.subr.mxu0 0.0
    %793 = vmatpush1.xpose.msra.mxu0 0.0
    %794 = vmatprep.subr.mxu0 0.0
    %795 = vmatpush1.xpose.msra.mxu0 0.0
    %796 = vmatprep.subr.mxu0 0.0
    %797 = vmatpush1.xpose.msra.mxu0 0.0
    %798 = vmatprep.subr.mxu0 0.0
    %799 = vmatpush1.xpose.msra.mxu0 0.0
    %800 = vmatprep.subr.mxu0 0.0
    %801 = vmatpush1.xpose.msra.mxu0 0.0
    %802 = vmatprep.subr.mxu0 0.0
    %803 = vmatpush1.xpose.msra.mxu0 0.0
    %804 = vmatprep.subr.mxu0 0.0
    %805 = vmatpush1.xpose.msra.mxu0 0.0
    %806 = vmatprep.subr.mxu0 0.0
    %807 = vmatpush1.xpose.msra.mxu0 0.0
    %808 = vmatprep.subr.mxu0 0.0
    %809 = vmatpush1.xpose.msra.mxu0 0.0
    %810 = vmatprep.subr.mxu0 0.0
    %811 = vmatpush1.xpose.msra.mxu0 0.0
    %812 = vmatprep.subr.mxu0 0.0
    %813 = vmatpush1.xpose.msra.mxu0 0.0
    %814 = vmatprep.subr.mxu0 0.0
    %815 = vmatpush1.xpose.msra.mxu0 0.0
    %816 = vmatprep.subr.mxu0 0.0
    %817 = vmatpush1.xpose.msra.mxu0 0.0
    %818 = vmatprep.subr.mxu0 0.0
    %819 = vmatpush1.xpose.msra.mxu0 0.0
    %820 = vmatprep.subr.mxu0 0.0
    %821 = vmatpush1.xpose.msra.mxu0 0.0
    %822 = vmatprep.subr.mxu0 0.0
    %823 = vmatpush1.xpose.msra.mxu0 0.0
    %824 = vmatprep.subr.mxu0 0.0
    %825 = vmatpush1.xpose.msra.mxu0 0.0
    %826 = vmatprep.subr.mxu0 0.0
    %827 = vmatpush1.xpose.msra.mxu0 0.0
    %828 = vmatprep.subr.mxu0 0.0
    %829 = vmatpush1.xpose.msra.mxu0 0.0
    %830 = vmatprep.subr.mxu0 0.0
    %831 = vmatpush1.xpose.msra.mxu0 0.0
    %832 = vmatprep.subr.mxu0 0.0
    %833 = vmatpush1.xpose.msra.mxu0 0.0
    %834 = vmatprep.mubr.f32.mxu0 0.0
    %835 = vmatmul.mubr.f32.gmra.mrb[0].mxu0 %v762
    %v836 = vpop.f32.mrb[0].mxu0
    %v837 = vadd.f32 %v133, %v836
    %v838 = vpop.f32.mrb[0].mxu0
    %839 = vmatprep.mubr.f32.mxu0 0.0
    %840 = vmatmul.mubr.f32.gmra.mrb[0].mxu0 %v764
    %v841 = vpop.f32.mrb[0].mxu0
    %v842 = vadd.f32 %v134, %v841
    %v843 = vpop.f32.mrb[0].mxu0
    %844 = vdwg.mxu0
    %v845 = vsel %vm648, %v837, -inf
    %846 = vmax.xlane.f32.xlu0 %v845
    %v847 = vpop.xlane.xlu0 %846
    %v848 = vsel %vm648, %v842, -inf
    %849 = vmax.xlane.f32.xlu0 %v848
    %v850 = vpop.xlane.xlu0 %849
    %v851 = vsub.f32 %v837, %v847
    %v852 = vsub.f32 %v842, %v850
    %v853 = vmul.f32 %v851, 1.442695
    %v854 = vpow.pop %v853
    %v855 = vmul.f32 %v852, 1.442695
    %v856 = vpow.pop %v855
    %v857 = vsel %vm648, %v854, 0.0
    %858 = vadd.xlane.f32.xlu0 %v857
    %v859 = vpop.xlane.xlu0 %858
    %v860 = vsel %vm648, %v856, 0.0
    %861 = vadd.xlane.f32.xlu0 %v860
    %v862 = vpop.xlane.xlu0 %861
    %v863 = vrcp.pop %v859
    %v864 = vrcp.pop %v862
    %v865 = vmul.f32 %v854, %v863
    %v866 = vmul.f32 %v856, %v864
    %869 = vrot.lane.b32.xlu0 %v549, 120
    %v870 = vpop.permute.xlu0 %869
    %871 = vrot.lane.b32.xlu0 %v554, 120
    %v872 = vpop.permute.xlu0 %871
    %v876 = vsel %vm648, %v865, 0
    %v879 = vsel %vm648, %v866, 0
    %881 = vmatprep.subr.mxu0 0.0
    %882 = vmatpush1.msra.mxu0 %v870
    %883 = vmatprep.subr.mxu0 0.0
    %884 = vmatpush1.msra.mxu0 %v872
    %885 = vmatprep.subr.mxu0 0.0
    %886 = vmatpush1.msra.mxu0 0.0
    %887 = vmatprep.subr.mxu0 0.0
    %888 = vmatpush1.msra.mxu0 0.0
    %889 = vmatprep.subr.mxu0 0.0
    %890 = vmatpush1.msra.mxu0 0.0
    %891 = vmatprep.subr.mxu0 0.0
    %892 = vmatpush1.msra.mxu0 0.0
    %893 = vmatprep.subr.mxu0 0.0
    %894 = vmatpush1.msra.mxu0 0.0
    %895 = vmatprep.subr.mxu0 0.0
    %896 = vmatpush1.msra.mxu0 0.0
    %897 = vmatprep.subr.mxu0 0.0
    %898 = vmatpush1.msra.mxu0 0.0
    %899 = vmatprep.subr.mxu0 0.0
    %900 = vmatpush1.msra.mxu0 0.0
    %901 = vmatprep.subr.mxu0 0.0
    %902 = vmatpush1.msra.mxu0 0.0
    %903 = vmatprep.subr.mxu0 0.0
    %904 = vmatpush1.msra.mxu0 0.0
    %905 = vmatprep.subr.mxu0 0.0
    %906 = vmatpush1.msra.mxu0 0.0
    %907 = vmatprep.subr.mxu0 0.0
    %908 = vmatpush1.msra.mxu0 0.0
    %909 = vmatprep.subr.mxu0 0.0
    %910 = vmatpush1.msra.mxu0 0.0
    %911 = vmatprep.subr.mxu0 0.0
    %912 = vmatpush1.msra.mxu0 0.0
    %913 = vmatprep.subr.mxu0 0.0
    %914 = vmatpush1.msra.mxu0 0.0
    %915 = vmatprep.subr.mxu0 0.0
    %916 = vmatpush1.msra.mxu0 0.0
    %917 = vmatprep.subr.mxu0 0.0
    %918 = vmatpush1.msra.mxu0 0.0
    %919 = vmatprep.subr.mxu0 0.0
    %920 = vmatpush1.msra.mxu0 0.0
    %921 = vmatprep.subr.mxu0 0.0
    %922 = vmatpush1.msra.mxu0 0.0
    %923 = vmatprep.subr.mxu0 0.0
    %924 = vmatpush1.msra.mxu0 0.0
    %925 = vmatprep.subr.mxu0 0.0
    %926 = vmatpush1.msra.mxu0 0.0
    %927 = vmatprep.subr.mxu0 0.0
    %928 = vmatpush1.msra.mxu0 0.0
    %929 = vmatprep.subr.mxu0 0.0
    %930 = vmatpush1.msra.mxu0 0.0
    %931 = vmatprep.subr.mxu0 0.0
    %932 = vmatpush1.msra.mxu0 0.0
    %933 = vmatprep.subr.mxu0 0.0
    %934 = vmatpush1.msra.mxu0 0.0
    %935 = vmatprep.subr.mxu0 0.0
    %936 = vmatpush1.msra.mxu0 0.0
    %937 = vmatprep.subr.mxu0 0.0
    %938 = vmatpush1.msra.mxu0 0.0
    %939 = vmatprep.subr.mxu0 0.0
    %940 = vmatpush1.msra.mxu0 0.0
    %941 = vmatprep.subr.mxu0 0.0
    %942 = vmatpush1.msra.mxu0 0.0
    %943 = vmatprep.subr.mxu0 0.0
    %944 = vmatpush1.msra.mxu0 0.0
    %945 = vmatprep.mubr.f32.mxu0 0.0
    %946 = vmatmul.mubr.f32.gmra.mrb[0].mxu0 %v876
    %v947 = vpop.f32.mrb[0].mxu0
    %v948 = vadd.f32 0.0, %v947
    %v949 = vpop.f32.mrb[0].mxu0
    %950 = vmatprep.mubr.f32.mxu0 0.0
    %951 = vmatmul.mubr.f32.gmra.mrb[0].mxu0 %v879
    %v952 = vpop.f32.mrb[0].mxu0
    %v953 = vadd.f32 0.0, %v952
    %v954 = vpop.f32.mrb[0].mxu0
    %955 = vdwg.mxu0
    %958 = vrot.lane.b32.xlu0 %v948, 8
    %v959 = vpop.permute.xlu0 %958
    %960 = vrot.lane.b32.xlu0 %v953, 8
    %v961 = vpop.permute.xlu0 %960
    %vm964 = vcmask 130112
    %965 = vst.msk [vmem:[#allocation2] sm:$0xff] %vm964, %v959
    %966 = vst.msk [vmem:[#allocation2 + $0x8] sm:$0xff] %vm964, %v961
    %967 = vrot.lane.b32.xlu0 %v447, 112
    %v968 = vpop.permute.xlu0 %967
    %969 = vrot.lane.b32.xlu0 %v452, 112
    %v970 = vpop.permute.xlu0 %969
    %971 = vrot.lane.b32.xlu0 %v447, 80
    %v972 = vpop.permute.xlu0 %971
    %973 = vrot.lane.b32.xlu0 %v452, 80
    %v974 = vpop.permute.xlu0 %973
    %v975 = vsel %vm564, %v968, 0
    %v977 = vsel %vm564, %v970, 0
    %v979 = vsel %vm564, %v972, 0
    %v981 = vsel %vm564, %v974, 0
    %983 = vmatprep.subr.mxu0 0.0
    %984 = vmatpush1.xpose.msra.mxu0 %v979
    %985 = vmatprep.subr.mxu0 0.0
    %986 = vmatpush1.xpose.msra.mxu0 %v981
    %987 = vmatprep.subr.mxu0 0.0
    %988 = vmatpush1.xpose.msra.mxu0 0.0
    %989 = vmatprep.subr.mxu0 0.0
    %990 = vmatpush1.xpose.msra.mxu0 0.0
    %991 = vmatprep.subr.mxu0 0.0
    %992 = vmatpush1.xpose.msra.mxu0 0.0
    %993 = vmatprep.subr.mxu0 0.0
    %994 = vmatpush1.xpose.msra.mxu0 0.0
    %995 = vmatprep.subr.mxu0 0.0
    %996 = vmatpush1.xpose.msra.mxu0 0.0
    %997 = vmatprep.subr.mxu0 0.0
    %998 = vmatpush1.xpose.msra.mxu0 0.0
    %999 = vmatprep.subr.mxu0 0.0
    %1000 = vmatpush1.xpose.msra.mxu0 0.0
    %1001 = vmatprep.subr.mxu0 0.0
    %1002 = vmatpush1.xpose.msra.mxu0 0.0
    %1003 = vmatprep.subr.mxu0 0.0
    %1004 = vmatpush1.xpose.msra.mxu0 0.0
    %1005 = vmatprep.subr.mxu0 0.0
    %1006 = vmatpush1.xpose.msra.mxu0 0.0
    %1007 = vmatprep.subr.mxu0 0.0
    %1008 = vmatpush1.xpose.msra.mxu0 0.0
    %1009 = vmatprep.subr.mxu0 0.0
    %1010 = vmatpush1.xpose.msra.mxu0 0.0
    %1011 = vmatprep.subr.mxu0 0.0
    %1012 = vmatpush1.xpose.msra.mxu0 0.0
    %1013 = vmatprep.subr.mxu0 0.0
    %1014 = vmatpush1.xpose.msra.mxu0 0.0
    %1015 = vmatprep.subr.mxu0 0.0
    %1016 = vmatpush1.xpose.msra.mxu0 0.0
    %1017 = vmatprep.subr.mxu0 0.0
    %1018 = vmatpush1.xpose.msra.mxu0 0.0
    %1019 = vmatprep.subr.mxu0 0.0
    %1020 = vmatpush1.xpose.msra.mxu0 0.0
    %1021 = vmatprep.subr.mxu0 0.0
    %1022 = vmatpush1.xpose.msra.mxu0 0.0
    %1023 = vmatprep.subr.mxu0 0.0
    %1024 = vmatpush1.xpose.msra.mxu0 0.0
    %1025 = vmatprep.subr.mxu0 0.0
    %1026 = vmatpush1.xpose.msra.mxu0 0.0
    %1027 = vmatprep.subr.mxu0 0.0
    %1028 = vmatpush1.xpose.msra.mxu0 0.0
    %1029 = vmatprep.subr.mxu0 0.0
    %1030 = vmatpush1.xpose.msra.mxu0 0.0
    %1031 = vmatprep.subr.mxu0 0.0
    %1032 = vmatpush1.xpose.msra.mxu0 0.0
    %1033 = vmatprep.subr.mxu0 0.0
    %1034 = vmatpush1.xpose.msra.mxu0 0.0
    %1035 = vmatprep.subr.mxu0 0.0
    %1036 = vmatpush1.xpose.msra.mxu0 0.0
    %1037 = vmatprep.subr.mxu0 0.0
    %1038 = vmatpush1.xpose.msra.mxu0 0.0
    %1039 = vmatprep.subr.mxu0 0.0
    %1040 = vmatpush1.xpose.msra.mxu0 0.0
    %1041 = vmatprep.subr.mxu0 0.0
    %1042 = vmatpush1.xpose.msra.mxu0 0.0
    %1043 = vmatprep.subr.mxu0 0.0
    %1044 = vmatpush1.xpose.msra.mxu0 0.0
    %1045 = vmatprep.subr.mxu0 0.0
    %1046 = vmatpush1.xpose.msra.mxu0 0.0
    %1047 = vmatprep.mubr.f32.mxu0 0.0
    %1048 = vmatmul.mubr.f32.gmra.mrb[0].mxu0 %v975
    %v1049 = vpop.f32.mrb[0].mxu0
    %v1050 = vadd.f32 %v133, %v1049
    %v1051 = vpop.f32.mrb[0].mxu0
    %1052 = vmatprep.mubr.f32.mxu0 0.0
    %1053 = vmatmul.mubr.f32.gmra.mrb[0].mxu0 %v977
    %v1054 = vpop.f32.mrb[0].mxu0
    %v1055 = vadd.f32 %v134, %v1054
    %v1056 = vpop.f32.mrb[0].mxu0
    %1057 = vdwg.mxu0
    %v1058 = vsel %vm648, %v1050, -inf
    %1059 = vmax.xlane.f32.xlu0 %v1058
    %v1060 = vpop.xlane.xlu0 %1059
    %v1061 = vsel %vm648, %v1055, -inf
    %1062 = vmax.xlane.f32.xlu0 %v1061
    %v1063 = vpop.xlane.xlu0 %1062
    %v1064 = vsub.f32 %v1050, %v1060
    %v1065 = vsub.f32 %v1055, %v1063
    %v1066 = vmul.f32 %v1064, 1.442695
    %v1067 = vpow.pop %v1066
    %v1068 = vmul.f32 %v1065, 1.442695
    %v1069 = vpow.pop %v1068
    %v1070 = vsel %vm648, %v1067, 0.0
    %1071 = vadd.xlane.f32.xlu0 %v1070
    %v1072 = vpop.xlane.xlu0 %1071
    %v1073 = vsel %vm648, %v1069, 0.0
    %1074 = vadd.xlane.f32.xlu0 %v1073
    %v1075 = vpop.xlane.xlu0 %1074
    %v1076 = vrcp.pop %v1072
    %v1077 = vrcp.pop %v1075
    %v1078 = vmul.f32 %v1067, %v1076
    %v1079 = vmul.f32 %v1069, %v1077
    %1080 = vrot.lane.b32.xlu0 %v549, 112
    %v1081 = vpop.permute.xlu0 %1080
    %1082 = vrot.lane.b32.xlu0 %v554, 112
    %v1083 = vpop.permute.xlu0 %1082
    %v1087 = vsel %vm648, %v1078, 0
    %v1090 = vsel %vm648, %v1079, 0
    %1092 = vmatprep.subr.mxu0 0.0
    %1093 = vmatpush1.msra.mxu0 %v1081
    %1094 = vmatprep.subr.mxu0 0.0
    %1095 = vmatpush1.msra.mxu0 %v1083
    %1096 = vmatprep.subr.mxu0 0.0
    %1097 = vmatpush1.msra.mxu0 0.0
    %1098 = vmatprep.subr.mxu0 0.0
    %1099 = vmatpush1.msra.mxu0 0.0
    %1100 = vmatprep.subr.mxu0 0.0
    %1101 = vmatpush1.msra.mxu0 0.0
    %1102 = vmatprep.subr.mxu0 0.0
    %1103 = vmatpush1.msra.mxu0 0.0
    %1104 = vmatprep.subr.mxu0 0.0
    %1105 = vmatpush1.msra.mxu0 0.0
    %1106 = vmatprep.subr.mxu0 0.0
    %1107 = vmatpush1.msra.mxu0 0.0
    %1108 = vmatprep.subr.mxu0 0.0
    %1109 = vmatpush1.msra.mxu0 0.0
    %1110 = vmatprep.subr.mxu0 0.0
    %1111 = vmatpush1.msra.mxu0 0.0
    %1112 = vmatprep.subr.mxu0 0.0
    %1113 = vmatpush1.msra.mxu0 0.0
    %1114 = vmatprep.subr.mxu0 0.0
    %1115 = vmatpush1.msra.mxu0 0.0
    %1116 = vmatprep.subr.mxu0 0.0
    %1117 = vmatpush1.msra.mxu0 0.0
    %1118 = vmatprep.subr.mxu0 0.0
    %1119 = vmatpush1.msra.mxu0 0.0
    %1120 = vmatprep.subr.mxu0 0.0
    %1121 = vmatpush1.msra.mxu0 0.0
    %1122 = vmatprep.subr.mxu0 0.0
    %1123 = vmatpush1.msra.mxu0 0.0
    %1124 = vmatprep.subr.mxu0 0.0
    %1125 = vmatpush1.msra.mxu0 0.0
    %1126 = vmatprep.subr.mxu0 0.0
    %1127 = vmatpush1.msra.mxu0 0.0
    %1128 = vmatprep.subr.mxu0 0.0
    %1129 = vmatpush1.msra.mxu0 0.0
    %1130 = vmatprep.subr.mxu0 0.0
    %1131 = vmatpush1.msra.mxu0 0.0
    %1132 = vmatprep.subr.mxu0 0.0
    %1133 = vmatpush1.msra.mxu0 0.0
    %1134 = vmatprep.subr.mxu0 0.0
    %1135 = vmatpush1.msra.mxu0 0.0
    %1136 = vmatprep.subr.mxu0 0.0
    %1137 = vmatpush1.msra.mxu0 0.0
    %1138 = vmatprep.subr.mxu0 0.0
    %1139 = vmatpush1.msra.mxu0 0.0
    %1140 = vmatprep.subr.mxu0 0.0
    %1141 = vmatpush1.msra.mxu0 0.0
    %1142 = vmatprep.subr.mxu0 0.0
    %1143 = vmatpush1.msra.mxu0 0.0
    %1144 = vmatprep.subr.mxu0 0.0
    %1145 = vmatpush1.msra.mxu0 0.0
    %1146 = vmatprep.subr.mxu0 0.0
    %1147 = vmatpush1.msra.mxu0 0.0
    %1148 = vmatprep.subr.mxu0 0.0
    %1149 = vmatpush1.msra.mxu0 0.0
    %1150 = vmatprep.subr.mxu0 0.0
    %1151 = vmatpush1.msra.mxu0 0.0
    %1152 = vmatprep.subr.mxu0 0.0
    %1153 = vmatpush1.msra.mxu0 0.0
    %1154 = vmatprep.subr.mxu0 0.0
    %1155 = vmatpush1.msra.mxu0 0.0
    %1156 = vmatprep.mubr.f32.mxu0 0.0
    %1157 = vmatmul.mubr.f32.gmra.mrb[0].mxu0 %v1087
    %v1158 = vpop.f32.mrb[0].mxu0
    %v1159 = vadd.f32 0.0, %v1158
    %v1160 = vpop.f32.mrb[0].mxu0
    %1161 = vmatprep.mubr.f32.mxu0 0.0
    %1162 = vmatmul.mubr.f32.gmra.mrb[0].mxu0 %v1090
    %v1163 = vpop.f32.mrb[0].mxu0
    %v1164 = vadd.f32 0.0, %v1163
    %v1165 = vpop.f32.mrb[0].mxu0
    %1166 = vdwg.mxu0
    %1169 = vrot.lane.b32.xlu0 %v1159, 16
    %v1170 = vpop.permute.xlu0 %1169
    %1171 = vrot.lane.b32.xlu0 %v1164, 16
    %v1172 = vpop.permute.xlu0 %1171
    %vm1175 = vcmask 195712
    %1176 = vst.msk [vmem:[#allocation2] sm:$0xff] %vm1175, %v1170
    %1177 = vst.msk [vmem:[#allocation2 + $0x8] sm:$0xff] %vm1175, %v1172
    %1178 = vrot.lane.b32.xlu0 %v447, 104
    %v1179 = vpop.permute.xlu0 %1178
    %1180 = vrot.lane.b32.xlu0 %v452, 104
    %v1181 = vpop.permute.xlu0 %1180
    %1182 = vrot.lane.b32.xlu0 %v447, 72
    %v1183 = vpop.permute.xlu0 %1182
    %1184 = vrot.lane.b32.xlu0 %v452, 72
    %v1185 = vpop.permute.xlu0 %1184
    %v1186 = vsel %vm564, %v1179, 0
    %v1188 = vsel %vm564, %v1181, 0
    %v1190 = vsel %vm564, %v1183, 0
    %v1192 = vsel %vm564, %v1185, 0
    %1194 = vmatprep.subr.mxu0 0.0
    %1195 = vmatpush1.xpose.msra.mxu0 %v1190
    %1196 = vmatprep.subr.mxu0 0.0
    %1197 = vmatpush1.xpose.msra.mxu0 %v1192
    %1198 = vmatprep.subr.mxu0 0.0
    %1199 = vmatpush1.xpose.msra.mxu0 0.0
    %1200 = vmatprep.subr.mxu0 0.0
    %1201 = vmatpush1.xpose.msra.mxu0 0.0
    %1202 = vmatprep.subr.mxu0 0.0
    %1203 = vmatpush1.xpose.msra.mxu0 0.0
    %1204 = vmatprep.subr.mxu0 0.0
    %1205 = vmatpush1.xpose.msra.mxu0 0.0
    %1206 = vmatprep.subr.mxu0 0.0
    %1207 = vmatpush1.xpose.msra.mxu0 0.0
    %1208 = vmatprep.subr.mxu0 0.0
    %1209 = vmatpush1.xpose.msra.mxu0 0.0
    %1210 = vmatprep.subr.mxu0 0.0
    %1211 = vmatpush1.xpose.msra.mxu0 0.0
    %1212 = vmatprep.subr.mxu0 0.0
    %1213 = vmatpush1.xpose.msra.mxu0 0.0
    %1214 = vmatprep.subr.mxu0 0.0
    %1215 = vmatpush1.xpose.msra.mxu0 0.0
    %1216 = vmatprep.subr.mxu0 0.0
    %1217 = vmatpush1.xpose.msra.mxu0 0.0
    %1218 = vmatprep.subr.mxu0 0.0
    %1219 = vmatpush1.xpose.msra.mxu0 0.0
    %1220 = vmatprep.subr.mxu0 0.0
    %1221 = vmatpush1.xpose.msra.mxu0 0.0
    %1222 = vmatprep.subr.mxu0 0.0
    %1223 = vmatpush1.xpose.msra.mxu0 0.0
    %1224 = vmatprep.subr.mxu0 0.0
    %1225 = vmatpush1.xpose.msra.mxu0 0.0
    %1226 = vmatprep.subr.mxu0 0.0
    %1227 = vmatpush1.xpose.msra.mxu0 0.0
    %1228 = vmatprep.subr.mxu0 0.0
    %1229 = vmatpush1.xpose.msra.mxu0 0.0
    %1230 = vmatprep.subr.mxu0 0.0
    %1231 = vmatpush1.xpose.msra.mxu0 0.0
    %1232 = vmatprep.subr.mxu0 0.0
    %1233 = vmatpush1.xpose.msra.mxu0 0.0
    %1234 = vmatprep.subr.mxu0 0.0
    %1235 = vmatpush1.xpose.msra.mxu0 0.0
    %1236 = vmatprep.subr.mxu0 0.0
    %1237 = vmatpush1.xpose.msra.mxu0 0.0
    %1238 = vmatprep.subr.mxu0 0.0
    %1239 = vmatpush1.xpose.msra.mxu0 0.0
    %1240 = vmatprep.subr.mxu0 0.0
    %1241 = vmatpush1.xpose.msra.mxu0 0.0
    %1242 = vmatprep.subr.mxu0 0.0
    %1243 = vmatpush1.xpose.msra.mxu0 0.0
    %1244 = vmatprep.subr.mxu0 0.0
    %1245 = vmatpush1.xpose.msra.mxu0 0.0
    %1246 = vmatprep.subr.mxu0 0.0
    %1247 = vmatpush1.xpose.msra.mxu0 0.0
    %1248 = vmatprep.subr.mxu0 0.0
    %1249 = vmatpush1.xpose.msra.mxu0 0.0
    %1250 = vmatprep.subr.mxu0 0.0
    %1251 = vmatpush1.xpose.msra.mxu0 0.0
    %1252 = vmatprep.subr.mxu0 0.0
    %1253 = vmatpush1.xpose.msra.mxu0 0.0
    %1254 = vmatprep.subr.mxu0 0.0
    %1255 = vmatpush1.xpose.msra.mxu0 0.0
    %1256 = vmatprep.subr.mxu0 0.0
    %1257 = vmatpush1.xpose.msra.mxu0 0.0
    %1258 = vmatprep.mubr.f32.mxu0 0.0
    %1259 = vmatmul.mubr.f32.gmra.mrb[0].mxu0 %v1186
    %v1260 = vpop.f32.mrb[0].mxu0
    %v1261 = vadd.f32 %v133, %v1260
    %v1262 = vpop.f32.mrb[0].mxu0
    %1263 = vmatprep.mubr.f32.mxu0 0.0
    %1264 = vmatmul.mubr.f32.gmra.mrb[0].mxu0 %v1188
    %v1265 = vpop.f32.mrb[0].mxu0
    %v1266 = vadd.f32 %v134, %v1265
    %v1267 = vpop.f32.mrb[0].mxu0
    %1268 = vdwg.mxu0
    %v1269 = vsel %vm648, %v1261, -inf
    %1270 = vmax.xlane.f32.xlu0 %v1269
    %v1271 = vpop.xlane.xlu0 %1270
    %v1272 = vsel %vm648, %v1266, -inf
    %1273 = vmax.xlane.f32.xlu0 %v1272
    %v1274 = vpop.xlane.xlu0 %1273
    %v1275 = vsub.f32 %v1261, %v1271
    %v1276 = vsub.f32 %v1266, %v1274
    %v1277 = vmul.f32 %v1275, 1.442695
    %v1278 = vpow.pop %v1277
    %v1279 = vmul.f32 %v1276, 1.442695
    %v1280 = vpow.pop %v1279
    %v1281 = vsel %vm648, %v1278, 0.0
    %1282 = vadd.xlane.f32.xlu0 %v1281
    %v1283 = vpop.xlane.xlu0 %1282
    %v1284 = vsel %vm648, %v1280, 0.0
    %1285 = vadd.xlane.f32.xlu0 %v1284
    %v1286 = vpop.xlane.xlu0 %1285
    %v1287 = vrcp.pop %v1283
    %v1288 = vrcp.pop %v1286
    %v1289 = vmul.f32 %v1278, %v1287
    %v1290 = vmul.f32 %v1280, %v1288
    %1291 = vrot.lane.b32.xlu0 %v549, 104
    %v1292 = vpop.permute.xlu0 %1291
    %1293 = vrot.lane.b32.xlu0 %v554, 104
    %v1294 = vpop.permute.xlu0 %1293
    %v1298 = vsel %vm648, %v1289, 0
    %v1301 = vsel %vm648, %v1290, 0
    %1303 = vmatprep.subr.mxu0 0.0
    %1304 = vmatpush1.msra.mxu0 %v1292
    %1305 = vmatprep.subr.mxu0 0.0
    %1306 = vmatpush1.msra.mxu0 %v1294
    %1307 = vmatprep.subr.mxu0 0.0
    %1308 = vmatpush1.msra.mxu0 0.0
    %1309 = vmatprep.subr.mxu0 0.0
    %1310 = vmatpush1.msra.mxu0 0.0
    %1311 = vmatprep.subr.mxu0 0.0
    %1312 = vmatpush1.msra.mxu0 0.0
    %1313 = vmatprep.subr.mxu0 0.0
    %1314 = vmatpush1.msra.mxu0 0.0
    %1315 = vmatprep.subr.mxu0 0.0
    %1316 = vmatpush1.msra.mxu0 0.0
    %1317 = vmatprep.subr.mxu0 0.0
    %1318 = vmatpush1.msra.mxu0 0.0
    %1319 = vmatprep.subr.mxu0 0.0
    %1320 = vmatpush1.msra.mxu0 0.0
    %1321 = vmatprep.subr.mxu0 0.0
    %1322 = vmatpush1.msra.mxu0 0.0
    %1323 = vmatprep.subr.mxu0 0.0
    %1324 = vmatpush1.msra.mxu0 0.0
    %1325 = vmatprep.subr.mxu0 0.0
    %1326 = vmatpush1.msra.mxu0 0.0
    %1327 = vmatprep.subr.mxu0 0.0
    %1328 = vmatpush1.msra.mxu0 0.0
    %1329 = vmatprep.subr.mxu0 0.0
    %1330 = vmatpush1.msra.mxu0 0.0
    %1331 = vmatprep.subr.mxu0 0.0
    %1332 = vmatpush1.msra.mxu0 0.0
    %1333 = vmatprep.subr.mxu0 0.0
    %1334 = vmatpush1.msra.mxu0 0.0
    %1335 = vmatprep.subr.mxu0 0.0
    %1336 = vmatpush1.msra.mxu0 0.0
    %1337 = vmatprep.subr.mxu0 0.0
    %1338 = vmatpush1.msra.mxu0 0.0
    %1339 = vmatprep.subr.mxu0 0.0
    %1340 = vmatpush1.msra.mxu0 0.0
    %1341 = vmatprep.subr.mxu0 0.0
    %1342 = vmatpush1.msra.mxu0 0.0
    %1343 = vmatprep.subr.mxu0 0.0
    %1344 = vmatpush1.msra.mxu0 0.0
    %1345 = vmatprep.subr.mxu0 0.0
    %1346 = vmatpush1.msra.mxu0 0.0
    %1347 = vmatprep.subr.mxu0 0.0
    %1348 = vmatpush1.msra.mxu0 0.0
    %1349 = vmatprep.subr.mxu0 0.0
    %1350 = vmatpush1.msra.mxu0 0.0
    %1351 = vmatprep.subr.mxu0 0.0
    %1352 = vmatpush1.msra.mxu0 0.0
    %1353 = vmatprep.subr.mxu0 0.0
    %1354 = vmatpush1.msra.mxu0 0.0
    %1355 = vmatprep.subr.mxu0 0.0
    %1356 = vmatpush1.msra.mxu0 0.0
    %1357 = vmatprep.subr.mxu0 0.0
    %1358 = vmatpush1.msra.mxu0 0.0
    %1359 = vmatprep.subr.mxu0 0.0
    %1360 = vmatpush1.msra.mxu0 0.0
    %1361 = vmatprep.subr.mxu0 0.0
    %1362 = vmatpush1.msra.mxu0 0.0
    %1363 = vmatprep.subr.mxu0 0.0
    %1364 = vmatpush1.msra.mxu0 0.0
    %1365 = vmatprep.subr.mxu0 0.0
    %1366 = vmatpush1.msra.mxu0 0.0
    %1367 = vmatprep.mubr.f32.mxu0 0.0
    %1368 = vmatmul.mubr.f32.gmra.mrb[0].mxu0 %v1298
    %v1369 = vpop.f32.mrb[0].mxu0
    %v1370 = vadd.f32 0.0, %v1369
    %v1371 = vpop.f32.mrb[0].mxu0
    %1372 = vmatprep.mubr.f32.mxu0 0.0
    %1373 = vmatmul.mubr.f32.gmra.mrb[0].mxu0 %v1301
    %v1374 = vpop.f32.mrb[0].mxu0
    %v1375 = vadd.f32 0.0, %v1374
    %v1376 = vpop.f32.mrb[0].mxu0
    %1377 = vdwg.mxu0
    %1380 = vrot.lane.b32.xlu0 %v1370, 24
    %v1381 = vpop.permute.xlu0 %1380
    %1382 = vrot.lane.b32.xlu0 %v1375, 24
    %v1383 = vpop.permute.xlu0 %1382
    %vm1386 = vcmask 261312
    %1387 = vst.msk [vmem:[#allocation2] sm:$0xff] %vm1386, %v1381
    %1388 = vst.msk [vmem:[#allocation2 + $0x8] sm:$0xff] %vm1386, %v1383
    %v1389 = vld [vmem:[#allocation2] sm:$0xff]
    %v1390 = vld [vmem:[#allocation2 + $0x8] sm:$0xff]
    %v1391 = vlaneseq
    %v1392 = vshrl.u32 %v1391, 7
    %v1393 = vsub.s32 0, %v1392
    %v1394 = vrot.slane %v557, %v1393
    %1395 = vrot.lane.b32.xlu0 %v359, 32
    %v1396 = vpop.permute.xlu0 %1395
    %1397 = vrot.lane.b32.xlu0 %v360, 32
    %v1398 = vpop.permute.xlu0 %1397
    %1399 = vrot.lane.b32.xlu0 %v361, 32
    %v1400 = vpop.permute.xlu0 %1399
    %1401 = vrot.lane.b32.xlu0 %v362, 32
    %v1402 = vpop.permute.xlu0 %1401
    %v1408 = vsel %vm144, %v1389, 0
    %v1411 = vsel %vm144, %v1390, 0
    %1413 = vmatprep.subr.mxu0 0.0
    %1414 = vmatpush1.msra.mxu0 %v1396
    %1415 = vmatprep.subr.mxu0 0.0
    %1416 = vmatpush1.msra.mxu0 %v1398
    %1417 = vmatprep.subr.mxu0 0.0
    %1418 = vmatpush1.msra.mxu0 %v1400
    %1419 = vmatprep.subr.mxu0 0.0
    %1420 = vmatpush1.msra.mxu0 %v1402
    %1421 = vmatprep.subr.mxu0 0.0
    %1422 = vmatpush1.msra.mxu0 0.0
    %1423 = vmatprep.subr.mxu0 0.0
    %1424 = vmatpush1.msra.mxu0 0.0
    %1425 = vmatprep.subr.mxu0 0.0
    %1426 = vmatpush1.msra.mxu0 0.0
    %1427 = vmatprep.subr.mxu0 0.0
    %1428 = vmatpush1.msra.mxu0 0.0
    %1429 = vmatprep.subr.mxu0 0.0
    %1430 = vmatpush1.msra.mxu0 0.0
    %1431 = vmatprep.subr.mxu0 0.0
    %1432 = vmatpush1.msra.mxu0 0.0
    %1433 = vmatprep.subr.mxu0 0.0
    %1434 = vmatpush1.msra.mxu0 0.0
    %1435 = vmatprep.subr.mxu0 0.0
    %1436 = vmatpush1.msra.mxu0 0.0
    %1437 = vmatprep.subr.mxu0 0.0
    %1438 = vmatpush1.msra.mxu0 0.0
    %1439 = vmatprep.subr.mxu0 0.0
    %1440 = vmatpush1.msra.mxu0 0.0
    %1441 = vmatprep.subr.mxu0 0.0
    %1442 = vmatpush1.msra.mxu0 0.0
    %1443 = vmatprep.subr.mxu0 0.0
    %1444 = vmatpush1.msra.mxu0 0.0
    %1445 = vmatprep.subr.mxu0 0.0
    %1446 = vmatpush1.msra.mxu0 0.0
    %1447 = vmatprep.subr.mxu0 0.0
    %1448 = vmatpush1.msra.mxu0 0.0
    %1449 = vmatprep.subr.mxu0 0.0
    %1450 = vmatpush1.msra.mxu0 0.0
    %1451 = vmatprep.subr.mxu0 0.0
    %1452 = vmatpush1.msra.mxu0 0.0
    %1453 = vmatprep.subr.mxu0 0.0
    %1454 = vmatpush1.msra.mxu0 0.0
    %1455 = vmatprep.subr.mxu0 0.0
    %1456 = vmatpush1.msra.mxu0 0.0
    %1457 = vmatprep.subr.mxu0 0.0
    %1458 = vmatpush1.msra.mxu0 0.0
    %1459 = vmatprep.subr.mxu0 0.0
    %1460 = vmatpush1.msra.mxu0 0.0
    %1461 = vmatprep.subr.mxu0 0.0
    %1462 = vmatpush1.msra.mxu0 0.0
    %1463 = vmatprep.subr.mxu0 0.0
    %1464 = vmatpush1.msra.mxu0 0.0
    %1465 = vmatprep.subr.mxu0 0.0
    %1466 = vmatpush1.msra.mxu0 0.0
    %1467 = vmatprep.subr.mxu0 0.0
    %1468 = vmatpush1.msra.mxu0 0.0
    %1469 = vmatprep.subr.mxu0 0.0
    %1470 = vmatpush1.msra.mxu0 0.0
    %1471 = vmatprep.subr.mxu0 0.0
    %1472 = vmatpush1.msra.mxu0 0.0
    %1473 = vmatprep.subr.mxu0 0.0
    %1474 = vmatpush1.msra.mxu0 0.0
    %1475 = vmatprep.subr.mxu0 0.0
    %1476 = vmatpush1.msra.mxu0 0.0
    %1477 = vmatprep.mubr.f32.mxu0 0.0
    %1478 = vmatmul.mubr.f32.gmra.mrb[0].mxu0 %v1408
    %v1479 = vpop.f32.mrb[0].mxu0
    %v1480 = vadd.f32 %v1394, %v1479
    %v1481 = vpop.f32.mrb[0].mxu0
    %1482 = vmatprep.mubr.f32.mxu0 0.0
    %1483 = vmatmul.mubr.f32.gmra.mrb[0].mxu0 %v1411
    %v1484 = vpop.f32.mrb[0].mxu0
    %v1485 = vadd.f32 %v1394, %v1484
    %v1486 = vpop.f32.mrb[0].mxu0
    %1487 = vdwg.mxu0
    %v1488 = vadd.f32 %v74, %v1480
    %v1489 = vadd.f32 %v75, %v1485
    %v1490 = vld [vmem:[#allocation8 + $0x7] sm:$0x1]
    %v1491 = vld [vmem:[#allocation8 + $0x8] sm:$0x1]
    %v1492 = vsel %vm144, %v1488, 0.0
    %1493 = vadd.xlane.f32.xlu0 %v1492
    %v1494 = vpop.xlane.xlu0 %1493
    %v1495 = vsel %vm144, %v1489, 0.0
    %1496 = vadd.xlane.f32.xlu0 %v1495
    %v1497 = vpop.xlane.xlu0 %1496
    %v1498 = vrcp.pop 32.0
    %v1499 = vmul.f32 %v1494, %v1498
    %v1500 = vmul.f32 %v1497, %v1498
    %v1501 = vsub.f32 %v1488, %v1499
    %v1502 = vsub.f32 %v1489, %v1500
    %v1503 = vmul.f32 %v1501, %v1501
    %v1504 = vmul.f32 %v1502, %v1502
    %v1505 = vsel %vm144, %v1503, 0.0
    %1506 = vadd.xlane.f32.xlu0 %v1505
    %v1507 = vpop.xlane.xlu0 %1506
    %v1508 = vsel %vm144, %v1504, 0.0
    %1509 = vadd.xlane.f32.xlu0 %v1508
    %v1510 = vpop.xlane.xlu0 %1509
    %v1511 = vmul.f32 %v1507, %v1498
    %v1512 = vmul.f32 %v1510, %v1498
    %v1513 = vadd.f32 %v1511, 1e-05
    %v1514 = vadd.f32 %v1512, 1e-05
    %v1515 = vrsqrt.pop %v1513
    %v1516 = vrsqrt.pop %v1514
    %v1517 = vmul.f32 %v1501, %v1515
    %v1518 = vmul.f32 %v1502, %v1516
    %v1519 = vlaneseq
    %v1520 = vshrl.u32 %v1519, 7
    %v1521 = vsub.s32 0, %v1520
    %v1522 = vrot.slane %v1490, %v1521
    %v1523 = vmul.f32 %v1517, %v1522
    %v1524 = vmul.f32 %v1518, %v1522
    %v1525 = vlaneseq
    %v1526 = vshrl.u32 %v1525, 7
    %v1527 = vsub.s32 0, %v1526
    %v1528 = vrot.slane %v1491, %v1527
    %v1529 = vadd.f32 %v1523, %v1528
    %v1530 = vadd.f32 %v1524, %v1528
    %v1531 = vadd.f32 %v1529, %v76
    %v1532 = vadd.f32 %v1530, %v77
    %v1533 = vld [vmem:[#allocation8 + $0x3] sm:$0x1]
    %v1534 = vlaneseq
    %v1535 = vshrl.u32 %v1534, 7
    %v1536 = vsub.s32 0, %v1535
    %v1537 = vrot.slane %v1533, %v1536
    %v1539 = vsel %vm144, %v1531, 0
    %v1542 = vsel %vm144, %v1532, 0
    %1544 = vmatprep.subr.mxu0 0.0
    %1545 = vmatpush1.msra.mxu0 %v363
    %1546 = vmatprep.subr.mxu0 0.0
    %1547 = vmatpush1.msra.mxu0 %v364
    %1548 = vmatprep.subr.mxu0 0.0
    %1549 = vmatpush1.msra.mxu0 %v365
    %1550 = vmatprep.subr.mxu0 0.0
    %1551 = vmatpush1.msra.mxu0 %v366
    %1552 = vmatprep.subr.mxu0 0.0
    %1553 = vmatpush1.msra.mxu0 0.0
    %1554 = vmatprep.subr.mxu0 0.0
    %1555 = vmatpush1.msra.mxu0 0.0
    %1556 = vmatprep.subr.mxu0 0.0
    %1557 = vmatpush1.msra.mxu0 0.0
    %1558 = vmatprep.subr.mxu0 0.0
    %1559 = vmatpush1.msra.mxu0 0.0
    %1560 = vmatprep.subr.mxu0 0.0
    %1561 = vmatpush1.msra.mxu0 0.0
    %1562 = vmatprep.subr.mxu0 0.0
    %1563 = vmatpush1.msra.mxu0 0.0
    %1564 = vmatprep.subr.mxu0 0.0
    %1565 = vmatpush1.msra.mxu0 0.0
    %1566 = vmatprep.subr.mxu0 0.0
    %1567 = vmatpush1.msra.mxu0 0.0
    %1568 = vmatprep.subr.mxu0 0.0
    %1569 = vmatpush1.msra.mxu0 0.0
    %1570 = vmatprep.subr.mxu0 0.0
    %1571 = vmatpush1.msra.mxu0 0.0
    %1572 = vmatprep.subr.mxu0 0.0
    %1573 = vmatpush1.msra.mxu0 0.0
    %1574 = vmatprep.subr.mxu0 0.0
    %1575 = vmatpush1.msra.mxu0 0.0
    %1576 = vmatprep.subr.mxu0 0.0
    %1577 = vmatpush1.msra.mxu0 0.0
    %1578 = vmatprep.subr.mxu0 0.0
    %1579 = vmatpush1.msra.mxu0 0.0
    %1580 = vmatprep.subr.mxu0 0.0
    %1581 = vmatpush1.msra.mxu0 0.0
    %1582 = vmatprep.subr.mxu0 0.0
    %1583 = vmatpush1.msra.mxu0 0.0
    %1584 = vmatprep.subr.mxu0 0.0
    %1585 = vmatpush1.msra.mxu0 0.0
    %1586 = vmatprep.subr.mxu0 0.0
    %1587 = vmatpush1.msra.mxu0 0.0
    %1588 = vmatprep.subr.mxu0 0.0
    %1589 = vmatpush1.msra.mxu0 0.0
    %1590 = vmatprep.subr.mxu0 0.0
    %1591 = vmatpush1.msra.mxu0 0.0
    %1592 = vmatprep.subr.mxu0 0.0
    %1593 = vmatpush1.msra.mxu0 0.0
    %1594 = vmatprep.subr.mxu0 0.0
    %1595 = vmatpush1.msra.mxu0 0.0
    %1596 = vmatprep.subr.mxu0 0.0
    %1597 = vmatpush1.msra.mxu0 0.0
    %1598 = vmatprep.subr.mxu0 0.0
    %1599 = vmatpush1.msra.mxu0 0.0
    %1600 = vmatprep.subr.mxu0 0.0
    %1601 = vmatpush1.msra.mxu0 0.0
    %1602 = vmatprep.subr.mxu0 0.0
    %1603 = vmatpush1.msra.mxu0 0.0
    %1604 = vmatprep.subr.mxu0 0.0
    %1605 = vmatpush1.msra.mxu0 0.0
    %1606 = vmatprep.subr.mxu0 0.0
    %1607 = vmatpush1.msra.mxu0 0.0
    %1608 = vmatprep.mubr.f32.mxu0 0.0
    %1609 = vmatmul.mubr.f32.gmra.mrb[0].mxu0 %v1539
    %v1610 = vpop.f32.mrb[0].mxu0
    %v1611 = vadd.f32 %v1537, %v1610
    %v1612 = vpop.f32.mrb[0].mxu0
    %1613 = vmatprep.mubr.f32.mxu0 0.0
    %1614 = vmatmul.mubr.f32.gmra.mrb[0].mxu0 %v1542
    %v1615 = vpop.f32.mrb[0].mxu0
    %v1616 = vadd.f32 %v1537, %v1615
    %v1617 = vpop.f32.mrb[0].mxu0
    %1618 = vdwg.mxu0
    %v1619 = vld [vmem:[#allocation8 + $0x4] sm:$0x1]
    %v1621 = vsel %vm564, %v1611, 0
    %v1624 = vsel %vm564, %v1616, 0
    %v1627 = vsel %vm564, %v224, 0
    %v1630 = vsel %vm564, %v229, 0
    %v1633 = vsel %vm564, %v234, 0
    %v1636 = vsel %vm564, %v239, 0
    %1638 = vmatprep.subr.mxu0 0.0
    %1639 = vmatpush1.xpose.msra.mxu0 %v1627
    %1640 = vmatprep.subr.mxu0 0.0
    %1641 = vmatpush1.xpose.msra.mxu0 %v1630
    %1642 = vmatprep.subr.mxu0 0.0
    %1643 = vmatpush1.xpose.msra.mxu0 %v1633
    %1644 = vmatprep.subr.mxu0 0.0
    %1645 = vmatpush1.xpose.msra.mxu0 %v1636
    %1646 = vmatprep.subr.mxu0 0.0
    %1647 = vmatpush1.xpose.msra.mxu0 0.0
    %1648 = vmatprep.subr.mxu0 0.0
    %1649 = vmatpush1.xpose.msra.mxu0 0.0
    %1650 = vmatprep.subr.mxu0 0.0
    %1651 = vmatpush1.xpose.msra.mxu0 0.0
    %1652 = vmatprep.subr.mxu0 0.0
    %1653 = vmatpush1.xpose.msra.mxu0 0.0
    %1654 = vmatprep.subr.mxu0 0.0
    %1655 = vmatpush1.xpose.msra.mxu0 0.0
    %1656 = vmatprep.subr.mxu0 0.0
    %1657 = vmatpush1.xpose.msra.mxu0 0.0
    %1658 = vmatprep.subr.mxu0 0.0
    %1659 = vmatpush1.xpose.msra.mxu0 0.0
    %1660 = vmatprep.subr.mxu0 0.0
    %1661 = vmatpush1.xpose.msra.mxu0 0.0
    %1662 = vmatprep.subr.mxu0 0.0
    %1663 = vmatpush1.xpose.msra.mxu0 0.0
    %1664 = vmatprep.subr.mxu0 0.0
    %1665 = vmatpush1.xpose.msra.mxu0 0.0
    %1666 = vmatprep.subr.mxu0 0.0
    %1667 = vmatpush1.xpose.msra.mxu0 0.0
    %1668 = vmatprep.subr.mxu0 0.0
    %1669 = vmatpush1.xpose.msra.mxu0 0.0
    %1670 = vmatprep.subr.mxu0 0.0
    %1671 = vmatpush1.xpose.msra.mxu0 0.0
    %1672 = vmatprep.subr.mxu0 0.0
    %1673 = vmatpush1.xpose.msra.mxu0 0.0
    %1674 = vmatprep.subr.mxu0 0.0
    %1675 = vmatpush1.xpose.msra.mxu0 0.0
    %1676 = vmatprep.subr.mxu0 0.0
    %1677 = vmatpush1.xpose.msra.mxu0 0.0
    %1678 = vmatprep.subr.mxu0 0.0
    %1679 = vmatpush1.xpose.msra.mxu0 0.0
    %1680 = vmatprep.subr.mxu0 0.0
    %1681 = vmatpush1.xpose.msra.mxu0 0.0
    %1682 = vmatprep.subr.mxu0 0.0
    %1683 = vmatpush1.xpose.msra.mxu0 0.0
    %1684 = vmatprep.subr.mxu0 0.0
    %1685 = vmatpush1.xpose.msra.mxu0 0.0
    %1686 = vmatprep.subr.mxu0 0.0
    %1687 = vmatpush1.xpose.msra.mxu0 0.0
    %1688 = vmatprep.subr.mxu0 0.0
    %1689 = vmatpush1.xpose.msra.mxu0 0.0
    %1690 = vmatprep.subr.mxu0 0.0
    %1691 = vmatpush1.xpose.msra.mxu0 0.0
    %1692 = vmatprep.subr.mxu0 0.0
    %1693 = vmatpush1.xpose.msra.mxu0 0.0
    %1694 = vmatprep.subr.mxu0 0.0
    %1695 = vmatpush1.xpose.msra.mxu0 0.0
    %1696 = vmatprep.subr.mxu0 0.0
    %1697 = vmatpush1.xpose.msra.mxu0 0.0
    %1698 = vmatprep.subr.mxu0 0.0
    %1699 = vmatpush1.xpose.msra.mxu0 0.0
    %1700 = vmatprep.subr.mxu0 0.0
    %1701 = vmatpush1.xpose.msra.mxu0 0.0
    %1702 = vmatprep.mubr.f32.mxu0 0.0
    %1703 = vmatmul.mubr.f32.gmra.mrb[0].mxu0 %v1621
    %v1704 = vpop.f32.mrb[0].mxu0
    %v1705 = vadd.f32 %v133, %v1704
    %v1706 = vpop.f32.mrb[0].mxu0
    %1707 = vmatprep.mubr.f32.mxu0 0.0
    %1708 = vmatmul.mubr.f32.gmra.mrb[0].mxu0 %v1624
    %v1709 = vpop.f32.mrb[0].mxu0
    %v1710 = vadd.f32 %v134, %v1709
    %v1711 = vpop.f32.mrb[0].mxu0
    %1712 = vdwg.mxu0
    %v1713 = vsel %vm144, %v1705, -inf
    %1714 = vmax.xlane.f32.xlu0 %v1713
    %v1715 = vpop.xlane.xlu0 %1714
    %v1716 = vsel %vm144, %v1710, -inf
    %1717 = vmax.xlane.f32.xlu0 %v1716
    %v1718 = vpop.xlane.xlu0 %1717
    %v1719 = vsub.f32 %v1705, %v1715
    %v1720 = vsub.f32 %v1710, %v1718
    %v1721 = vmul.f32 %v1719, 1.442695
    %v1722 = vpow.pop %v1721
    %v1723 = vmul.f32 %v1720, 1.442695
    %v1724 = vpow.pop %v1723
    %v1725 = vsel %vm144, %v1722, 0.0
    %1726 = vadd.xlane.f32.xlu0 %v1725
    %v1727 = vpop.xlane.xlu0 %1726
    %v1728 = vsel %vm144, %v1724, 0.0
    %1729 = vadd.xlane.f32.xlu0 %v1728
    %v1730 = vpop.xlane.xlu0 %1729
    %v1731 = vrcp.pop %v1727
    %v1732 = vrcp.pop %v1730
    %v1733 = vmul.f32 %v1722, %v1731
    %v1734 = vmul.f32 %v1724, %v1732
    %v1736 = vsel %vm144, %v1733, 0
    %v1739 = vsel %vm144, %v1734, 0
    %1741 = vmatprep.subr.mxu0 0.0
    %1742 = vmatpush1.msra.mxu0 %v341
    %1743 = vmatprep.subr.mxu0 0.0
    %1744 = vmatpush1.msra.mxu0 %v346
    %1745 = vmatprep.subr.mxu0 0.0
    %1746 = vmatpush1.msra.mxu0 %v351
    %1747 = vmatprep.subr.mxu0 0.0
    %1748 = vmatpush1.msra.mxu0 %v356
    %1749 = vmatprep.subr.mxu0 0.0
    %1750 = vmatpush1.msra.mxu0 0.0
    %1751 = vmatprep.subr.mxu0 0.0
    %1752 = vmatpush1.msra.mxu0 0.0
    %1753 = vmatprep.subr.mxu0 0.0
    %1754 = vmatpush1.msra.mxu0 0.0
    %1755 = vmatprep.subr.mxu0 0.0
    %1756 = vmatpush1.msra.mxu0 0.0
    %1757 = vmatprep.subr.mxu0 0.0
    %1758 = vmatpush1.msra.mxu0 0.0
    %1759 = vmatprep.subr.mxu0 0.0
    %1760 = vmatpush1.msra.mxu0 0.0
    %1761 = vmatprep.subr.mxu0 0.0
    %1762 = vmatpush1.msra.mxu0 0.0
    %1763 = vmatprep.subr.mxu0 0.0
    %1764 = vmatpush1.msra.mxu0 0.0
    %1765 = vmatprep.subr.mxu0 0.0
    %1766 = vmatpush1.msra.mxu0 0.0
    %1767 = vmatprep.subr.mxu0 0.0
    %1768 = vmatpush1.msra.mxu0 0.0
    %1769 = vmatprep.subr.mxu0 0.0
    %1770 = vmatpush1.msra.mxu0 0.0
    %1771 = vmatprep.subr.mxu0 0.0
    %1772 = vmatpush1.msra.mxu0 0.0
    %1773 = vmatprep.subr.mxu0 0.0
    %1774 = vmatpush1.msra.mxu0 0.0
    %1775 = vmatprep.subr.mxu0 0.0
    %1776 = vmatpush1.msra.mxu0 0.0
    %1777 = vmatprep.subr.mxu0 0.0
    %1778 = vmatpush1.msra.mxu0 0.0
    %1779 = vmatprep.subr.mxu0 0.0
    %1780 = vmatpush1.msra.mxu0 0.0
    %1781 = vmatprep.subr.mxu0 0.0
    %1782 = vmatpush1.msra.mxu0 0.0
    %1783 = vmatprep.subr.mxu0 0.0
    %1784 = vmatpush1.msra.mxu0 0.0
    %1785 = vmatprep.subr.mxu0 0.0
    %1786 = vmatpush1.msra.mxu0 0.0
    %1787 = vmatprep.subr.mxu0 0.0
    %1788 = vmatpush1.msra.mxu0 0.0
    %1789 = vmatprep.subr.mxu0 0.0
    %1790 = vmatpush1.msra.mxu0 0.0
    %1791 = vmatprep.subr.mxu0 0.0
    %1792 = vmatpush1.msra.mxu0 0.0
    %1793 = vmatprep.subr.mxu0 0.0
    %1794 = vmatpush1.msra.mxu0 0.0
    %1795 = vmatprep.subr.mxu0 0.0
    %1796 = vmatpush1.msra.mxu0 0.0
    %1797 = vmatprep.subr.mxu0 0.0
    %1798 = vmatpush1.msra.mxu0 0.0
    %1799 = vmatprep.subr.mxu0 0.0
    %1800 = vmatpush1.msra.mxu0 0.0
    %1801 = vmatprep.subr.mxu0 0.0
    %1802 = vmatpush1.msra.mxu0 0.0
    %1803 = vmatprep.subr.mxu0 0.0
    %1804 = vmatpush1.msra.mxu0 0.0
    %1805 = vmatprep.mubr.f32.mxu0 0.0
    %1806 = vmatmul.mubr.f32.gmra.mrb[0].mxu0 %v1736
    %v1807 = vpop.f32.mrb[0].mxu0
    %v1808 = vadd.f32 0.0, %v1807
    %v1809 = vpop.f32.mrb[0].mxu0
    %1810 = vmatprep.mubr.f32.mxu0 0.0
    %1811 = vmatmul.mubr.f32.gmra.mrb[0].mxu0 %v1739
    %v1812 = vpop.f32.mrb[0].mxu0
    %v1813 = vadd.f32 0.0, %v1812
    %v1814 = vpop.f32.mrb[0].mxu0
    %1815 = vdwg.mxu0
    %1816 = vst.msk [vmem:[#allocation2] sm:$0xff] %vm564, %v1808
    %1817 = vst.msk [vmem:[#allocation2 + $0x8] sm:$0xff] %vm564, %v1813
    %1818 = vrot.lane.b32.xlu0 %v1611, 120
    %v1819 = vpop.permute.xlu0 %1818
    %1820 = vrot.lane.b32.xlu0 %v1616, 120
    %v1821 = vpop.permute.xlu0 %1820
    %1822 = vrot.lane.b32.xlu0 %v224, 120
    %v1823 = vpop.permute.xlu0 %1822
    %1824 = vrot.lane.b32.xlu0 %v229, 120
    %v1825 = vpop.permute.xlu0 %1824
    %1826 = vrot.lane.b32.xlu0 %v234, 120
    %v1827 = vpop.permute.xlu0 %1826
    %1828 = vrot.lane.b32.xlu0 %v239, 120
    %v1829 = vpop.permute.xlu0 %1828
    %v1830 = vsel %vm564, %v1819, 0
    %v1832 = vsel %vm564, %v1821, 0
    %v1834 = vsel %vm564, %v1823, 0
    %v1836 = vsel %vm564, %v1825, 0
    %v1838 = vsel %vm564, %v1827, 0
    %v1840 = vsel %vm564, %v1829, 0
    %1842 = vmatprep.subr.mxu0 0.0
    %1843 = vmatpush1.xpose.msra.mxu0 %v1834
    %1844 = vmatprep.subr.mxu0 0.0
    %1845 = vmatpush1.xpose.msra.mxu0 %v1836
    %1846 = vmatprep.subr.mxu0 0.0
    %1847 = vmatpush1.xpose.msra.mxu0 %v1838
    %1848 = vmatprep.subr.mxu0 0.0
    %1849 = vmatpush1.xpose.msra.mxu0 %v1840
    %1850 = vmatprep.subr.mxu0 0.0
    %1851 = vmatpush1.xpose.msra.mxu0 0.0
    %1852 = vmatprep.subr.mxu0 0.0
    %1853 = vmatpush1.xpose.msra.mxu0 0.0
    %1854 = vmatprep.subr.mxu0 0.0
    %1855 = vmatpush1.xpose.msra.mxu0 0.0
    %1856 = vmatprep.subr.mxu0 0.0
    %1857 = vmatpush1.xpose.msra.mxu0 0.0
    %1858 = vmatprep.subr.mxu0 0.0
    %1859 = vmatpush1.xpose.msra.mxu0 0.0
    %1860 = vmatprep.subr.mxu0 0.0
    %1861 = vmatpush1.xpose.msra.mxu0 0.0
    %1862 = vmatprep.subr.mxu0 0.0
    %1863 = vmatpush1.xpose.msra.mxu0 0.0
    %1864 = vmatprep.subr.mxu0 0.0
    %1865 = vmatpush1.xpose.msra.mxu0 0.0
    %1866 = vmatprep.subr.mxu0 0.0
    %1867 = vmatpush1.xpose.msra.mxu0 0.0
    %1868 = vmatprep.subr.mxu0 0.0
    %1869 = vmatpush1.xpose.msra.mxu0 0.0
    %1870 = vmatprep.subr.mxu0 0.0
    %1871 = vmatpush1.xpose.msra.mxu0 0.0
    %1872 = vmatprep.subr.mxu0 0.0
    %1873 = vmatpush1.xpose.msra.mxu0 0.0
    %1874 = vmatprep.subr.mxu0 0.0
    %1875 = vmatpush1.xpose.msra.mxu0 0.0
    %1876 = vmatprep.subr.mxu0 0.0
    %1877 = vmatpush1.xpose.msra.mxu0 0.0
    %1878 = vmatprep.subr.mxu0 0.0
    %1879 = vmatpush1.xpose.msra.mxu0 0.0
    %1880 = vmatprep.subr.mxu0 0.0
    %1881 = vmatpush1.xpose.msra.mxu0 0.0
    %1882 = vmatprep.subr.mxu0 0.0
    %1883 = vmatpush1.xpose.msra.mxu0 0.0
    %1884 = vmatprep.subr.mxu0 0.0
    %1885 = vmatpush1.xpose.msra.mxu0 0.0
    %1886 = vmatprep.subr.mxu0 0.0
    %1887 = vmatpush1.xpose.msra.mxu0 0.0
    %1888 = vmatprep.subr.mxu0 0.0
    %1889 = vmatpush1.xpose.msra.mxu0 0.0
    %1890 = vmatprep.subr.mxu0 0.0
    %1891 = vmatpush1.xpose.msra.mxu0 0.0
    %1892 = vmatprep.subr.mxu0 0.0
    %1893 = vmatpush1.xpose.msra.mxu0 0.0
    %1894 = vmatprep.subr.mxu0 0.0
    %1895 = vmatpush1.xpose.msra.mxu0 0.0
    %1896 = vmatprep.subr.mxu0 0.0
    %1897 = vmatpush1.xpose.msra.mxu0 0.0
    %1898 = vmatprep.subr.mxu0 0.0
    %1899 = vmatpush1.xpose.msra.mxu0 0.0
    %1900 = vmatprep.subr.mxu0 0.0
    %1901 = vmatpush1.xpose.msra.mxu0 0.0
    %1902 = vmatprep.subr.mxu0 0.0
    %1903 = vmatpush1.xpose.msra.mxu0 0.0
    %1904 = vmatprep.subr.mxu0 0.0
    %1905 = vmatpush1.xpose.msra.mxu0 0.0
    %1906 = vmatprep.mubr.f32.mxu0 0.0
    %1907 = vmatmul.mubr.f32.gmra.mrb[0].mxu0 %v1830
    %v1908 = vpop.f32.mrb[0].mxu0
    %v1909 = vadd.f32 %v133, %v1908
    %v1910 = vpop.f32.mrb[0].mxu0
    %1911 = vmatprep.mubr.f32.mxu0 0.0
    %1912 = vmatmul.mubr.f32.gmra.mrb[0].mxu0 %v1832
    %v1913 = vpop.f32.mrb[0].mxu0
    %v1914 = vadd.f32 %v134, %v1913
    %v1915 = vpop.f32.mrb[0].mxu0
    %1916 = vdwg.mxu0
    %v1917 = vsel %vm144, %v1909, -inf
    %1918 = vmax.xlane.f32.xlu0 %v1917
    %v1919 = vpop.xlane.xlu0 %1918
    %v1920 = vsel %vm144, %v1914, -inf
    %1921 = vmax.xlane.f32.xlu0 %v1920
    %v1922 = vpop.xlane.xlu0 %1921
    %v1923 = vsub.f32 %v1909, %v1919
    %v1924 = vsub.f32 %v1914, %v1922
    %v1925 = vmul.f32 %v1923, 1.442695
    %v1926 = vpow.pop %v1925
    %v1927 = vmul.f32 %v1924, 1.442695
    %v1928 = vpow.pop %v1927
    %v1929 = vsel %vm144, %v1926, 0.0
    %1930 = vadd.xlane.f32.xlu0 %v1929
    %v1931 = vpop.xlane.xlu0 %1930
    %v1932 = vsel %vm144, %v1928, 0.0
    %1933 = vadd.xlane.f32.xlu0 %v1932
    %v1934 = vpop.xlane.xlu0 %1933
    %v1935 = vrcp.pop %v1931
    %v1936 = vrcp.pop %v1934
    %v1937 = vmul.f32 %v1926, %v1935
    %v1938 = vmul.f32 %v1928, %v1936
    %1943 = vrot.lane.b32.xlu0 %v341, 120
    %v1944 = vpop.permute.xlu0 %1943
    %1945 = vrot.lane.b32.xlu0 %v346, 120
    %v1946 = vpop.permute.xlu0 %1945
    %1947 = vrot.lane.b32.xlu0 %v351, 120
    %v1948 = vpop.permute.xlu0 %1947
    %1949 = vrot.lane.b32.xlu0 %v356, 120
    %v1950 = vpop.permute.xlu0 %1949
    %v1956 = vsel %vm144, %v1937, 0
    %v1959 = vsel %vm144, %v1938, 0
    %1961 = vmatprep.subr.mxu0 0.0
    %1962 = vmatpush1.msra.mxu0 %v1944
    %1963 = vmatprep.subr.mxu0 0.0
    %1964 = vmatpush1.msra.mxu0 %v1946
    %1965 = vmatprep.subr.mxu0 0.0
    %1966 = vmatpush1.msra.mxu0 %v1948
    %1967 = vmatprep.subr.mxu0 0.0
    %1968 = vmatpush1.msra.mxu0 %v1950
    %1969 = vmatprep.subr.mxu0 0.0
    %1970 = vmatpush1.msra.mxu0 0.0
    %1971 = vmatprep.subr.mxu0 0.0
    %1972 = vmatpush1.msra.mxu0 0.0
    %1973 = vmatprep.subr.mxu0 0.0
    %1974 = vmatpush1.msra.mxu0 0.0
    %1975 = vmatprep.subr.mxu0 0.0
    %1976 = vmatpush1.msra.mxu0 0.0
    %1977 = vmatprep.subr.mxu0 0.0
    %1978 = vmatpush1.msra.mxu0 0.0
    %1979 = vmatprep.subr.mxu0 0.0
    %1980 = vmatpush1.msra.mxu0 0.0
    %1981 = vmatprep.subr.mxu0 0.0
    %1982 = vmatpush1.msra.mxu0 0.0
    %1983 = vmatprep.subr.mxu0 0.0
    %1984 = vmatpush1.msra.mxu0 0.0
    %1985 = vmatprep.subr.mxu0 0.0
    %1986 = vmatpush1.msra.mxu0 0.0
    %1987 = vmatprep.subr.mxu0 0.0
    %1988 = vmatpush1.msra.mxu0 0.0
    %1989 = vmatprep.subr.mxu0 0.0
    %1990 = vmatpush1.msra.mxu0 0.0
    %1991 = vmatprep.subr.mxu0 0.0
    %1992 = vmatpush1.msra.mxu0 0.0
    %1993 = vmatprep.subr.mxu0 0.0
    %1994 = vmatpush1.msra.mxu0 0.0
    %1995 = vmatprep.subr.mxu0 0.0
    %1996 = vmatpush1.msra.mxu0 0.0
    %1997 = vmatprep.subr.mxu0 0.0
    %1998 = vmatpush1.msra.mxu0 0.0
    %1999 = vmatprep.subr.mxu0 0.0
    %2000 = vmatpush1.msra.mxu0 0.0
    %2001 = vmatprep.subr.mxu0 0.0
    %2002 = vmatpush1.msra.mxu0 0.0
    %2003 = vmatprep.subr.mxu0 0.0
    %2004 = vmatpush1.msra.mxu0 0.0
    %2005 = vmatprep.subr.mxu0 0.0
    %2006 = vmatpush1.msra.mxu0 0.0
    %2007 = vmatprep.subr.mxu0 0.0
    %2008 = vmatpush1.msra.mxu0 0.0
    %2009 = vmatprep.subr.mxu0 0.0
    %2010 = vmatpush1.msra.mxu0 0.0
    %2011 = vmatprep.subr.mxu0 0.0
    %2012 = vmatpush1.msra.mxu0 0.0
    %2013 = vmatprep.subr.mxu0 0.0
    %2014 = vmatpush1.msra.mxu0 0.0
    %2015 = vmatprep.subr.mxu0 0.0
    %2016 = vmatpush1.msra.mxu0 0.0
    %2017 = vmatprep.subr.mxu0 0.0
    %2018 = vmatpush1.msra.mxu0 0.0
    %2019 = vmatprep.subr.mxu0 0.0
    %2020 = vmatpush1.msra.mxu0 0.0
    %2021 = vmatprep.subr.mxu0 0.0
    %2022 = vmatpush1.msra.mxu0 0.0
    %2023 = vmatprep.subr.mxu0 0.0
    %2024 = vmatpush1.msra.mxu0 0.0
    %2025 = vmatprep.mubr.f32.mxu0 0.0
    %2026 = vmatmul.mubr.f32.gmra.mrb[0].mxu0 %v1956
    %v2027 = vpop.f32.mrb[0].mxu0
    %v2028 = vadd.f32 0.0, %v2027
    %v2029 = vpop.f32.mrb[0].mxu0
    %2030 = vmatprep.mubr.f32.mxu0 0.0
    %2031 = vmatmul.mubr.f32.gmra.mrb[0].mxu0 %v1959
    %v2032 = vpop.f32.mrb[0].mxu0
    %v2033 = vadd.f32 0.0, %v2032
    %v2034 = vpop.f32.mrb[0].mxu0
    %2035 = vdwg.mxu0
    %2038 = vrot.lane.b32.xlu0 %v2028, 8
    %v2039 = vpop.permute.xlu0 %2038
    %2040 = vrot.lane.b32.xlu0 %v2033, 8
    %v2041 = vpop.permute.xlu0 %2040
    %2044 = vst.msk [vmem:[#allocation2] sm:$0xff] %vm964, %v2039
    %2045 = vst.msk [vmem:[#allocation2 + $0x8] sm:$0xff] %vm964, %v2041
    %2046 = vrot.lane.b32.xlu0 %v1611, 112
    %v2047 = vpop.permute.xlu0 %2046
    %2048 = vrot.lane.b32.xlu0 %v1616, 112
    %v2049 = vpop.permute.xlu0 %2048
    %2050 = vrot.lane.b32.xlu0 %v224, 112
    %v2051 = vpop.permute.xlu0 %2050
    %2052 = vrot.lane.b32.xlu0 %v229, 112
    %v2053 = vpop.permute.xlu0 %2052
    %2054 = vrot.lane.b32.xlu0 %v234, 112
    %v2055 = vpop.permute.xlu0 %2054
    %2056 = vrot.lane.b32.xlu0 %v239, 112
    %v2057 = vpop.permute.xlu0 %2056
    %v2058 = vsel %vm564, %v2047, 0
    %v2060 = vsel %vm564, %v2049, 0
    %v2062 = vsel %vm564, %v2051, 0
    %v2064 = vsel %vm564, %v2053, 0
    %v2066 = vsel %vm564, %v2055, 0
    %v2068 = vsel %vm564, %v2057, 0
    %2070 = vmatprep.subr.mxu0 0.0
    %2071 = vmatpush1.xpose.msra.mxu0 %v2062
    %2072 = vmatprep.subr.mxu0 0.0
    %2073 = vmatpush1.xpose.msra.mxu0 %v2064
    %2074 = vmatprep.subr.mxu0 0.0
    %2075 = vmatpush1.xpose.msra.mxu0 %v2066
    %2076 = vmatprep.subr.mxu0 0.0
    %2077 = vmatpush1.xpose.msra.mxu0 %v2068
    %2078 = vmatprep.subr.mxu0 0.0
    %2079 = vmatpush1.xpose.msra.mxu0 0.0
    %2080 = vmatprep.subr.mxu0 0.0
    %2081 = vmatpush1.xpose.msra.mxu0 0.0
    %2082 = vmatprep.subr.mxu0 0.0
    %2083 = vmatpush1.xpose.msra.mxu0 0.0
    %2084 = vmatprep.subr.mxu0 0.0
    %2085 = vmatpush1.xpose.msra.mxu0 0.0
    %2086 = vmatprep.subr.mxu0 0.0
    %2087 = vmatpush1.xpose.msra.mxu0 0.0
    %2088 = vmatprep.subr.mxu0 0.0
    %2089 = vmatpush1.xpose.msra.mxu0 0.0
    %2090 = vmatprep.subr.mxu0 0.0
    %2091 = vmatpush1.xpose.msra.mxu0 0.0
    %2092 = vmatprep.subr.mxu0 0.0
    %2093 = vmatpush1.xpose.msra.mxu0 0.0
    %2094 = vmatprep.subr.mxu0 0.0
    %2095 = vmatpush1.xpose.msra.mxu0 0.0
    %2096 = vmatprep.subr.mxu0 0.0
    %2097 = vmatpush1.xpose.msra.mxu0 0.0
    %2098 = vmatprep.subr.mxu0 0.0
    %2099 = vmatpush1.xpose.msra.mxu0 0.0
    %2100 = vmatprep.subr.mxu0 0.0
    %2101 = vmatpush1.xpose.msra.mxu0 0.0
    %2102 = vmatprep.subr.mxu0 0.0
    %2103 = vmatpush1.xpose.msra.mxu0 0.0
    %2104 = vmatprep.subr.mxu0 0.0
    %2105 = vmatpush1.xpose.msra.mxu0 0.0
    %2106 = vmatprep.subr.mxu0 0.0
    %2107 = vmatpush1.xpose.msra.mxu0 0.0
    %2108 = vmatprep.subr.mxu0 0.0
    %2109 = vmatpush1.xpose.msra.mxu0 0.0
    %2110 = vmatprep.subr.mxu0 0.0
    %2111 = vmatpush1.xpose.msra.mxu0 0.0
    %2112 = vmatprep.subr.mxu0 0.0
    %2113 = vmatpush1.xpose.msra.mxu0 0.0
    %2114 = vmatprep.subr.mxu0 0.0
    %2115 = vmatpush1.xpose.msra.mxu0 0.0
    %2116 = vmatprep.subr.mxu0 0.0
    %2117 = vmatpush1.xpose.msra.mxu0 0.0
    %2118 = vmatprep.subr.mxu0 0.0
    %2119 = vmatpush1.xpose.msra.mxu0 0.0
    %2120 = vmatprep.subr.mxu0 0.0
    %2121 = vmatpush1.xpose.msra.mxu0 0.0
    %2122 = vmatprep.subr.mxu0 0.0
    %2123 = vmatpush1.xpose.msra.mxu0 0.0
    %2124 = vmatprep.subr.mxu0 0.0
    %2125 = vmatpush1.xpose.msra.mxu0 0.0
    %2126 = vmatprep.subr.mxu0 0.0
    %2127 = vmatpush1.xpose.msra.mxu0 0.0
    %2128 = vmatprep.subr.mxu0 0.0
    %2129 = vmatpush1.xpose.msra.mxu0 0.0
    %2130 = vmatprep.subr.mxu0 0.0
    %2131 = vmatpush1.xpose.msra.mxu0 0.0
    %2132 = vmatprep.subr.mxu0 0.0
    %2133 = vmatpush1.xpose.msra.mxu0 0.0
    %2134 = vmatprep.mubr.f32.mxu0 0.0
    %2135 = vmatmul.mubr.f32.gmra.mrb[0].mxu0 %v2058
    %v2136 = vpop.f32.mrb[0].mxu0
    %v2137 = vadd.f32 %v133, %v2136
    %v2138 = vpop.f32.mrb[0].mxu0
    %2139 = vmatprep.mubr.f32.mxu0 0.0
    %2140 = vmatmul.mubr.f32.gmra.mrb[0].mxu0 %v2060
    %v2141 = vpop.f32.mrb[0].mxu0
    %v2142 = vadd.f32 %v134, %v2141
    %v2143 = vpop.f32.mrb[0].mxu0
    %2144 = vdwg.mxu0
    %v2145 = vsel %vm144, %v2137, -inf
    %2146 = vmax.xlane.f32.xlu0 %v2145
    %v2147 = vpop.xlane.xlu0 %2146
    %v2148 = vsel %vm144, %v2142, -inf
    %2149 = vmax.xlane.f32.xlu0 %v2148
    %v2150 = vpop.xlane.xlu0 %2149
    %v2151 = vsub.f32 %v2137, %v2147
    %v2152 = vsub.f32 %v2142, %v2150
    %v2153 = vmul.f32 %v2151, 1.442695
    %v2154 = vpow.pop %v2153
    %v2155 = vmul.f32 %v2152, 1.442695
    %v2156 = vpow.pop %v2155
    %v2157 = vsel %vm144, %v2154, 0.0
    %2158 = vadd.xlane.f32.xlu0 %v2157
    %v2159 = vpop.xlane.xlu0 %2158
    %v2160 = vsel %vm144, %v2156, 0.0
    %2161 = vadd.xlane.f32.xlu0 %v2160
    %v2162 = vpop.xlane.xlu0 %2161
    %v2163 = vrcp.pop %v2159
    %v2164 = vrcp.pop %v2162
    %v2165 = vmul.f32 %v2154, %v2163
    %v2166 = vmul.f32 %v2156, %v2164
    %2167 = vrot.lane.b32.xlu0 %v341, 112
    %v2168 = vpop.permute.xlu0 %2167
    %2169 = vrot.lane.b32.xlu0 %v346, 112
    %v2170 = vpop.permute.xlu0 %2169
    %2171 = vrot.lane.b32.xlu0 %v351, 112
    %v2172 = vpop.permute.xlu0 %2171
    %2173 = vrot.lane.b32.xlu0 %v356, 112
    %v2174 = vpop.permute.xlu0 %2173
    %v2180 = vsel %vm144, %v2165, 0
    %v2183 = vsel %vm144, %v2166, 0
    %2185 = vmatprep.subr.mxu0 0.0
    %2186 = vmatpush1.msra.mxu0 %v2168
    %2187 = vmatprep.subr.mxu0 0.0
    %2188 = vmatpush1.msra.mxu0 %v2170
    %2189 = vmatprep.subr.mxu0 0.0
    %2190 = vmatpush1.msra.mxu0 %v2172
    %2191 = vmatprep.subr.mxu0 0.0
    %2192 = vmatpush1.msra.mxu0 %v2174
    %2193 = vmatprep.subr.mxu0 0.0
    %2194 = vmatpush1.msra.mxu0 0.0
    %2195 = vmatprep.subr.mxu0 0.0
    %2196 = vmatpush1.msra.mxu0 0.0
    %2197 = vmatprep.subr.mxu0 0.0
    %2198 = vmatpush1.msra.mxu0 0.0
    %2199 = vmatprep.subr.mxu0 0.0
    %2200 = vmatpush1.msra.mxu0 0.0
    %2201 = vmatprep.subr.mxu0 0.0
    %2202 = vmatpush1.msra.mxu0 0.0
    %2203 = vmatprep.subr.mxu0 0.0
    %2204 = vmatpush1.msra.mxu0 0.0
    %2205 = vmatprep.subr.mxu0 0.0
    %2206 = vmatpush1.msra.mxu0 0.0
    %2207 = vmatprep.subr.mxu0 0.0
    %2208 = vmatpush1.msra.mxu0 0.0
    %2209 = vmatprep.subr.mxu0 0.0
    %2210 = vmatpush1.msra.mxu0 0.0
    %2211 = vmatprep.subr.mxu0 0.0
    %2212 = vmatpush1.msra.mxu0 0.0
    %2213 = vmatprep.subr.mxu0 0.0
    %2214 = vmatpush1.msra.mxu0 0.0
    %2215 = vmatprep.subr.mxu0 0.0
    %2216 = vmatpush1.msra.mxu0 0.0
    %2217 = vmatprep.subr.mxu0 0.0
    %2218 = vmatpush1.msra.mxu0 0.0
    %2219 = vmatprep.subr.mxu0 0.0
    %2220 = vmatpush1.msra.mxu0 0.0
    %2221 = vmatprep.subr.mxu0 0.0
    %2222 = vmatpush1.msra.mxu0 0.0
    %2223 = vmatprep.subr.mxu0 0.0
    %2224 = vmatpush1.msra.mxu0 0.0
    %2225 = vmatprep.subr.mxu0 0.0
    %2226 = vmatpush1.msra.mxu0 0.0
    %2227 = vmatprep.subr.mxu0 0.0
    %2228 = vmatpush1.msra.mxu0 0.0
    %2229 = vmatprep.subr.mxu0 0.0
    %2230 = vmatpush1.msra.mxu0 0.0
    %2231 = vmatprep.subr.mxu0 0.0
    %2232 = vmatpush1.msra.mxu0 0.0
    %2233 = vmatprep.subr.mxu0 0.0
    %2234 = vmatpush1.msra.mxu0 0.0
    %2235 = vmatprep.subr.mxu0 0.0
    %2236 = vmatpush1.msra.mxu0 0.0
    %2237 = vmatprep.subr.mxu0 0.0
    %2238 = vmatpush1.msra.mxu0 0.0
    %2239 = vmatprep.subr.mxu0 0.0
    %2240 = vmatpush1.msra.mxu0 0.0
    %2241 = vmatprep.subr.mxu0 0.0
    %2242 = vmatpush1.msra.mxu0 0.0
    %2243 = vmatprep.subr.mxu0 0.0
    %2244 = vmatpush1.msra.mxu0 0.0
    %2245 = vmatprep.subr.mxu0 0.0
    %2246 = vmatpush1.msra.mxu0 0.0
    %2247 = vmatprep.subr.mxu0 0.0
    %2248 = vmatpush1.msra.mxu0 0.0
    %2249 = vmatprep.mubr.f32.mxu0 0.0
    %2250 = vmatmul.mubr.f32.gmra.mrb[0].mxu0 %v2180
    %v2251 = vpop.f32.mrb[0].mxu0
    %v2252 = vadd.f32 0.0, %v2251
    %v2253 = vpop.f32.mrb[0].mxu0
    %2254 = vmatprep.mubr.f32.mxu0 0.0
    %2255 = vmatmul.mubr.f32.gmra.mrb[0].mxu0 %v2183
    %v2256 = vpop.f32.mrb[0].mxu0
    %v2257 = vadd.f32 0.0, %v2256
    %v2258 = vpop.f32.mrb[0].mxu0
    %2259 = vdwg.mxu0
    %2262 = vrot.lane.b32.xlu0 %v2252, 16
    %v2263 = vpop.permute.xlu0 %2262
    %2264 = vrot.lane.b32.xlu0 %v2257, 16
    %v2265 = vpop.permute.xlu0 %2264
    %2268 = vst.msk [vmem:[#allocation2] sm:$0xff] %vm1175, %v2263
    %2269 = vst.msk [vmem:[#allocation2 + $0x8] sm:$0xff] %vm1175, %v2265
    %2270 = vrot.lane.b32.xlu0 %v1611, 104
    %v2271 = vpop.permute.xlu0 %2270
    %2272 = vrot.lane.b32.xlu0 %v1616, 104
    %v2273 = vpop.permute.xlu0 %2272
    %2274 = vrot.lane.b32.xlu0 %v224, 104
    %v2275 = vpop.permute.xlu0 %2274
    %2276 = vrot.lane.b32.xlu0 %v229, 104
    %v2277 = vpop.permute.xlu0 %2276
    %2278 = vrot.lane.b32.xlu0 %v234, 104
    %v2279 = vpop.permute.xlu0 %2278
    %2280 = vrot.lane.b32.xlu0 %v239, 104
    %v2281 = vpop.permute.xlu0 %2280
    %v2282 = vsel %vm564, %v2271, 0
    %v2284 = vsel %vm564, %v2273, 0
    %v2286 = vsel %vm564, %v2275, 0
    %v2288 = vsel %vm564, %v2277, 0
    %v2290 = vsel %vm564, %v2279, 0
    %v2292 = vsel %vm564, %v2281, 0
    %2294 = vmatprep.subr.mxu0 0.0
    %2295 = vmatpush1.xpose.msra.mxu0 %v2286
    %2296 = vmatprep.subr.mxu0 0.0
    %2297 = vmatpush1.xpose.msra.mxu0 %v2288
    %2298 = vmatprep.subr.mxu0 0.0
    %2299 = vmatpush1.xpose.msra.mxu0 %v2290
    %2300 = vmatprep.subr.mxu0 0.0
    %2301 = vmatpush1.xpose.msra.mxu0 %v2292
    %2302 = vmatprep.subr.mxu0 0.0
    %2303 = vmatpush1.xpose.msra.mxu0 0.0
    %2304 = vmatprep.subr.mxu0 0.0
    %2305 = vmatpush1.xpose.msra.mxu0 0.0
    %2306 = vmatprep.subr.mxu0 0.0
    %2307 = vmatpush1.xpose.msra.mxu0 0.0
    %2308 = vmatprep.subr.mxu0 0.0
    %2309 = vmatpush1.xpose.msra.mxu0 0.0
    %2310 = vmatprep.subr.mxu0 0.0
    %2311 = vmatpush1.xpose.msra.mxu0 0.0
    %2312 = vmatprep.subr.mxu0 0.0
    %2313 = vmatpush1.xpose.msra.mxu0 0.0
    %2314 = vmatprep.subr.mxu0 0.0
    %2315 = vmatpush1.xpose.msra.mxu0 0.0
    %2316 = vmatprep.subr.mxu0 0.0
    %2317 = vmatpush1.xpose.msra.mxu0 0.0
    %2318 = vmatprep.subr.mxu0 0.0
    %2319 = vmatpush1.xpose.msra.mxu0 0.0
    %2320 = vmatprep.subr.mxu0 0.0
    %2321 = vmatpush1.xpose.msra.mxu0 0.0
    %2322 = vmatprep.subr.mxu0 0.0
    %2323 = vmatpush1.xpose.msra.mxu0 0.0
    %2324 = vmatprep.subr.mxu0 0.0
    %2325 = vmatpush1.xpose.msra.mxu0 0.0
    %2326 = vmatprep.subr.mxu0 0.0
    %2327 = vmatpush1.xpose.msra.mxu0 0.0
    %2328 = vmatprep.subr.mxu0 0.0
    %2329 = vmatpush1.xpose.msra.mxu0 0.0
    %2330 = vmatprep.subr.mxu0 0.0
    %2331 = vmatpush1.xpose.msra.mxu0 0.0
    %2332 = vmatprep.subr.mxu0 0.0
    %2333 = vmatpush1.xpose.msra.mxu0 0.0
    %2334 = vmatprep.subr.mxu0 0.0
    %2335 = vmatpush1.xpose.msra.mxu0 0.0
    %2336 = vmatprep.subr.mxu0 0.0
    %2337 = vmatpush1.xpose.msra.mxu0 0.0
    %2338 = vmatprep.subr.mxu0 0.0
    %2339 = vmatpush1.xpose.msra.mxu0 0.0
    %2340 = vmatprep.subr.mxu0 0.0
    %2341 = vmatpush1.xpose.msra.mxu0 0.0
    %2342 = vmatprep.subr.mxu0 0.0
    %2343 = vmatpush1.xpose.msra.mxu0 0.0
    %2344 = vmatprep.subr.mxu0 0.0
    %2345 = vmatpush1.xpose.msra.mxu0 0.0
    %2346 = vmatprep.subr.mxu0 0.0
    %2347 = vmatpush1.xpose.msra.mxu0 0.0
    %2348 = vmatprep.subr.mxu0 0.0
    %2349 = vmatpush1.xpose.msra.mxu0 0.0
    %2350 = vmatprep.subr.mxu0 0.0
    %2351 = vmatpush1.xpose.msra.mxu0 0.0
    %2352 = vmatprep.subr.mxu0 0.0
    %2353 = vmatpush1.xpose.msra.mxu0 0.0
    %2354 = vmatprep.subr.mxu0 0.0
    %2355 = vmatpush1.xpose.msra.mxu0 0.0
    %2356 = vmatprep.subr.mxu0 0.0
    %2357 = vmatpush1.xpose.msra.mxu0 0.0
    %2358 = vmatprep.mubr.f32.mxu0 0.0
    %2359 = vmatmul.mubr.f32.gmra.mrb[0].mxu0 %v2282
    %v2360 = vpop.f32.mrb[0].mxu0
    %v2361 = vadd.f32 %v133, %v2360
    %v2362 = vpop.f32.mrb[0].mxu0
    %2363 = vmatprep.mubr.f32.mxu0 0.0
    %2364 = vmatmul.mubr.f32.gmra.mrb[0].mxu0 %v2284
    %v2365 = vpop.f32.mrb[0].mxu0
    %v2366 = vadd.f32 %v134, %v2365
    %v2367 = vpop.f32.mrb[0].mxu0
    %2368 = vdwg.mxu0
    %v2369 = vsel %vm144, %v2361, -inf
    %2370 = vmax.xlane.f32.xlu0 %v2369
    %v2371 = vpop.xlane.xlu0 %2370
    %v2372 = vsel %vm144, %v2366, -inf
    %2373 = vmax.xlane.f32.xlu0 %v2372
    %v2374 = vpop.xlane.xlu0 %2373
    %v2375 = vsub.f32 %v2361, %v2371
    %v2376 = vsub.f32 %v2366, %v2374
    %v2377 = vmul.f32 %v2375, 1.442695
    %v2378 = vpow.pop %v2377
    %v2379 = vmul.f32 %v2376, 1.442695
    %v2380 = vpow.pop %v2379
    %v2381 = vsel %vm144, %v2378, 0.0
    %2382 = vadd.xlane.f32.xlu0 %v2381
    %v2383 = vpop.xlane.xlu0 %2382
    %v2384 = vsel %vm144, %v2380, 0.0
    %2385 = vadd.xlane.f32.xlu0 %v2384
    %v2386 = vpop.xlane.xlu0 %2385
    %v2387 = vrcp.pop %v2383
    %v2388 = vrcp.pop %v2386
    %v2389 = vmul.f32 %v2378, %v2387
    %v2390 = vmul.f32 %v2380, %v2388
    %2391 = vrot.lane.b32.xlu0 %v341, 104
    %v2392 = vpop.permute.xlu0 %2391
    %2393 = vrot.lane.b32.xlu0 %v346, 104
    %v2394 = vpop.permute.xlu0 %2393
    %2395 = vrot.lane.b32.xlu0 %v351, 104
    %v2396 = vpop.permute.xlu0 %2395
    %2397 = vrot.lane.b32.xlu0 %v356, 104
    %v2398 = vpop.permute.xlu0 %2397
    %v2404 = vsel %vm144, %v2389, 0
    %v2407 = vsel %vm144, %v2390, 0
    %2409 = vmatprep.subr.mxu0 0.0
    %2410 = vmatpush1.msra.mxu0 %v2392
    %2411 = vmatprep.subr.mxu0 0.0
    %2412 = vmatpush1.msra.mxu0 %v2394
    %2413 = vmatprep.subr.mxu0 0.0
    %2414 = vmatpush1.msra.mxu0 %v2396
    %2415 = vmatprep.subr.mxu0 0.0
    %2416 = vmatpush1.msra.mxu0 %v2398
    %2417 = vmatprep.subr.mxu0 0.0
    %2418 = vmatpush1.msra.mxu0 0.0
    %2419 = vmatprep.subr.mxu0 0.0
    %2420 = vmatpush1.msra.mxu0 0.0
    %2421 = vmatprep.subr.mxu0 0.0
    %2422 = vmatpush1.msra.mxu0 0.0
    %2423 = vmatprep.subr.mxu0 0.0
    %2424 = vmatpush1.msra.mxu0 0.0
    %2425 = vmatprep.subr.mxu0 0.0
    %2426 = vmatpush1.msra.mxu0 0.0
    %2427 = vmatprep.subr.mxu0 0.0
    %2428 = vmatpush1.msra.mxu0 0.0
    %2429 = vmatprep.subr.mxu0 0.0
    %2430 = vmatpush1.msra.mxu0 0.0
    %2431 = vmatprep.subr.mxu0 0.0
    %2432 = vmatpush1.msra.mxu0 0.0
    %2433 = vmatprep.subr.mxu0 0.0
    %2434 = vmatpush1.msra.mxu0 0.0
    %2435 = vmatprep.subr.mxu0 0.0
    %2436 = vmatpush1.msra.mxu0 0.0
    %2437 = vmatprep.subr.mxu0 0.0
    %2438 = vmatpush1.msra.mxu0 0.0
    %2439 = vmatprep.subr.mxu0 0.0
    %2440 = vmatpush1.msra.mxu0 0.0
    %2441 = vmatprep.subr.mxu0 0.0
    %2442 = vmatpush1.msra.mxu0 0.0
    %2443 = vmatprep.subr.mxu0 0.0
    %2444 = vmatpush1.msra.mxu0 0.0
    %2445 = vmatprep.subr.mxu0 0.0
    %2446 = vmatpush1.msra.mxu0 0.0
    %2447 = vmatprep.subr.mxu0 0.0
    %2448 = vmatpush1.msra.mxu0 0.0
    %2449 = vmatprep.subr.mxu0 0.0
    %2450 = vmatpush1.msra.mxu0 0.0
    %2451 = vmatprep.subr.mxu0 0.0
    %2452 = vmatpush1.msra.mxu0 0.0
    %2453 = vmatprep.subr.mxu0 0.0
    %2454 = vmatpush1.msra.mxu0 0.0
    %2455 = vmatprep.subr.mxu0 0.0
    %2456 = vmatpush1.msra.mxu0 0.0
    %2457 = vmatprep.subr.mxu0 0.0
    %2458 = vmatpush1.msra.mxu0 0.0
    %2459 = vmatprep.subr.mxu0 0.0
    %2460 = vmatpush1.msra.mxu0 0.0
    %2461 = vmatprep.subr.mxu0 0.0
    %2462 = vmatpush1.msra.mxu0 0.0
    %2463 = vmatprep.subr.mxu0 0.0
    %2464 = vmatpush1.msra.mxu0 0.0
    %2465 = vmatprep.subr.mxu0 0.0
    %2466 = vmatpush1.msra.mxu0 0.0
    %2467 = vmatprep.subr.mxu0 0.0
    %2468 = vmatpush1.msra.mxu0 0.0
    %2469 = vmatprep.subr.mxu0 0.0
    %2470 = vmatpush1.msra.mxu0 0.0
    %2471 = vmatprep.subr.mxu0 0.0
    %2472 = vmatpush1.msra.mxu0 0.0
    %2473 = vmatprep.mubr.f32.mxu0 0.0
    %2474 = vmatmul.mubr.f32.gmra.mrb[0].mxu0 %v2404
    %v2475 = vpop.f32.mrb[0].mxu0
    %v2476 = vadd.f32 0.0, %v2475
    %v2477 = vpop.f32.mrb[0].mxu0
    %2478 = vmatprep.mubr.f32.mxu0 0.0
    %2479 = vmatmul.mubr.f32.gmra.mrb[0].mxu0 %v2407
    %v2480 = vpop.f32.mrb[0].mxu0
    %v2481 = vadd.f32 0.0, %v2480
    %v2482 = vpop.f32.mrb[0].mxu0
    %2483 = vdwg.mxu0
    %2486 = vrot.lane.b32.xlu0 %v2476, 24
    %v2487 = vpop.permute.xlu0 %2486
    %2488 = vrot.lane.b32.xlu0 %v2481, 24
    %v2489 = vpop.permute.xlu0 %2488
    %2492 = vst.msk [vmem:[#allocation2] sm:$0xff] %vm1386, %v2487
    %2493 = vst.msk [vmem:[#allocation2 + $0x8] sm:$0xff] %vm1386, %v2489
    %v2494 = vld [vmem:[#allocation2] sm:$0xff]
    %v2495 = vld [vmem:[#allocation2 + $0x8] sm:$0xff]
    %v2496 = vlaneseq
    %v2497 = vshrl.u32 %v2496, 7
    %v2498 = vsub.s32 0, %v2497
    %v2499 = vrot.slane %v1619, %v2498
    %2504 = vrot.lane.b32.xlu0 %v363, 96
    %v2505 = vpop.permute.xlu0 %2504
    %2506 = vrot.lane.b32.xlu0 %v364, 96
    %v2507 = vpop.permute.xlu0 %2506
    %2508 = vrot.lane.b32.xlu0 %v365, 96
    %v2509 = vpop.permute.xlu0 %2508
    %2510 = vrot.lane.b32.xlu0 %v366, 96
    %v2511 = vpop.permute.xlu0 %2510
    %v2517 = vsel %vm144, %v2494, 0
    %v2520 = vsel %vm144, %v2495, 0
    %2522 = vmatprep.subr.mxu0 0.0
    %2523 = vmatpush1.msra.mxu0 %v2505
    %2524 = vmatprep.subr.mxu0 0.0
    %2525 = vmatpush1.msra.mxu0 %v2507
    %2526 = vmatprep.subr.mxu0 0.0
    %2527 = vmatpush1.msra.mxu0 %v2509
    %2528 = vmatprep.subr.mxu0 0.0
    %2529 = vmatpush1.msra.mxu0 %v2511
    %2530 = vmatprep.subr.mxu0 0.0
    %2531 = vmatpush1.msra.mxu0 0.0
    %2532 = vmatprep.subr.mxu0 0.0
    %2533 = vmatpush1.msra.mxu0 0.0
    %2534 = vmatprep.subr.mxu0 0.0
    %2535 = vmatpush1.msra.mxu0 0.0
    %2536 = vmatprep.subr.mxu0 0.0
    %2537 = vmatpush1.msra.mxu0 0.0
    %2538 = vmatprep.subr.mxu0 0.0
    %2539 = vmatpush1.msra.mxu0 0.0
    %2540 = vmatprep.subr.mxu0 0.0
    %2541 = vmatpush1.msra.mxu0 0.0
    %2542 = vmatprep.subr.mxu0 0.0
    %2543 = vmatpush1.msra.mxu0 0.0
    %2544 = vmatprep.subr.mxu0 0.0
    %2545 = vmatpush1.msra.mxu0 0.0
    %2546 = vmatprep.subr.mxu0 0.0
    %2547 = vmatpush1.msra.mxu0 0.0
    %2548 = vmatprep.subr.mxu0 0.0
    %2549 = vmatpush1.msra.mxu0 0.0
    %2550 = vmatprep.subr.mxu0 0.0
    %2551 = vmatpush1.msra.mxu0 0.0
    %2552 = vmatprep.subr.mxu0 0.0
    %2553 = vmatpush1.msra.mxu0 0.0
    %2554 = vmatprep.subr.mxu0 0.0
    %2555 = vmatpush1.msra.mxu0 0.0
    %2556 = vmatprep.subr.mxu0 0.0
    %2557 = vmatpush1.msra.mxu0 0.0
    %2558 = vmatprep.subr.mxu0 0.0
    %2559 = vmatpush1.msra.mxu0 0.0
    %2560 = vmatprep.subr.mxu0 0.0
    %2561 = vmatpush1.msra.mxu0 0.0
    %2562 = vmatprep.subr.mxu0 0.0
    %2563 = vmatpush1.msra.mxu0 0.0
    %2564 = vmatprep.subr.mxu0 0.0
    %2565 = vmatpush1.msra.mxu0 0.0
    %2566 = vmatprep.subr.mxu0 0.0
    %2567 = vmatpush1.msra.mxu0 0.0
    %2568 = vmatprep.subr.mxu0 0.0
    %2569 = vmatpush1.msra.mxu0 0.0
    %2570 = vmatprep.subr.mxu0 0.0
    %2571 = vmatpush1.msra.mxu0 0.0
    %2572 = vmatprep.subr.mxu0 0.0
    %2573 = vmatpush1.msra.mxu0 0.0
    %2574 = vmatprep.subr.mxu0 0.0
    %2575 = vmatpush1.msra.mxu0 0.0
    %2576 = vmatprep.subr.mxu0 0.0
    %2577 = vmatpush1.msra.mxu0 0.0
    %2578 = vmatprep.subr.mxu0 0.0
    %2579 = vmatpush1.msra.mxu0 0.0
    %2580 = vmatprep.subr.mxu0 0.0
    %2581 = vmatpush1.msra.mxu0 0.0
    %2582 = vmatprep.subr.mxu0 0.0
    %2583 = vmatpush1.msra.mxu0 0.0
    %2584 = vmatprep.subr.mxu0 0.0
    %2585 = vmatpush1.msra.mxu0 0.0
    %2586 = vmatprep.mubr.f32.mxu0 0.0
    %2587 = vmatmul.mubr.f32.gmra.mrb[0].mxu0 %v2517
    %v2588 = vpop.f32.mrb[0].mxu0
    %v2589 = vadd.f32 %v2499, %v2588
    %v2590 = vpop.f32.mrb[0].mxu0
    %2591 = vmatprep.mubr.f32.mxu0 0.0
    %2592 = vmatmul.mubr.f32.gmra.mrb[0].mxu0 %v2520
    %v2593 = vpop.f32.mrb[0].mxu0
    %v2594 = vadd.f32 %v2499, %v2593
    %v2595 = vpop.f32.mrb[0].mxu0
    %2596 = vdwg.mxu0
    %v2597 = vadd.f32 %v1529, %v2589
    %v2598 = vadd.f32 %v1530, %v2594
    %v2599 = vld [vmem:[#allocation8 + $0x9] sm:$0x1]
    %v2600 = vld [vmem:[#allocation8 + $0xa] sm:$0x1]
    %v2601 = vsel %vm144, %v2597, 0.0
    %2602 = vadd.xlane.f32.xlu0 %v2601
    %v2603 = vpop.xlane.xlu0 %2602
    %v2604 = vsel %vm144, %v2598, 0.0
    %2605 = vadd.xlane.f32.xlu0 %v2604
    %v2606 = vpop.xlane.xlu0 %2605
    %v2607 = vmul.f32 %v2603, %v1498
    %v2608 = vmul.f32 %v2606, %v1498
    %v2609 = vsub.f32 %v2597, %v2607
    %v2610 = vsub.f32 %v2598, %v2608
    %v2611 = vmul.f32 %v2609, %v2609
    %v2612 = vmul.f32 %v2610, %v2610
    %v2613 = vsel %vm144, %v2611, 0.0
    %2614 = vadd.xlane.f32.xlu0 %v2613
    %v2615 = vpop.xlane.xlu0 %2614
    %v2616 = vsel %vm144, %v2612, 0.0
    %2617 = vadd.xlane.f32.xlu0 %v2616
    %v2618 = vpop.xlane.xlu0 %2617
    %v2619 = vmul.f32 %v2615, %v1498
    %v2620 = vmul.f32 %v2618, %v1498
    %v2621 = vadd.f32 %v2619, 1e-05
    %v2622 = vadd.f32 %v2620, 1e-05
    %v2623 = vrsqrt.pop %v2621
    %v2624 = vrsqrt.pop %v2622
    %v2625 = vmul.f32 %v2609, %v2623
    %v2626 = vmul.f32 %v2610, %v2624
    %v2627 = vlaneseq
    %v2628 = vshrl.u32 %v2627, 7
    %v2629 = vsub.s32 0, %v2628
    %v2630 = vrot.slane %v2599, %v2629
    %v2631 = vmul.f32 %v2625, %v2630
    %v2632 = vmul.f32 %v2626, %v2630
    %v2633 = vlaneseq
    %v2634 = vshrl.u32 %v2633, 7
    %v2635 = vsub.s32 0, %v2634
    %v2636 = vrot.slane %v2600, %v2635
    %v2637 = vadd.f32 %v2631, %v2636
    %v2638 = vadd.f32 %v2632, %v2636
    %v2639 = vld [vmem:[#allocation8 + $0x5] sm:$0x1]
    %v2640 = vlaneseq
    %v2641 = vshrl.u32 %v2640, 7
    %v2642 = vsub.s32 0, %v2641
    %v2643 = vrot.slane %v2639, %v2642
    %2644 = vrot.lane.b32.xlu0 %v363, 64
    %v2645 = vpop.permute.xlu0 %2644
    %2646 = vrot.lane.b32.xlu0 %v364, 64
    %v2647 = vpop.permute.xlu0 %2646
    %2648 = vrot.lane.b32.xlu0 %v365, 64
    %v2649 = vpop.permute.xlu0 %2648
    %2650 = vrot.lane.b32.xlu0 %v366, 64
    %v2651 = vpop.permute.xlu0 %2650
    %v2657 = vsel %vm144, %v2637, 0
    %v2660 = vsel %vm144, %v2638, 0
    %2662 = vmatprep.subr.mxu0 0.0
    %2663 = vmatpush1.msra.mxu0 %v2645
    %2664 = vmatprep.subr.mxu0 0.0
    %2665 = vmatpush1.msra.mxu0 %v2647
    %2666 = vmatprep.subr.mxu0 0.0
    %2667 = vmatpush1.msra.mxu0 %v2649
    %2668 = vmatprep.subr.mxu0 0.0
    %2669 = vmatpush1.msra.mxu0 %v2651
    %2670 = vmatprep.subr.mxu0 0.0
    %2671 = vmatpush1.msra.mxu0 0.0
    %2672 = vmatprep.subr.mxu0 0.0
    %2673 = vmatpush1.msra.mxu0 0.0
    %2674 = vmatprep.subr.mxu0 0.0
    %2675 = vmatpush1.msra.mxu0 0.0
    %2676 = vmatprep.subr.mxu0 0.0
    %2677 = vmatpush1.msra.mxu0 0.0
    %2678 = vmatprep.subr.mxu0 0.0
    %2679 = vmatpush1.msra.mxu0 0.0
    %2680 = vmatprep.subr.mxu0 0.0
    %2681 = vmatpush1.msra.mxu0 0.0
    %2682 = vmatprep.subr.mxu0 0.0
    %2683 = vmatpush1.msra.mxu0 0.0
    %2684 = vmatprep.subr.mxu0 0.0
    %2685 = vmatpush1.msra.mxu0 0.0
    %2686 = vmatprep.subr.mxu0 0.0
    %2687 = vmatpush1.msra.mxu0 0.0
    %2688 = vmatprep.subr.mxu0 0.0
    %2689 = vmatpush1.msra.mxu0 0.0
    %2690 = vmatprep.subr.mxu0 0.0
    %2691 = vmatpush1.msra.mxu0 0.0
    %2692 = vmatprep.subr.mxu0 0.0
    %2693 = vmatpush1.msra.mxu0 0.0
    %2694 = vmatprep.subr.mxu0 0.0
    %2695 = vmatpush1.msra.mxu0 0.0
    %2696 = vmatprep.subr.mxu0 0.0
    %2697 = vmatpush1.msra.mxu0 0.0
    %2698 = vmatprep.subr.mxu0 0.0
    %2699 = vmatpush1.msra.mxu0 0.0
    %2700 = vmatprep.subr.mxu0 0.0
    %2701 = vmatpush1.msra.mxu0 0.0
    %2702 = vmatprep.subr.mxu0 0.0
    %2703 = vmatpush1.msra.mxu0 0.0
    %2704 = vmatprep.subr.mxu0 0.0
    %2705 = vmatpush1.msra.mxu0 0.0
    %2706 = vmatprep.subr.mxu0 0.0
    %2707 = vmatpush1.msra.mxu0 0.0
    %2708 = vmatprep.subr.mxu0 0.0
    %2709 = vmatpush1.msra.mxu0 0.0
    %2710 = vmatprep.subr.mxu0 0.0
    %2711 = vmatpush1.msra.mxu0 0.0
    %2712 = vmatprep.subr.mxu0 0.0
    %2713 = vmatpush1.msra.mxu0 0.0
    %2714 = vmatprep.subr.mxu0 0.0
    %2715 = vmatpush1.msra.mxu0 0.0
    %2716 = vmatprep.subr.mxu0 0.0
    %2717 = vmatpush1.msra.mxu0 0.0
    %2718 = vmatprep.subr.mxu0 0.0
    %2719 = vmatpush1.msra.mxu0 0.0
    %2720 = vmatprep.subr.mxu0 0.0
    %2721 = vmatpush1.msra.mxu0 0.0
    %2722 = vmatprep.subr.mxu0 0.0
    %2723 = vmatpush1.msra.mxu0 0.0
    %2724 = vmatprep.subr.mxu0 0.0
    %2725 = vmatpush1.msra.mxu0 0.0
    %2726 = vmatprep.mubr.f32.mxu0 0.0
    %2727 = vmatmul.mubr.f32.gmra.mrb[0].mxu0 %v2657
    %v2728 = vpop.f32.mrb[0].mxu0
    %v2729 = vadd.f32 %v2643, %v2728
    %v2730 = vpop.f32.mrb[0].mxu0
    %2731 = vmatprep.mubr.f32.mxu0 0.0
    %2732 = vmatmul.mubr.f32.gmra.mrb[0].mxu0 %v2660
    %v2733 = vpop.f32.mrb[0].mxu0
    %v2734 = vadd.f32 %v2643, %v2733
    %v2735 = vpop.f32.mrb[0].mxu0
    %2736 = vdwg.mxu0
    %v2737 = vmax.f32 %v2729, 0.0
    %v2738 = vmax.f32 %v2734, 0.0
    %v2739 = vld [vmem:[%s7] sm:$0xff]
    %v2740 = vld [vmem:[%s7 + $0x8] sm:$0xff]
    %v2741 = vld [vmem:[%s7 + $0x10] sm:$0xff]
    %v2742 = vld [vmem:[%s7 + $0x18] sm:$0xff]
    %v2743 = vld [vmem:[%s7 + $0x20] sm:$0xff]
    %v2744 = vld [vmem:[%s7 + $0x28] sm:$0xff]
    %v2745 = vld [vmem:[%s7 + $0x30] sm:$0xff]
    %v2746 = vld [vmem:[%s7 + $0x38] sm:$0xff]
    %v2747 = vld [vmem:[#allocation8 + $0x6] sm:$0x1]
    %v2748 = vlaneseq
    %v2749 = vshrl.u32 %v2748, 7
    %v2750 = vsub.s32 0, %v2749
    %v2751 = vrot.slane %v2747, %v2750
    %vm2752 = vcmask 523264
    %v2754 = vsel %vm2752, %v2737, 0
    %v2757 = vsel %vm2752, %v2738, 0
    %2759 = vmatprep.subr.mxu0 0.0
    %2760 = vmatpush1.msra.mxu0 %v2739
    %2761 = vmatprep.subr.mxu0 0.0
    %2762 = vmatpush1.msra.mxu0 %v2740
    %2763 = vmatprep.subr.mxu0 0.0
    %2764 = vmatpush1.msra.mxu0 %v2741
    %2765 = vmatprep.subr.mxu0 0.0
    %2766 = vmatpush1.msra.mxu0 %v2742
    %2767 = vmatprep.subr.mxu0 0.0
    %2768 = vmatpush1.msra.mxu0 %v2743
    %2769 = vmatprep.subr.mxu0 0.0
    %2770 = vmatpush1.msra.mxu0 %v2744
    %2771 = vmatprep.subr.mxu0 0.0
    %2772 = vmatpush1.msra.mxu0 %v2745
    %2773 = vmatprep.subr.mxu0 0.0
    %2774 = vmatpush1.msra.mxu0 %v2746
    %2775 = vmatprep.subr.mxu0 0.0
    %2776 = vmatpush1.msra.mxu0 0.0
    %2777 = vmatprep.subr.mxu0 0.0
    %2778 = vmatpush1.msra.mxu0 0.0
    %2779 = vmatprep.subr.mxu0 0.0
    %2780 = vmatpush1.msra.mxu0 0.0
    %2781 = vmatprep.subr.mxu0 0.0
    %2782 = vmatpush1.msra.mxu0 0.0
    %2783 = vmatprep.subr.mxu0 0.0
    %2784 = vmatpush1.msra.mxu0 0.0
    %2785 = vmatprep.subr.mxu0 0.0
    %2786 = vmatpush1.msra.mxu0 0.0
    %2787 = vmatprep.subr.mxu0 0.0
    %2788 = vmatpush1.msra.mxu0 0.0
    %2789 = vmatprep.subr.mxu0 0.0
    %2790 = vmatpush1.msra.mxu0 0.0
    %2791 = vmatprep.subr.mxu0 0.0
    %2792 = vmatpush1.msra.mxu0 0.0
    %2793 = vmatprep.subr.mxu0 0.0
    %2794 = vmatpush1.msra.mxu0 0.0
    %2795 = vmatprep.subr.mxu0 0.0
    %2796 = vmatpush1.msra.mxu0 0.0
    %2797 = vmatprep.subr.mxu0 0.0
    %2798 = vmatpush1.msra.mxu0 0.0
    %2799 = vmatprep.subr.mxu0 0.0
    %2800 = vmatpush1.msra.mxu0 0.0
    %2801 = vmatprep.subr.mxu0 0.0
    %2802 = vmatpush1.msra.mxu0 0.0
    %2803 = vmatprep.subr.mxu0 0.0
    %2804 = vmatpush1.msra.mxu0 0.0
    %2805 = vmatprep.subr.mxu0 0.0
    %2806 = vmatpush1.msra.mxu0 0.0
    %2807 = vmatprep.subr.mxu0 0.0
    %2808 = vmatpush1.msra.mxu0 0.0
    %2809 = vmatprep.subr.mxu0 0.0
    %2810 = vmatpush1.msra.mxu0 0.0
    %2811 = vmatprep.subr.mxu0 0.0
    %2812 = vmatpush1.msra.mxu0 0.0
    %2813 = vmatprep.subr.mxu0 0.0
    %2814 = vmatpush1.msra.mxu0 0.0
    %2815 = vmatprep.subr.mxu0 0.0
    %2816 = vmatpush1.msra.mxu0 0.0
    %2817 = vmatprep.subr.mxu0 0.0
    %2818 = vmatpush1.msra.mxu0 0.0
    %2819 = vmatprep.subr.mxu0 0.0
    %2820 = vmatpush1.msra.mxu0 0.0
    %2821 = vmatprep.subr.mxu0 0.0
    %2822 = vmatpush1.msra.mxu0 0.0
    %2823 = vmatprep.mubr.f32.mxu0 0.0
    %2824 = vmatmul.mubr.f32.gmra.mrb[0].mxu0 %v2754
    %v2825 = vpop.f32.mrb[0].mxu0
    %v2826 = vadd.f32 %v2751, %v2825
    %v2827 = vpop.f32.mrb[0].mxu0
    %2828 = vmatprep.mubr.f32.mxu0 0.0
    %2829 = vmatmul.mubr.f32.gmra.mrb[0].mxu0 %v2757
    %v2830 = vpop.f32.mrb[0].mxu0
    %v2831 = vadd.f32 %v2751, %v2830
    %v2832 = vpop.f32.mrb[0].mxu0
    %2833 = vdwg.mxu0
    %v2834 = vadd.f32 %v2637, %v2826
    %v2835 = vadd.f32 %v2638, %v2831
    %v2836 = vld [vmem:[#allocation8 + $0xb] sm:$0x1]
    %v2837 = vld [vmem:[#allocation8 + $0xc] sm:$0x1]
    %v2838 = vsel %vm144, %v2834, 0.0
    %2839 = vadd.xlane.f32.xlu0 %v2838
    %v2840 = vpop.xlane.xlu0 %2839
    %v2841 = vsel %vm144, %v2835, 0.0
    %2842 = vadd.xlane.f32.xlu0 %v2841
    %v2843 = vpop.xlane.xlu0 %2842
    %v2844 = vmul.f32 %v2840, %v1498
    %v2845 = vmul.f32 %v2843, %v1498
    %v2846 = vsub.f32 %v2834, %v2844
    %v2847 = vsub.f32 %v2835, %v2845
    %v2848 = vmul.f32 %v2846, %v2846
    %v2849 = vmul.f32 %v2847, %v2847
    %v2850 = vsel %vm144, %v2848, 0.0
    %2851 = vadd.xlane.f32.xlu0 %v2850
    %v2852 = vpop.xlane.xlu0 %2851
    %v2853 = vsel %vm144, %v2849, 0.0
    %2854 = vadd.xlane.f32.xlu0 %v2853
    %v2855 = vpop.xlane.xlu0 %2854
    %v2856 = vmul.f32 %v2852, %v1498
    %v2857 = vmul.f32 %v2855, %v1498
    %v2858 = vadd.f32 %v2856, 1e-05
    %v2859 = vadd.f32 %v2857, 1e-05
    %v2860 = vrsqrt.pop %v2858
    %v2861 = vrsqrt.pop %v2859
    %v2862 = vmul.f32 %v2846, %v2860
    %v2863 = vmul.f32 %v2847, %v2861
    %v2864 = vlaneseq
    %v2865 = vshrl.u32 %v2864, 7
    %v2866 = vsub.s32 0, %v2865
    %v2867 = vrot.slane %v2836, %v2866
    %v2868 = vmul.f32 %v2862, %v2867
    %v2869 = vmul.f32 %v2863, %v2867
    %v2870 = vlaneseq
    %v2871 = vshrl.u32 %v2870, 7
    %v2872 = vsub.s32 0, %v2871
    %v2873 = vrot.slane %v2837, %v2872
    %v2874 = vadd.f32 %v2868, %v2873
    %v2875 = vadd.f32 %v2869, %v2873
    %s2876 = scalar_lea.vmem %s4, 32
    %v2877 = vld [vmem:[%s2876] sm:$0xff]
    %v2878 = vld [vmem:[%s2876 + $0x8] sm:$0xff]
    %v2879 = vld [vmem:[%s2876 + $0x10] sm:$0xff]
    %v2880 = vld [vmem:[%s2876 + $0x18] sm:$0xff]
    %s2881 = scalar_lea.vmem %s5, 32
    %v2882 = vld [vmem:[%s2881] sm:$0xff]
    %v2883 = vld [vmem:[%s2881 + $0x8] sm:$0xff]
    %v2884 = vld [vmem:[%s2881 + $0x10] sm:$0xff]
    %v2885 = vld [vmem:[%s2881 + $0x18] sm:$0xff]
    %v2886 = vadd.f32 %v2874, %v76
    %v2887 = vadd.f32 %v2875, %v77
    %v2888 = vld [vmem:[#allocation8 + $0xd] sm:$0x1]
    %v2889 = vlaneseq
    %v2890 = vshrl.u32 %v2889, 7
    %v2891 = vsub.s32 0, %v2890
    %v2892 = vrot.slane %v2888, %v2891
    %v2894 = vsel %vm144, %v2886, 0
    %v2897 = vsel %vm144, %v2887, 0
    %2899 = vmatprep.subr.mxu0 0.0
    %2900 = vmatpush1.msra.mxu0 %v2877
    %2901 = vmatprep.subr.mxu0 0.0
    %2902 = vmatpush1.msra.mxu0 %v2878
    %2903 = vmatprep.subr.mxu0 0.0
    %2904 = vmatpush1.msra.mxu0 %v2879
    %2905 = vmatprep.subr.mxu0 0.0
    %2906 = vmatpush1.msra.mxu0 %v2880
    %2907 = vmatprep.subr.mxu0 0.0
    %2908 = vmatpush1.msra.mxu0 0.0
    %2909 = vmatprep.subr.mxu0 0.0
    %2910 = vmatpush1.msra.mxu0 0.0
    %2911 = vmatprep.subr.mxu0 0.0
    %2912 = vmatpush1.msra.mxu0 0.0
    %2913 = vmatprep.subr.mxu0 0.0
    %2914 = vmatpush1.msra.mxu0 0.0
    %2915 = vmatprep.subr.mxu0 0.0
    %2916 = vmatpush1.msra.mxu0 0.0
    %2917 = vmatprep.subr.mxu0 0.0
    %2918 = vmatpush1.msra.mxu0 0.0
    %2919 = vmatprep.subr.mxu0 0.0
    %2920 = vmatpush1.msra.mxu0 0.0
    %2921 = vmatprep.subr.mxu0 0.0
    %2922 = vmatpush1.msra.mxu0 0.0
    %2923 = vmatprep.subr.mxu0 0.0
    %2924 = vmatpush1.msra.mxu0 0.0
    %2925 = vmatprep.subr.mxu0 0.0
    %2926 = vmatpush1.msra.mxu0 0.0
    %2927 = vmatprep.subr.mxu0 0.0
    %2928 = vmatpush1.msra.mxu0 0.0
    %2929 = vmatprep.subr.mxu0 0.0
    %2930 = vmatpush1.msra.mxu0 0.0
    %2931 = vmatprep.subr.mxu0 0.0
    %2932 = vmatpush1.msra.mxu0 0.0
    %2933 = vmatprep.subr.mxu0 0.0
    %2934 = vmatpush1.msra.mxu0 0.0
    %2935 = vmatprep.subr.mxu0 0.0
    %2936 = vmatpush1.msra.mxu0 0.0
    %2937 = vmatprep.subr.mxu0 0.0
    %2938 = vmatpush1.msra.mxu0 0.0
    %2939 = vmatprep.subr.mxu0 0.0
    %2940 = vmatpush1.msra.mxu0 0.0
    %2941 = vmatprep.subr.mxu0 0.0
    %2942 = vmatpush1.msra.mxu0 0.0
    %2943 = vmatprep.subr.mxu0 0.0
    %2944 = vmatpush1.msra.mxu0 0.0
    %2945 = vmatprep.subr.mxu0 0.0
    %2946 = vmatpush1.msra.mxu0 0.0
    %2947 = vmatprep.subr.mxu0 0.0
    %2948 = vmatpush1.msra.mxu0 0.0
    %2949 = vmatprep.subr.mxu0 0.0
    %2950 = vmatpush1.msra.mxu0 0.0
    %2951 = vmatprep.subr.mxu0 0.0
    %2952 = vmatpush1.msra.mxu0 0.0
    %2953 = vmatprep.subr.mxu0 0.0
    %2954 = vmatpush1.msra.mxu0 0.0
    %2955 = vmatprep.subr.mxu0 0.0
    %2956 = vmatpush1.msra.mxu0 0.0
    %2957 = vmatprep.subr.mxu0 0.0
    %2958 = vmatpush1.msra.mxu0 0.0
    %2959 = vmatprep.subr.mxu0 0.0
    %2960 = vmatpush1.msra.mxu0 0.0
    %2961 = vmatprep.subr.mxu0 0.0
    %2962 = vmatpush1.msra.mxu0 0.0
    %2963 = vmatprep.mubr.f32.mxu0 0.0
    %2964 = vmatmul.mubr.f32.gmra.mrb[0].mxu0 %v2894
    %v2965 = vpop.f32.mrb[0].mxu0
    %v2966 = vadd.f32 %v2892, %v2965
    %v2967 = vpop.f32.mrb[0].mxu0
    %2968 = vmatprep.mubr.f32.mxu0 0.0
    %2969 = vmatmul.mubr.f32.gmra.mrb[0].mxu0 %v2897
    %v2970 = vpop.f32.mrb[0].mxu0
    %v2971 = vadd.f32 %v2892, %v2970
    %v2972 = vpop.f32.mrb[0].mxu0
    %2973 = vdwg.mxu0
    %v2974 = vld [vmem:[#allocation8 + $0xe] sm:$0x1]
    %v2975 = vlaneseq
    %v2976 = vshrl.u32 %v2975, 7
    %v2977 = vsub.s32 0, %v2976
    %v2978 = vrot.slane %v2974, %v2977
    %2983 = vrot.lane.b32.xlu0 %v2877, 64
    %v2984 = vpop.permute.xlu0 %2983
    %2985 = vrot.lane.b32.xlu0 %v2878, 64
    %v2986 = vpop.permute.xlu0 %2985
    %2987 = vrot.lane.b32.xlu0 %v2879, 64
    %v2988 = vpop.permute.xlu0 %2987
    %2989 = vrot.lane.b32.xlu0 %v2880, 64
    %v2990 = vpop.permute.xlu0 %2989
    %v2996 = vsel %vm144, %v2874, 0
    %v2999 = vsel %vm144, %v2875, 0
    %3001 = vmatprep.subr.mxu0 0.0
    %3002 = vmatpush1.msra.mxu0 %v2984
    %3003 = vmatprep.subr.mxu0 0.0
    %3004 = vmatpush1.msra.mxu0 %v2986
    %3005 = vmatprep.subr.mxu0 0.0
    %3006 = vmatpush1.msra.mxu0 %v2988
    %3007 = vmatprep.subr.mxu0 0.0
    %3008 = vmatpush1.msra.mxu0 %v2990
    %3009 = vmatprep.subr.mxu0 0.0
    %3010 = vmatpush1.msra.mxu0 0.0
    %3011 = vmatprep.subr.mxu0 0.0
    %3012 = vmatpush1.msra.mxu0 0.0
    %3013 = vmatprep.subr.mxu0 0.0
    %3014 = vmatpush1.msra.mxu0 0.0
    %3015 = vmatprep.subr.mxu0 0.0
    %3016 = vmatpush1.msra.mxu0 0.0
    %3017 = vmatprep.subr.mxu0 0.0
    %3018 = vmatpush1.msra.mxu0 0.0
    %3019 = vmatprep.subr.mxu0 0.0
    %3020 = vmatpush1.msra.mxu0 0.0
    %3021 = vmatprep.subr.mxu0 0.0
    %3022 = vmatpush1.msra.mxu0 0.0
    %3023 = vmatprep.subr.mxu0 0.0
    %3024 = vmatpush1.msra.mxu0 0.0
    %3025 = vmatprep.subr.mxu0 0.0
    %3026 = vmatpush1.msra.mxu0 0.0
    %3027 = vmatprep.subr.mxu0 0.0
    %3028 = vmatpush1.msra.mxu0 0.0
    %3029 = vmatprep.subr.mxu0 0.0
    %3030 = vmatpush1.msra.mxu0 0.0
    %3031 = vmatprep.subr.mxu0 0.0
    %3032 = vmatpush1.msra.mxu0 0.0
    %3033 = vmatprep.subr.mxu0 0.0
    %3034 = vmatpush1.msra.mxu0 0.0
    %3035 = vmatprep.subr.mxu0 0.0
    %3036 = vmatpush1.msra.mxu0 0.0
    %3037 = vmatprep.subr.mxu0 0.0
    %3038 = vmatpush1.msra.mxu0 0.0
    %3039 = vmatprep.subr.mxu0 0.0
    %3040 = vmatpush1.msra.mxu0 0.0
    %3041 = vmatprep.subr.mxu0 0.0
    %3042 = vmatpush1.msra.mxu0 0.0
    %3043 = vmatprep.subr.mxu0 0.0
    %3044 = vmatpush1.msra.mxu0 0.0
    %3045 = vmatprep.subr.mxu0 0.0
    %3046 = vmatpush1.msra.mxu0 0.0
    %3047 = vmatprep.subr.mxu0 0.0
    %3048 = vmatpush1.msra.mxu0 0.0
    %3049 = vmatprep.subr.mxu0 0.0
    %3050 = vmatpush1.msra.mxu0 0.0
    %3051 = vmatprep.subr.mxu0 0.0
    %3052 = vmatpush1.msra.mxu0 0.0
    %3053 = vmatprep.subr.mxu0 0.0
    %3054 = vmatpush1.msra.mxu0 0.0
    %3055 = vmatprep.subr.mxu0 0.0
    %3056 = vmatpush1.msra.mxu0 0.0
    %3057 = vmatprep.subr.mxu0 0.0
    %3058 = vmatpush1.msra.mxu0 0.0
    %3059 = vmatprep.subr.mxu0 0.0
    %3060 = vmatpush1.msra.mxu0 0.0
    %3061 = vmatprep.subr.mxu0 0.0
    %3062 = vmatpush1.msra.mxu0 0.0
    %3063 = vmatprep.subr.mxu0 0.0
    %3064 = vmatpush1.msra.mxu0 0.0
    %3065 = vmatprep.mubr.f32.mxu0 0.0
    %3066 = vmatmul.mubr.f32.gmra.mrb[0].mxu0 %v2996
    %v3067 = vpop.f32.mrb[0].mxu0
    %v3068 = vadd.f32 %v2978, %v3067
    %v3069 = vpop.f32.mrb[0].mxu0
    %3070 = vmatprep.mubr.f32.mxu0 0.0
    %3071 = vmatmul.mubr.f32.gmra.mrb[0].mxu0 %v2999
    %v3072 = vpop.f32.mrb[0].mxu0
    %v3073 = vadd.f32 %v2978, %v3072
    %v3074 = vpop.f32.mrb[0].mxu0
    %3075 = vdwg.mxu0
    %v3076 = vld [vmem:[#allocation8 + $0xf] sm:$0x1]
    %3079 = vrot.lane.b32.xlu0 %v2966, 96
    %v3080 = vpop.permute.xlu0 %3079
    %3081 = vrot.lane.b32.xlu0 %v2971, 96
    %v3082 = vpop.permute.xlu0 %3081
    %v3083 = vsel %vm564, %v2966, 0
    %v3085 = vsel %vm564, %v2971, 0
    %v3087 = vsel %vm564, %v3080, 0
    %v3089 = vsel %vm564, %v3082, 0
    %3091 = vmatprep.subr.mxu0 0.0
    %3092 = vmatpush1.xpose.msra.mxu0 %v3087
    %3093 = vmatprep.subr.mxu0 0.0
    %3094 = vmatpush1.xpose.msra.mxu0 %v3089
    %3095 = vmatprep.subr.mxu0 0.0
    %3096 = vmatpush1.xpose.msra.mxu0 0.0
    %3097 = vmatprep.subr.mxu0 0.0
    %3098 = vmatpush1.xpose.msra.mxu0 0.0
    %3099 = vmatprep.subr.mxu0 0.0
    %3100 = vmatpush1.xpose.msra.mxu0 0.0
    %3101 = vmatprep.subr.mxu0 0.0
    %3102 = vmatpush1.xpose.msra.mxu0 0.0
    %3103 = vmatprep.subr.mxu0 0.0
    %3104 = vmatpush1.xpose.msra.mxu0 0.0
    %3105 = vmatprep.subr.mxu0 0.0
    %3106 = vmatpush1.xpose.msra.mxu0 0.0
    %3107 = vmatprep.subr.mxu0 0.0
    %3108 = vmatpush1.xpose.msra.mxu0 0.0
    %3109 = vmatprep.subr.mxu0 0.0
    %3110 = vmatpush1.xpose.msra.mxu0 0.0
    %3111 = vmatprep.subr.mxu0 0.0
    %3112 = vmatpush1.xpose.msra.mxu0 0.0
    %3113 = vmatprep.subr.mxu0 0.0
    %3114 = vmatpush1.xpose.msra.mxu0 0.0
    %3115 = vmatprep.subr.mxu0 0.0
    %3116 = vmatpush1.xpose.msra.mxu0 0.0
    %3117 = vmatprep.subr.mxu0 0.0
    %3118 = vmatpush1.xpose.msra.mxu0 0.0
    %3119 = vmatprep.subr.mxu0 0.0
    %3120 = vmatpush1.xpose.msra.mxu0 0.0
    %3121 = vmatprep.subr.mxu0 0.0
    %3122 = vmatpush1.xpose.msra.mxu0 0.0
    %3123 = vmatprep.subr.mxu0 0.0
    %3124 = vmatpush1.xpose.msra.mxu0 0.0
    %3125 = vmatprep.subr.mxu0 0.0
    %3126 = vmatpush1.xpose.msra.mxu0 0.0
    %3127 = vmatprep.subr.mxu0 0.0
    %3128 = vmatpush1.xpose.msra.mxu0 0.0
    %3129 = vmatprep.subr.mxu0 0.0
    %3130 = vmatpush1.xpose.msra.mxu0 0.0
    %3131 = vmatprep.subr.mxu0 0.0
    %3132 = vmatpush1.xpose.msra.mxu0 0.0
    %3133 = vmatprep.subr.mxu0 0.0
    %3134 = vmatpush1.xpose.msra.mxu0 0.0
    %3135 = vmatprep.subr.mxu0 0.0
    %3136 = vmatpush1.xpose.msra.mxu0 0.0
    %3137 = vmatprep.subr.mxu0 0.0
    %3138 = vmatpush1.xpose.msra.mxu0 0.0
    %3139 = vmatprep.subr.mxu0 0.0
    %3140 = vmatpush1.xpose.msra.mxu0 0.0
    %3141 = vmatprep.subr.mxu0 0.0
    %3142 = vmatpush1.xpose.msra.mxu0 0.0
    %3143 = vmatprep.subr.mxu0 0.0
    %3144 = vmatpush1.xpose.msra.mxu0 0.0
    %3145 = vmatprep.subr.mxu0 0.0
    %3146 = vmatpush1.xpose.msra.mxu0 0.0
    %3147 = vmatprep.subr.mxu0 0.0
    %3148 = vmatpush1.xpose.msra.mxu0 0.0
    %3149 = vmatprep.subr.mxu0 0.0
    %3150 = vmatpush1.xpose.msra.mxu0 0.0
    %3151 = vmatprep.subr.mxu0 0.0
    %3152 = vmatpush1.xpose.msra.mxu0 0.0
    %3153 = vmatprep.subr.mxu0 0.0
    %3154 = vmatpush1.xpose.msra.mxu0 0.0
    %3155 = vmatprep.mubr.f32.mxu0 0.0
    %3156 = vmatmul.mubr.f32.gmra.mrb[0].mxu0 %v3083
    %v3157 = vpop.f32.mrb[0].mxu0
    %v3158 = vadd.f32 %v133, %v3157
    %v3159 = vpop.f32.mrb[0].mxu0
    %3160 = vmatprep.mubr.f32.mxu0 0.0
    %3161 = vmatmul.mubr.f32.gmra.mrb[0].mxu0 %v3085
    %v3162 = vpop.f32.mrb[0].mxu0
    %v3163 = vadd.f32 %v134, %v3162
    %v3164 = vpop.f32.mrb[0].mxu0
    %3165 = vdwg.mxu0
    %v3166 = vsel %vm648, %v3158, -inf
    %3167 = vmax.xlane.f32.xlu0 %v3166
    %v3168 = vpop.xlane.xlu0 %3167
    %v3169 = vsel %vm648, %v3163, -inf
    %3170 = vmax.xlane.f32.xlu0 %v3169
    %v3171 = vpop.xlane.xlu0 %3170
    %v3172 = vsub.f32 %v3158, %v3168
    %v3173 = vsub.f32 %v3163, %v3171
    %v3174 = vmul.f32 %v3172, 1.442695
    %v3175 = vpow.pop %v3174
    %v3176 = vmul.f32 %v3173, 1.442695
    %v3177 = vpow.pop %v3176
    %v3178 = vsel %vm648, %v3175, 0.0
    %3179 = vadd.xlane.f32.xlu0 %v3178
    %v3180 = vpop.xlane.xlu0 %3179
    %v3181 = vsel %vm648, %v3177, 0.0
    %3182 = vadd.xlane.f32.xlu0 %v3181
    %v3183 = vpop.xlane.xlu0 %3182
    %v3184 = vrcp.pop %v3180
    %v3185 = vrcp.pop %v3183
    %v3186 = vmul.f32 %v3175, %v3184
    %v3187 = vmul.f32 %v3177, %v3185
    %v3189 = vsel %vm648, %v3186, 0
    %v3192 = vsel %vm648, %v3187, 0
    %3194 = vmatprep.subr.mxu0 0.0
    %3195 = vmatpush1.msra.mxu0 %v3068
    %3196 = vmatprep.subr.mxu0 0.0
    %3197 = vmatpush1.msra.mxu0 %v3073
    %3198 = vmatprep.subr.mxu0 0.0
    %3199 = vmatpush1.msra.mxu0 0.0
    %3200 = vmatprep.subr.mxu0 0.0
    %3201 = vmatpush1.msra.mxu0 0.0
    %3202 = vmatprep.subr.mxu0 0.0
    %3203 = vmatpush1.msra.mxu0 0.0
    %3204 = vmatprep.subr.mxu0 0.0
    %3205 = vmatpush1.msra.mxu0 0.0
    %3206 = vmatprep.subr.mxu0 0.0
    %3207 = vmatpush1.msra.mxu0 0.0
    %3208 = vmatprep.subr.mxu0 0.0
    %3209 = vmatpush1.msra.mxu0 0.0
    %3210 = vmatprep.subr.mxu0 0.0
    %3211 = vmatpush1.msra.mxu0 0.0
    %3212 = vmatprep.subr.mxu0 0.0
    %3213 = vmatpush1.msra.mxu0 0.0
    %3214 = vmatprep.subr.mxu0 0.0
    %3215 = vmatpush1.msra.mxu0 0.0
    %3216 = vmatprep.subr.mxu0 0.0
    %3217 = vmatpush1.msra.mxu0 0.0
    %3218 = vmatprep.subr.mxu0 0.0
    %3219 = vmatpush1.msra.mxu0 0.0
    %3220 = vmatprep.subr.mxu0 0.0
    %3221 = vmatpush1.msra.mxu0 0.0
    %3222 = vmatprep.subr.mxu0 0.0
    %3223 = vmatpush1.msra.mxu0 0.0
    %3224 = vmatprep.subr.mxu0 0.0
    %3225 = vmatpush1.msra.mxu0 0.0
    %3226 = vmatprep.subr.mxu0 0.0
    %3227 = vmatpush1.msra.mxu0 0.0
    %3228 = vmatprep.subr.mxu0 0.0
    %3229 = vmatpush1.msra.mxu0 0.0
    %3230 = vmatprep.subr.mxu0 0.0
    %3231 = vmatpush1.msra.mxu0 0.0
    %3232 = vmatprep.subr.mxu0 0.0
    %3233 = vmatpush1.msra.mxu0 0.0
    %3234 = vmatprep.subr.mxu0 0.0
    %3235 = vmatpush1.msra.mxu0 0.0
    %3236 = vmatprep.subr.mxu0 0.0
    %3237 = vmatpush1.msra.mxu0 0.0
    %3238 = vmatprep.subr.mxu0 0.0
    %3239 = vmatpush1.msra.mxu0 0.0
    %3240 = vmatprep.subr.mxu0 0.0
    %3241 = vmatpush1.msra.mxu0 0.0
    %3242 = vmatprep.subr.mxu0 0.0
    %3243 = vmatpush1.msra.mxu0 0.0
    %3244 = vmatprep.subr.mxu0 0.0
    %3245 = vmatpush1.msra.mxu0 0.0
    %3246 = vmatprep.subr.mxu0 0.0
    %3247 = vmatpush1.msra.mxu0 0.0
    %3248 = vmatprep.subr.mxu0 0.0
    %3249 = vmatpush1.msra.mxu0 0.0
    %3250 = vmatprep.subr.mxu0 0.0
    %3251 = vmatpush1.msra.mxu0 0.0
    %3252 = vmatprep.subr.mxu0 0.0
    %3253 = vmatpush1.msra.mxu0 0.0
    %3254 = vmatprep.subr.mxu0 0.0
    %3255 = vmatpush1.msra.mxu0 0.0
    %3256 = vmatprep.subr.mxu0 0.0
    %3257 = vmatpush1.msra.mxu0 0.0
    %3258 = vmatprep.mubr.f32.mxu0 0.0
    %3259 = vmatmul.mubr.f32.gmra.mrb[0].mxu0 %v3189
    %v3260 = vpop.f32.mrb[0].mxu0
    %v3261 = vadd.f32 0.0, %v3260
    %v3262 = vpop.f32.mrb[0].mxu0
    %3263 = vmatprep.mubr.f32.mxu0 0.0
    %3264 = vmatmul.mubr.f32.gmra.mrb[0].mxu0 %v3192
    %v3265 = vpop.f32.mrb[0].mxu0
    %v3266 = vadd.f32 0.0, %v3265
    %v3267 = vpop.f32.mrb[0].mxu0
    %3268 = vdwg.mxu0
    %3269 = vst.msk [vmem:[#allocation2] sm:$0xff] %vm564, %v3261
    %3270 = vst.msk [vmem:[#allocation2 + $0x8] sm:$0xff] %vm564, %v3266
    %3271 = vrot.lane.b32.xlu0 %v2966, 120
    %v3272 = vpop.permute.xlu0 %3271
    %3273 = vrot.lane.b32.xlu0 %v2971, 120
    %v3274 = vpop.permute.xlu0 %3273
    %3275 = vrot.lane.b32.xlu0 %v2966, 88
    %v3276 = vpop.permute.xlu0 %3275
    %3277 = vrot.lane.b32.xlu0 %v2971, 88
    %v3278 = vpop.permute.xlu0 %3277
    %v3279 = vsel %vm564, %v3272, 0
    %v3281 = vsel %vm564, %v3274, 0
    %v3283 = vsel %vm564, %v3276, 0
    %v3285 = vsel %vm564, %v3278, 0
    %3287 = vmatprep.subr.mxu0 0.0
    %3288 = vmatpush1.xpose.msra.mxu0 %v3283
    %3289 = vmatprep.subr.mxu0 0.0
    %3290 = vmatpush1.xpose.msra.mxu0 %v3285
    %3291 = vmatprep.subr.mxu0 0.0
    %3292 = vmatpush1.xpose.msra.mxu0 0.0
    %3293 = vmatprep.subr.mxu0 0.0
    %3294 = vmatpush1.xpose.msra.mxu0 0.0
    %3295 = vmatprep.subr.mxu0 0.0
    %3296 = vmatpush1.xpose.msra.mxu0 0.0
    %3297 = vmatprep.subr.mxu0 0.0
    %3298 = vmatpush1.xpose.msra.mxu0 0.0
    %3299 = vmatprep.subr.mxu0 0.0
    %3300 = vmatpush1.xpose.msra.mxu0 0.0
    %3301 = vmatprep.subr.mxu0 0.0
    %3302 = vmatpush1.xpose.msra.mxu0 0.0
    %3303 = vmatprep.subr.mxu0 0.0
    %3304 = vmatpush1.xpose.msra.mxu0 0.0
    %3305 = vmatprep.subr.mxu0 0.0
    %3306 = vmatpush1.xpose.msra.mxu0 0.0
    %3307 = vmatprep.subr.mxu0 0.0
    %3308 = vmatpush1.xpose.msra.mxu0 0.0
    %3309 = vmatprep.subr.mxu0 0.0
    %3310 = vmatpush1.xpose.msra.mxu0 0.0
    %3311 = vmatprep.subr.mxu0 0.0
    %3312 = vmatpush1.xpose.msra.mxu0 0.0
    %3313 = vmatprep.subr.mxu0 0.0
    %3314 = vmatpush1.xpose.msra.mxu0 0.0
    %3315 = vmatprep.subr.mxu0 0.0
    %3316 = vmatpush1.xpose.msra.mxu0 0.0
    %3317 = vmatprep.subr.mxu0 0.0
    %3318 = vmatpush1.xpose.msra.mxu0 0.0
    %3319 = vmatprep.subr.mxu0 0.0
    %3320 = vmatpush1.xpose.msra.mxu0 0.0
    %3321 = vmatprep.subr.mxu0 0.0
    %3322 = vmatpush1.xpose.msra.mxu0 0.0
    %3323 = vmatprep.subr.mxu0 0.0
    %3324 = vmatpush1.xpose.msra.mxu0 0.0
    %3325 = vmatprep.subr.mxu0 0.0
    %3326 = vmatpush1.xpose.msra.mxu0 0.0
    %3327 = vmatprep.subr.mxu0 0.0
    %3328 = vmatpush1.xpose.msra.mxu0 0.0
    %3329 = vmatprep.subr.mxu0 0.0
    %3330 = vmatpush1.xpose.msra.mxu0 0.0
    %3331 = vmatprep.subr.mxu0 0.0
    %3332 = vmatpush1.xpose.msra.mxu0 0.0
    %3333 = vmatprep.subr.mxu0 0.0
    %3334 = vmatpush1.xpose.msra.mxu0 0.0
    %3335 = vmatprep.subr.mxu0 0.0
    %3336 = vmatpush1.xpose.msra.mxu0 0.0
    %3337 = vmatprep.subr.mxu0 0.0
    %3338 = vmatpush1.xpose.msra.mxu0 0.0
    %3339 = vmatprep.subr.mxu0 0.0
    %3340 = vmatpush1.xpose.msra.mxu0 0.0
    %3341 = vmatprep.subr.mxu0 0.0
    %3342 = vmatpush1.xpose.msra.mxu0 0.0
    %3343 = vmatprep.subr.mxu0 0.0
    %3344 = vmatpush1.xpose.msra.mxu0 0.0
    %3345 = vmatprep.subr.mxu0 0.0
    %3346 = vmatpush1.xpose.msra.mxu0 0.0
    %3347 = vmatprep.subr.mxu0 0.0
    %3348 = vmatpush1.xpose.msra.mxu0 0.0
    %3349 = vmatprep.subr.mxu0 0.0
    %3350 = vmatpush1.xpose.msra.mxu0 0.0
    %3351 = vmatprep.mubr.f32.mxu0 0.0
    %3352 = vmatmul.mubr.f32.gmra.mrb[0].mxu0 %v3279
    %v3353 = vpop.f32.mrb[0].mxu0
    %v3354 = vadd.f32 %v133, %v3353
    %v3355 = vpop.f32.mrb[0].mxu0
    %3356 = vmatprep.mubr.f32.mxu0 0.0
    %3357 = vmatmul.mubr.f32.gmra.mrb[0].mxu0 %v3281
    %v3358 = vpop.f32.mrb[0].mxu0
    %v3359 = vadd.f32 %v134, %v3358
    %v3360 = vpop.f32.mrb[0].mxu0
    %3361 = vdwg.mxu0
    %v3362 = vsel %vm648, %v3354, -inf
    %3363 = vmax.xlane.f32.xlu0 %v3362
    %v3364 = vpop.xlane.xlu0 %3363
    %v3365 = vsel %vm648, %v3359, -inf
    %3366 = vmax.xlane.f32.xlu0 %v3365
    %v3367 = vpop.xlane.xlu0 %3366
    %v3368 = vsub.f32 %v3354, %v3364
    %v3369 = vsub.f32 %v3359, %v3367
    %v3370 = vmul.f32 %v3368, 1.442695
    %v3371 = vpow.pop %v3370
    %v3372 = vmul.f32 %v3369, 1.442695
    %v3373 = vpow.pop %v3372
    %v3374 = vsel %vm648, %v3371, 0.0
    %3375 = vadd.xlane.f32.xlu0 %v3374
    %v3376 = vpop.xlane.xlu0 %3375
    %v3377 = vsel %vm648, %v3373, 0.0
    %3378 = vadd.xlane.f32.xlu0 %v3377
    %v3379 = vpop.xlane.xlu0 %3378
    %v3380 = vrcp.pop %v3376
    %v3381 = vrcp.pop %v3379
    %v3382 = vmul.f32 %v3371, %v3380
    %v3383 = vmul.f32 %v3373, %v3381
    %3386 = vrot.lane.b32.xlu0 %v3068, 120
    %v3387 = vpop.permute.xlu0 %3386
    %3388 = vrot.lane.b32.xlu0 %v3073, 120
    %v3389 = vpop.permute.xlu0 %3388
    %v3393 = vsel %vm648, %v3382, 0
    %v3396 = vsel %vm648, %v3383, 0
    %3398 = vmatprep.subr.mxu0 0.0
    %3399 = vmatpush1.msra.mxu0 %v3387
    %3400 = vmatprep.subr.mxu0 0.0
    %3401 = vmatpush1.msra.mxu0 %v3389
    %3402 = vmatprep.subr.mxu0 0.0
    %3403 = vmatpush1.msra.mxu0 0.0
    %3404 = vmatprep.subr.mxu0 0.0
    %3405 = vmatpush1.msra.mxu0 0.0
    %3406 = vmatprep.subr.mxu0 0.0
    %3407 = vmatpush1.msra.mxu0 0.0
    %3408 = vmatprep.subr.mxu0 0.0
    %3409 = vmatpush1.msra.mxu0 0.0
    %3410 = vmatprep.subr.mxu0 0.0
    %3411 = vmatpush1.msra.mxu0 0.0
    %3412 = vmatprep.subr.mxu0 0.0
    %3413 = vmatpush1.msra.mxu0 0.0
    %3414 = vmatprep.subr.mxu0 0.0
    %3415 = vmatpush1.msra.mxu0 0.0
    %3416 = vmatprep.subr.mxu0 0.0
    %3417 = vmatpush1.msra.mxu0 0.0
    %3418 = vmatprep.subr.mxu0 0.0
    %3419 = vmatpush1.msra.mxu0 0.0
    %3420 = vmatprep.subr.mxu0 0.0
    %3421 = vmatpush1.msra.mxu0 0.0
    %3422 = vmatprep.subr.mxu0 0.0
    %3423 = vmatpush1.msra.mxu0 0.0
    %3424 = vmatprep.subr.mxu0 0.0
    %3425 = vmatpush1.msra.mxu0 0.0
    %3426 = vmatprep.subr.mxu0 0.0
    %3427 = vmatpush1.msra.mxu0 0.0
    %3428 = vmatprep.subr.mxu0 0.0
    %3429 = vmatpush1.msra.mxu0 0.0
    %3430 = vmatprep.subr.mxu0 0.0
    %3431 = vmatpush1.msra.mxu0 0.0
    %3432 = vmatprep.subr.mxu0 0.0
    %3433 = vmatpush1.msra.mxu0 0.0
    %3434 = vmatprep.subr.mxu0 0.0
    %3435 = vmatpush1.msra.mxu0 0.0
    %3436 = vmatprep.subr.mxu0 0.0
    %3437 = vmatpush1.msra.mxu0 0.0
    %3438 = vmatprep.subr.mxu0 0.0
    %3439 = vmatpush1.msra.mxu0 0.0
    %3440 = vmatprep.subr.mxu0 0.0
    %3441 = vmatpush1.msra.mxu0 0.0
    %3442 = vmatprep.subr.mxu0 0.0
    %3443 = vmatpush1.msra.mxu0 0.0
    %3444 = vmatprep.subr.mxu0 0.0
    %3445 = vmatpush1.msra.mxu0 0.0
    %3446 = vmatprep.subr.mxu0 0.0
    %3447 = vmatpush1.msra.mxu0 0.0
    %3448 = vmatprep.subr.mxu0 0.0
    %3449 = vmatpush1.msra.mxu0 0.0
    %3450 = vmatprep.subr.mxu0 0.0
    %3451 = vmatpush1.msra.mxu0 0.0
    %3452 = vmatprep.subr.mxu0 0.0
    %3453 = vmatpush1.msra.mxu0 0.0
    %3454 = vmatprep.subr.mxu0 0.0
    %3455 = vmatpush1.msra.mxu0 0.0
    %3456 = vmatprep.subr.mxu0 0.0
    %3457 = vmatpush1.msra.mxu0 0.0
    %3458 = vmatprep.subr.mxu0 0.0
    %3459 = vmatpush1.msra.mxu0 0.0
    %3460 = vmatprep.subr.mxu0 0.0
    %3461 = vmatpush1.msra.mxu0 0.0
    %3462 = vmatprep.mubr.f32.mxu0 0.0
    %3463 = vmatmul.mubr.f32.gmra.mrb[0].mxu0 %v3393
    %v3464 = vpop.f32.mrb[0].mxu0
    %v3465 = vadd.f32 0.0, %v3464
    %v3466 = vpop.f32.mrb[0].mxu0
    %3467 = vmatprep.mubr.f32.mxu0 0.0
    %3468 = vmatmul.mubr.f32.gmra.mrb[0].mxu0 %v3396
    %v3469 = vpop.f32.mrb[0].mxu0
    %v3470 = vadd.f32 0.0, %v3469
    %v3471 = vpop.f32.mrb[0].mxu0
    %3472 = vdwg.mxu0
    %3475 = vrot.lane.b32.xlu0 %v3465, 8
    %v3476 = vpop.permute.xlu0 %3475
    %3477 = vrot.lane.b32.xlu0 %v3470, 8
    %v3478 = vpop.permute.xlu0 %3477
    %3481 = vst.msk [vmem:[#allocation2] sm:$0xff] %vm964, %v3476
    %3482 = vst.msk [vmem:[#allocation2 + $0x8] sm:$0xff] %vm964, %v3478
    %3483 = vrot.lane.b32.xlu0 %v2966, 112
    %v3484 = vpop.permute.xlu0 %3483
    %3485 = vrot.lane.b32.xlu0 %v2971, 112
    %v3486 = vpop.permute.xlu0 %3485
    %3487 = vrot.lane.b32.xlu0 %v2966, 80
    %v3488 = vpop.permute.xlu0 %3487
    %3489 = vrot.lane.b32.xlu0 %v2971, 80
    %v3490 = vpop.permute.xlu0 %3489
    %v3491 = vsel %vm564, %v3484, 0
    %v3493 = vsel %vm564, %v3486, 0
    %v3495 = vsel %vm564, %v3488, 0
    %v3497 = vsel %vm564, %v3490, 0
    %3499 = vmatprep.subr.mxu0 0.0
    %3500 = vmatpush1.xpose.msra.mxu0 %v3495
    %3501 = vmatprep.subr.mxu0 0.0
    %3502 = vmatpush1.xpose.msra.mxu0 %v3497
    %3503 = vmatprep.subr.mxu0 0.0
    %3504 = vmatpush1.xpose.msra.mxu0 0.0
    %3505 = vmatprep.subr.mxu0 0.0
    %3506 = vmatpush1.xpose.msra.mxu0 0.0
    %3507 = vmatprep.subr.mxu0 0.0
    %3508 = vmatpush1.xpose.msra.mxu0 0.0
    %3509 = vmatprep.subr.mxu0 0.0
    %3510 = vmatpush1.xpose.msra.mxu0 0.0
    %3511 = vmatprep.subr.mxu0 0.0
    %3512 = vmatpush1.xpose.msra.mxu0 0.0
    %3513 = vmatprep.subr.mxu0 0.0
    %3514 = vmatpush1.xpose.msra.mxu0 0.0
    %3515 = vmatprep.subr.mxu0 0.0
    %3516 = vmatpush1.xpose.msra.mxu0 0.0
    %3517 = vmatprep.subr.mxu0 0.0
    %3518 = vmatpush1.xpose.msra.mxu0 0.0
    %3519 = vmatprep.subr.mxu0 0.0
    %3520 = vmatpush1.xpose.msra.mxu0 0.0
    %3521 = vmatprep.subr.mxu0 0.0
    %3522 = vmatpush1.xpose.msra.mxu0 0.0
    %3523 = vmatprep.subr.mxu0 0.0
    %3524 = vmatpush1.xpose.msra.mxu0 0.0
    %3525 = vmatprep.subr.mxu0 0.0
    %3526 = vmatpush1.xpose.msra.mxu0 0.0
    %3527 = vmatprep.subr.mxu0 0.0
    %3528 = vmatpush1.xpose.msra.mxu0 0.0
    %3529 = vmatprep.subr.mxu0 0.0
    %3530 = vmatpush1.xpose.msra.mxu0 0.0
    %3531 = vmatprep.subr.mxu0 0.0
    %3532 = vmatpush1.xpose.msra.mxu0 0.0
    %3533 = vmatprep.subr.mxu0 0.0
    %3534 = vmatpush1.xpose.msra.mxu0 0.0
    %3535 = vmatprep.subr.mxu0 0.0
    %3536 = vmatpush1.xpose.msra.mxu0 0.0
    %3537 = vmatprep.subr.mxu0 0.0
    %3538 = vmatpush1.xpose.msra.mxu0 0.0
    %3539 = vmatprep.subr.mxu0 0.0
    %3540 = vmatpush1.xpose.msra.mxu0 0.0
    %3541 = vmatprep.subr.mxu0 0.0
    %3542 = vmatpush1.xpose.msra.mxu0 0.0
    %3543 = vmatprep.subr.mxu0 0.0
    %3544 = vmatpush1.xpose.msra.mxu0 0.0
    %3545 = vmatprep.subr.mxu0 0.0
    %3546 = vmatpush1.xpose.msra.mxu0 0.0
    %3547 = vmatprep.subr.mxu0 0.0
    %3548 = vmatpush1.xpose.msra.mxu0 0.0
    %3549 = vmatprep.subr.mxu0 0.0
    %3550 = vmatpush1.xpose.msra.mxu0 0.0
    %3551 = vmatprep.subr.mxu0 0.0
    %3552 = vmatpush1.xpose.msra.mxu0 0.0
    %3553 = vmatprep.subr.mxu0 0.0
    %3554 = vmatpush1.xpose.msra.mxu0 0.0
    %3555 = vmatprep.subr.mxu0 0.0
    %3556 = vmatpush1.xpose.msra.mxu0 0.0
    %3557 = vmatprep.subr.mxu0 0.0
    %3558 = vmatpush1.xpose.msra.mxu0 0.0
    %3559 = vmatprep.subr.mxu0 0.0
    %3560 = vmatpush1.xpose.msra.mxu0 0.0
    %3561 = vmatprep.subr.mxu0 0.0
    %3562 = vmatpush1.xpose.msra.mxu0 0.0
    %3563 = vmatprep.mubr.f32.mxu0 0.0
    %3564 = vmatmul.mubr.f32.gmra.mrb[0].mxu0 %v3491
    %v3565 = vpop.f32.mrb[0].mxu0
    %v3566 = vadd.f32 %v133, %v3565
    %v3567 = vpop.f32.mrb[0].mxu0
    %3568 = vmatprep.mubr.f32.mxu0 0.0
    %3569 = vmatmul.mubr.f32.gmra.mrb[0].mxu0 %v3493
    %v3570 = vpop.f32.mrb[0].mxu0
    %v3571 = vadd.f32 %v134, %v3570
    %v3572 = vpop.f32.mrb[0].mxu0
    %3573 = vdwg.mxu0
    %v3574 = vsel %vm648, %v3566, -inf
    %3575 = vmax.xlane.f32.xlu0 %v3574
    %v3576 = vpop.xlane.xlu0 %3575
    %v3577 = vsel %vm648, %v3571, -inf
    %3578 = vmax.xlane.f32.xlu0 %v3577
    %v3579 = vpop.xlane.xlu0 %3578
    %v3580 = vsub.f32 %v3566, %v3576
    %v3581 = vsub.f32 %v3571, %v3579
    %v3582 = vmul.f32 %v3580, 1.442695
    %v3583 = vpow.pop %v3582
    %v3584 = vmul.f32 %v3581, 1.442695
    %v3585 = vpow.pop %v3584
    %v3586 = vsel %vm648, %v3583, 0.0
    %3587 = vadd.xlane.f32.xlu0 %v3586
    %v3588 = vpop.xlane.xlu0 %3587
    %v3589 = vsel %vm648, %v3585, 0.0
    %3590 = vadd.xlane.f32.xlu0 %v3589
    %v3591 = vpop.xlane.xlu0 %3590
    %v3592 = vrcp.pop %v3588
    %v3593 = vrcp.pop %v3591
    %v3594 = vmul.f32 %v3583, %v3592
    %v3595 = vmul.f32 %v3585, %v3593
    %3596 = vrot.lane.b32.xlu0 %v3068, 112
    %v3597 = vpop.permute.xlu0 %3596
    %3598 = vrot.lane.b32.xlu0 %v3073, 112
    %v3599 = vpop.permute.xlu0 %3598
    %v3603 = vsel %vm648, %v3594, 0
    %v3606 = vsel %vm648, %v3595, 0
    %3608 = vmatprep.subr.mxu0 0.0
    %3609 = vmatpush1.msra.mxu0 %v3597
    %3610 = vmatprep.subr.mxu0 0.0
    %3611 = vmatpush1.msra.mxu0 %v3599
    %3612 = vmatprep.subr.mxu0 0.0
    %3613 = vmatpush1.msra.mxu0 0.0
    %3614 = vmatprep.subr.mxu0 0.0
    %3615 = vmatpush1.msra.mxu0 0.0
    %3616 = vmatprep.subr.mxu0 0.0
    %3617 = vmatpush1.msra.mxu0 0.0
    %3618 = vmatprep.subr.mxu0 0.0
    %3619 = vmatpush1.msra.mxu0 0.0
    %3620 = vmatprep.subr.mxu0 0.0
    %3621 = vmatpush1.msra.mxu0 0.0
    %3622 = vmatprep.subr.mxu0 0.0
    %3623 = vmatpush1.msra.mxu0 0.0
    %3624 = vmatprep.subr.mxu0 0.0
    %3625 = vmatpush1.msra.mxu0 0.0
    %3626 = vmatprep.subr.mxu0 0.0
    %3627 = vmatpush1.msra.mxu0 0.0
    %3628 = vmatprep.subr.mxu0 0.0
    %3629 = vmatpush1.msra.mxu0 0.0
    %3630 = vmatprep.subr.mxu0 0.0
    %3631 = vmatpush1.msra.mxu0 0.0
    %3632 = vmatprep.subr.mxu0 0.0
    %3633 = vmatpush1.msra.mxu0 0.0
    %3634 = vmatprep.subr.mxu0 0.0
    %3635 = vmatpush1.msra.mxu0 0.0
    %3636 = vmatprep.subr.mxu0 0.0
    %3637 = vmatpush1.msra.mxu0 0.0
    %3638 = vmatprep.subr.mxu0 0.0
    %3639 = vmatpush1.msra.mxu0 0.0
    %3640 = vmatprep.subr.mxu0 0.0
    %3641 = vmatpush1.msra.mxu0 0.0
    %3642 = vmatprep.subr.mxu0 0.0
    %3643 = vmatpush1.msra.mxu0 0.0
    %3644 = vmatprep.subr.mxu0 0.0
    %3645 = vmatpush1.msra.mxu0 0.0
    %3646 = vmatprep.subr.mxu0 0.0
    %3647 = vmatpush1.msra.mxu0 0.0
    %3648 = vmatprep.subr.mxu0 0.0
    %3649 = vmatpush1.msra.mxu0 0.0
    %3650 = vmatprep.subr.mxu0 0.0
    %3651 = vmatpush1.msra.mxu0 0.0
    %3652 = vmatprep.subr.mxu0 0.0
    %3653 = vmatpush1.msra.mxu0 0.0
    %3654 = vmatprep.subr.mxu0 0.0
    %3655 = vmatpush1.msra.mxu0 0.0
    %3656 = vmatprep.subr.mxu0 0.0
    %3657 = vmatpush1.msra.mxu0 0.0
    %3658 = vmatprep.subr.mxu0 0.0
    %3659 = vmatpush1.msra.mxu0 0.0
    %3660 = vmatprep.subr.mxu0 0.0
    %3661 = vmatpush1.msra.mxu0 0.0
    %3662 = vmatprep.subr.mxu0 0.0
    %3663 = vmatpush1.msra.mxu0 0.0
    %3664 = vmatprep.subr.mxu0 0.0
    %3665 = vmatpush1.msra.mxu0 0.0
    %3666 = vmatprep.subr.mxu0 0.0
    %3667 = vmatpush1.msra.mxu0 0.0
    %3668 = vmatprep.subr.mxu0 0.0
    %3669 = vmatpush1.msra.mxu0 0.0
    %3670 = vmatprep.subr.mxu0 0.0
    %3671 = vmatpush1.msra.mxu0 0.0
    %3672 = vmatprep.mubr.f32.mxu0 0.0
    %3673 = vmatmul.mubr.f32.gmra.mrb[0].mxu0 %v3603
    %v3674 = vpop.f32.mrb[0].mxu0
    %v3675 = vadd.f32 0.0, %v3674
    %v3676 = vpop.f32.mrb[0].mxu0
    %3677 = vmatprep.mubr.f32.mxu0 0.0
    %3678 = vmatmul.mubr.f32.gmra.mrb[0].mxu0 %v3606
    %v3679 = vpop.f32.mrb[0].mxu0
    %v3680 = vadd.f32 0.0, %v3679
    %v3681 = vpop.f32.mrb[0].mxu0
    %3682 = vdwg.mxu0
    %3685 = vrot.lane.b32.xlu0 %v3675, 16
    %v3686 = vpop.permute.xlu0 %3685
    %3687 = vrot.lane.b32.xlu0 %v3680, 16
    %v3688 = vpop.permute.xlu0 %3687
    %3691 = vst.msk [vmem:[#allocation2] sm:$0xff] %vm1175, %v3686
    %3692 = vst.msk [vmem:[#allocation2 + $0x8] sm:$0xff] %vm1175, %v3688
    %3693 = vrot.lane.b32.xlu0 %v2966, 104
    %v3694 = vpop.permute.xlu0 %3693
    %3695 = vrot.lane.b32.xlu0 %v2971, 104
    %v3696 = vpop.permute.xlu0 %3695
    %3697 = vrot.lane.b32.xlu0 %v2966, 72
    %v3698 = vpop.permute.xlu0 %3697
    %3699 = vrot.lane.b32.xlu0 %v2971, 72
    %v3700 = vpop.permute.xlu0 %3699
    %v3701 = vsel %vm564, %v3694, 0
    %v3703 = vsel %vm564, %v3696, 0
    %v3705 = vsel %vm564, %v3698, 0
    %v3707 = vsel %vm564, %v3700, 0
    %3709 = vmatprep.subr.mxu0 0.0
    %3710 = vmatpush1.xpose.msra.mxu0 %v3705
    %3711 = vmatprep.subr.mxu0 0.0
    %3712 = vmatpush1.xpose.msra.mxu0 %v3707
    %3713 = vmatprep.subr.mxu0 0.0
    %3714 = vmatpush1.xpose.msra.mxu0 0.0
    %3715 = vmatprep.subr.mxu0 0.0
    %3716 = vmatpush1.xpose.msra.mxu0 0.0
    %3717 = vmatprep.subr.mxu0 0.0
    %3718 = vmatpush1.xpose.msra.mxu0 0.0
    %3719 = vmatprep.subr.mxu0 0.0
    %3720 = vmatpush1.xpose.msra.mxu0 0.0
    %3721 = vmatprep.subr.mxu0 0.0
    %3722 = vmatpush1.xpose.msra.mxu0 0.0
    %3723 = vmatprep.subr.mxu0 0.0
    %3724 = vmatpush1.xpose.msra.mxu0 0.0
    %3725 = vmatprep.subr.mxu0 0.0
    %3726 = vmatpush1.xpose.msra.mxu0 0.0
    %3727 = vmatprep.subr.mxu0 0.0
    %3728 = vmatpush1.xpose.msra.mxu0 0.0
    %3729 = vmatprep.subr.mxu0 0.0
    %3730 = vmatpush1.xpose.msra.mxu0 0.0
    %3731 = vmatprep.subr.mxu0 0.0
    %3732 = vmatpush1.xpose.msra.mxu0 0.0
    %3733 = vmatprep.subr.mxu0 0.0
    %3734 = vmatpush1.xpose.msra.mxu0 0.0
    %3735 = vmatprep.subr.mxu0 0.0
    %3736 = vmatpush1.xpose.msra.mxu0 0.0
    %3737 = vmatprep.subr.mxu0 0.0
    %3738 = vmatpush1.xpose.msra.mxu0 0.0
    %3739 = vmatprep.subr.mxu0 0.0
    %3740 = vmatpush1.xpose.msra.mxu0 0.0
    %3741 = vmatprep.subr.mxu0 0.0
    %3742 = vmatpush1.xpose.msra.mxu0 0.0
    %3743 = vmatprep.subr.mxu0 0.0
    %3744 = vmatpush1.xpose.msra.mxu0 0.0
    %3745 = vmatprep.subr.mxu0 0.0
    %3746 = vmatpush1.xpose.msra.mxu0 0.0
    %3747 = vmatprep.subr.mxu0 0.0
    %3748 = vmatpush1.xpose.msra.mxu0 0.0
    %3749 = vmatprep.subr.mxu0 0.0
    %3750 = vmatpush1.xpose.msra.mxu0 0.0
    %3751 = vmatprep.subr.mxu0 0.0
    %3752 = vmatpush1.xpose.msra.mxu0 0.0
    %3753 = vmatprep.subr.mxu0 0.0
    %3754 = vmatpush1.xpose.msra.mxu0 0.0
    %3755 = vmatprep.subr.mxu0 0.0
    %3756 = vmatpush1.xpose.msra.mxu0 0.0
    %3757 = vmatprep.subr.mxu0 0.0
    %3758 = vmatpush1.xpose.msra.mxu0 0.0
    %3759 = vmatprep.subr.mxu0 0.0
    %3760 = vmatpush1.xpose.msra.mxu0 0.0
    %3761 = vmatprep.subr.mxu0 0.0
    %3762 = vmatpush1.xpose.msra.mxu0 0.0
    %3763 = vmatprep.subr.mxu0 0.0
    %3764 = vmatpush1.xpose.msra.mxu0 0.0
    %3765 = vmatprep.subr.mxu0 0.0
    %3766 = vmatpush1.xpose.msra.mxu0 0.0
    %3767 = vmatprep.subr.mxu0 0.0
    %3768 = vmatpush1.xpose.msra.mxu0 0.0
    %3769 = vmatprep.subr.mxu0 0.0
    %3770 = vmatpush1.xpose.msra.mxu0 0.0
    %3771 = vmatprep.subr.mxu0 0.0
    %3772 = vmatpush1.xpose.msra.mxu0 0.0
    %3773 = vmatprep.mubr.f32.mxu0 0.0
    %3774 = vmatmul.mubr.f32.gmra.mrb[0].mxu0 %v3701
    %v3775 = vpop.f32.mrb[0].mxu0
    %v3776 = vadd.f32 %v133, %v3775
    %v3777 = vpop.f32.mrb[0].mxu0
    %3778 = vmatprep.mubr.f32.mxu0 0.0
    %3779 = vmatmul.mubr.f32.gmra.mrb[0].mxu0 %v3703
    %v3780 = vpop.f32.mrb[0].mxu0
    %v3781 = vadd.f32 %v134, %v3780
    %v3782 = vpop.f32.mrb[0].mxu0
    %3783 = vdwg.mxu0
    %v3784 = vsel %vm648, %v3776, -inf
    %3785 = vmax.xlane.f32.xlu0 %v3784
    %v3786 = vpop.xlane.xlu0 %3785
    %v3787 = vsel %vm648, %v3781, -inf
    %3788 = vmax.xlane.f32.xlu0 %v3787
    %v3789 = vpop.xlane.xlu0 %3788
    %v3790 = vsub.f32 %v3776, %v3786
    %v3791 = vsub.f32 %v3781, %v3789
    %v3792 = vmul.f32 %v3790, 1.442695
    %v3793 = vpow.pop %v3792
    %v3794 = vmul.f32 %v3791, 1.442695
    %v3795 = vpow.pop %v3794
    %v3796 = vsel %vm648, %v3793, 0.0
    %3797 = vadd.xlane.f32.xlu0 %v3796
    %v3798 = vpop.xlane.xlu0 %3797
    %v3799 = vsel %vm648, %v3795, 0.0
    %3800 = vadd.xlane.f32.xlu0 %v3799
    %v3801 = vpop.xlane.xlu0 %3800
    %v3802 = vrcp.pop %v3798
    %v3803 = vrcp.pop %v3801
    %v3804 = vmul.f32 %v3793, %v3802
    %v3805 = vmul.f32 %v3795, %v3803
    %3806 = vrot.lane.b32.xlu0 %v3068, 104
    %v3807 = vpop.permute.xlu0 %3806
    %3808 = vrot.lane.b32.xlu0 %v3073, 104
    %v3809 = vpop.permute.xlu0 %3808
    %v3813 = vsel %vm648, %v3804, 0
    %v3816 = vsel %vm648, %v3805, 0
    %3818 = vmatprep.subr.mxu0 0.0
    %3819 = vmatpush1.msra.mxu0 %v3807
    %3820 = vmatprep.subr.mxu0 0.0
    %3821 = vmatpush1.msra.mxu0 %v3809
    %3822 = vmatprep.subr.mxu0 0.0
    %3823 = vmatpush1.msra.mxu0 0.0
    %3824 = vmatprep.subr.mxu0 0.0
    %3825 = vmatpush1.msra.mxu0 0.0
    %3826 = vmatprep.subr.mxu0 0.0
    %3827 = vmatpush1.msra.mxu0 0.0
    %3828 = vmatprep.subr.mxu0 0.0
    %3829 = vmatpush1.msra.mxu0 0.0
    %3830 = vmatprep.subr.mxu0 0.0
    %3831 = vmatpush1.msra.mxu0 0.0
    %3832 = vmatprep.subr.mxu0 0.0
    %3833 = vmatpush1.msra.mxu0 0.0
    %3834 = vmatprep.subr.mxu0 0.0
    %3835 = vmatpush1.msra.mxu0 0.0
    %3836 = vmatprep.subr.mxu0 0.0
    %3837 = vmatpush1.msra.mxu0 0.0
    %3838 = vmatprep.subr.mxu0 0.0
    %3839 = vmatpush1.msra.mxu0 0.0
    %3840 = vmatprep.subr.mxu0 0.0
    %3841 = vmatpush1.msra.mxu0 0.0
    %3842 = vmatprep.subr.mxu0 0.0
    %3843 = vmatpush1.msra.mxu0 0.0
    %3844 = vmatprep.subr.mxu0 0.0
    %3845 = vmatpush1.msra.mxu0 0.0
    %3846 = vmatprep.subr.mxu0 0.0
    %3847 = vmatpush1.msra.mxu0 0.0
    %3848 = vmatprep.subr.mxu0 0.0
    %3849 = vmatpush1.msra.mxu0 0.0
    %3850 = vmatprep.subr.mxu0 0.0
    %3851 = vmatpush1.msra.mxu0 0.0
    %3852 = vmatprep.subr.mxu0 0.0
    %3853 = vmatpush1.msra.mxu0 0.0
    %3854 = vmatprep.subr.mxu0 0.0
    %3855 = vmatpush1.msra.mxu0 0.0
    %3856 = vmatprep.subr.mxu0 0.0
    %3857 = vmatpush1.msra.mxu0 0.0
    %3858 = vmatprep.subr.mxu0 0.0
    %3859 = vmatpush1.msra.mxu0 0.0
    %3860 = vmatprep.subr.mxu0 0.0
    %3861 = vmatpush1.msra.mxu0 0.0
    %3862 = vmatprep.subr.mxu0 0.0
    %3863 = vmatpush1.msra.mxu0 0.0
    %3864 = vmatprep.subr.mxu0 0.0
    %3865 = vmatpush1.msra.mxu0 0.0
    %3866 = vmatprep.subr.mxu0 0.0
    %3867 = vmatpush1.msra.mxu0 0.0
    %3868 = vmatprep.subr.mxu0 0.0
    %3869 = vmatpush1.msra.mxu0 0.0
    %3870 = vmatprep.subr.mxu0 0.0
    %3871 = vmatpush1.msra.mxu0 0.0
    %3872 = vmatprep.subr.mxu0 0.0
    %3873 = vmatpush1.msra.mxu0 0.0
    %3874 = vmatprep.subr.mxu0 0.0
    %3875 = vmatpush1.msra.mxu0 0.0
    %3876 = vmatprep.subr.mxu0 0.0
    %3877 = vmatpush1.msra.mxu0 0.0
    %3878 = vmatprep.subr.mxu0 0.0
    %3879 = vmatpush1.msra.mxu0 0.0
    %3880 = vmatprep.subr.mxu0 0.0
    %3881 = vmatpush1.msra.mxu0 0.0
    %3882 = vmatprep.mubr.f32.mxu0 0.0
    %3883 = vmatmul.mubr.f32.gmra.mrb[0].mxu0 %v3813
    %v3884 = vpop.f32.mrb[0].mxu0
    %v3885 = vadd.f32 0.0, %v3884
    %v3886 = vpop.f32.mrb[0].mxu0
    %3887 = vmatprep.mubr.f32.mxu0 0.0
    %3888 = vmatmul.mubr.f32.gmra.mrb[0].mxu0 %v3816
    %v3889 = vpop.f32.mrb[0].mxu0
    %v3890 = vadd.f32 0.0, %v3889
    %v3891 = vpop.f32.mrb[0].mxu0
    %3892 = vdwg.mxu0
    %3895 = vrot.lane.b32.xlu0 %v3885, 24
    %v3896 = vpop.permute.xlu0 %3895
    %3897 = vrot.lane.b32.xlu0 %v3890, 24
    %v3898 = vpop.permute.xlu0 %3897
    %3901 = vst.msk [vmem:[#allocation2] sm:$0xff] %vm1386, %v3896
    %3902 = vst.msk [vmem:[#allocation2 + $0x8] sm:$0xff] %vm1386, %v3898
    %v3903 = vld [vmem:[#allocation2] sm:$0xff]
    %v3904 = vld [vmem:[#allocation2 + $0x8] sm:$0xff]
    %v3905 = vlaneseq
    %v3906 = vshrl.u32 %v3905, 7
    %v3907 = vsub.s32 0, %v3906
    %v3908 = vrot.slane %v3076, %v3907
    %3909 = vrot.lane.b32.xlu0 %v2877, 32
    %v3910 = vpop.permute.xlu0 %3909
    %3911 = vrot.lane.b32.xlu0 %v2878, 32
    %v3912 = vpop.permute.xlu0 %3911
    %3913 = vrot.lane.b32.xlu0 %v2879, 32
    %v3914 = vpop.permute.xlu0 %3913
    %3915 = vrot.lane.b32.xlu0 %v2880, 32
    %v3916 = vpop.permute.xlu0 %3915
    %v3922 = vsel %vm144, %v3903, 0
    %v3925 = vsel %vm144, %v3904, 0
    %3927 = vmatprep.subr.mxu0 0.0
    %3928 = vmatpush1.msra.mxu0 %v3910
    %3929 = vmatprep.subr.mxu0 0.0
    %3930 = vmatpush1.msra.mxu0 %v3912
    %3931 = vmatprep.subr.mxu0 0.0
    %3932 = vmatpush1.msra.mxu0 %v3914
    %3933 = vmatprep.subr.mxu0 0.0
    %3934 = vmatpush1.msra.mxu0 %v3916
    %3935 = vmatprep.subr.mxu0 0.0
    %3936 = vmatpush1.msra.mxu0 0.0
    %3937 = vmatprep.subr.mxu0 0.0
    %3938 = vmatpush1.msra.mxu0 0.0
    %3939 = vmatprep.subr.mxu0 0.0
    %3940 = vmatpush1.msra.mxu0 0.0
    %3941 = vmatprep.subr.mxu0 0.0
    %3942 = vmatpush1.msra.mxu0 0.0
    %3943 = vmatprep.subr.mxu0 0.0
    %3944 = vmatpush1.msra.mxu0 0.0
    %3945 = vmatprep.subr.mxu0 0.0
    %3946 = vmatpush1.msra.mxu0 0.0
    %3947 = vmatprep.subr.mxu0 0.0
    %3948 = vmatpush1.msra.mxu0 0.0
    %3949 = vmatprep.subr.mxu0 0.0
    %3950 = vmatpush1.msra.mxu0 0.0
    %3951 = vmatprep.subr.mxu0 0.0
    %3952 = vmatpush1.msra.mxu0 0.0
    %3953 = vmatprep.subr.mxu0 0.0
    %3954 = vmatpush1.msra.mxu0 0.0
    %3955 = vmatprep.subr.mxu0 0.0
    %3956 = vmatpush1.msra.mxu0 0.0
    %3957 = vmatprep.subr.mxu0 0.0
    %3958 = vmatpush1.msra.mxu0 0.0
    %3959 = vmatprep.subr.mxu0 0.0
    %3960 = vmatpush1.msra.mxu0 0.0
    %3961 = vmatprep.subr.mxu0 0.0
    %3962 = vmatpush1.msra.mxu0 0.0
    %3963 = vmatprep.subr.mxu0 0.0
    %3964 = vmatpush1.msra.mxu0 0.0
    %3965 = vmatprep.subr.mxu0 0.0
    %3966 = vmatpush1.msra.mxu0 0.0
    %3967 = vmatprep.subr.mxu0 0.0
    %3968 = vmatpush1.msra.mxu0 0.0
    %3969 = vmatprep.subr.mxu0 0.0
    %3970 = vmatpush1.msra.mxu0 0.0
    %3971 = vmatprep.subr.mxu0 0.0
    %3972 = vmatpush1.msra.mxu0 0.0
    %3973 = vmatprep.subr.mxu0 0.0
    %3974 = vmatpush1.msra.mxu0 0.0
    %3975 = vmatprep.subr.mxu0 0.0
    %3976 = vmatpush1.msra.mxu0 0.0
    %3977 = vmatprep.subr.mxu0 0.0
    %3978 = vmatpush1.msra.mxu0 0.0
    %3979 = vmatprep.subr.mxu0 0.0
    %3980 = vmatpush1.msra.mxu0 0.0
    %3981 = vmatprep.subr.mxu0 0.0
    %3982 = vmatpush1.msra.mxu0 0.0
    %3983 = vmatprep.subr.mxu0 0.0
    %3984 = vmatpush1.msra.mxu0 0.0
    %3985 = vmatprep.subr.mxu0 0.0
    %3986 = vmatpush1.msra.mxu0 0.0
    %3987 = vmatprep.subr.mxu0 0.0
    %3988 = vmatpush1.msra.mxu0 0.0
    %3989 = vmatprep.subr.mxu0 0.0
    %3990 = vmatpush1.msra.mxu0 0.0
    %3991 = vmatprep.mubr.f32.mxu0 0.0
    %3992 = vmatmul.mubr.f32.gmra.mrb[0].mxu0 %v3922
    %v3993 = vpop.f32.mrb[0].mxu0
    %v3994 = vadd.f32 %v3908, %v3993
    %v3995 = vpop.f32.mrb[0].mxu0
    %3996 = vmatprep.mubr.f32.mxu0 0.0
    %3997 = vmatmul.mubr.f32.gmra.mrb[0].mxu0 %v3925
    %v3998 = vpop.f32.mrb[0].mxu0
    %v3999 = vadd.f32 %v3908, %v3998
    %v4000 = vpop.f32.mrb[0].mxu0
    %4001 = vdwg.mxu0
    %v4002 = vadd.f32 %v2874, %v3994
    %v4003 = vadd.f32 %v2875, %v3999
    %v4004 = vld [vmem:[#allocation8 + $0x14] sm:$0x1]
    %v4005 = vld [vmem:[#allocation8 + $0x15] sm:$0x1]
    %v4006 = vsel %vm144, %v4002, 0.0
    %4007 = vadd.xlane.f32.xlu0 %v4006
    %v4008 = vpop.xlane.xlu0 %4007
    %v4009 = vsel %vm144, %v4003, 0.0
    %4010 = vadd.xlane.f32.xlu0 %v4009
    %v4011 = vpop.xlane.xlu0 %4010
    %v4012 = vmul.f32 %v4008, %v1498
    %v4013 = vmul.f32 %v4011, %v1498
    %v4014 = vsub.f32 %v4002, %v4012
    %v4015 = vsub.f32 %v4003, %v4013
    %v4016 = vmul.f32 %v4014, %v4014
    %v4017 = vmul.f32 %v4015, %v4015
    %v4018 = vsel %vm144, %v4016, 0.0
    %4019 = vadd.xlane.f32.xlu0 %v4018
    %v4020 = vpop.xlane.xlu0 %4019
    %v4021 = vsel %vm144, %v4017, 0.0
    %4022 = vadd.xlane.f32.xlu0 %v4021
    %v4023 = vpop.xlane.xlu0 %4022
    %v4024 = vmul.f32 %v4020, %v1498
    %v4025 = vmul.f32 %v4023, %v1498
    %v4026 = vadd.f32 %v4024, 1e-05
    %v4027 = vadd.f32 %v4025, 1e-05
    %v4028 = vrsqrt.pop %v4026
    %v4029 = vrsqrt.pop %v4027
    %v4030 = vmul.f32 %v4014, %v4028
    %v4031 = vmul.f32 %v4015, %v4029
    %v4032 = vlaneseq
    %v4033 = vshrl.u32 %v4032, 7
    %v4034 = vsub.s32 0, %v4033
    %v4035 = vrot.slane %v4004, %v4034
    %v4036 = vmul.f32 %v4030, %v4035
    %v4037 = vmul.f32 %v4031, %v4035
    %v4038 = vlaneseq
    %v4039 = vshrl.u32 %v4038, 7
    %v4040 = vsub.s32 0, %v4039
    %v4041 = vrot.slane %v4005, %v4040
    %v4042 = vadd.f32 %v4036, %v4041
    %v4043 = vadd.f32 %v4037, %v4041
    %v4044 = vadd.f32 %v4042, %v76
    %v4045 = vadd.f32 %v4043, %v77
    %v4046 = vld [vmem:[#allocation8 + $0x10] sm:$0x1]
    %v4047 = vlaneseq
    %v4048 = vshrl.u32 %v4047, 7
    %v4049 = vsub.s32 0, %v4048
    %v4050 = vrot.slane %v4046, %v4049
    %v4052 = vsel %vm144, %v4044, 0
    %v4055 = vsel %vm144, %v4045, 0
    %4057 = vmatprep.subr.mxu0 0.0
    %4058 = vmatpush1.msra.mxu0 %v2882
    %4059 = vmatprep.subr.mxu0 0.0
    %4060 = vmatpush1.msra.mxu0 %v2883
    %4061 = vmatprep.subr.mxu0 0.0
    %4062 = vmatpush1.msra.mxu0 %v2884
    %4063 = vmatprep.subr.mxu0 0.0
    %4064 = vmatpush1.msra.mxu0 %v2885
    %4065 = vmatprep.subr.mxu0 0.0
    %4066 = vmatpush1.msra.mxu0 0.0
    %4067 = vmatprep.subr.mxu0 0.0
    %4068 = vmatpush1.msra.mxu0 0.0
    %4069 = vmatprep.subr.mxu0 0.0
    %4070 = vmatpush1.msra.mxu0 0.0
    %4071 = vmatprep.subr.mxu0 0.0
    %4072 = vmatpush1.msra.mxu0 0.0
    %4073 = vmatprep.subr.mxu0 0.0
    %4074 = vmatpush1.msra.mxu0 0.0
    %4075 = vmatprep.subr.mxu0 0.0
    %4076 = vmatpush1.msra.mxu0 0.0
    %4077 = vmatprep.subr.mxu0 0.0
    %4078 = vmatpush1.msra.mxu0 0.0
    %4079 = vmatprep.subr.mxu0 0.0
    %4080 = vmatpush1.msra.mxu0 0.0
    %4081 = vmatprep.subr.mxu0 0.0
    %4082 = vmatpush1.msra.mxu0 0.0
    %4083 = vmatprep.subr.mxu0 0.0
    %4084 = vmatpush1.msra.mxu0 0.0
    %4085 = vmatprep.subr.mxu0 0.0
    %4086 = vmatpush1.msra.mxu0 0.0
    %4087 = vmatprep.subr.mxu0 0.0
    %4088 = vmatpush1.msra.mxu0 0.0
    %4089 = vmatprep.subr.mxu0 0.0
    %4090 = vmatpush1.msra.mxu0 0.0
    %4091 = vmatprep.subr.mxu0 0.0
    %4092 = vmatpush1.msra.mxu0 0.0
    %4093 = vmatprep.subr.mxu0 0.0
    %4094 = vmatpush1.msra.mxu0 0.0
    %4095 = vmatprep.subr.mxu0 0.0
    %4096 = vmatpush1.msra.mxu0 0.0
    %4097 = vmatprep.subr.mxu0 0.0
    %4098 = vmatpush1.msra.mxu0 0.0
    %4099 = vmatprep.subr.mxu0 0.0
    %4100 = vmatpush1.msra.mxu0 0.0
    %4101 = vmatprep.subr.mxu0 0.0
    %4102 = vmatpush1.msra.mxu0 0.0
    %4103 = vmatprep.subr.mxu0 0.0
    %4104 = vmatpush1.msra.mxu0 0.0
    %4105 = vmatprep.subr.mxu0 0.0
    %4106 = vmatpush1.msra.mxu0 0.0
    %4107 = vmatprep.subr.mxu0 0.0
    %4108 = vmatpush1.msra.mxu0 0.0
    %4109 = vmatprep.subr.mxu0 0.0
    %4110 = vmatpush1.msra.mxu0 0.0
    %4111 = vmatprep.subr.mxu0 0.0
    %4112 = vmatpush1.msra.mxu0 0.0
    %4113 = vmatprep.subr.mxu0 0.0
    %4114 = vmatpush1.msra.mxu0 0.0
    %4115 = vmatprep.subr.mxu0 0.0
    %4116 = vmatpush1.msra.mxu0 0.0
    %4117 = vmatprep.subr.mxu0 0.0
    %4118 = vmatpush1.msra.mxu0 0.0
    %4119 = vmatprep.subr.mxu0 0.0
    %4120 = vmatpush1.msra.mxu0 0.0
    %4121 = vmatprep.mubr.f32.mxu0 0.0
    %4122 = vmatmul.mubr.f32.gmra.mrb[0].mxu0 %v4052
    %v4123 = vpop.f32.mrb[0].mxu0
    %v4124 = vadd.f32 %v4050, %v4123
    %v4125 = vpop.f32.mrb[0].mxu0
    %4126 = vmatprep.mubr.f32.mxu0 0.0
    %4127 = vmatmul.mubr.f32.gmra.mrb[0].mxu0 %v4055
    %v4128 = vpop.f32.mrb[0].mxu0
    %v4129 = vadd.f32 %v4050, %v4128
    %v4130 = vpop.f32.mrb[0].mxu0
    %4131 = vdwg.mxu0
    %v4132 = vld [vmem:[#allocation8 + $0x11] sm:$0x1]
    %4133 = vrot.lane.b32.xlu0 %v224, 96
    %v4134 = vpop.permute.xlu0 %4133
    %4135 = vrot.lane.b32.xlu0 %v229, 96
    %v4136 = vpop.permute.xlu0 %4135
    %4137 = vrot.lane.b32.xlu0 %v234, 96
    %v4138 = vpop.permute.xlu0 %4137
    %4139 = vrot.lane.b32.xlu0 %v239, 96
    %v4140 = vpop.permute.xlu0 %4139
    %v4142 = vsel %vm564, %v4124, 0
    %v4145 = vsel %vm564, %v4129, 0
    %v4147 = vsel %vm564, %v4134, 0
    %v4149 = vsel %vm564, %v4136, 0
    %v4151 = vsel %vm564, %v4138, 0
    %v4153 = vsel %vm564, %v4140, 0
    %4155 = vmatprep.subr.mxu0 0.0
    %4156 = vmatpush1.xpose.msra.mxu0 %v4147
    %4157 = vmatprep.subr.mxu0 0.0
    %4158 = vmatpush1.xpose.msra.mxu0 %v4149
    %4159 = vmatprep.subr.mxu0 0.0
    %4160 = vmatpush1.xpose.msra.mxu0 %v4151
    %4161 = vmatprep.subr.mxu0 0.0
    %4162 = vmatpush1.xpose.msra.mxu0 %v4153
    %4163 = vmatprep.subr.mxu0 0.0
    %4164 = vmatpush1.xpose.msra.mxu0 0.0
    %4165 = vmatprep.subr.mxu0 0.0
    %4166 = vmatpush1.xpose.msra.mxu0 0.0
    %4167 = vmatprep.subr.mxu0 0.0
    %4168 = vmatpush1.xpose.msra.mxu0 0.0
    %4169 = vmatprep.subr.mxu0 0.0
    %4170 = vmatpush1.xpose.msra.mxu0 0.0
    %4171 = vmatprep.subr.mxu0 0.0
    %4172 = vmatpush1.xpose.msra.mxu0 0.0
    %4173 = vmatprep.subr.mxu0 0.0
    %4174 = vmatpush1.xpose.msra.mxu0 0.0
    %4175 = vmatprep.subr.mxu0 0.0
    %4176 = vmatpush1.xpose.msra.mxu0 0.0
    %4177 = vmatprep.subr.mxu0 0.0
    %4178 = vmatpush1.xpose.msra.mxu0 0.0
    %4179 = vmatprep.subr.mxu0 0.0
    %4180 = vmatpush1.xpose.msra.mxu0 0.0
    %4181 = vmatprep.subr.mxu0 0.0
    %4182 = vmatpush1.xpose.msra.mxu0 0.0
    %4183 = vmatprep.subr.mxu0 0.0
    %4184 = vmatpush1.xpose.msra.mxu0 0.0
    %4185 = vmatprep.subr.mxu0 0.0
    %4186 = vmatpush1.xpose.msra.mxu0 0.0
    %4187 = vmatprep.subr.mxu0 0.0
    %4188 = vmatpush1.xpose.msra.mxu0 0.0
    %4189 = vmatprep.subr.mxu0 0.0
    %4190 = vmatpush1.xpose.msra.mxu0 0.0
    %4191 = vmatprep.subr.mxu0 0.0
    %4192 = vmatpush1.xpose.msra.mxu0 0.0
    %4193 = vmatprep.subr.mxu0 0.0
    %4194 = vmatpush1.xpose.msra.mxu0 0.0
    %4195 = vmatprep.subr.mxu0 0.0
    %4196 = vmatpush1.xpose.msra.mxu0 0.0
    %4197 = vmatprep.subr.mxu0 0.0
    %4198 = vmatpush1.xpose.msra.mxu0 0.0
    %4199 = vmatprep.subr.mxu0 0.0
    %4200 = vmatpush1.xpose.msra.mxu0 0.0
    %4201 = vmatprep.subr.mxu0 0.0
    %4202 = vmatpush1.xpose.msra.mxu0 0.0
    %4203 = vmatprep.subr.mxu0 0.0
    %4204 = vmatpush1.xpose.msra.mxu0 0.0
    %4205 = vmatprep.subr.mxu0 0.0
    %4206 = vmatpush1.xpose.msra.mxu0 0.0
    %4207 = vmatprep.subr.mxu0 0.0
    %4208 = vmatpush1.xpose.msra.mxu0 0.0
    %4209 = vmatprep.subr.mxu0 0.0
    %4210 = vmatpush1.xpose.msra.mxu0 0.0
    %4211 = vmatprep.subr.mxu0 0.0
    %4212 = vmatpush1.xpose.msra.mxu0 0.0
    %4213 = vmatprep.subr.mxu0 0.0
    %4214 = vmatpush1.xpose.msra.mxu0 0.0
    %4215 = vmatprep.subr.mxu0 0.0
    %4216 = vmatpush1.xpose.msra.mxu0 0.0
    %4217 = vmatprep.subr.mxu0 0.0
    %4218 = vmatpush1.xpose.msra.mxu0 0.0
    %4219 = vmatprep.mubr.f32.mxu0 0.0
    %4220 = vmatmul.mubr.f32.gmra.mrb[0].mxu0 %v4142
    %v4221 = vpop.f32.mrb[0].mxu0
    %v4222 = vadd.f32 %v133, %v4221
    %v4223 = vpop.f32.mrb[0].mxu0
    %4224 = vmatprep.mubr.f32.mxu0 0.0
    %4225 = vmatmul.mubr.f32.gmra.mrb[0].mxu0 %v4145
    %v4226 = vpop.f32.mrb[0].mxu0
    %v4227 = vadd.f32 %v134, %v4226
    %v4228 = vpop.f32.mrb[0].mxu0
    %4229 = vdwg.mxu0
    %v4230 = vsel %vm144, %v4222, -inf
    %4231 = vmax.xlane.f32.xlu0 %v4230
    %v4232 = vpop.xlane.xlu0 %4231
    %v4233 = vsel %vm144, %v4227, -inf
    %4234 = vmax.xlane.f32.xlu0 %v4233
    %v4235 = vpop.xlane.xlu0 %4234
    %v4236 = vsub.f32 %v4222, %v4232
    %v4237 = vsub.f32 %v4227, %v4235
    %v4238 = vmul.f32 %v4236, 1.442695
    %v4239 = vpow.pop %v4238
    %v4240 = vmul.f32 %v4237, 1.442695
    %v4241 = vpow.pop %v4240
    %v4242 = vsel %vm144, %v4239, 0.0
    %4243 = vadd.xlane.f32.xlu0 %v4242
    %v4244 = vpop.xlane.xlu0 %4243
    %v4245 = vsel %vm144, %v4241, 0.0
    %4246 = vadd.xlane.f32.xlu0 %v4245
    %v4247 = vpop.xlane.xlu0 %4246
    %v4248 = vrcp.pop %v4244
    %v4249 = vrcp.pop %v4247
    %v4250 = vmul.f32 %v4239, %v4248
    %v4251 = vmul.f32 %v4241, %v4249
    %4252 = vrot.lane.b32.xlu0 %v341, 96
    %v4253 = vpop.permute.xlu0 %4252
    %4254 = vrot.lane.b32.xlu0 %v346, 96
    %v4255 = vpop.permute.xlu0 %4254
    %4256 = vrot.lane.b32.xlu0 %v351, 96
    %v4257 = vpop.permute.xlu0 %4256
    %4258 = vrot.lane.b32.xlu0 %v356, 96
    %v4259 = vpop.permute.xlu0 %4258
    %v4265 = vsel %vm144, %v4250, 0
    %v4268 = vsel %vm144, %v4251, 0
    %4270 = vmatprep.subr.mxu0 0.0
    %4271 = vmatpush1.msra.mxu0 %v4253
    %4272 = vmatprep.subr.mxu0 0.0
    %4273 = vmatpush1.msra.mxu0 %v4255
    %4274 = vmatprep.subr.mxu0 0.0
    %4275 = vmatpush1.msra.mxu0 %v4257
    %4276 = vmatprep.subr.mxu0 0.0
    %4277 = vmatpush1.msra.mxu0 %v4259
    %4278 = vmatprep.subr.mxu0 0.0
    %4279 = vmatpush1.msra.mxu0 0.0
    %4280 = vmatprep.subr.mxu0 0.0
    %4281 = vmatpush1.msra.mxu0 0.0
    %4282 = vmatprep.subr.mxu0 0.0
    %4283 = vmatpush1.msra.mxu0 0.0
    %4284 = vmatprep.subr.mxu0 0.0
    %4285 = vmatpush1.msra.mxu0 0.0
    %4286 = vmatprep.subr.mxu0 0.0
    %4287 = vmatpush1.msra.mxu0 0.0
    %4288 = vmatprep.subr.mxu0 0.0
    %4289 = vmatpush1.msra.mxu0 0.0
    %4290 = vmatprep.subr.mxu0 0.0
    %4291 = vmatpush1.msra.mxu0 0.0
    %4292 = vmatprep.subr.mxu0 0.0
    %4293 = vmatpush1.msra.mxu0 0.0
    %4294 = vmatprep.subr.mxu0 0.0
    %4295 = vmatpush1.msra.mxu0 0.0
    %4296 = vmatprep.subr.mxu0 0.0
    %4297 = vmatpush1.msra.mxu0 0.0
    %4298 = vmatprep.subr.mxu0 0.0
    %4299 = vmatpush1.msra.mxu0 0.0
    %4300 = vmatprep.subr.mxu0 0.0
    %4301 = vmatpush1.msra.mxu0 0.0
    %4302 = vmatprep.subr.mxu0 0.0
    %4303 = vmatpush1.msra.mxu0 0.0
    %4304 = vmatprep.subr.mxu0 0.0
    %4305 = vmatpush1.msra.mxu0 0.0
    %4306 = vmatprep.subr.mxu0 0.0
    %4307 = vmatpush1.msra.mxu0 0.0
    %4308 = vmatprep.subr.mxu0 0.0
    %4309 = vmatpush1.msra.mxu0 0.0
    %4310 = vmatprep.subr.mxu0 0.0
    %4311 = vmatpush1.msra.mxu0 0.0
    %4312 = vmatprep.subr.mxu0 0.0
    %4313 = vmatpush1.msra.mxu0 0.0
    %4314 = vmatprep.subr.mxu0 0.0
    %4315 = vmatpush1.msra.mxu0 0.0
    %4316 = vmatprep.subr.mxu0 0.0
    %4317 = vmatpush1.msra.mxu0 0.0
    %4318 = vmatprep.subr.mxu0 0.0
    %4319 = vmatpush1.msra.mxu0 0.0
    %4320 = vmatprep.subr.mxu0 0.0
    %4321 = vmatpush1.msra.mxu0 0.0
    %4322 = vmatprep.subr.mxu0 0.0
    %4323 = vmatpush1.msra.mxu0 0.0
    %4324 = vmatprep.subr.mxu0 0.0
    %4325 = vmatpush1.msra.mxu0 0.0
    %4326 = vmatprep.subr.mxu0 0.0
    %4327 = vmatpush1.msra.mxu0 0.0
    %4328 = vmatprep.subr.mxu0 0.0
    %4329 = vmatpush1.msra.mxu0 0.0
    %4330 = vmatprep.subr.mxu0 0.0
    %4331 = vmatpush1.msra.mxu0 0.0
    %4332 = vmatprep.subr.mxu0 0.0
    %4333 = vmatpush1.msra.mxu0 0.0
    %4334 = vmatprep.mubr.f32.mxu0 0.0
    %4335 = vmatmul.mubr.f32.gmra.mrb[0].mxu0 %v4265
    %v4336 = vpop.f32.mrb[0].mxu0
    %v4337 = vadd.f32 0.0, %v4336
    %v4338 = vpop.f32.mrb[0].mxu0
    %4339 = vmatprep.mubr.f32.mxu0 0.0
    %4340 = vmatmul.mubr.f32.gmra.mrb[0].mxu0 %v4268
    %v4341 = vpop.f32.mrb[0].mxu0
    %v4342 = vadd.f32 0.0, %v4341
    %v4343 = vpop.f32.mrb[0].mxu0
    %4344 = vdwg.mxu0
    %4345 = vst.msk [vmem:[#allocation2] sm:$0xff] %vm564, %v4337
    %4346 = vst.msk [vmem:[#allocation2 + $0x8] sm:$0xff] %vm564, %v4342
    %4347 = vrot.lane.b32.xlu0 %v4124, 120
    %v4348 = vpop.permute.xlu0 %4347
    %4349 = vrot.lane.b32.xlu0 %v4129, 120
    %v4350 = vpop.permute.xlu0 %4349
    %4351 = vrot.lane.b32.xlu0 %v224, 88
    %v4352 = vpop.permute.xlu0 %4351
    %4353 = vrot.lane.b32.xlu0 %v229, 88
    %v4354 = vpop.permute.xlu0 %4353
    %4355 = vrot.lane.b32.xlu0 %v234, 88
    %v4356 = vpop.permute.xlu0 %4355
    %4357 = vrot.lane.b32.xlu0 %v239, 88
    %v4358 = vpop.permute.xlu0 %4357
    %v4359 = vsel %vm564, %v4348, 0
    %v4361 = vsel %vm564, %v4350, 0
    %v4363 = vsel %vm564, %v4352, 0
    %v4365 = vsel %vm564, %v4354, 0
    %v4367 = vsel %vm564, %v4356, 0
    %v4369 = vsel %vm564, %v4358, 0
    %4371 = vmatprep.subr.mxu0 0.0
    %4372 = vmatpush1.xpose.msra.mxu0 %v4363
    %4373 = vmatprep.subr.mxu0 0.0
    %4374 = vmatpush1.xpose.msra.mxu0 %v4365
    %4375 = vmatprep.subr.mxu0 0.0
    %4376 = vmatpush1.xpose.msra.mxu0 %v4367
    %4377 = vmatprep.subr.mxu0 0.0
    %4378 = vmatpush1.xpose.msra.mxu0 %v4369
    %4379 = vmatprep.subr.mxu0 0.0
    %4380 = vmatpush1.xpose.msra.mxu0 0.0
    %4381 = vmatprep.subr.mxu0 0.0
    %4382 = vmatpush1.xpose.msra.mxu0 0.0
    %4383 = vmatprep.subr.mxu0 0.0
    %4384 = vmatpush1.xpose.msra.mxu0 0.0
    %4385 = vmatprep.subr.mxu0 0.0
    %4386 = vmatpush1.xpose.msra.mxu0 0.0
    %4387 = vmatprep.subr.mxu0 0.0
    %4388 = vmatpush1.xpose.msra.mxu0 0.0
    %4389 = vmatprep.subr.mxu0 0.0
    %4390 = vmatpush1.xpose.msra.mxu0 0.0
    %4391 = vmatprep.subr.mxu0 0.0
    %4392 = vmatpush1.xpose.msra.mxu0 0.0
    %4393 = vmatprep.subr.mxu0 0.0
    %4394 = vmatpush1.xpose.msra.mxu0 0.0
    %4395 = vmatprep.subr.mxu0 0.0
    %4396 = vmatpush1.xpose.msra.mxu0 0.0
    %4397 = vmatprep.subr.mxu0 0.0
    %4398 = vmatpush1.xpose.msra.mxu0 0.0
    %4399 = vmatprep.subr.mxu0 0.0
    %4400 = vmatpush1.xpose.msra.mxu0 0.0
    %4401 = vmatprep.subr.mxu0 0.0
    %4402 = vmatpush1.xpose.msra.mxu0 0.0
    %4403 = vmatprep.subr.mxu0 0.0
    %4404 = vmatpush1.xpose.msra.mxu0 0.0
    %4405 = vmatprep.subr.mxu0 0.0
    %4406 = vmatpush1.xpose.msra.mxu0 0.0
    %4407 = vmatprep.subr.mxu0 0.0
    %4408 = vmatpush1.xpose.msra.mxu0 0.0
    %4409 = vmatprep.subr.mxu0 0.0
    %4410 = vmatpush1.xpose.msra.mxu0 0.0
    %4411 = vmatprep.subr.mxu0 0.0
    %4412 = vmatpush1.xpose.msra.mxu0 0.0
    %4413 = vmatprep.subr.mxu0 0.0
    %4414 = vmatpush1.xpose.msra.mxu0 0.0
    %4415 = vmatprep.subr.mxu0 0.0
    %4416 = vmatpush1.xpose.msra.mxu0 0.0
    %4417 = vmatprep.subr.mxu0 0.0
    %4418 = vmatpush1.xpose.msra.mxu0 0.0
    %4419 = vmatprep.subr.mxu0 0.0
    %4420 = vmatpush1.xpose.msra.mxu0 0.0
    %4421 = vmatprep.subr.mxu0 0.0
    %4422 = vmatpush1.xpose.msra.mxu0 0.0
    %4423 = vmatprep.subr.mxu0 0.0
    %4424 = vmatpush1.xpose.msra.mxu0 0.0
    %4425 = vmatprep.subr.mxu0 0.0
    %4426 = vmatpush1.xpose.msra.mxu0 0.0
    %4427 = vmatprep.subr.mxu0 0.0
    %4428 = vmatpush1.xpose.msra.mxu0 0.0
    %4429 = vmatprep.subr.mxu0 0.0
    %4430 = vmatpush1.xpose.msra.mxu0 0.0
    %4431 = vmatprep.subr.mxu0 0.0
    %4432 = vmatpush1.xpose.msra.mxu0 0.0
    %4433 = vmatprep.subr.mxu0 0.0
    %4434 = vmatpush1.xpose.msra.mxu0 0.0
    %4435 = vmatprep.mubr.f32.mxu0 0.0
    %4436 = vmatmul.mubr.f32.gmra.mrb[0].mxu0 %v4359
    %v4437 = vpop.f32.mrb[0].mxu0
    %v4438 = vadd.f32 %v133, %v4437
    %v4439 = vpop.f32.mrb[0].mxu0
    %4440 = vmatprep.mubr.f32.mxu0 0.0
    %4441 = vmatmul.mubr.f32.gmra.mrb[0].mxu0 %v4361
    %v4442 = vpop.f32.mrb[0].mxu0
    %v4443 = vadd.f32 %v134, %v4442
    %v4444 = vpop.f32.mrb[0].mxu0
    %4445 = vdwg.mxu0
    %v4446 = vsel %vm144, %v4438, -inf
    %4447 = vmax.xlane.f32.xlu0 %v4446
    %v4448 = vpop.xlane.xlu0 %4447
    %v4449 = vsel %vm144, %v4443, -inf
    %4450 = vmax.xlane.f32.xlu0 %v4449
    %v4451 = vpop.xlane.xlu0 %4450
    %v4452 = vsub.f32 %v4438, %v4448
    %v4453 = vsub.f32 %v4443, %v4451
    %v4454 = vmul.f32 %v4452, 1.442695
    %v4455 = vpow.pop %v4454
    %v4456 = vmul.f32 %v4453, 1.442695
    %v4457 = vpow.pop %v4456
    %v4458 = vsel %vm144, %v4455, 0.0
    %4459 = vadd.xlane.f32.xlu0 %v4458
    %v4460 = vpop.xlane.xlu0 %4459
    %v4461 = vsel %vm144, %v4457, 0.0
    %4462 = vadd.xlane.f32.xlu0 %v4461
    %v4463 = vpop.xlane.xlu0 %4462
    %v4464 = vrcp.pop %v4460
    %v4465 = vrcp.pop %v4463
    %v4466 = vmul.f32 %v4455, %v4464
    %v4467 = vmul.f32 %v4457, %v4465
    %4468 = vrot.lane.b32.xlu0 %v341, 88
    %v4469 = vpop.permute.xlu0 %4468
    %4470 = vrot.lane.b32.xlu0 %v346, 88
    %v4471 = vpop.permute.xlu0 %4470
    %4472 = vrot.lane.b32.xlu0 %v351, 88
    %v4473 = vpop.permute.xlu0 %4472
    %4474 = vrot.lane.b32.xlu0 %v356, 88
    %v4475 = vpop.permute.xlu0 %4474
    %v4481 = vsel %vm144, %v4466, 0
    %v4484 = vsel %vm144, %v4467, 0
    %4486 = vmatprep.subr.mxu0 0.0
    %4487 = vmatpush1.msra.mxu0 %v4469
    %4488 = vmatprep.subr.mxu0 0.0
    %4489 = vmatpush1.msra.mxu0 %v4471
    %4490 = vmatprep.subr.mxu0 0.0
    %4491 = vmatpush1.msra.mxu0 %v4473
    %4492 = vmatprep.subr.mxu0 0.0
    %4493 = vmatpush1.msra.mxu0 %v4475
    %4494 = vmatprep.subr.mxu0 0.0
    %4495 = vmatpush1.msra.mxu0 0.0
    %4496 = vmatprep.subr.mxu0 0.0
    %4497 = vmatpush1.msra.mxu0 0.0
    %4498 = vmatprep.subr.mxu0 0.0
    %4499 = vmatpush1.msra.mxu0 0.0
    %4500 = vmatprep.subr.mxu0 0.0
    %4501 = vmatpush1.msra.mxu0 0.0
    %4502 = vmatprep.subr.mxu0 0.0
    %4503 = vmatpush1.msra.mxu0 0.0
    %4504 = vmatprep.subr.mxu0 0.0
    %4505 = vmatpush1.msra.mxu0 0.0
    %4506 = vmatprep.subr.mxu0 0.0
    %4507 = vmatpush1.msra.mxu0 0.0
    %4508 = vmatprep.subr.mxu0 0.0
    %4509 = vmatpush1.msra.mxu0 0.0
    %4510 = vmatprep.subr.mxu0 0.0
    %4511 = vmatpush1.msra.mxu0 0.0
    %4512 = vmatprep.subr.mxu0 0.0
    %4513 = vmatpush1.msra.mxu0 0.0
    %4514 = vmatprep.subr.mxu0 0.0
    %4515 = vmatpush1.msra.mxu0 0.0
    %4516 = vmatprep.subr.mxu0 0.0
    %4517 = vmatpush1.msra.mxu0 0.0
    %4518 = vmatprep.subr.mxu0 0.0
    %4519 = vmatpush1.msra.mxu0 0.0
    %4520 = vmatprep.subr.mxu0 0.0
    %4521 = vmatpush1.msra.mxu0 0.0
    %4522 = vmatprep.subr.mxu0 0.0
    %4523 = vmatpush1.msra.mxu0 0.0
    %4524 = vmatprep.subr.mxu0 0.0
    %4525 = vmatpush1.msra.mxu0 0.0
    %4526 = vmatprep.subr.mxu0 0.0
    %4527 = vmatpush1.msra.mxu0 0.0
    %4528 = vmatprep.subr.mxu0 0.0
    %4529 = vmatpush1.msra.mxu0 0.0
    %4530 = vmatprep.subr.mxu0 0.0
    %4531 = vmatpush1.msra.mxu0 0.0
    %4532 = vmatprep.subr.mxu0 0.0
    %4533 = vmatpush1.msra.mxu0 0.0
    %4534 = vmatprep.subr.mxu0 0.0
    %4535 = vmatpush1.msra.mxu0 0.0
    %4536 = vmatprep.subr.mxu0 0.0
    %4537 = vmatpush1.msra.mxu0 0.0
    %4538 = vmatprep.subr.mxu0 0.0
    %4539 = vmatpush1.msra.mxu0 0.0
    %4540 = vmatprep.subr.mxu0 0.0
    %4541 = vmatpush1.msra.mxu0 0.0
    %4542 = vmatprep.subr.mxu0 0.0
    %4543 = vmatpush1.msra.mxu0 0.0
    %4544 = vmatprep.subr.mxu0 0.0
    %4545 = vmatpush1.msra.mxu0 0.0
    %4546 = vmatprep.subr.mxu0 0.0
    %4547 = vmatpush1.msra.mxu0 0.0
    %4548 = vmatprep.subr.mxu0 0.0
    %4549 = vmatpush1.msra.mxu0 0.0
    %4550 = vmatprep.mubr.f32.mxu0 0.0
    %4551 = vmatmul.mubr.f32.gmra.mrb[0].mxu0 %v4481
    %v4552 = vpop.f32.mrb[0].mxu0
    %v4553 = vadd.f32 0.0, %v4552
    %v4554 = vpop.f32.mrb[0].mxu0
    %4555 = vmatprep.mubr.f32.mxu0 0.0
    %4556 = vmatmul.mubr.f32.gmra.mrb[0].mxu0 %v4484
    %v4557 = vpop.f32.mrb[0].mxu0
    %v4558 = vadd.f32 0.0, %v4557
    %v4559 = vpop.f32.mrb[0].mxu0
    %4560 = vdwg.mxu0
    %4563 = vrot.lane.b32.xlu0 %v4553, 8
    %v4564 = vpop.permute.xlu0 %4563
    %4565 = vrot.lane.b32.xlu0 %v4558, 8
    %v4566 = vpop.permute.xlu0 %4565
    %4569 = vst.msk [vmem:[#allocation2] sm:$0xff] %vm964, %v4564
    %4570 = vst.msk [vmem:[#allocation2 + $0x8] sm:$0xff] %vm964, %v4566
    %4571 = vrot.lane.b32.xlu0 %v4124, 112
    %v4572 = vpop.permute.xlu0 %4571
    %4573 = vrot.lane.b32.xlu0 %v4129, 112
    %v4574 = vpop.permute.xlu0 %4573
    %4575 = vrot.lane.b32.xlu0 %v224, 80
    %v4576 = vpop.permute.xlu0 %4575
    %4577 = vrot.lane.b32.xlu0 %v229, 80
    %v4578 = vpop.permute.xlu0 %4577
    %4579 = vrot.lane.b32.xlu0 %v234, 80
    %v4580 = vpop.permute.xlu0 %4579
    %4581 = vrot.lane.b32.xlu0 %v239, 80
    %v4582 = vpop.permute.xlu0 %4581
    %v4583 = vsel %vm564, %v4572, 0
    %v4585 = vsel %vm564, %v4574, 0
    %v4587 = vsel %vm564, %v4576, 0
    %v4589 = vsel %vm564, %v4578, 0
    %v4591 = vsel %vm564, %v4580, 0
    %v4593 = vsel %vm564, %v4582, 0
    %4595 = vmatprep.subr.mxu0 0.0
    %4596 = vmatpush1.xpose.msra.mxu0 %v4587
    %4597 = vmatprep.subr.mxu0 0.0
    %4598 = vmatpush1.xpose.msra.mxu0 %v4589
    %4599 = vmatprep.subr.mxu0 0.0
    %4600 = vmatpush1.xpose.msra.mxu0 %v4591
    %4601 = vmatprep.subr.mxu0 0.0
    %4602 = vmatpush1.xpose.msra.mxu0 %v4593
    %4603 = vmatprep.subr.mxu0 0.0
    %4604 = vmatpush1.xpose.msra.mxu0 0.0
    %4605 = vmatprep.subr.mxu0 0.0
    %4606 = vmatpush1.xpose.msra.mxu0 0.0
    %4607 = vmatprep.subr.mxu0 0.0
    %4608 = vmatpush1.xpose.msra.mxu0 0.0
    %4609 = vmatprep.subr.mxu0 0.0
    %4610 = vmatpush1.xpose.msra.mxu0 0.0
    %4611 = vmatprep.subr.mxu0 0.0
    %4612 = vmatpush1.xpose.msra.mxu0 0.0
    %4613 = vmatprep.subr.mxu0 0.0
    %4614 = vmatpush1.xpose.msra.mxu0 0.0
    %4615 = vmatprep.subr.mxu0 0.0
    %4616 = vmatpush1.xpose.msra.mxu0 0.0
    %4617 = vmatprep.subr.mxu0 0.0
    %4618 = vmatpush1.xpose.msra.mxu0 0.0
    %4619 = vmatprep.subr.mxu0 0.0
    %4620 = vmatpush1.xpose.msra.mxu0 0.0
    %4621 = vmatprep.subr.mxu0 0.0
    %4622 = vmatpush1.xpose.msra.mxu0 0.0
    %4623 = vmatprep.subr.mxu0 0.0
    %4624 = vmatpush1.xpose.msra.mxu0 0.0
    %4625 = vmatprep.subr.mxu0 0.0
    %4626 = vmatpush1.xpose.msra.mxu0 0.0
    %4627 = vmatprep.subr.mxu0 0.0
    %4628 = vmatpush1.xpose.msra.mxu0 0.0
    %4629 = vmatprep.subr.mxu0 0.0
    %4630 = vmatpush1.xpose.msra.mxu0 0.0
    %4631 = vmatprep.subr.mxu0 0.0
    %4632 = vmatpush1.xpose.msra.mxu0 0.0
    %4633 = vmatprep.subr.mxu0 0.0
    %4634 = vmatpush1.xpose.msra.mxu0 0.0
    %4635 = vmatprep.subr.mxu0 0.0
    %4636 = vmatpush1.xpose.msra.mxu0 0.0
    %4637 = vmatprep.subr.mxu0 0.0
    %4638 = vmatpush1.xpose.msra.mxu0 0.0
    %4639 = vmatprep.subr.mxu0 0.0
    %4640 = vmatpush1.xpose.msra.mxu0 0.0
    %4641 = vmatprep.subr.mxu0 0.0
    %4642 = vmatpush1.xpose.msra.mxu0 0.0
    %4643 = vmatprep.subr.mxu0 0.0
    %4644 = vmatpush1.xpose.msra.mxu0 0.0
    %4645 = vmatprep.subr.mxu0 0.0
    %4646 = vmatpush1.xpose.msra.mxu0 0.0
    %4647 = vmatprep.subr.mxu0 0.0
    %4648 = vmatpush1.xpose.msra.mxu0 0.0
    %4649 = vmatprep.subr.mxu0 0.0
    %4650 = vmatpush1.xpose.msra.mxu0 0.0
    %4651 = vmatprep.subr.mxu0 0.0
    %4652 = vmatpush1.xpose.msra.mxu0 0.0
    %4653 = vmatprep.subr.mxu0 0.0
    %4654 = vmatpush1.xpose.msra.mxu0 0.0
    %4655 = vmatprep.subr.mxu0 0.0
    %4656 = vmatpush1.xpose.msra.mxu0 0.0
    %4657 = vmatprep.subr.mxu0 0.0
    %4658 = vmatpush1.xpose.msra.mxu0 0.0
    %4659 = vmatprep.mubr.f32.mxu0 0.0
    %4660 = vmatmul.mubr.f32.gmra.mrb[0].mxu0 %v4583
    %v4661 = vpop.f32.mrb[0].mxu0
    %v4662 = vadd.f32 %v133, %v4661
    %v4663 = vpop.f32.mrb[0].mxu0
    %4664 = vmatprep.mubr.f32.mxu0 0.0
    %4665 = vmatmul.mubr.f32.gmra.mrb[0].mxu0 %v4585
    %v4666 = vpop.f32.mrb[0].mxu0
    %v4667 = vadd.f32 %v134, %v4666
    %v4668 = vpop.f32.mrb[0].mxu0
    %4669 = vdwg.mxu0
    %v4670 = vsel %vm144, %v4662, -inf
    %4671 = vmax.xlane.f32.xlu0 %v4670
    %v4672 = vpop.xlane.xlu0 %4671
    %v4673 = vsel %vm144, %v4667, -inf
    %4674 = vmax.xlane.f32.xlu0 %v4673
    %v4675 = vpop.xlane.xlu0 %4674
    %v4676 = vsub.f32 %v4662, %v4672
    %v4677 = vsub.f32 %v4667, %v4675
    %v4678 = vmul.f32 %v4676, 1.442695
    %v4679 = vpow.pop %v4678
    %v4680 = vmul.f32 %v4677, 1.442695
    %v4681 = vpow.pop %v4680
    %v4682 = vsel %vm144, %v4679, 0.0
    %4683 = vadd.xlane.f32.xlu0 %v4682
    %v4684 = vpop.xlane.xlu0 %4683
    %v4685 = vsel %vm144, %v4681, 0.0
    %4686 = vadd.xlane.f32.xlu0 %v4685
    %v4687 = vpop.xlane.xlu0 %4686
    %v4688 = vrcp.pop %v4684
    %v4689 = vrcp.pop %v4687
    %v4690 = vmul.f32 %v4679, %v4688
    %v4691 = vmul.f32 %v4681, %v4689
    %4692 = vrot.lane.b32.xlu0 %v341, 80
    %v4693 = vpop.permute.xlu0 %4692
    %4694 = vrot.lane.b32.xlu0 %v346, 80
    %v4695 = vpop.permute.xlu0 %4694
    %4696 = vrot.lane.b32.xlu0 %v351, 80
    %v4697 = vpop.permute.xlu0 %4696
    %4698 = vrot.lane.b32.xlu0 %v356, 80
    %v4699 = vpop.permute.xlu0 %4698
    %v4705 = vsel %vm144, %v4690, 0
    %v4708 = vsel %vm144, %v4691, 0
    %4710 = vmatprep.subr.mxu0 0.0
    %4711 = vmatpush1.msra.mxu0 %v4693
    %4712 = vmatprep.subr.mxu0 0.0
    %4713 = vmatpush1.msra.mxu0 %v4695
    %4714 = vmatprep.subr.mxu0 0.0
    %4715 = vmatpush1.msra.mxu0 %v4697
    %4716 = vmatprep.subr.mxu0 0.0
    %4717 = vmatpush1.msra.mxu0 %v4699
    %4718 = vmatprep.subr.mxu0 0.0
    %4719 = vmatpush1.msra.mxu0 0.0
    %4720 = vmatprep.subr.mxu0 0.0
    %4721 = vmatpush1.msra.mxu0 0.0
    %4722 = vmatprep.subr.mxu0 0.0
    %4723 = vmatpush1.msra.mxu0 0.0
    %4724 = vmatprep.subr.mxu0 0.0
    %4725 = vmatpush1.msra.mxu0 0.0
    %4726 = vmatprep.subr.mxu0 0.0
    %4727 = vmatpush1.msra.mxu0 0.0
    %4728 = vmatprep.subr.mxu0 0.0
    %4729 = vmatpush1.msra.mxu0 0.0
    %4730 = vmatprep.subr.mxu0 0.0
    %4731 = vmatpush1.msra.mxu0 0.0
    %4732 = vmatprep.subr.mxu0 0.0
    %4733 = vmatpush1.msra.mxu0 0.0
    %4734 = vmatprep.subr.mxu0 0.0
    %4735 = vmatpush1.msra.mxu0 0.0
    %4736 = vmatprep.subr.mxu0 0.0
    %4737 = vmatpush1.msra.mxu0 0.0
    %4738 = vmatprep.subr.mxu0 0.0
    %4739 = vmatpush1.msra.mxu0 0.0
    %4740 = vmatprep.subr.mxu0 0.0
    %4741 = vmatpush1.msra.mxu0 0.0
    %4742 = vmatprep.subr.mxu0 0.0
    %4743 = vmatpush1.msra.mxu0 0.0
    %4744 = vmatprep.subr.mxu0 0.0
    %4745 = vmatpush1.msra.mxu0 0.0
    %4746 = vmatprep.subr.mxu0 0.0
    %4747 = vmatpush1.msra.mxu0 0.0
    %4748 = vmatprep.subr.mxu0 0.0
    %4749 = vmatpush1.msra.mxu0 0.0
    %4750 = vmatprep.subr.mxu0 0.0
    %4751 = vmatpush1.msra.mxu0 0.0
    %4752 = vmatprep.subr.mxu0 0.0
    %4753 = vmatpush1.msra.mxu0 0.0
    %4754 = vmatprep.subr.mxu0 0.0
    %4755 = vmatpush1.msra.mxu0 0.0
    %4756 = vmatprep.subr.mxu0 0.0
    %4757 = vmatpush1.msra.mxu0 0.0
    %4758 = vmatprep.subr.mxu0 0.0
    %4759 = vmatpush1.msra.mxu0 0.0
    %4760 = vmatprep.subr.mxu0 0.0
    %4761 = vmatpush1.msra.mxu0 0.0
    %4762 = vmatprep.subr.mxu0 0.0
    %4763 = vmatpush1.msra.mxu0 0.0
    %4764 = vmatprep.subr.mxu0 0.0
    %4765 = vmatpush1.msra.mxu0 0.0
    %4766 = vmatprep.subr.mxu0 0.0
    %4767 = vmatpush1.msra.mxu0 0.0
    %4768 = vmatprep.subr.mxu0 0.0
    %4769 = vmatpush1.msra.mxu0 0.0
    %4770 = vmatprep.subr.mxu0 0.0
    %4771 = vmatpush1.msra.mxu0 0.0
    %4772 = vmatprep.subr.mxu0 0.0
    %4773 = vmatpush1.msra.mxu0 0.0
    %4774 = vmatprep.mubr.f32.mxu0 0.0
    %4775 = vmatmul.mubr.f32.gmra.mrb[0].mxu0 %v4705
    %v4776 = vpop.f32.mrb[0].mxu0
    %v4777 = vadd.f32 0.0, %v4776
    %v4778 = vpop.f32.mrb[0].mxu0
    %4779 = vmatprep.mubr.f32.mxu0 0.0
    %4780 = vmatmul.mubr.f32.gmra.mrb[0].mxu0 %v4708
    %v4781 = vpop.f32.mrb[0].mxu0
    %v4782 = vadd.f32 0.0, %v4781
    %v4783 = vpop.f32.mrb[0].mxu0
    %4784 = vdwg.mxu0
    %4787 = vrot.lane.b32.xlu0 %v4777, 16
    %v4788 = vpop.permute.xlu0 %4787
    %4789 = vrot.lane.b32.xlu0 %v4782, 16
    %v4790 = vpop.permute.xlu0 %4789
    %4793 = vst.msk [vmem:[#allocation2] sm:$0xff] %vm1175, %v4788
    %4794 = vst.msk [vmem:[#allocation2 + $0x8] sm:$0xff] %vm1175, %v4790
    %4795 = vrot.lane.b32.xlu0 %v4124, 104
    %v4796 = vpop.permute.xlu0 %4795
    %4797 = vrot.lane.b32.xlu0 %v4129, 104
    %v4798 = vpop.permute.xlu0 %4797
    %4799 = vrot.lane.b32.xlu0 %v224, 72
    %v4800 = vpop.permute.xlu0 %4799
    %4801 = vrot.lane.b32.xlu0 %v229, 72
    %v4802 = vpop.permute.xlu0 %4801
    %4803 = vrot.lane.b32.xlu0 %v234, 72
    %v4804 = vpop.permute.xlu0 %4803
    %4805 = vrot.lane.b32.xlu0 %v239, 72
    %v4806 = vpop.permute.xlu0 %4805
    %v4807 = vsel %vm564, %v4796, 0
    %v4809 = vsel %vm564, %v4798, 0
    %v4811 = vsel %vm564, %v4800, 0
    %v4813 = vsel %vm564, %v4802, 0
    %v4815 = vsel %vm564, %v4804, 0
    %v4817 = vsel %vm564, %v4806, 0
    %4819 = vmatprep.subr.mxu0 0.0
    %4820 = vmatpush1.xpose.msra.mxu0 %v4811
    %4821 = vmatprep.subr.mxu0 0.0
    %4822 = vmatpush1.xpose.msra.mxu0 %v4813
    %4823 = vmatprep.subr.mxu0 0.0
    %4824 = vmatpush1.xpose.msra.mxu0 %v4815
    %4825 = vmatprep.subr.mxu0 0.0
    %4826 = vmatpush1.xpose.msra.mxu0 %v4817
    %4827 = vmatprep.subr.mxu0 0.0
    %4828 = vmatpush1.xpose.msra.mxu0 0.0
    %4829 = vmatprep.subr.mxu0 0.0
    %4830 = vmatpush1.xpose.msra.mxu0 0.0
    %4831 = vmatprep.subr.mxu0 0.0
    %4832 = vmatpush1.xpose.msra.mxu0 0.0
    %4833 = vmatprep.subr.mxu0 0.0
    %4834 = vmatpush1.xpose.msra.mxu0 0.0
    %4835 = vmatprep.subr.mxu0 0.0
    %4836 = vmatpush1.xpose.msra.mxu0 0.0
    %4837 = vmatprep.subr.mxu0 0.0
    %4838 = vmatpush1.xpose.msra.mxu0 0.0
    %4839 = vmatprep.subr.mxu0 0.0
    %4840 = vmatpush1.xpose.msra.mxu0 0.0
    %4841 = vmatprep.subr.mxu0 0.0
    %4842 = vmatpush1.xpose.msra.mxu0 0.0
    %4843 = vmatprep.subr.mxu0 0.0
    %4844 = vmatpush1.xpose.msra.mxu0 0.0
    %4845 = vmatprep.subr.mxu0 0.0
    %4846 = vmatpush1.xpose.msra.mxu0 0.0
    %4847 = vmatprep.subr.mxu0 0.0
    %4848 = vmatpush1.xpose.msra.mxu0 0.0
    %4849 = vmatprep.subr.mxu0 0.0
    %4850 = vmatpush1.xpose.msra.mxu0 0.0
    %4851 = vmatprep.subr.mxu0 0.0
    %4852 = vmatpush1.xpose.msra.mxu0 0.0
    %4853 = vmatprep.subr.mxu0 0.0
    %4854 = vmatpush1.xpose.msra.mxu0 0.0
    %4855 = vmatprep.subr.mxu0 0.0
    %4856 = vmatpush1.xpose.msra.mxu0 0.0
    %4857 = vmatprep.subr.mxu0 0.0
    %4858 = vmatpush1.xpose.msra.mxu0 0.0
    %4859 = vmatprep.subr.mxu0 0.0
    %4860 = vmatpush1.xpose.msra.mxu0 0.0
    %4861 = vmatprep.subr.mxu0 0.0
    %4862 = vmatpush1.xpose.msra.mxu0 0.0
    %4863 = vmatprep.subr.mxu0 0.0
    %4864 = vmatpush1.xpose.msra.mxu0 0.0
    %4865 = vmatprep.subr.mxu0 0.0
    %4866 = vmatpush1.xpose.msra.mxu0 0.0
    %4867 = vmatprep.subr.mxu0 0.0
    %4868 = vmatpush1.xpose.msra.mxu0 0.0
    %4869 = vmatprep.subr.mxu0 0.0
    %4870 = vmatpush1.xpose.msra.mxu0 0.0
    %4871 = vmatprep.subr.mxu0 0.0
    %4872 = vmatpush1.xpose.msra.mxu0 0.0
    %4873 = vmatprep.subr.mxu0 0.0
    %4874 = vmatpush1.xpose.msra.mxu0 0.0
    %4875 = vmatprep.subr.mxu0 0.0
    %4876 = vmatpush1.xpose.msra.mxu0 0.0
    %4877 = vmatprep.subr.mxu0 0.0
    %4878 = vmatpush1.xpose.msra.mxu0 0.0
    %4879 = vmatprep.subr.mxu0 0.0
    %4880 = vmatpush1.xpose.msra.mxu0 0.0
    %4881 = vmatprep.subr.mxu0 0.0
    %4882 = vmatpush1.xpose.msra.mxu0 0.0
    %4883 = vmatprep.mubr.f32.mxu0 0.0
    %4884 = vmatmul.mubr.f32.gmra.mrb[0].mxu0 %v4807
    %v4885 = vpop.f32.mrb[0].mxu0
    %v4886 = vadd.f32 %v133, %v4885
    %v4887 = vpop.f32.mrb[0].mxu0
    %4888 = vmatprep.mubr.f32.mxu0 0.0
    %4889 = vmatmul.mubr.f32.gmra.mrb[0].mxu0 %v4809
    %v4890 = vpop.f32.mrb[0].mxu0
    %v4891 = vadd.f32 %v134, %v4890
    %v4892 = vpop.f32.mrb[0].mxu0
    %4893 = vdwg.mxu0
    %v4894 = vsel %vm144, %v4886, -inf
    %4895 = vmax.xlane.f32.xlu0 %v4894
    %v4896 = vpop.xlane.xlu0 %4895
    %v4897 = vsel %vm144, %v4891, -inf
    %4898 = vmax.xlane.f32.xlu0 %v4897
    %v4899 = vpop.xlane.xlu0 %4898
    %v4900 = vsub.f32 %v4886, %v4896
    %v4901 = vsub.f32 %v4891, %v4899
    %v4902 = vmul.f32 %v4900, 1.442695
    %v4903 = vpow.pop %v4902
    %v4904 = vmul.f32 %v4901, 1.442695
    %v4905 = vpow.pop %v4904
    %v4906 = vsel %vm144, %v4903, 0.0
    %4907 = vadd.xlane.f32.xlu0 %v4906
    %v4908 = vpop.xlane.xlu0 %4907
    %v4909 = vsel %vm144, %v4905, 0.0
    %4910 = vadd.xlane.f32.xlu0 %v4909
    %v4911 = vpop.xlane.xlu0 %4910
    %v4912 = vrcp.pop %v4908
    %v4913 = vrcp.pop %v4911
    %v4914 = vmul.f32 %v4903, %v4912
    %v4915 = vmul.f32 %v4905, %v4913
    %4916 = vrot.lane.b32.xlu0 %v341, 72
    %v4917 = vpop.permute.xlu0 %4916
    %4918 = vrot.lane.b32.xlu0 %v346, 72
    %v4919 = vpop.permute.xlu0 %4918
    %4920 = vrot.lane.b32.xlu0 %v351, 72
    %v4921 = vpop.permute.xlu0 %4920
    %4922 = vrot.lane.b32.xlu0 %v356, 72
    %v4923 = vpop.permute.xlu0 %4922
    %v4929 = vsel %vm144, %v4914, 0
    %v4932 = vsel %vm144, %v4915, 0
    %4934 = vmatprep.subr.mxu0 0.0
    %4935 = vmatpush1.msra.mxu0 %v4917
    %4936 = vmatprep.subr.mxu0 0.0
    %4937 = vmatpush1.msra.mxu0 %v4919
    %4938 = vmatprep.subr.mxu0 0.0
    %4939 = vmatpush1.msra.mxu0 %v4921
    %4940 = vmatprep.subr.mxu0 0.0
    %4941 = vmatpush1.msra.mxu0 %v4923
    %4942 = vmatprep.subr.mxu0 0.0
    %4943 = vmatpush1.msra.mxu0 0.0
    %4944 = vmatprep.subr.mxu0 0.0
    %4945 = vmatpush1.msra.mxu0 0.0
    %4946 = vmatprep.subr.mxu0 0.0
    %4947 = vmatpush1.msra.mxu0 0.0
    %4948 = vmatprep.subr.mxu0 0.0
    %4949 = vmatpush1.msra.mxu0 0.0
    %4950 = vmatprep.subr.mxu0 0.0
    %4951 = vmatpush1.msra.mxu0 0.0
    %4952 = vmatprep.subr.mxu0 0.0
    %4953 = vmatpush1.msra.mxu0 0.0
    %4954 = vmatprep.subr.mxu0 0.0
    %4955 = vmatpush1.msra.mxu0 0.0
    %4956 = vmatprep.subr.mxu0 0.0
    %4957 = vmatpush1.msra.mxu0 0.0
    %4958 = vmatprep.subr.mxu0 0.0
    %4959 = vmatpush1.msra.mxu0 0.0
    %4960 = vmatprep.subr.mxu0 0.0
    %4961 = vmatpush1.msra.mxu0 0.0
    %4962 = vmatprep.subr.mxu0 0.0
    %4963 = vmatpush1.msra.mxu0 0.0
    %4964 = vmatprep.subr.mxu0 0.0
    %4965 = vmatpush1.msra.mxu0 0.0
    %4966 = vmatprep.subr.mxu0 0.0
    %4967 = vmatpush1.msra.mxu0 0.0
    %4968 = vmatprep.subr.mxu0 0.0
    %4969 = vmatpush1.msra.mxu0 0.0
    %4970 = vmatprep.subr.mxu0 0.0
    %4971 = vmatpush1.msra.mxu0 0.0
    %4972 = vmatprep.subr.mxu0 0.0
    %4973 = vmatpush1.msra.mxu0 0.0
    %4974 = vmatprep.subr.mxu0 0.0
    %4975 = vmatpush1.msra.mxu0 0.0
    %4976 = vmatprep.subr.mxu0 0.0
    %4977 = vmatpush1.msra.mxu0 0.0
    %4978 = vmatprep.subr.mxu0 0.0
    %4979 = vmatpush1.msra.mxu0 0.0
    %4980 = vmatprep.subr.mxu0 0.0
    %4981 = vmatpush1.msra.mxu0 0.0
    %4982 = vmatprep.subr.mxu0 0.0
    %4983 = vmatpush1.msra.mxu0 0.0
    %4984 = vmatprep.subr.mxu0 0.0
    %4985 = vmatpush1.msra.mxu0 0.0
    %4986 = vmatprep.subr.mxu0 0.0
    %4987 = vmatpush1.msra.mxu0 0.0
    %4988 = vmatprep.subr.mxu0 0.0
    %4989 = vmatpush1.msra.mxu0 0.0
    %4990 = vmatprep.subr.mxu0 0.0
    %4991 = vmatpush1.msra.mxu0 0.0
    %4992 = vmatprep.subr.mxu0 0.0
    %4993 = vmatpush1.msra.mxu0 0.0
    %4994 = vmatprep.subr.mxu0 0.0
    %4995 = vmatpush1.msra.mxu0 0.0
    %4996 = vmatprep.subr.mxu0 0.0
    %4997 = vmatpush1.msra.mxu0 0.0
    %4998 = vmatprep.mubr.f32.mxu0 0.0
    %4999 = vmatmul.mubr.f32.gmra.mrb[0].mxu0 %v4929
    %v5000 = vpop.f32.mrb[0].mxu0
    %v5001 = vadd.f32 0.0, %v5000
    %v5002 = vpop.f32.mrb[0].mxu0
    %5003 = vmatprep.mubr.f32.mxu0 0.0
    %5004 = vmatmul.mubr.f32.gmra.mrb[0].mxu0 %v4932
    %v5005 = vpop.f32.mrb[0].mxu0
    %v5006 = vadd.f32 0.0, %v5005
    %v5007 = vpop.f32.mrb[0].mxu0
    %5008 = vdwg.mxu0
    %5011 = vrot.lane.b32.xlu0 %v5001, 24
    %v5012 = vpop.permute.xlu0 %5011
    %5013 = vrot.lane.b32.xlu0 %v5006, 24
    %v5014 = vpop.permute.xlu0 %5013
    %5017 = vst.msk [vmem:[#allocation2] sm:$0xff] %vm1386, %v5012
    %5018 = vst.msk [vmem:[#allocation2 + $0x8] sm:$0xff] %vm1386, %v5014
    %v5019 = vld [vmem:[#allocation2] sm:$0xff]
    %v5020 = vld [vmem:[#allocation2 + $0x8] sm:$0xff]
    %v5021 = vlaneseq
    %v5022 = vshrl.u32 %v5021, 7
    %v5023 = vsub.s32 0, %v5022
    %v5024 = vrot.slane %v4132, %v5023
    %5029 = vrot.lane.b32.xlu0 %v2882, 96
    %v5030 = vpop.permute.xlu0 %5029
    %5031 = vrot.lane.b32.xlu0 %v2883, 96
    %v5032 = vpop.permute.xlu0 %5031
    %5033 = vrot.lane.b32.xlu0 %v2884, 96
    %v5034 = vpop.permute.xlu0 %5033
    %5035 = vrot.lane.b32.xlu0 %v2885, 96
    %v5036 = vpop.permute.xlu0 %5035
    %v5042 = vsel %vm144, %v5019, 0
    %v5045 = vsel %vm144, %v5020, 0
    %5047 = vmatprep.subr.mxu0 0.0
    %5048 = vmatpush1.msra.mxu0 %v5030
    %5049 = vmatprep.subr.mxu0 0.0
    %5050 = vmatpush1.msra.mxu0 %v5032
    %5051 = vmatprep.subr.mxu0 0.0
    %5052 = vmatpush1.msra.mxu0 %v5034
    %5053 = vmatprep.subr.mxu0 0.0
    %5054 = vmatpush1.msra.mxu0 %v5036
    %5055 = vmatprep.subr.mxu0 0.0
    %5056 = vmatpush1.msra.mxu0 0.0
    %5057 = vmatprep.subr.mxu0 0.0
    %5058 = vmatpush1.msra.mxu0 0.0
    %5059 = vmatprep.subr.mxu0 0.0
    %5060 = vmatpush1.msra.mxu0 0.0
    %5061 = vmatprep.subr.mxu0 0.0
    %5062 = vmatpush1.msra.mxu0 0.0
    %5063 = vmatprep.subr.mxu0 0.0
    %5064 = vmatpush1.msra.mxu0 0.0
    %5065 = vmatprep.subr.mxu0 0.0
    %5066 = vmatpush1.msra.mxu0 0.0
    %5067 = vmatprep.subr.mxu0 0.0
    %5068 = vmatpush1.msra.mxu0 0.0
    %5069 = vmatprep.subr.mxu0 0.0
    %5070 = vmatpush1.msra.mxu0 0.0
    %5071 = vmatprep.subr.mxu0 0.0
    %5072 = vmatpush1.msra.mxu0 0.0
    %5073 = vmatprep.subr.mxu0 0.0
    %5074 = vmatpush1.msra.mxu0 0.0
    %5075 = vmatprep.subr.mxu0 0.0
    %5076 = vmatpush1.msra.mxu0 0.0
    %5077 = vmatprep.subr.mxu0 0.0
    %5078 = vmatpush1.msra.mxu0 0.0
    %5079 = vmatprep.subr.mxu0 0.0
    %5080 = vmatpush1.msra.mxu0 0.0
    %5081 = vmatprep.subr.mxu0 0.0
    %5082 = vmatpush1.msra.mxu0 0.0
    %5083 = vmatprep.subr.mxu0 0.0
    %5084 = vmatpush1.msra.mxu0 0.0
    %5085 = vmatprep.subr.mxu0 0.0
    %5086 = vmatpush1.msra.mxu0 0.0
    %5087 = vmatprep.subr.mxu0 0.0
    %5088 = vmatpush1.msra.mxu0 0.0
    %5089 = vmatprep.subr.mxu0 0.0
    %5090 = vmatpush1.msra.mxu0 0.0
    %5091 = vmatprep.subr.mxu0 0.0
    %5092 = vmatpush1.msra.mxu0 0.0
    %5093 = vmatprep.subr.mxu0 0.0
    %5094 = vmatpush1.msra.mxu0 0.0
    %5095 = vmatprep.subr.mxu0 0.0
    %5096 = vmatpush1.msra.mxu0 0.0
    %5097 = vmatprep.subr.mxu0 0.0
    %5098 = vmatpush1.msra.mxu0 0.0
    %5099 = vmatprep.subr.mxu0 0.0
    %5100 = vmatpush1.msra.mxu0 0.0
    %5101 = vmatprep.subr.mxu0 0.0
    %5102 = vmatpush1.msra.mxu0 0.0
    %5103 = vmatprep.subr.mxu0 0.0
    %5104 = vmatpush1.msra.mxu0 0.0
    %5105 = vmatprep.subr.mxu0 0.0
    %5106 = vmatpush1.msra.mxu0 0.0
    %5107 = vmatprep.subr.mxu0 0.0
    %5108 = vmatpush1.msra.mxu0 0.0
    %5109 = vmatprep.subr.mxu0 0.0
    %5110 = vmatpush1.msra.mxu0 0.0
    %5111 = vmatprep.mubr.f32.mxu0 0.0
    %5112 = vmatmul.mubr.f32.gmra.mrb[0].mxu0 %v5042
    %v5113 = vpop.f32.mrb[0].mxu0
    %v5114 = vadd.f32 %v5024, %v5113
    %v5115 = vpop.f32.mrb[0].mxu0
    %5116 = vmatprep.mubr.f32.mxu0 0.0
    %5117 = vmatmul.mubr.f32.gmra.mrb[0].mxu0 %v5045
    %v5118 = vpop.f32.mrb[0].mxu0
    %v5119 = vadd.f32 %v5024, %v5118
    %v5120 = vpop.f32.mrb[0].mxu0
    %5121 = vdwg.mxu0
    %v5122 = vadd.f32 %v4042, %v5114
    %v5123 = vadd.f32 %v4043, %v5119
    %v5124 = vld [vmem:[#allocation8 + $0x16] sm:$0x1]
    %v5125 = vld [vmem:[#allocation8 + $0x17] sm:$0x1]
    %v5126 = vsel %vm144, %v5122, 0.0
    %5127 = vadd.xlane.f32.xlu0 %v5126
    %v5128 = vpop.xlane.xlu0 %5127
    %v5129 = vsel %vm144, %v5123, 0.0
    %5130 = vadd.xlane.f32.xlu0 %v5129
    %v5131 = vpop.xlane.xlu0 %5130
    %v5132 = vmul.f32 %v5128, %v1498
    %v5133 = vmul.f32 %v5131, %v1498
    %v5134 = vsub.f32 %v5122, %v5132
    %v5135 = vsub.f32 %v5123, %v5133
    %v5136 = vmul.f32 %v5134, %v5134
    %v5137 = vmul.f32 %v5135, %v5135
    %v5138 = vsel %vm144, %v5136, 0.0
    %5139 = vadd.xlane.f32.xlu0 %v5138
    %v5140 = vpop.xlane.xlu0 %5139
    %v5141 = vsel %vm144, %v5137, 0.0
    %5142 = vadd.xlane.f32.xlu0 %v5141
    %v5143 = vpop.xlane.xlu0 %5142
    %v5144 = vmul.f32 %v5140, %v1498
    %v5145 = vmul.f32 %v5143, %v1498
    %v5146 = vadd.f32 %v5144, 1e-05
    %v5147 = vadd.f32 %v5145, 1e-05
    %v5148 = vrsqrt.pop %v5146
    %v5149 = vrsqrt.pop %v5147
    %v5150 = vmul.f32 %v5134, %v5148
    %v5151 = vmul.f32 %v5135, %v5149
    %v5152 = vlaneseq
    %v5153 = vshrl.u32 %v5152, 7
    %v5154 = vsub.s32 0, %v5153
    %v5155 = vrot.slane %v5124, %v5154
    %v5156 = vmul.f32 %v5150, %v5155
    %v5157 = vmul.f32 %v5151, %v5155
    %v5158 = vlaneseq
    %v5159 = vshrl.u32 %v5158, 7
    %v5160 = vsub.s32 0, %v5159
    %v5161 = vrot.slane %v5125, %v5160
    %v5162 = vadd.f32 %v5156, %v5161
    %v5163 = vadd.f32 %v5157, %v5161
    %v5164 = vld [vmem:[#allocation8 + $0x12] sm:$0x1]
    %v5165 = vlaneseq
    %v5166 = vshrl.u32 %v5165, 7
    %v5167 = vsub.s32 0, %v5166
    %v5168 = vrot.slane %v5164, %v5167
    %5169 = vrot.lane.b32.xlu0 %v2882, 64
    %v5170 = vpop.permute.xlu0 %5169
    %5171 = vrot.lane.b32.xlu0 %v2883, 64
    %v5172 = vpop.permute.xlu0 %5171
    %5173 = vrot.lane.b32.xlu0 %v2884, 64
    %v5174 = vpop.permute.xlu0 %5173
    %5175 = vrot.lane.b32.xlu0 %v2885, 64
    %v5176 = vpop.permute.xlu0 %5175
    %v5182 = vsel %vm144, %v5162, 0
    %v5185 = vsel %vm144, %v5163, 0
    %5187 = vmatprep.subr.mxu0 0.0
    %5188 = vmatpush1.msra.mxu0 %v5170
    %5189 = vmatprep.subr.mxu0 0.0
    %5190 = vmatpush1.msra.mxu0 %v5172
    %5191 = vmatprep.subr.mxu0 0.0
    %5192 = vmatpush1.msra.mxu0 %v5174
    %5193 = vmatprep.subr.mxu0 0.0
    %5194 = vmatpush1.msra.mxu0 %v5176
    %5195 = vmatprep.subr.mxu0 0.0
    %5196 = vmatpush1.msra.mxu0 0.0
    %5197 = vmatprep.subr.mxu0 0.0
    %5198 = vmatpush1.msra.mxu0 0.0
    %5199 = vmatprep.subr.mxu0 0.0
    %5200 = vmatpush1.msra.mxu0 0.0
    %5201 = vmatprep.subr.mxu0 0.0
    %5202 = vmatpush1.msra.mxu0 0.0
    %5203 = vmatprep.subr.mxu0 0.0
    %5204 = vmatpush1.msra.mxu0 0.0
    %5205 = vmatprep.subr.mxu0 0.0
    %5206 = vmatpush1.msra.mxu0 0.0
    %5207 = vmatprep.subr.mxu0 0.0
    %5208 = vmatpush1.msra.mxu0 0.0
    %5209 = vmatprep.subr.mxu0 0.0
    %5210 = vmatpush1.msra.mxu0 0.0
    %5211 = vmatprep.subr.mxu0 0.0
    %5212 = vmatpush1.msra.mxu0 0.0
    %5213 = vmatprep.subr.mxu0 0.0
    %5214 = vmatpush1.msra.mxu0 0.0
    %5215 = vmatprep.subr.mxu0 0.0
    %5216 = vmatpush1.msra.mxu0 0.0
    %5217 = vmatprep.subr.mxu0 0.0
    %5218 = vmatpush1.msra.mxu0 0.0
    %5219 = vmatprep.subr.mxu0 0.0
    %5220 = vmatpush1.msra.mxu0 0.0
    %5221 = vmatprep.subr.mxu0 0.0
    %5222 = vmatpush1.msra.mxu0 0.0
    %5223 = vmatprep.subr.mxu0 0.0
    %5224 = vmatpush1.msra.mxu0 0.0
    %5225 = vmatprep.subr.mxu0 0.0
    %5226 = vmatpush1.msra.mxu0 0.0
    %5227 = vmatprep.subr.mxu0 0.0
    %5228 = vmatpush1.msra.mxu0 0.0
    %5229 = vmatprep.subr.mxu0 0.0
    %5230 = vmatpush1.msra.mxu0 0.0
    %5231 = vmatprep.subr.mxu0 0.0
    %5232 = vmatpush1.msra.mxu0 0.0
    %5233 = vmatprep.subr.mxu0 0.0
    %5234 = vmatpush1.msra.mxu0 0.0
    %5235 = vmatprep.subr.mxu0 0.0
    %5236 = vmatpush1.msra.mxu0 0.0
    %5237 = vmatprep.subr.mxu0 0.0
    %5238 = vmatpush1.msra.mxu0 0.0
    %5239 = vmatprep.subr.mxu0 0.0
    %5240 = vmatpush1.msra.mxu0 0.0
    %5241 = vmatprep.subr.mxu0 0.0
    %5242 = vmatpush1.msra.mxu0 0.0
    %5243 = vmatprep.subr.mxu0 0.0
    %5244 = vmatpush1.msra.mxu0 0.0
    %5245 = vmatprep.subr.mxu0 0.0
    %5246 = vmatpush1.msra.mxu0 0.0
    %5247 = vmatprep.subr.mxu0 0.0
    %5248 = vmatpush1.msra.mxu0 0.0
    %5249 = vmatprep.subr.mxu0 0.0
    %5250 = vmatpush1.msra.mxu0 0.0
    %5251 = vmatprep.mubr.f32.mxu0 0.0
    %5252 = vmatmul.mubr.f32.gmra.mrb[0].mxu0 %v5182
    %v5253 = vpop.f32.mrb[0].mxu0
    %v5254 = vadd.f32 %v5168, %v5253
    %v5255 = vpop.f32.mrb[0].mxu0
    %5256 = vmatprep.mubr.f32.mxu0 0.0
    %5257 = vmatmul.mubr.f32.gmra.mrb[0].mxu0 %v5185
    %v5258 = vpop.f32.mrb[0].mxu0
    %v5259 = vadd.f32 %v5168, %v5258
    %v5260 = vpop.f32.mrb[0].mxu0
    %5261 = vdwg.mxu0
    %v5262 = vmax.f32 %v5254, 0.0
    %v5263 = vmax.f32 %v5259, 0.0
    %s5264 = scalar_lea.vmem %s7, 64
    %v5265 = vld [vmem:[%s5264] sm:$0xff]
    %v5266 = vld [vmem:[%s5264 + $0x8] sm:$0xff]
    %v5267 = vld [vmem:[%s5264 + $0x10] sm:$0xff]
    %v5268 = vld [vmem:[%s5264 + $0x18] sm:$0xff]
    %v5269 = vld [vmem:[%s5264 + $0x20] sm:$0xff]
    %v5270 = vld [vmem:[%s5264 + $0x28] sm:$0xff]
    %v5271 = vld [vmem:[%s5264 + $0x30] sm:$0xff]
    %v5272 = vld [vmem:[%s5264 + $0x38] sm:$0xff]
    %v5273 = vld [vmem:[#allocation8 + $0x13] sm:$0x1]
    %v5274 = vlaneseq
    %v5275 = vshrl.u32 %v5274, 7
    %v5276 = vsub.s32 0, %v5275
    %v5277 = vrot.slane %v5273, %v5276
    %v5279 = vsel %vm2752, %v5262, 0
    %v5282 = vsel %vm2752, %v5263, 0
    %5284 = vmatprep.subr.mxu0 0.0
    %5285 = vmatpush1.msra.mxu0 %v5265
    %5286 = vmatprep.subr.mxu0 0.0
    %5287 = vmatpush1.msra.mxu0 %v5266
    %5288 = vmatprep.subr.mxu0 0.0
    %5289 = vmatpush1.msra.mxu0 %v5267
    %5290 = vmatprep.subr.mxu0 0.0
    %5291 = vmatpush1.msra.mxu0 %v5268
    %5292 = vmatprep.subr.mxu0 0.0
    %5293 = vmatpush1.msra.mxu0 %v5269
    %5294 = vmatprep.subr.mxu0 0.0
    %5295 = vmatpush1.msra.mxu0 %v5270
    %5296 = vmatprep.subr.mxu0 0.0
    %5297 = vmatpush1.msra.mxu0 %v5271
    %5298 = vmatprep.subr.mxu0 0.0
    %5299 = vmatpush1.msra.mxu0 %v5272
    %5300 = vmatprep.subr.mxu0 0.0
    %5301 = vmatpush1.msra.mxu0 0.0
    %5302 = vmatprep.subr.mxu0 0.0
    %5303 = vmatpush1.msra.mxu0 0.0
    %5304 = vmatprep.subr.mxu0 0.0
    %5305 = vmatpush1.msra.mxu0 0.0
    %5306 = vmatprep.subr.mxu0 0.0
    %5307 = vmatpush1.msra.mxu0 0.0
    %5308 = vmatprep.subr.mxu0 0.0
    %5309 = vmatpush1.msra.mxu0 0.0
    %5310 = vmatprep.subr.mxu0 0.0
    %5311 = vmatpush1.msra.mxu0 0.0
    %5312 = vmatprep.subr.mxu0 0.0
    %5313 = vmatpush1.msra.mxu0 0.0
    %5314 = vmatprep.subr.mxu0 0.0
    %5315 = vmatpush1.msra.mxu0 0.0
    %5316 = vmatprep.subr.mxu0 0.0
    %5317 = vmatpush1.msra.mxu0 0.0
    %5318 = vmatprep.subr.mxu0 0.0
    %5319 = vmatpush1.msra.mxu0 0.0
    %5320 = vmatprep.subr.mxu0 0.0
    %5321 = vmatpush1.msra.mxu0 0.0
    %5322 = vmatprep.subr.mxu0 0.0
    %5323 = vmatpush1.msra.mxu0 0.0
    %5324 = vmatprep.subr.mxu0 0.0
    %5325 = vmatpush1.msra.mxu0 0.0
    %5326 = vmatprep.subr.mxu0 0.0
    %5327 = vmatpush1.msra.mxu0 0.0
    %5328 = vmatprep.subr.mxu0 0.0
    %5329 = vmatpush1.msra.mxu0 0.0
    %5330 = vmatprep.subr.mxu0 0.0
    %5331 = vmatpush1.msra.mxu0 0.0
    %5332 = vmatprep.subr.mxu0 0.0
    %5333 = vmatpush1.msra.mxu0 0.0
    %5334 = vmatprep.subr.mxu0 0.0
    %5335 = vmatpush1.msra.mxu0 0.0
    %5336 = vmatprep.subr.mxu0 0.0
    %5337 = vmatpush1.msra.mxu0 0.0
    %5338 = vmatprep.subr.mxu0 0.0
    %5339 = vmatpush1.msra.mxu0 0.0
    %5340 = vmatprep.subr.mxu0 0.0
    %5341 = vmatpush1.msra.mxu0 0.0
    %5342 = vmatprep.subr.mxu0 0.0
    %5343 = vmatpush1.msra.mxu0 0.0
    %5344 = vmatprep.subr.mxu0 0.0
    %5345 = vmatpush1.msra.mxu0 0.0
    %5346 = vmatprep.subr.mxu0 0.0
    %5347 = vmatpush1.msra.mxu0 0.0
    %5348 = vmatprep.mubr.f32.mxu0 0.0
    %5349 = vmatmul.mubr.f32.gmra.mrb[0].mxu0 %v5279
    %v5350 = vpop.f32.mrb[0].mxu0
    %v5351 = vadd.f32 %v5277, %v5350
    %v5352 = vpop.f32.mrb[0].mxu0
    %5353 = vmatprep.mubr.f32.mxu0 0.0
    %5354 = vmatmul.mubr.f32.gmra.mrb[0].mxu0 %v5282
    %v5355 = vpop.f32.mrb[0].mxu0
    %v5356 = vadd.f32 %v5277, %v5355
    %v5357 = vpop.f32.mrb[0].mxu0
    %5358 = vdwg.mxu0
    %v5359 = vadd.f32 %v5162, %v5351
    %v5360 = vadd.f32 %v5163, %v5356
    %v5361 = vld [vmem:[#allocation8 + $0x18] sm:$0x1]
    %v5362 = vld [vmem:[#allocation8 + $0x19] sm:$0x1]
    %v5363 = vsel %vm144, %v5359, 0.0
    %5364 = vadd.xlane.f32.xlu0 %v5363
    %v5365 = vpop.xlane.xlu0 %5364
    %v5366 = vsel %vm144, %v5360, 0.0
    %5367 = vadd.xlane.f32.xlu0 %v5366
    %v5368 = vpop.xlane.xlu0 %5367
    %v5369 = vmul.f32 %v5365, %v1498
    %v5370 = vmul.f32 %v5368, %v1498
    %v5371 = vsub.f32 %v5359, %v5369
    %v5372 = vsub.f32 %v5360, %v5370
    %v5373 = vmul.f32 %v5371, %v5371
    %v5374 = vmul.f32 %v5372, %v5372
    %v5375 = vsel %vm144, %v5373, 0.0
    %5376 = vadd.xlane.f32.xlu0 %v5375
    %v5377 = vpop.xlane.xlu0 %5376
    %v5378 = vsel %vm144, %v5374, 0.0
    %5379 = vadd.xlane.f32.xlu0 %v5378
    %v5380 = vpop.xlane.xlu0 %5379
    %v5381 = vmul.f32 %v5377, %v1498
    %v5382 = vmul.f32 %v5380, %v1498
    %v5383 = vadd.f32 %v5381, 1e-05
    %v5384 = vadd.f32 %v5382, 1e-05
    %v5385 = vrsqrt.pop %v5383
    %v5386 = vrsqrt.pop %v5384
    %v5387 = vmul.f32 %v5371, %v5385
    %v5388 = vmul.f32 %v5372, %v5386
    %v5389 = vlaneseq
    %v5390 = vshrl.u32 %v5389, 7
    %v5391 = vsub.s32 0, %v5390
    %v5392 = vrot.slane %v5361, %v5391
    %v5393 = vmul.f32 %v5387, %v5392
    %v5394 = vmul.f32 %v5388, %v5392
    %v5395 = vlaneseq
    %v5396 = vshrl.u32 %v5395, 7
    %v5397 = vsub.s32 0, %v5396
    %v5398 = vrot.slane %v5362, %v5397
    %v5399 = vadd.f32 %v5393, %v5398
    %v5400 = vadd.f32 %v5394, %v5398
    %v5401 = vld [vmem:[#allocation8 + $0x1b] sm:$0x1]
    %v5402 = vld [vmem:[#allocation8 + $0x1c] sm:$0x1]
    %v5403 = vsel %vm144, %v5399, 0.0
    %5404 = vadd.xlane.f32.xlu0 %v5403
    %v5405 = vpop.xlane.xlu0 %5404
    %v5406 = vsel %vm144, %v5400, 0.0
    %5407 = vadd.xlane.f32.xlu0 %v5406
    %v5408 = vpop.xlane.xlu0 %5407
    %v5409 = vmul.f32 %v5405, %v1498
    %v5410 = vmul.f32 %v5408, %v1498
    %v5411 = vsub.f32 %v5399, %v5409
    %v5412 = vsub.f32 %v5400, %v5410
    %v5413 = vmul.f32 %v5411, %v5411
    %v5414 = vmul.f32 %v5412, %v5412
    %v5415 = vsel %vm144, %v5413, 0.0
    %5416 = vadd.xlane.f32.xlu0 %v5415
    %v5417 = vpop.xlane.xlu0 %5416
    %v5418 = vsel %vm144, %v5414, 0.0
    %5419 = vadd.xlane.f32.xlu0 %v5418
    %v5420 = vpop.xlane.xlu0 %5419
    %v5421 = vmul.f32 %v5417, %v1498
    %v5422 = vmul.f32 %v5420, %v1498
    %v5423 = vadd.f32 %v5421, 1e-05
    %v5424 = vadd.f32 %v5422, 1e-05
    %v5425 = vrsqrt.pop %v5423
    %v5426 = vrsqrt.pop %v5424
    %v5427 = vmul.f32 %v5411, %v5425
    %v5428 = vmul.f32 %v5412, %v5426
    %v5429 = vlaneseq
    %v5430 = vshrl.u32 %v5429, 7
    %v5431 = vsub.s32 0, %v5430
    %v5432 = vrot.slane %v5401, %v5431
    %v5433 = vmul.f32 %v5427, %v5432
    %v5434 = vmul.f32 %v5428, %v5432
    %v5435 = vlaneseq
    %v5436 = vshrl.u32 %v5435, 7
    %v5437 = vsub.s32 0, %v5436
    %v5438 = vrot.slane %v5402, %v5437
    %v5439 = vadd.f32 %v5433, %v5438
    %v5440 = vadd.f32 %v5434, %v5438
    %5441 = vst.msk [vmem:[#allocation9] sm:$0xff] %vm144, %v5439
    %5442 = vst.msk [vmem:[#allocation9 + $0x8] sm:$0xff] %vm144, %v5440
    // Predicated region
    $region50: #{transformer_decoder.1} parent=1 // pred_check
      _
    $region51: #{transformer_decoder.1} parent=1 // pred_check_branch
      %5444 = sbr.rel (0) target = $region53
    $region52: #{transformer_decoder.1} parent=1 // pred_region
      %s5446 = ssub.s32 256, 256
      %5447 = vsyncadd [#allocation5], %s5446
      %s5448 = sshll.u32 [#allocation9], 4
      %s5449 = int_to_ptr.vmem [resolvable:$true] %s5448
      %5454 = dma.vmem_to_hbm [thread:$0]  %s5449, 256, %s9, [#allocation5], 128, 128, 8
    $region53: #{transformer_decoder.1} parent=1 // pred_fallthru
      _
    // Predicated region
    $region54: #{transformer_decoder.1} parent=1 // pred_check
      _
    $region55: #{transformer_decoder.1} parent=1 // pred_check_branch
      %5456 = sbr.rel (0) target = $region57
    $region56: #{transformer_decoder.1} parent=1 // pred_region
      %5457 = dma.done [#allocation5], 256
    $region57: #{transformer_decoder.1} parent=1 // pred_fallthru
      _
    %5458 = vsyncpa [#allocation4], 1
    %5459 = vsyncpa [#allocation7], 1
    %5460 = vsyncpa [#allocation5], 1

</llo_original>
